<compile_context>
chip_gen: v7x
topology: tpu7x:2x2x1
jax: 0.10.0
libtpu: 0.0.40
codegen_flags: <defaults>
</compile_context>

<pallas_src>
import functools
import math

import numpy as np
import jax
import jax.numpy as jnp
from jax import lax
from jax.experimental import pallas as pl
from jax.experimental.pallas import tpu as pltpu


# ----------------------------------------------------------------------------
# Generation-aware VMEM / tile budgets.
# ----------------------------------------------------------------------------
@functools.lru_cache(maxsize=None)
def _budgets():
    cap = None
    try:
        info = pltpu.get_tpu_info()
        cap = int(getattr(info, "vmem_capacity_bytes", 0)) or None
    except Exception:
        cap = None
    if cap is None:
        # Unknown generation: conservative settings that work everywhere.
        return dict(vmem_limit=64 * 1024 * 1024, attn_tile=256, seq_tile=256,
                    ff_tile=512, proj_n_tile=512)
    if cap <= 64 * 1024 * 1024:
        # v7x-class: 64 MiB physical VMEM per TensorCore -> small tiles.
        return dict(vmem_limit=48 * 1024 * 1024, attn_tile=256, seq_tile=128,
                    ff_tile=512, proj_n_tile=512)
    # v5e / v6e: 128 MiB physical VMEM -> large q tiles cut K/V re-reads.
    return dict(vmem_limit=100 * 1024 * 1024, attn_tile=512, seq_tile=256,
                ff_tile=1024, proj_n_tile=1024)


def _pick_tile(n, cap, mult):
    """Largest multiple-of-`mult` divisor of n that is <= cap, else n itself."""
    best = None
    limit = min(n, cap)
    for t in range(mult, limit + 1, mult):
        if n % t == 0:
            best = t
    return best if best is not None else n


# ----------------------------------------------------------------------------
# Kernel 1: adaLN (RMSNorm*(1+scale)+shift) fused into the [Wq|Wk|Wv] projection.
# The normalized tile is cached in VMEM scratch at j==0 and reused for all
# output-column tiles j (j is the innermost, 'arbitrary' axis).
# ----------------------------------------------------------------------------
def _adaln_qkv_kernel(x_ref, rw_ref, sc_ref, sh_ref, w_ref, o_ref, xn_ref, *, eps):
    @pl.when(pl.program_id(2) == 0)
    def _():
        x = x_ref[...].astype(jnp.float32)
        xn = x * lax.rsqrt(jnp.mean(x * x, axis=-1, keepdims=True) + eps)
        xn = xn * rw_ref[...].astype(jnp.float32)
        xn = xn * (1.0 + sc_ref[...].astype(jnp.float32)) \
            + sh_ref[...].astype(jnp.float32)
        xn_ref[...] = xn.astype(xn_ref.dtype)
    o_ref[...] = jnp.dot(xn_ref[...], w_ref[...],
                         preferred_element_type=jnp.float32).astype(o_ref.dtype)


def adaln_qkv_proj(x, rms_w, scale, shift, w_qkv, *, n_vis_blocks, eps, tm, tn,
                   vmem_limit):
    B, S, D = x.shape
    N = w_qkv.shape[-1]
    sidx = lambda i: (i >= n_vis_blocks).astype(jnp.int32)
    return pl.pallas_call(
        functools.partial(_adaln_qkv_kernel, eps=eps),
        out_shape=jax.ShapeDtypeStruct((B, S, N), x.dtype),
        grid_spec=pltpu.PrefetchScalarGridSpec(
            num_scalar_prefetch=0,
            grid=(B, S // tm, N // tn),
            in_specs=[
                pl.BlockSpec((pl.Squeezed(), tm, D), lambda b, i, j: (b, i, 0)),
                pl.BlockSpec((pl.Squeezed(), 1, D),
                             lambda b, i, j: (sidx(i), 0, 0)),
                pl.BlockSpec((pl.Squeezed(), pl.Squeezed(), 1, D),
                             lambda b, i, j: (sidx(i), b, 0, 0)),
                pl.BlockSpec((pl.Squeezed(), pl.Squeezed(), 1, D),
                             lambda b, i, j: (sidx(i), b, 0, 0)),
                pl.BlockSpec((pl.Squeezed(), D, tn),
                             lambda b, i, j: (sidx(i), 0, j)),
            ],
            out_specs=pl.BlockSpec((pl.Squeezed(), tm, tn),
                                   lambda b, i, j: (b, i, j)),
            scratch_shapes=[pltpu.VMEM((tm, D), x.dtype)],
        ),
        compiler_params=pltpu.CompilerParams(
            dimension_semantics=("parallel", "parallel", "arbitrary"),
            vmem_limit_bytes=vmem_limit),
    )(x, rms_w, scale, shift, w_qkv)


# ----------------------------------------------------------------------------
# Kernel 2: head split to (B, H, S, hd) + qk-RMSNorm + 3D RoPE + q scaling,
# applied ONCE per token (hoisted out of the flash inner loop).  Text rows get
# identity RoPE via cos=1 / sin=0 table rows; video/text qk-norm weights are
# selected per seq tile through the index_map.
# ----------------------------------------------------------------------------
def _qkv_split_rope_kernel(qkv_ref, cos_ref, sin_ref, qw_ref, kw_ref, rot_ref,
                           q_ref, k_ref, v_ref, *, num_heads, head_dim, inner,
                           eps, scale):
    cos = cos_ref[...].astype(jnp.float32)       # (tm, hd)
    sin = sin_ref[...].astype(jnp.float32)
    rot = rot_ref[...]                           # (hd, hd) +/-1 rotate-half matrix
    qw = qw_ref[...].astype(jnp.float32)         # (1, hd)
    kw = kw_ref[...].astype(jnp.float32)

    def norm_rope(xh, w):
        xh = xh * lax.rsqrt(jnp.mean(xh * xh, axis=-1, keepdims=True) + eps) * w
        return xh * cos + jnp.dot(xh, rot, preferred_element_type=jnp.float32) * sin

    for h in range(num_heads):
        lo = h * head_dim
        qh = qkv_ref[:, lo:lo + head_dim].astype(jnp.float32)
        kh = qkv_ref[:, inner + lo:inner + lo + head_dim].astype(jnp.float32)
        q_ref[h, :, :] = (norm_rope(qh, qw) * scale).astype(q_ref.dtype)
        k_ref[h, :, :] = norm_rope(kh, kw).astype(k_ref.dtype)
        v_ref[h, :, :] = qkv_ref[:, 2 * inner + lo:2 * inner + lo + head_dim]


def qkv_rope_head_split(qkv, cos, sin, qw, kw, rot, *, num_heads, head_dim, eps,
                        scale, tm, n_vis_blocks, vmem_limit):
    B, S, _ = qkv.shape
    inner = num_heads * head_dim
    sidx = lambda i: (i >= n_vis_blocks).astype(jnp.int32)
    kernel = functools.partial(_qkv_split_rope_kernel, num_heads=num_heads,
                               head_dim=head_dim, inner=inner, eps=eps,
                               scale=scale)
    head_spec = pl.BlockSpec((pl.Squeezed(), num_heads, tm, head_dim),
                             lambda b, i: (b, 0, i, 0))
    return pl.pallas_call(
        kernel,
        out_shape=[jax.ShapeDtypeStruct((B, num_heads, S, head_dim), qkv.dtype)] * 3,
        grid_spec=pltpu.PrefetchScalarGridSpec(
            num_scalar_prefetch=0,
            grid=(B, S // tm),
            in_specs=[
                pl.BlockSpec((pl.Squeezed(), tm, 3 * inner),
                             lambda b, i: (b, i, 0)),
                pl.BlockSpec((tm, head_dim), lambda b, i: (i, 0)),
                pl.BlockSpec((tm, head_dim), lambda b, i: (i, 0)),
                pl.BlockSpec((pl.Squeezed(), 1, head_dim),
                             lambda b, i: (sidx(i), 0, 0)),
                pl.BlockSpec((pl.Squeezed(), 1, head_dim),
                             lambda b, i: (sidx(i), 0, 0)),
                pl.BlockSpec((head_dim, head_dim), lambda b, i: (0, 0)),
            ],
            out_specs=[head_spec, head_spec, head_spec],
        ),
        compiler_params=pltpu.CompilerParams(
            dimension_semantics=("parallel", "parallel"),
            vmem_limit_bytes=vmem_limit),
    )(qkv, cos, sin, qw, kw, rot)


# ----------------------------------------------------------------------------
# Kernel 3: flash attention with a head grid axis.  Pure QK^T / online softmax /
# PV; q is already normed+roped+scaled.  Exact reciprocal at finalize.
# ----------------------------------------------------------------------------
def _flash_kernel(q_ref, k_ref, v_ref, o_ref, acc_ref, m_ref, l_ref):
    ki = pl.program_id(3)

    @pl.when(ki == 0)
    def _():
        m_ref[...] = jnp.full(m_ref.shape, -jnp.inf, dtype=m_ref.dtype)
        l_ref[...] = jnp.zeros(l_ref.shape, dtype=l_ref.dtype)
        acc_ref[...] = jnp.zeros(acc_ref.shape, dtype=acc_ref.dtype)

    s = lax.dot_general(q_ref[...], k_ref[...], (((1,), (1,)), ((), ())),
                        preferred_element_type=jnp.float32)          # (tq, tk)
    m_prev = m_ref[...]
    m_new = jnp.maximum(m_prev, jnp.max(s, axis=-1, keepdims=True))
    alpha = jnp.exp(m_prev - m_new)
    p = jnp.exp(s - m_new)
    l_ref[...] = alpha * l_ref[...] + jnp.sum(p, axis=-1, keepdims=True)
    m_ref[...] = m_new
    acc_ref[...] = alpha * acc_ref[...] + jnp.dot(
        p.astype(v_ref.dtype), v_ref[...], preferred_element_type=jnp.float32)

    @pl.when(ki == pl.num_programs(3) - 1)
    def _():
        o_ref[...] = (acc_ref[...] / l_ref[...]).astype(o_ref.dtype)


def flash_attention(q, k, v, *, tq, tk, vmem_limit):
    B, H, S, hd = q.shape
    q_spec = pl.BlockSpec((pl.Squeezed(), pl.Squeezed(), tq, hd),
                          lambda b, h, qi, ki: (b, h, qi, 0))
    kv_spec = pl.BlockSpec((pl.Squeezed(), pl.Squeezed(), tk, hd),
                           lambda b, h, qi, ki: (b, h, ki, 0))
    return pl.pallas_call(
        _flash_kernel,
        out_shape=jax.ShapeDtypeStruct((B, H, S, hd), q.dtype),
        grid_spec=pltpu.PrefetchScalarGridSpec(
            num_scalar_prefetch=0,
            grid=(B, H, S // tq, S // tk),
            in_specs=[q_spec, kv_spec, kv_spec],
            out_specs=pl.BlockSpec((pl.Squeezed(), pl.Squeezed(), tq, hd),
                                   lambda b, h, qi, ki: (b, h, qi, 0)),
            scratch_shapes=[
                pltpu.VMEM((tq, hd), jnp.float32),    # output accumulator
                pltpu.VMEM((tq, 1), jnp.float32),     # running max
                pltpu.VMEM((tq, 1), jnp.float32),     # running denom
            ]),
        compiler_params=pltpu.CompilerParams(
            dimension_semantics=("parallel", "parallel", "parallel", "arbitrary"),
            vmem_limit_bytes=vmem_limit),
    )(q, k, v)


# ----------------------------------------------------------------------------
# Kernel 4: out-projection as a head-reduction matmul (fuses the (B,H,S,hd) ->
# (B,S,H*hd) transpose) with gated residual:  out = res + gate * (sum_h a_h@W_h + b)
# ----------------------------------------------------------------------------
def _out_proj_kernel(a_ref, w_ref, b_ref, res_ref, g_ref, o_ref, acc_ref):
    h = pl.program_id(2)

    @pl.when(h == 0)
    def _():
        acc_ref[...] = jnp.zeros(acc_ref.shape, dtype=acc_ref.dtype)

    acc_ref[...] += jnp.dot(a_ref[...], w_ref[...],
                            preferred_element_type=jnp.float32)

    @pl.when(h == pl.num_programs(2) - 1)
    def _():
        out = res_ref[...].astype(jnp.float32) + g_ref[...].astype(jnp.float32) * (
            acc_ref[...] + b_ref[...].astype(jnp.float32))
        o_ref[...] = out.astype(o_ref.dtype)


def out_proj_gated_residual(attn, w_out, b_out, res, gate, *, n_vis_blocks, tm,
                            vmem_limit):
    B, H, S, hd = attn.shape
    D = w_out.shape[-1]
    sidx = lambda i: (i >= n_vis_blocks).astype(jnp.int32)
    return pl.pallas_call(
        _out_proj_kernel,
        out_shape=jax.ShapeDtypeStruct((B, S, D), res.dtype),
        grid_spec=pltpu.PrefetchScalarGridSpec(
            num_scalar_prefetch=0,
            grid=(B, S // tm, H),
            in_specs=[
                pl.BlockSpec((pl.Squeezed(), pl.Squeezed(), tm, hd),
                             lambda b, i, h: (b, h, i, 0)),
                pl.BlockSpec((pl.Squeezed(), pl.Squeezed(), hd, D),
                             lambda b, i, h: (sidx(i), h, 0, 0)),
                pl.BlockSpec((pl.Squeezed(), 1, D),
                             lambda b, i, h: (sidx(i), 0, 0)),
                pl.BlockSpec((pl.Squeezed(), tm, D), lambda b, i, h: (b, i, 0)),
                pl.BlockSpec((pl.Squeezed(), pl.Squeezed(), 1, D),
                             lambda b, i, h: (sidx(i), b, 0, 0)),
            ],
            out_specs=pl.BlockSpec((pl.Squeezed(), tm, D),
                                   lambda b, i, h: (b, i, 0)),
            scratch_shapes=[pltpu.VMEM((tm, D), jnp.float32)],
        ),
        compiler_params=pltpu.CompilerParams(
            dimension_semantics=("parallel", "parallel", "arbitrary"),
            vmem_limit_bytes=vmem_limit),
    )(attn, w_out, b_out, res, gate)


# ----------------------------------------------------------------------------
# Kernel 5: norm2 + GEGLU feed-forward + gated residual with an F-reduction
# grid axis (FF weights streamed in tf-wide tiles, f32 accumulator in scratch).
# Runs over the joint [video; text] sequence so the FF weights are read once.
# ----------------------------------------------------------------------------
def _adaln_ff_kernel(x_ref, rw_ref, sc_ref, sh_ref, w1a_ref, b1a_ref,
                     w1g_ref, b1g_ref, w2_ref, b2_ref, g_ref, o_ref,
                     xn_ref, acc_ref, *, eps):
    f = pl.program_id(2)

    @pl.when(f == 0)
    def _():
        x = x_ref[...].astype(jnp.float32)
        xn = x * lax.rsqrt(jnp.mean(x * x, axis=-1, keepdims=True) + eps)
        xn = xn * rw_ref[...].astype(jnp.float32)
        xn = xn * (1.0 + sc_ref[...].astype(jnp.float32)) \
            + sh_ref[...].astype(jnp.float32)
        xn_ref[...] = xn.astype(xn_ref.dtype)
        acc_ref[...] = jnp.zeros(acc_ref.shape, dtype=acc_ref.dtype)

    xn = xn_ref[...]
    ha = jnp.dot(xn, w1a_ref[...], preferred_element_type=jnp.float32) \
        + b1a_ref[...].astype(jnp.float32)
    hg = jnp.dot(xn, w1g_ref[...], preferred_element_type=jnp.float32) \
        + b1g_ref[...].astype(jnp.float32)
    # exact (erf) GELU gate, matching diffusers GEGLU / F.gelu default
    hg = 0.5 * hg * (1.0 + lax.erf(hg * (1.0 / math.sqrt(2.0))))
    acc_ref[...] += jnp.dot((ha * hg).astype(xn_ref.dtype), w2_ref[...],
                            preferred_element_type=jnp.float32)

    @pl.when(f == pl.num_programs(2) - 1)
    def _():
        out = x_ref[...].astype(jnp.float32) + g_ref[...].astype(jnp.float32) * (
            acc_ref[...] + b2_ref[...].astype(jnp.float32))
        o_ref[...] = out.astype(o_ref.dtype)


def adaln_ff_gated(x, rms_w, scale, shift, w1a, b1a, w1g, b1g, w2, b2, gate, *,
                   n_vis_blocks, eps, tm, tf, vmem_limit):
    B, S, D = x.shape
    F = w2.shape[0]
    sidx = lambda i: (i >= n_vis_blocks).astype(jnp.int32)
    return pl.pallas_call(
        functools.partial(_adaln_ff_kernel, eps=eps),
        out_shape=jax.ShapeDtypeStruct((B, S, D), x.dtype),
        grid_spec=pltpu.PrefetchScalarGridSpec(
            num_scalar_prefetch=0,
            grid=(B, S // tm, F // tf),
            in_specs=[
                pl.BlockSpec((pl.Squeezed(), tm, D), lambda b, i, f: (b, i, 0)),
                pl.BlockSpec((pl.Squeezed(), 1, D),
                             lambda b, i, f: (sidx(i), 0, 0)),
                pl.BlockSpec((pl.Squeezed(), pl.Squeezed(), 1, D),
                             lambda b, i, f: (sidx(i), b, 0, 0)),
                pl.BlockSpec((pl.Squeezed(), pl.Squeezed(), 1, D),
                             lambda b, i, f: (sidx(i), b, 0, 0)),
                pl.BlockSpec((D, tf), lambda b, i, f: (0, f)),
                pl.BlockSpec((1, tf), lambda b, i, f: (0, f)),
                pl.BlockSpec((D, tf), lambda b, i, f: (0, f)),
                pl.BlockSpec((1, tf), lambda b, i, f: (0, f)),
                pl.BlockSpec((tf, D), lambda b, i, f: (f, 0)),
                pl.BlockSpec((1, D), lambda b, i, f: (0, 0)),
                pl.BlockSpec((pl.Squeezed(), pl.Squeezed(), 1, D),
                             lambda b, i, f: (sidx(i), b, 0, 0)),
            ],
            out_specs=pl.BlockSpec((pl.Squeezed(), tm, D),
                                   lambda b, i, f: (b, i, 0)),
            scratch_shapes=[pltpu.VMEM((tm, D), x.dtype),
                            pltpu.VMEM((tm, D), jnp.float32)],
        ),
        compiler_params=pltpu.CompilerParams(
            dimension_semantics=("parallel", "parallel", "arbitrary"),
            vmem_limit_bytes=vmem_limit),
    )(x, rms_w, scale, shift, w1a, b1a, w1g, b1g, w2, b2, gate)


# ----------------------------------------------------------------------------
# Glue: 3D RoPE tables (PositionGetter3D + RoPE3D), parameter init
# ----------------------------------------------------------------------------
def _rope_1d_cos_sin(d, positions, interp_scale, base=10000.0):
    inv_freq = 1.0 / (base ** (jnp.arange(0, d, 2, dtype=jnp.float32) / d))
    t = positions.astype(jnp.float32) / interp_scale
    freqs = t[:, None] * inv_freq[None, :]
    freqs = jnp.concatenate([freqs, freqs], axis=-1)
    return jnp.cos(freqs), jnp.sin(freqs)


def build_rope_rows(head_dim, frames, height, width, s_txt,
                    interp_thw=(1.0, 1.0, 1.0)):
    d_t = head_dim // 16 * 4
    d_hw = head_dim // 16 * 6
    # PositionGetter3D: t-major, then h, then w
    t_ids = jnp.repeat(jnp.arange(frames), height * width)
    h_ids = jnp.tile(jnp.repeat(jnp.arange(height), width), frames)
    w_ids = jnp.tile(jnp.arange(width), frames * height)
    cos_t, sin_t = _rope_1d_cos_sin(d_t, t_ids, interp_thw[0])
    cos_h, sin_h = _rope_1d_cos_sin(d_hw, h_ids, interp_thw[1])
    cos_w, sin_w = _rope_1d_cos_sin(d_hw, w_ids, interp_thw[2])
    cos_vis = jnp.concatenate([cos_t, cos_h, cos_w], axis=-1)
    sin_vis = jnp.concatenate([sin_t, sin_h, sin_w], axis=-1)
    # text tokens get no rotary embedding -> cos=1, sin=0 (identity)
    cos = jnp.concatenate([cos_vis, jnp.ones((s_txt, head_dim), jnp.float32)], 0)
    sin = jnp.concatenate([sin_vis, jnp.zeros((s_txt, head_dim), jnp.float32)], 0)
    # per-part rotate_half expressed as a +/-1 matrix: rot_half(x) = x @ R
    rot = np.zeros((head_dim, head_dim), np.float32)
    off = 0
    for d in (d_t, d_hw, d_hw):
        half = d // 2
        for c in range(d):
            if c < half:
                rot[off + c + half, off + c] = -1.0
            else:
                rot[off + c - half, off + c] = 1.0
        off += d
    return cos, sin, jnp.asarray(rot)


def init_params(key, dim, num_heads, head_dim, t_emb_dim, ff_inner):
    inner = num_heads * head_dim
    keys = jax.random.split(key, 12)

    def w(k, shape, scl=0.02):
        return jax.random.normal(k, shape, jnp.float32) * scl

    p = {}
    # OpenSoraNormZero x2: SiLU -> Linear(t_emb, 6*dim) + RMSNorm(dim) (vis & enc)
    p["norm1_lin_w"] = w(keys[0], (t_emb_dim, 6 * dim))
    p["norm1_lin_b"] = jnp.zeros((6 * dim,), jnp.float32)
    p["norm1_rms_w"] = jnp.ones((dim,), jnp.float32)
    p["norm1_rms_enc_w"] = jnp.ones((dim,), jnp.float32)
    p["norm2_lin_w"] = w(keys[1], (t_emb_dim, 6 * dim))
    p["norm2_lin_b"] = jnp.zeros((6 * dim,), jnp.float32)
    p["norm2_rms_w"] = jnp.ones((dim,), jnp.float32)
    p["norm2_rms_enc_w"] = jnp.ones((dim,), jnp.float32)
    # attention: q/k/v (no bias: attention_bias=False), added q/k/v, out (+bias)
    p["wq"] = w(keys[2], (dim, inner))
    p["wk"] = w(keys[3], (dim, inner))
    p["wv"] = w(keys[4], (dim, inner))
    p["wq_add"] = w(keys[5], (dim, inner))
    p["wk_add"] = w(keys[6], (dim, inner))
    p["wv_add"] = w(keys[7], (dim, inner))
    p["w_out"] = w(keys[8], (inner, dim))
    p["b_out"] = jnp.zeros((dim,), jnp.float32)
    p["w_add_out"] = w(keys[9], (inner, dim))
    p["b_add_out"] = jnp.zeros((dim,), jnp.float32)
    # qk RMSNorm weights (per head_dim), video and text branches
    p["q_norm_w"] = jnp.ones((head_dim,), jnp.float32)
    p["k_norm_w"] = jnp.ones((head_dim,), jnp.float32)
    p["q_norm_add_w"] = jnp.ones((head_dim,), jnp.float32)
    p["k_norm_add_w"] = jnp.ones((head_dim,), jnp.float32)
    # FeedForward (GEGLU): Linear(dim, 2*ff_inner) -> geglu -> Linear(ff_inner, dim)
    p["ff_w1"] = w(keys[10], (dim, 2 * ff_inner))
    p["ff_b1"] = jnp.zeros((2 * ff_inner,), jnp.float32)
    p["ff_w2"] = w(keys[11], (ff_inner, dim))
    p["ff_b2"] = jnp.zeros((dim,), jnp.float32)
    return p


# ----------------------------------------------------------------------------
# Full SparseMMDiTBlock forward
# ----------------------------------------------------------------------------
def sparse_mmdit_block_forward(params, hidden_states_sbh, encoder_sbh, temb, *,
                               frames, height, width, num_heads, head_dim,
                               eps=1e-5, compute_dtype=jnp.bfloat16,
                               attn_q_tile=None, attn_kv_tile=None,
                               seq_tile=None, ff_tile=None, proj_n_tile=None):
    S_vis, B, D = hidden_states_sbh.shape
    S_txt = encoder_sbh.shape[0]
    S_tot = S_vis + S_txt
    inner = num_heads * head_dim
    out_dtype = hidden_states_sbh.dtype
    cdt = jnp.dtype(compute_dtype)
    bud = _budgets()
    vmem_limit = bud["vmem_limit"]
    attn_q_tile = attn_q_tile or bud["attn_tile"]
    attn_kv_tile = attn_kv_tile or bud["attn_tile"]
    seq_tile = seq_tile or bud["seq_tile"]
    ff_tile = ff_tile or bud["ff_tile"]
    proj_n_tile = proj_n_tile or bud["proj_n_tile"]
    row_mult = 16 if cdt == jnp.dtype(jnp.bfloat16) else 8

    # SBH -> BSD, single joint [video; text] activation (the only activation concat).
    h = jnp.transpose(hidden_states_sbh, (1, 0, 2))
    e = jnp.transpose(encoder_sbh, (1, 0, 2))
    x = jnp.concatenate([h, e], axis=1).astype(cdt)              # (B, S_tot, D)

    # RoPE tables kept in f32 (phase precision), rotate-half as +/-1 matrix.
    cos, sin, rot = build_rope_rows(head_dim, frames, height, width, S_txt)
    scale = 1.0 / math.sqrt(head_dim)

    # Timestep modulation in plain XLA (2 rows -> not worth a pallas grid); SiLU fused.
    t32 = temb.astype(jnp.float32)
    t_silu = t32 * jax.nn.sigmoid(t32)

    def modulation(lin_w, lin_b):
        m = t_silu @ lin_w.astype(jnp.float32) + lin_b.astype(jnp.float32)
        c = jnp.split(m, 6, axis=1)   # shift, scale, gate | enc_shift, enc_scale, enc_gate

        def stack2(a, b_):
            return jnp.stack([a, b_], axis=0)[:, :, None, :]     # (2, B, 1, D)
        return stack2(c[0], c[3]), stack2(c[1], c[4]), stack2(c[2], c[5])

    shift1, scale1, gate1 = modulation(params["norm1_lin_w"], params["norm1_lin_b"])
    shift2, scale2, gate2 = modulation(params["norm2_lin_w"], params["norm2_lin_b"])

    # Stacked per-stream parameters (index_map selects video vs text per seq tile).
    # A real model would store these pre-fused/stacked.
    rms1 = jnp.stack([params["norm1_rms_w"], params["norm1_rms_enc_w"]], 0)[:, None, :]
    rms2 = jnp.stack([params["norm2_rms_w"], params["norm2_rms_enc_w"]], 0)[:, None, :]
    w_qkv = jnp.stack([
        jnp.concatenate([params["wq"], params["wk"], params["wv"]], 1),
        jnp.concatenate([params["wq_add"], params["wk_add"], params["wv_add"]], 1),
    ], 0).astype(cdt)                                            # (2, D, 3*inner)
    w_out = jnp.stack([params["w_out"].reshape(num_heads, head_dim, D),
                       params["w_add_out"].reshape(num_heads, head_dim, D)],
                      0).astype(cdt)                             # (2, H, hd, D)
    b_out = jnp.stack([params["b_out"], params["b_add_out"]], 0)[:, None, :]
    qw = jnp.stack([params["q_norm_w"], params["q_norm_add_w"]], 0)[:, None, :]
    kw = jnp.stack([params["k_norm_w"], params["k_norm_add_w"]], 0)[:, None, :]
    F_ff = params["ff_w2"].shape[0]
    w1a = params["ff_w1"][:, :F_ff].astype(cdt)
    w1g = params["ff_w1"][:, F_ff:].astype(cdt)
    b1a = params["ff_b1"][:F_ff][None, :]
    b1g = params["ff_b1"][F_ff:][None, :]
    w2 = params["ff_w2"].astype(cdt)
    b2 = params["ff_b2"][None, :]

    # Tile sizes: seq tiles must not straddle the video/text boundary.
    seq_gcd = math.gcd(S_vis, S_txt)
    tm = _pick_tile(seq_gcd, seq_tile, row_mult)
    n_vis_blocks = S_vis // tm
    tn = _pick_tile(3 * inner, proj_n_tile, 128)
    tf = _pick_tile(F_ff, ff_tile, 128)
    tq = _pick_tile(S_tot, attn_q_tile, row_mult)
    tk = _pick_tile(S_tot, attn_kv_tile, row_mult)

    # ---- norm1 (adaLN fused into projection) + joint video/text attention ----
    qkv = adaln_qkv_proj(x, rms1, scale1, shift1, w_qkv, n_vis_blocks=n_vis_blocks,
                         eps=eps, tm=tm, tn=tn, vmem_limit=vmem_limit)
    q, k, v = qkv_rope_head_split(qkv, cos, sin, qw, kw, rot,
                                  num_heads=num_heads, head_dim=head_dim, eps=eps,
                                  scale=scale, tm=tm, n_vis_blocks=n_vis_blocks,
                                  vmem_limit=vmem_limit)
    attn = flash_attention(q, k, v, tq=tq, tk=tk, vmem_limit=vmem_limit)
    x = out_proj_gated_residual(attn, w_out, b_out, x, gate1,
                                n_vis_blocks=n_vis_blocks, tm=tm,
                                vmem_limit=vmem_limit)

    # ---- norm2 + GEGLU feed-forward + gated residual (joint sequence) ----
    x = adaln_ff_gated(x, rms2, scale2, shift2, w1a, b1a, w1g, b1g, w2, b2, gate2,
                       n_vis_blocks=n_vis_blocks, eps=eps, tm=tm, tf=tf,
                       vmem_limit=vmem_limit)

    # BSD -> SBH, split back into the two streams.
    h_out = jnp.transpose(x[:, :S_vis], (1, 0, 2)).astype(out_dtype)
    e_out = jnp.transpose(x[:, S_vis:], (1, 0, 2)).astype(out_dtype)
    return h_out, e_out


# ----------------------------------------------------------------------------
if __name__ == "__main__":
    B, FRAMES, HEIGHT, WIDTH = 2, 2, 4, 8
    S_VIS = FRAMES * HEIGHT * WIDTH          # 64 visual tokens
    S_TXT = 32                               # text tokens
    DIM, NUM_HEADS, HEAD_DIM = 128, 4, 32    # dim = num_heads * head_dim
    T_EMB = 128
    FF_INNER = 4 * DIM

    key = jax.random.PRNGKey(0)
    k_p, k_h, k_e, k_t = jax.random.split(key, 4)
    params = init_params(k_p, DIM, NUM_HEADS, HEAD_DIM, T_EMB, FF_INNER)
    hidden = jax.random.normal(k_h, (S_VIS, B, DIM), jnp.float32)     # SBH
    encoder = jax.random.normal(k_e, (S_TXT, B, DIM), jnp.float32)    # SBH
    temb = jax.random.normal(k_t, (B, T_EMB), jnp.float32)

    fwd = jax.jit(functools.partial(
        sparse_mmdit_block_forward, frames=FRAMES, height=HEIGHT, width=WIDTH,
        num_heads=NUM_HEADS, head_dim=HEAD_DIM, eps=1e-5,
        compute_dtype=jnp.bfloat16,
        # small tiles so the demo exercises every grid / reduction axis
        attn_q_tile=32, attn_kv_tile=32, seq_tile=32, ff_tile=128,
        proj_n_tile=128))

    out_h, out_e = fwd(params, hidden, encoder, temb)
    jax.block_until_ready((out_h, out_e))

    assert out_h.shape == (S_VIS, B, DIM)
    assert out_e.shape == (S_TXT, B, DIM)
    assert bool(jnp.all(jnp.isfinite(out_h))) and bool(jnp.all(jnp.isfinite(out_e)))
    print("KERNEL_OK")
</pallas_src>

<mosaic_0001>
module attributes {stable_mosaic.version = 11 : i64} {
  func.func @_adaln_qkv_kernel(%arg0: i32, %arg1: i32, %arg2: i32, %arg3: memref<1x32x128xbf16, #tpu.memory_space<vmem>>, %arg4: memref<1x1x128xf32, #tpu.memory_space<vmem>>, %arg5: memref<1x1x1x128xf32, #tpu.memory_space<vmem>>, %arg6: memref<1x1x1x128xf32, #tpu.memory_space<vmem>>, %arg7: memref<1x128x128xbf16, #tpu.memory_space<vmem>>, %arg8: memref<1x32x128xbf16, #tpu.memory_space<vmem>>, %arg9: memref<32x128xbf16, #tpu.memory_space<vmem>>) attributes {dimension_semantics = [#tpu.dimension_semantics<parallel>, #tpu.dimension_semantics<parallel>, #tpu.dimension_semantics<arbitrary>], iteration_bounds = array<i64: 2, 3, 3>, scalar_prefetch = 0 : i64, scratch_operands = 1 : i64, tpu.core_type = #tpu.core_type<tc>, window_params = [{transform_indices = @transform_0, window_bounds = array<i64: 1, 32, 128>}, {transform_indices = @transform_1, window_bounds = array<i64: 1, 1, 128>}, {transform_indices = @transform_2, window_bounds = array<i64: 1, 1, 1, 128>}, {transform_indices = @transform_3, window_bounds = array<i64: 1, 1, 1, 128>}, {transform_indices = @transform_4, window_bounds = array<i64: 1, 128, 128>}, {transform_indices = @transform_5, window_bounds = array<i64: 1, 32, 128>}]} {
    %c0_i32 = arith.constant 0 : i32
    %0 = arith.cmpi eq, %arg2, %c0_i32 : i32
    %1 = arith.extui %0 : i1 to i32
    %c0_i32_0 = arith.constant 0 : i32
    %2 = arith.cmpi ne, %1, %c0_i32_0 : i32
    scf.if %2 {
      %c0_8 = arith.constant 0 : index
      %c0_9 = arith.constant 0 : index
      %c0_10 = arith.constant 0 : index
      %11 = vector.load %arg3[%c0_8, %c0_9, %c0_10] : memref<1x32x128xbf16, #tpu.memory_space<vmem>>, vector<1x32x128xbf16>
      %12 = vector.shape_cast %11 : vector<1x32x128xbf16> to vector<32x128xbf16>
      %13 = arith.extf %12 : vector<32x128xbf16> to vector<32x128xf32>
      %14 = arith.mulf %13, %13 : vector<32x128xf32>
      %cst_11 = arith.constant dense<0.000000e+00> : vector<32xf32>
      %15 = vector.multi_reduction <add>, %14, %cst_11 [1] : vector<32x128xf32> to vector<32xf32>
      %16 = vector.shape_cast %15 : vector<32xf32> to vector<32x1xf32>
      %cst_12 = arith.constant 1.280000e+02 : f32
      %17 = vector.broadcast %cst_12 : f32 to vector<32x1xf32>
      %18 = arith.divf %16, %17 : vector<32x1xf32>
      %cst_13 = arith.constant 9.99999974E-6 : f32
      %19 = vector.broadcast %cst_13 : f32 to vector<32x1xf32>
      %20 = arith.addf %18, %19 : vector<32x1xf32>
      %21 = math.rsqrt %20 : vector<32x1xf32>
      %22 = vector.broadcast %21 : vector<32x1xf32> to vector<32x128xf32>
      %23 = arith.mulf %13, %22 : vector<32x128xf32>
      %c0_14 = arith.constant 0 : index
      %c0_15 = arith.constant 0 : index
      %c0_16 = arith.constant 0 : index
      %24 = vector.load %arg4[%c0_14, %c0_15, %c0_16] : memref<1x1x128xf32, #tpu.memory_space<vmem>>, vector<1x1x128xf32>
      %25 = vector.shape_cast %24 : vector<1x1x128xf32> to vector<1x128xf32>
      %26 = vector.broadcast %25 : vector<1x128xf32> to vector<32x128xf32>
      %27 = arith.mulf %23, %26 : vector<32x128xf32>
      %c0_17 = arith.constant 0 : index
      %c0_18 = arith.constant 0 : index
      %c0_19 = arith.constant 0 : index
      %c0_20 = arith.constant 0 : index
      %28 = vector.load %arg5[%c0_17, %c0_18, %c0_19, %c0_20] : memref<1x1x1x128xf32, #tpu.memory_space<vmem>>, vector<1x1x1x128xf32>
      %29 = vector.shape_cast %28 : vector<1x1x1x128xf32> to vector<1x128xf32>
      %cst_21 = arith.constant 1.000000e+00 : f32
      %30 = vector.broadcast %cst_21 : f32 to vector<1x128xf32>
      %31 = arith.addf %30, %29 : vector<1x128xf32>
      %32 = vector.broadcast %31 : vector<1x128xf32> to vector<32x128xf32>
      %33 = arith.mulf %27, %32 : vector<32x128xf32>
      %c0_22 = arith.constant 0 : index
      %c0_23 = arith.constant 0 : index
      %c0_24 = arith.constant 0 : index
      %c0_25 = arith.constant 0 : index
      %34 = vector.load %arg6[%c0_22, %c0_23, %c0_24, %c0_25] : memref<1x1x1x128xf32, #tpu.memory_space<vmem>>, vector<1x1x1x128xf32>
      %35 = vector.shape_cast %34 : vector<1x1x1x128xf32> to vector<1x128xf32>
      %36 = vector.broadcast %35 : vector<1x128xf32> to vector<32x128xf32>
      %37 = arith.addf %33, %36 : vector<32x128xf32>
      %38 = arith.truncf %37 : vector<32x128xf32> to vector<32x128xbf16>
      %c0_26 = arith.constant 0 : index
      %c0_27 = arith.constant 0 : index
      %39 = vector.load %arg9[%c0_26, %c0_27] : memref<32x128xbf16, #tpu.memory_space<vmem>>, vector<32x128xbf16>
      tpu.vector_store %arg9[%c0_26, %c0_27], %38 {strides = array<i32>} : memref<32x128xbf16, #tpu.memory_space<vmem>>, vector<32x128xbf16>,
    } else {
    }
    %c0 = arith.constant 0 : index
    %c0_1 = arith.constant 0 : index
    %3 = vector.load %arg9[%c0, %c0_1] : memref<32x128xbf16, #tpu.memory_space<vmem>>, vector<32x128xbf16>
    %c0_2 = arith.constant 0 : index
    %c0_3 = arith.constant 0 : index
    %c0_4 = arith.constant 0 : index
    %4 = vector.load %arg7[%c0_2, %c0_3, %c0_4] : memref<1x128x128xbf16, #tpu.memory_space<vmem>>, vector<1x128x128xbf16>
    %5 = vector.shape_cast %4 : vector<1x128x128xbf16> to vector<128x128xbf16>
    %cst = arith.constant dense<0.000000e+00> : vector<32x128xf32>
    %6 = tpu.matmul %3, %5, %cst {dimension_numbers = #tpu.dot_dimension_numbers<[1], [0], [0], [1], [0, 0, 1, 1], [], []>} : vector<32x128xbf16>, vector<128x128xbf16>, vector<32x128xf32> -> vector<32x128xf32>
    %7 = arith.truncf %6 : vector<32x128xf32> to vector<32x128xbf16>
    %c0_5 = arith.constant 0 : index
    %c0_6 = arith.constant 0 : index
    %c0_7 = arith.constant 0 : index
    %8 = vector.load %arg8[%c0_5, %c0_6, %c0_7] : memref<1x32x128xbf16, #tpu.memory_space<vmem>>, vector<1x32x128xbf16>
    %9 = vector.shape_cast %8 : vector<1x32x128xbf16> to vector<32x128xbf16>
    %10 = vector.shape_cast %7 : vector<32x128xbf16> to vector<1x32x128xbf16>
    tpu.vector_store %arg8[%c0_5, %c0_6, %c0_7], %10 {strides = array<i32>} : memref<1x32x128xbf16, #tpu.memory_space<vmem>>, vector<1x32x128xbf16>,
    return
  }
  func.func @transform_0(%arg0: i32, %arg1: i32, %arg2: i32) -> (i32, i32, i32) {
    %c0_i32 = arith.constant 0 : i32
    %c0_i32_0 = arith.constant 0 : i32
    return %arg0, %arg1, %c0_i32 : i32, i32, i32
  }
  func.func @transform_1(%arg0: i32, %arg1: i32, %arg2: i32) -> (i32, i32, i32) {
    %c2_i32 = arith.constant 2 : i32
    %0 = arith.cmpi sge, %arg1, %c2_i32 : i32
    %1 = arith.extui %0 : i1 to i32
    %c0_i32 = arith.constant 0 : i32
    %c0_i32_0 = arith.constant 0 : i32
    %c0_i32_1 = arith.constant 0 : i32
    return %1, %c0_i32, %c0_i32_0 : i32, i32, i32
  }
  func.func @transform_2(%arg0: i32, %arg1: i32, %arg2: i32) -> (i32, i32, i32, i32) {
    %c2_i32 = arith.constant 2 : i32
    %0 = arith.cmpi sge, %arg1, %c2_i32 : i32
    %1 = arith.extui %0 : i1 to i32
    %c0_i32 = arith.constant 0 : i32
    %c0_i32_0 = arith.constant 0 : i32
    %c0_i32_1 = arith.constant 0 : i32
    return %1, %arg0, %c0_i32, %c0_i32_0 : i32, i32, i32, i32
  }
  func.func @transform_3(%arg0: i32, %arg1: i32, %arg2: i32) -> (i32, i32, i32, i32) {
    %c2_i32 = arith.constant 2 : i32
    %0 = arith.cmpi sge, %arg1, %c2_i32 : i32
    %1 = arith.extui %0 : i1 to i32
    %c0_i32 = arith.constant 0 : i32
    %c0_i32_0 = arith.constant 0 : i32
    %c0_i32_1 = arith.constant 0 : i32
    return %1, %arg0, %c0_i32, %c0_i32_0 : i32, i32, i32, i32
  }
  func.func @transform_4(%arg0: i32, %arg1: i32, %arg2: i32) -> (i32, i32, i32) {
    %c2_i32 = arith.constant 2 : i32
    %0 = arith.cmpi sge, %arg1, %c2_i32 : i32
    %1 = arith.extui %0 : i1 to i32
    %c0_i32 = arith.constant 0 : i32
    %c0_i32_0 = arith.constant 0 : i32
    return %1, %c0_i32, %arg2 : i32, i32, i32
  }
  func.func @transform_5(%arg0: i32, %arg1: i32, %arg2: i32) -> (i32, i32, i32) {
    %c0_i32 = arith.constant 0 : i32
    return %arg0, %arg1, %arg2 : i32, i32, i32
  }
}

module attributes {stable_mosaic.version = 11 : i64} {
  func.func @_qkv_split_rope_kernel(%arg0: i32, %arg1: i32, %arg2: memref<1x32x384xbf16, #tpu.memory_space<vmem>>, %arg3: memref<32x32xf32, #tpu.memory_space<vmem>>, %arg4: memref<32x32xf32, #tpu.memory_space<vmem>>, %arg5: memref<1x1x32xf32, #tpu.memory_space<vmem>>, %arg6: memref<1x1x32xf32, #tpu.memory_space<vmem>>, %arg7: memref<32x32xf32, #tpu.memory_space<vmem>>, %arg8: memref<1x4x32x32xbf16, #tpu.memory_space<vmem>>, %arg9: memref<1x4x32x32xbf16, #tpu.memory_space<vmem>>, %arg10: memref<1x4x32x32xbf16, #tpu.memory_space<vmem>>) attributes {dimension_semantics = [#tpu.dimension_semantics<parallel>, #tpu.dimension_semantics<parallel>], iteration_bounds = array<i64: 2, 3>, scalar_prefetch = 0 : i64, scratch_operands = 0 : i64, tpu.core_type = #tpu.core_type<tc>, window_params = [{transform_indices = @transform_0, window_bounds = array<i64: 1, 32, 384>}, {transform_indices = @transform_1, window_bounds = array<i64: 32, 32>}, {transform_indices = @transform_2, window_bounds = array<i64: 32, 32>}, {transform_indices = @transform_3, window_bounds = array<i64: 1, 1, 32>}, {transform_indices = @transform_4, window_bounds = array<i64: 1, 1, 32>}, {pipeline_mode = #tpu.pipeline_mode<synchronous>, transform_indices = @transform_5, window_bounds = array<i64: 32, 32>}, {transform_indices = @transform_6, window_bounds = array<i64: 1, 4, 32, 32>}, {transform_indices = @transform_7, window_bounds = array<i64: 1, 4, 32, 32>}, {transform_indices = @transform_8, window_bounds = array<i64: 1, 4, 32, 32>}]} {
    %c0 = arith.constant 0 : index
    %c0_0 = arith.constant 0 : index
    %0 = vector.load %arg3[%c0, %c0_0] : memref<32x32xf32, #tpu.memory_space<vmem>>, vector<32x32xf32>
    %c0_1 = arith.constant 0 : index
    %c0_2 = arith.constant 0 : index
    %1 = vector.load %arg4[%c0_1, %c0_2] : memref<32x32xf32, #tpu.memory_space<vmem>>, vector<32x32xf32>
    %c0_3 = arith.constant 0 : index
    %c0_4 = arith.constant 0 : index
    %2 = vector.load %arg7[%c0_3, %c0_4] : memref<32x32xf32, #tpu.memory_space<vmem>>, vector<32x32xf32>
    %c0_5 = arith.constant 0 : index
    %c0_6 = arith.constant 0 : index
    %c0_7 = arith.constant 0 : index
    %3 = vector.load %arg5[%c0_5, %c0_6, %c0_7] : memref<1x1x32xf32, #tpu.memory_space<vmem>>, vector<1x1x32xf32>
    %4 = vector.shape_cast %3 : vector<1x1x32xf32> to vector<1x32xf32>
    %c0_8 = arith.constant 0 : index
    %c0_9 = arith.constant 0 : index
    %c0_10 = arith.constant 0 : index
    %5 = vector.load %arg6[%c0_8, %c0_9, %c0_10] : memref<1x1x32xf32, #tpu.memory_space<vmem>>, vector<1x1x32xf32>
    %6 = vector.shape_cast %5 : vector<1x1x32xf32> to vector<1x32xf32>
    %c0_11 = arith.constant 0 : index
    %c0_12 = arith.constant 0 : index
    %c0_13 = arith.constant 0 : index
    %7 = vector.load %arg2[%c0_11, %c0_12, %c0_13] : memref<1x32x384xbf16, #tpu.memory_space<vmem>>, vector<1x32x32xbf16>
    %8 = vector.shape_cast %7 : vector<1x32x32xbf16> to vector<32x32xbf16>
    %9 = arith.extf %8 : vector<32x32xbf16> to vector<32x32xf32>
    %c0_14 = arith.constant 0 : index
    %c0_15 = arith.constant 0 : index
    %c128 = arith.constant 128 : index
    %10 = vector.load %arg2[%c0_14, %c0_15, %c128] : memref<1x32x384xbf16, #tpu.memory_space<vmem>>, vector<1x32x32xbf16>
    %11 = vector.shape_cast %10 : vector<1x32x32xbf16> to vector<32x32xbf16>
    %12 = arith.extf %11 : vector<32x32xbf16> to vector<32x32xf32>
    %13 = arith.mulf %9, %9 : vector<32x32xf32>
    %cst = arith.constant dense<0.000000e+00> : vector<32xf32>
    %14 = vector.multi_reduction <add>, %13, %cst [1] : vector<32x32xf32> to vector<32xf32>
    %15 = vector.shape_cast %14 : vector<32xf32> to vector<32x1xf32>
    %cst_16 = arith.constant 3.200000e+01 : f32
    %16 = vector.broadcast %cst_16 : f32 to vector<32x1xf32>
    %17 = arith.divf %15, %16 : vector<32x1xf32>
    %cst_17 = arith.constant 9.99999974E-6 : f32
    %18 = vector.broadcast %cst_17 : f32 to vector<32x1xf32>
    %19 = arith.addf %17, %18 : vector<32x1xf32>
    %20 = math.rsqrt %19 : vector<32x1xf32>
    %21 = vector.broadcast %20 : vector<32x1xf32> to vector<32x32xf32>
    %22 = arith.mulf %9, %21 : vector<32x32xf32>
    %23 = vector.broadcast %4 : vector<1x32xf32> to vector<32x32xf32>
    %24 = arith.mulf %22, %23 : vector<32x32xf32>
    %25 = arith.mulf %24, %0 : vector<32x32xf32>
    %cst_18 = arith.constant dense<0.000000e+00> : vector<32x32xf32>
    %26 = tpu.matmul %24, %2, %cst_18 {dimension_numbers = #tpu.dot_dimension_numbers<[1], [0], [0], [1], [0, 0, 1, 1], [], []>} : vector<32x32xf32>, vector<32x32xf32>, vector<32x32xf32> -> vector<32x32xf32>
    %27 = arith.mulf %26, %1 : vector<32x32xf32>
    %28 = arith.addf %25, %27 : vector<32x32xf32>
    %cst_19 = arith.constant 0.176776692 : f32
    %29 = vector.broadcast %cst_19 : f32 to vector<32x32xf32>
    %30 = arith.mulf %28, %29 : vector<32x32xf32>
    %31 = arith.truncf %30 : vector<32x32xf32> to vector<32x32xbf16>
    %c0_20 = arith.constant 0 : index
    %c0_21 = arith.constant 0 : index
    %c0_22 = arith.constant 0 : index
    %c0_23 = arith.constant 0 : index
    %32 = vector.load %arg8[%c0_20, %c0_21, %c0_22, %c0_23] : memref<1x4x32x32xbf16, #tpu.memory_space<vmem>>, vector<1x1x32x32xbf16>
    %33 = vector.shape_cast %32 : vector<1x1x32x32xbf16> to vector<32x32xbf16>
    %34 = vector.shape_cast %31 : vector<32x32xbf16> to vector<1x1x32x32xbf16>
    tpu.vector_store %arg8[%c0_20, %c0_21, %c0_22, %c0_23], %34 {strides = array<i32>} : memref<1x4x32x32xbf16, #tpu.memory_space<vmem>>, vector<1x1x32x32xbf16>,
    %35 = arith.mulf %12, %12 : vector<32x32xf32>
    %cst_24 = arith.constant dense<0.000000e+00> : vector<32xf32>
    %36 = vector.multi_reduction <add>, %35, %cst_24 [1] : vector<32x32xf32> to vector<32xf32>
    %37 = vector.shape_cast %36 : vector<32xf32> to vector<32x1xf32>
    %cst_25 = arith.constant 3.200000e+01 : f32
    %38 = vector.broadcast %cst_25 : f32 to vector<32x1xf32>
    %39 = arith.divf %37, %38 : vector<32x1xf32>
    %cst_26 = arith.constant 9.99999974E-6 : f32
    %40 = vector.broadcast %cst_26 : f32 to vector<32x1xf32>
    %41 = arith.addf %39, %40 : vector<32x1xf32>
    %42 = math.rsqrt %41 : vector<32x1xf32>
    %43 = vector.broadcast %42 : vector<32x1xf32> to vector<32x32xf32>
    %44 = arith.mulf %12, %43 : vector<32x32xf32>
    %45 = vector.broadcast %6 : vector<1x32xf32> to vector<32x32xf32>
    %46 = arith.mulf %44, %45 : vector<32x32xf32>
    %47 = arith.mulf %46, %0 : vector<32x32xf32>
    %cst_27 = arith.constant dense<0.000000e+00> : vector<32x32xf32>
    %48 = tpu.matmul %46, %2, %cst_27 {dimension_numbers = #tpu.dot_dimension_numbers<[1], [0], [0], [1], [0, 0, 1, 1], [], []>} : vector<32x32xf32>, vector<32x32xf32>, vector<32x32xf32> -> vector<32x32xf32>
    %49 = arith.mulf %48, %1 : vector<32x32xf32>
    %50 = arith.addf %47, %49 : vector<32x32xf32>
    %51 = arith.truncf %50 : vector<32x32xf32> to vector<32x32xbf16>
    %c0_28 = arith.constant 0 : index
    %c0_29 = arith.constant 0 : index
    %c0_30 = arith.constant 0 : index
    %c0_31 = arith.constant 0 : index
    %52 = vector.load %arg9[%c0_28, %c0_29, %c0_30, %c0_31] : memref<1x4x32x32xbf16, #tpu.memory_space<vmem>>, vector<1x1x32x32xbf16>
    %53 = vector.shape_cast %52 : vector<1x1x32x32xbf16> to vector<32x32xbf16>
    %54 = vector.shape_cast %51 : vector<32x32xbf16> to vector<1x1x32x32xbf16>
    tpu.vector_store %arg9[%c0_28, %c0_29, %c0_30, %c0_31], %54 {strides = array<i32>} : memref<1x4x32x32xbf16, #tpu.memory_space<vmem>>, vector<1x1x32x32xbf16>,
    %c0_32 = arith.constant 0 : index
    %c0_33 = arith.constant 0 : index
    %c256 = arith.constant 256 : index
    %55 = vector.load %arg2[%c0_32, %c0_33, %c256] : memref<1x32x384xbf16, #tpu.memory_space<vmem>>, vector<1x32x32xbf16>
    %56 = vector.shape_cast %55 : vector<1x32x32xbf16> to vector<32x32xbf16>
    %c0_34 = arith.constant 0 : index
    %c0_35 = arith.constant 0 : index
    %c0_36 = arith.constant 0 : index
    %c0_37 = arith.constant 0 : index
    %57 = vector.load %arg10[%c0_34, %c0_35, %c0_36, %c0_37] : memref<1x4x32x32xbf16, #tpu.memory_space<vmem>>, vector<1x1x32x32xbf16>
    %58 = vector.shape_cast %57 : vector<1x1x32x32xbf16> to vector<32x32xbf16>
    %59 = vector.shape_cast %56 : vector<32x32xbf16> to vector<1x1x32x32xbf16>
    tpu.vector_store %arg10[%c0_34, %c0_35, %c0_36, %c0_37], %59 {strides = array<i32>} : memref<1x4x32x32xbf16, #tpu.memory_space<vmem>>, vector<1x1x32x32xbf16>,
    %c0_38 = arith.constant 0 : index
    %c0_39 = arith.constant 0 : index
    %c32 = arith.constant 32 : index
    %60 = vector.load %arg2[%c0_38, %c0_39, %c32] : memref<1x32x384xbf16, #tpu.memory_space<vmem>>, vector<1x32x32xbf16>
    %61 = vector.shape_cast %60 : vector<1x32x32xbf16> to vector<32x32xbf16>
    %62 = arith.extf %61 : vector<32x32xbf16> to vector<32x32xf32>
    %c0_40 = arith.constant 0 : index
    %c0_41 = arith.constant 0 : index
    %c160 = arith.constant 160 : index
    %63 = vector.load %arg2[%c0_40, %c0_41, %c160] : memref<1x32x384xbf16, #tpu.memory_space<vmem>>, vector<1x32x32xbf16>
    %64 = vector.shape_cast %63 : vector<1x32x32xbf16> to vector<32x32xbf16>
    %65 = arith.extf %64 : vector<32x32xbf16> to vector<32x32xf32>
    %66 = arith.mulf %62, %62 : vector<32x32xf32>
    %cst_42 = arith.constant dense<0.000000e+00> : vector<32xf32>
    %67 = vector.multi_reduction <add>, %66, %cst_42 [1] : vector<32x32xf32> to vector<32xf32>
    %68 = vector.shape_cast %67 : vector<32xf32> to vector<32x1xf32>
    %cst_43 = arith.constant 3.200000e+01 : f32
    %69 = vector.broadcast %cst_43 : f32 to vector<32x1xf32>
    %70 = arith.divf %68, %69 : vector<32x1xf32>
    %cst_44 = arith.constant 9.99999974E-6 : f32
    %71 = vector.broadcast %cst_44 : f32 to vector<32x1xf32>
    %72 = arith.addf %70, %71 : vector<32x1xf32>
    %73 = math.rsqrt %72 : vector<32x1xf32>
    %74 = vector.broadcast %73 : vector<32x1xf32> to vector<32x32xf32>
    %75 = arith.mulf %62, %74 : vector<32x32xf32>
    %76 = vector.broadcast %4 : vector<1x32xf32> to vector<32x32xf32>
    %77 = arith.mulf %75, %76 : vector<32x32xf32>
    %78 = arith.mulf %77, %0 : vector<32x32xf32>
    %cst_45 = arith.constant dense<0.000000e+00> : vector<32x32xf32>
    %79 = tpu.matmul %77, %2, %cst_45 {dimension_numbers = #tpu.dot_dimension_numbers<[1], [0], [0], [1], [0, 0, 1, 1], [], []>} : vector<32x32xf32>, vector<32x32xf32>, vector<32x32xf32> -> vector<32x32xf32>
    %80 = arith.mulf %79, %1 : vector<32x32xf32>
    %81 = arith.addf %78, %80 : vector<32x32xf32>
    %cst_46 = arith.constant 0.176776692 : f32
    %82 = vector.broadcast %cst_46 : f32 to vector<32x32xf32>
    %83 = arith.mulf %81, %82 : vector<32x32xf32>
    %84 = arith.truncf %83 : vector<32x32xf32> to vector<32x32xbf16>
    %c0_47 = arith.constant 0 : index
    %c1 = arith.constant 1 : index
    %c0_48 = arith.constant 0 : index
    %c0_49 = arith.constant 0 : index
    %85 = vector.load %arg8[%c0_47, %c1, %c0_48, %c0_49] : memref<1x4x32x32xbf16, #tpu.memory_space<vmem>>, vector<1x1x32x32xbf16>
    %86 = vector.shape_cast %85 : vector<1x1x32x32xbf16> to vector<32x32xbf16>
    %87 = vector.shape_cast %84 : vector<32x32xbf16> to vector<1x1x32x32xbf16>
    tpu.vector_store %arg8[%c0_47, %c1, %c0_48, %c0_49], %87 {strides = array<i32>} : memref<1x4x32x32xbf16, #tpu.memory_space<vmem>>, vector<1x1x32x32xbf16>,
    %88 = arith.mulf %65, %65 : vector<32x32xf32>
    %cst_50 = arith.constant dense<0.000000e+00> : vector<32xf32>
    %89 = vector.multi_reduction <add>, %88, %cst_50 [1] : vector<32x32xf32> to vector<32xf32>
    %90 = vector.shape_cast %89 : vector<32xf32> to vector<32x1xf32>
    %cst_51 = arith.constant 3.200000e+01 : f32
    %91 = vector.broadcast %cst_51 : f32 to vector<32x1xf32>
    %92 = arith.divf %90, %91 : vector<32x1xf32>
    %cst_52 = arith.constant 9.99999974E-6 : f32
    %93 = vector.broadcast %cst_52 : f32 to vector<32x1xf32>
    %94 = arith.addf %92, %93 : vector<32x1xf32>
    %95 = math.rsqrt %94 : vector<32x1xf32>
    %96 = vector.broadcast %95 : vector<32x1xf32> to vector<32x32xf32>
    %97 = arith.mulf %65, %96 : vector<32x32xf32>
    %98 = vector.broadcast %6 : vector<1x32xf32> to vector<32x32xf32>
    %99 = arith.mulf %97, %98 : vector<32x32xf32>
    %100 = arith.mulf %99, %0 : vector<32x32xf32>
    %cst_53 = arith.constant dense<0.000000e+00> : vector<32x32xf32>
    %101 = tpu.matmul %99, %2, %cst_53 {dimension_numbers = #tpu.dot_dimension_numbers<[1], [0], [0], [1], [0, 0, 1, 1], [], []>} : vector<32x32xf32>, vector<32x32xf32>, vector<32x32xf32> -> vector<32x32xf32>
    %102 = arith.mulf %101, %1 : vector<32x32xf32>
    %103 = arith.addf %100, %102 : vector<32x32xf32>
    %104 = arith.truncf %103 : vector<32x32xf32> to vector<32x32xbf16>
    %c0_54 = arith.constant 0 : index
    %c1_55 = arith.constant 1 : index
    %c0_56 = arith.constant 0 : index
    %c0_57 = arith.constant 0 : index
    %105 = vector.load %arg9[%c0_54, %c1_55, %c0_56, %c0_57] : memref<1x4x32x32xbf16, #tpu.memory_space<vmem>>, vector<1x1x32x32xbf16>
    %106 = vector.shape_cast %105 : vector<1x1x32x32xbf16> to vector<32x32xbf16>
    %107 = vector.shape_cast %104 : vector<32x32xbf16> to vector<1x1x32x32xbf16>
    tpu.vector_store %arg9[%c0_54, %c1_55, %c0_56, %c0_57], %107 {strides = array<i32>} : memref<1x4x32x32xbf16, #tpu.memory_space<vmem>>, vector<1x1x32x32xbf16>,
    %c0_58 = arith.constant 0 : index
    %c0_59 = arith.constant 0 : index
    %c288 = arith.constant 288 : index
    %108 = vector.load %arg2[%c0_58, %c0_59, %c288] : memref<1x32x384xbf16, #tpu.memory_space<vmem>>, vector<1x32x32xbf16>
    %109 = vector.shape_cast %108 : vector<1x32x32xbf16> to vector<32x32xbf16>
    %c0_60 = arith.constant 0 : index
    %c1_61 = arith.constant 1 : index
    %c0_62 = arith.constant 0 : index
    %c0_63 = arith.constant 0 : index
    %110 = vector.load %arg10[%c0_60, %c1_61, %c0_62, %c0_63] : memref<1x4x32x32xbf16, #tpu.memory_space<vmem>>, vector<1x1x32x32xbf16>
    %111 = vector.shape_cast %110 : vector<1x1x32x32xbf16> to vector<32x32xbf16>
    %112 = vector.shape_cast %109 : vector<32x32xbf16> to vector<1x1x32x32xbf16>
    tpu.vector_store %arg10[%c0_60, %c1_61, %c0_62, %c0_63], %112 {strides = array<i32>} : memref<1x4x32x32xbf16, #tpu.memory_space<vmem>>, vector<1x1x32x32xbf16>,
    %c0_64 = arith.constant 0 : index
    %c0_65 = arith.constant 0 : index
    %c64 = arith.constant 64 : index
    %113 = vector.load %arg2[%c0_64, %c0_65, %c64] : memref<1x32x384xbf16, #tpu.memory_space<vmem>>, vector<1x32x32xbf16>
    %114 = vector.shape_cast %113 : vector<1x32x32xbf16> to vector<32x32xbf16>
    %115 = arith.extf %114 : vector<32x32xbf16> to vector<32x32xf32>
    %c0_66 = arith.constant 0 : index
    %c0_67 = arith.constant 0 : index
    %c192 = arith.constant 192 : index
    %116 = vector.load %arg2[%c0_66, %c0_67, %c192] : memref<1x32x384xbf16, #tpu.memory_space<vmem>>, vector<1x32x32xbf16>
    %117 = vector.shape_cast %116 : vector<1x32x32xbf16> to vector<32x32xbf16>
    %118 = arith.extf %117 : vector<32x32xbf16> to vector<32x32xf32>
    %119 = arith.mulf %115, %115 : vector<32x32xf32>
    %cst_68 = arith.constant dense<0.000000e+00> : vector<32xf32>
    %120 = vector.multi_reduction <add>, %119, %cst_68 [1] : vector<32x32xf32> to vector<32xf32>
    %121 = vector.shape_cast %120 : vector<32xf32> to vector<32x1xf32>
    %cst_69 = arith.constant 3.200000e+01 : f32
    %122 = vector.broadcast %cst_69 : f32 to vector<32x1xf32>
    %123 = arith.divf %121, %122 : vector<32x1xf32>
    %cst_70 = arith.constant 9.99999974E-6 : f32
    %124 = vector.broadcast %cst_70 : f32 to vector<32x1xf32>
    %125 = arith.addf %123, %124 : vector<32x1xf32>
    %126 = math.rsqrt %125 : vector<32x1xf32>
    %127 = vector.broadcast %126 : vector<32x1xf32> to vector<32x32xf32>
    %128 = arith.mulf %115, %127 : vector<32x32xf32>
    %129 = vector.broadcast %4 : vector<1x32xf32> to vector<32x32xf32>
    %130 = arith.mulf %128, %129 : vector<32x32xf32>
    %131 = arith.mulf %130, %0 : vector<32x32xf32>
    %cst_71 = arith.constant dense<0.000000e+00> : vector<32x32xf32>
    %132 = tpu.matmul %130, %2, %cst_71 {dimension_numbers = #tpu.dot_dimension_numbers<[1], [0], [0], [1], [0, 0, 1, 1], [], []>} : vector<32x32xf32>, vector<32x32xf32>, vector<32x32xf32> -> vector<32x32xf32>
    %133 = arith.mulf %132, %1 : vector<32x32xf32>
    %134 = arith.addf %131, %133 : vector<32x32xf32>
    %cst_72 = arith.constant 0.176776692 : f32
    %135 = vector.broadcast %cst_72 : f32 to vector<32x32xf32>
    %136 = arith.mulf %134, %135 : vector<32x32xf32>
    %137 = arith.truncf %136 : vector<32x32xf32> to vector<32x32xbf16>
    %c0_73 = arith.constant 0 : index
    %c2 = arith.constant 2 : index
    %c0_74 = arith.constant 0 : index
    %c0_75 = arith.constant 0 : index
    %138 = vector.load %arg8[%c0_73, %c2, %c0_74, %c0_75] : memref<1x4x32x32xbf16, #tpu.memory_space<vmem>>, vector<1x1x32x32xbf16>
    %139 = vector.shape_cast %138 : vector<1x1x32x32xbf16> to vector<32x32xbf16>
    %140 = vector.shape_cast %137 : vector<32x32xbf16> to vector<1x1x32x32xbf16>
    tpu.vector_store %arg8[%c0_73, %c2, %c0_74, %c0_75], %140 {strides = array<i32>} : memref<1x4x32x32xbf16, #tpu.memory_space<vmem>>, vector<1x1x32x32xbf16>,
    %141 = arith.mulf %118, %118 : vector<32x32xf32>
    %cst_76 = arith.constant dense<0.000000e+00> : vector<32xf32>
    %142 = vector.multi_reduction <add>, %141, %cst_76 [1] : vector<32x32xf32> to vector<32xf32>
    %143 = vector.shape_cast %142 : vector<32xf32> to vector<32x1xf32>
    %cst_77 = arith.constant 3.200000e+01 : f32
    %144 = vector.broadcast %cst_77 : f32 to vector<32x1xf32>
    %145 = arith.divf %143, %144 : vector<32x1xf32>
    %cst_78 = arith.constant 9.99999974E-6 : f32
    %146 = vector.broadcast %cst_78 : f32 to vector<32x1xf32>
    %147 = arith.addf %145, %146 : vector<32x1xf32>
    %148 = math.rsqrt %147 : vector<32x1xf32>
    %149 = vector.broadcast %148 : vector<32x1xf32> to vector<32x32xf32>
    %150 = arith.mulf %118, %149 : vector<32x32xf32>
    %151 = vector.broadcast %6 : vector<1x32xf32> to vector<32x32xf32>
    %152 = arith.mulf %150, %151 : vector<32x32xf32>
    %153 = arith.mulf %152, %0 : vector<32x32xf32>
    %cst_79 = arith.constant dense<0.000000e+00> : vector<32x32xf32>
    %154 = tpu.matmul %152, %2, %cst_79 {dimension_numbers = #tpu.dot_dimension_numbers<[1], [0], [0], [1], [0, 0, 1, 1], [], []>} : vector<32x32xf32>, vector<32x32xf32>, vector<32x32xf32> -> vector<32x32xf32>
    %155 = arith.mulf %154, %1 : vector<32x32xf32>
    %156 = arith.addf %153, %155 : vector<32x32xf32>
    %157 = arith.truncf %156 : vector<32x32xf32> to vector<32x32xbf16>
    %c0_80 = arith.constant 0 : index
    %c2_81 = arith.constant 2 : index
    %c0_82 = arith.constant 0 : index
    %c0_83 = arith.constant 0 : index
    %158 = vector.load %arg9[%c0_80, %c2_81, %c0_82, %c0_83] : memref<1x4x32x32xbf16, #tpu.memory_space<vmem>>, vector<1x1x32x32xbf16>
    %159 = vector.shape_cast %158 : vector<1x1x32x32xbf16> to vector<32x32xbf16>
    %160 = vector.shape_cast %157 : vector<32x32xbf16> to vector<1x1x32x32xbf16>
    tpu.vector_store %arg9[%c0_80, %c2_81, %c0_82, %c0_83], %160 {strides = array<i32>} : memref<1x4x32x32xbf16, #tpu.memory_space<vmem>>, vector<1x1x32x32xbf16>,
    %c0_84 = arith.constant 0 : index
    %c0_85 = arith.constant 0 : index
    %c320 = arith.constant 320 : index
    %161 = vector.load %arg2[%c0_84, %c0_85, %c320] : memref<1x32x384xbf16, #tpu.memory_space<vmem>>, vector<1x32x32xbf16>
    %162 = vector.shape_cast %161 : vector<1x32x32xbf16> to vector<32x32xbf16>
    %c0_86 = arith.constant 0 : index
    %c2_87 = arith.constant 2 : index
    %c0_88 = arith.constant 0 : index
    %c0_89 = arith.constant 0 : index
    %163 = vector.load %arg10[%c0_86, %c2_87, %c0_88, %c0_89] : memref<1x4x32x32xbf16, #tpu.memory_space<vmem>>, vector<1x1x32x32xbf16>
    %164 = vector.shape_cast %163 : vector<1x1x32x32xbf16> to vector<32x32xbf16>
    %165 = vector.shape_cast %162 : vector<32x32xbf16> to vector<1x1x32x32xbf16>
    tpu.vector_store %arg10[%c0_86, %c2_87, %c0_88, %c0_89], %165 {strides = array<i32>} : memref<1x4x32x32xbf16, #tpu.memory_space<vmem>>, vector<1x1x32x32xbf16>,
    %c0_90 = arith.constant 0 : index
    %c0_91 = arith.constant 0 : index
    %c96 = arith.constant 96 : index
    %166 = vector.load %arg2[%c0_90, %c0_91, %c96] : memref<1x32x384xbf16, #tpu.memory_space<vmem>>, vector<1x32x32xbf16>
    %167 = vector.shape_cast %166 : vector<1x32x32xbf16> to vector<32x32xbf16>
    %168 = arith.extf %167 : vector<32x32xbf16> to vector<32x32xf32>
    %c0_92 = arith.constant 0 : index
    %c0_93 = arith.constant 0 : index
    %c224 = arith.constant 224 : index
    %169 = vector.load %arg2[%c0_92, %c0_93, %c224] : memref<1x32x384xbf16, #tpu.memory_space<vmem>>, vector<1x32x32xbf16>
    %170 = vector.shape_cast %169 : vector<1x32x32xbf16> to vector<32x32xbf16>
    %171 = arith.extf %170 : vector<32x32xbf16> to vector<32x32xf32>
    %172 = arith.mulf %168, %168 : vector<32x32xf32>
    %cst_94 = arith.constant dense<0.000000e+00> : vector<32xf32>
    %173 = vector.multi_reduction <add>, %172, %cst_94 [1] : vector<32x32xf32> to vector<32xf32>
    %174 = vector.shape_cast %173 : vector<32xf32> to vector<32x1xf32>
    %cst_95 = arith.constant 3.200000e+01 : f32
    %175 = vector.broadcast %cst_95 : f32 to vector<32x1xf32>
    %176 = arith.divf %174, %175 : vector<32x1xf32>
    %cst_96 = arith.constant 9.99999974E-6 : f32
    %177 = vector.broadcast %cst_96 : f32 to vector<32x1xf32>
    %178 = arith.addf %176, %177 : vector<32x1xf32>
    %179 = math.rsqrt %178 : vector<32x1xf32>
    %180 = vector.broadcast %179 : vector<32x1xf32> to vector<32x32xf32>
    %181 = arith.mulf %168, %180 : vector<32x32xf32>
    %182 = vector.broadcast %4 : vector<1x32xf32> to vector<32x32xf32>
    %183 = arith.mulf %181, %182 : vector<32x32xf32>
    %184 = arith.mulf %183, %0 : vector<32x32xf32>
    %cst_97 = arith.constant dense<0.000000e+00> : vector<32x32xf32>
    %185 = tpu.matmul %183, %2, %cst_97 {dimension_numbers = #tpu.dot_dimension_numbers<[1], [0], [0], [1], [0, 0, 1, 1], [], []>} : vector<32x32xf32>, vector<32x32xf32>, vector<32x32xf32> -> vector<32x32xf32>
    %186 = arith.mulf %185, %1 : vector<32x32xf32>
    %187 = arith.addf %184, %186 : vector<32x32xf32>
    %cst_98 = arith.constant 0.176776692 : f32
    %188 = vector.broadcast %cst_98 : f32 to vector<32x32xf32>
    %189 = arith.mulf %187, %188 : vector<32x32xf32>
    %190 = arith.truncf %189 : vector<32x32xf32> to vector<32x32xbf16>
    %c0_99 = arith.constant 0 : index
    %c3 = arith.constant 3 : index
    %c0_100 = arith.constant 0 : index
    %c0_101 = arith.constant 0 : index
    %191 = vector.load %arg8[%c0_99, %c3, %c0_100, %c0_101] : memref<1x4x32x32xbf16, #tpu.memory_space<vmem>>, vector<1x1x32x32xbf16>
    %192 = vector.shape_cast %191 : vector<1x1x32x32xbf16> to vector<32x32xbf16>
    %193 = vector.shape_cast %190 : vector<32x32xbf16> to vector<1x1x32x32xbf16>
    tpu.vector_store %arg8[%c0_99, %c3, %c0_100, %c0_101], %193 {strides = array<i32>} : memref<1x4x32x32xbf16, #tpu.memory_space<vmem>>, vector<1x1x32x32xbf16>,
    %194 = arith.mulf %171, %171 : vector<32x32xf32>
    %cst_102 = arith.constant dense<0.000000e+00> : vector<32xf32>
    %195 = vector.multi_reduction <add>, %194, %cst_102 [1] : vector<32x32xf32> to vector<32xf32>
    %196 = vector.shape_cast %195 : vector<32xf32> to vector<32x1xf32>
    %cst_103 = arith.constant 3.200000e+01 : f32
    %197 = vector.broadcast %cst_103 : f32 to vector<32x1xf32>
    %198 = arith.divf %196, %197 : vector<32x1xf32>
    %cst_104 = arith.constant 9.99999974E-6 : f32
    %199 = vector.broadcast %cst_104 : f32 to vector<32x1xf32>
    %200 = arith.addf %198, %199 : vector<32x1xf32>
    %201 = math.rsqrt %200 : vector<32x1xf32>
    %202 = vector.broadcast %201 : vector<32x1xf32> to vector<32x32xf32>
    %203 = arith.mulf %171, %202 : vector<32x32xf32>
    %204 = vector.broadcast %6 : vector<1x32xf32> to vector<32x32xf32>
    %205 = arith.mulf %203, %204 : vector<32x32xf32>
    %206 = arith.mulf %205, %0 : vector<32x32xf32>
    %cst_105 = arith.constant dense<0.000000e+00> : vector<32x32xf32>
    %207 = tpu.matmul %205, %2, %cst_105 {dimension_numbers = #tpu.dot_dimension_numbers<[1], [0], [0], [1], [0, 0, 1, 1], [], []>} : vector<32x32xf32>, vector<32x32xf32>, vector<32x32xf32> -> vector<32x32xf32>
    %208 = arith.mulf %207, %1 : vector<32x32xf32>
    %209 = arith.addf %206, %208 : vector<32x32xf32>
    %210 = arith.truncf %209 : vector<32x32xf32> to vector<32x32xbf16>
    %c0_106 = arith.constant 0 : index
    %c3_107 = arith.constant 3 : index
    %c0_108 = arith.constant 0 : index
    %c0_109 = arith.constant 0 : index
    %211 = vector.load %arg9[%c0_106, %c3_107, %c0_108, %c0_109] : memref<1x4x32x32xbf16, #tpu.memory_space<vmem>>, vector<1x1x32x32xbf16>
    %212 = vector.shape_cast %211 : vector<1x1x32x32xbf16> to vector<32x32xbf16>
    %213 = vector.shape_cast %210 : vector<32x32xbf16> to vector<1x1x32x32xbf16>
    tpu.vector_store %arg9[%c0_106, %c3_107, %c0_108, %c0_109], %213 {strides = array<i32>} : memref<1x4x32x32xbf16, #tpu.memory_space<vmem>>, vector<1x1x32x32xbf16>,
    %c0_110 = arith.constant 0 : index
    %c0_111 = arith.constant 0 : index
    %c352 = arith.constant 352 : index
    %214 = vector.load %arg2[%c0_110, %c0_111, %c352] : memref<1x32x384xbf16, #tpu.memory_space<vmem>>, vector<1x32x32xbf16>
    %215 = vector.shape_cast %214 : vector<1x32x32xbf16> to vector<32x32xbf16>
    %c0_112 = arith.constant 0 : index
    %c3_113 = arith.constant 3 : index
    %c0_114 = arith.constant 0 : index
    %c0_115 = arith.constant 0 : index
    %216 = vector.load %arg10[%c0_112, %c3_113, %c0_114, %c0_115] : memref<1x4x32x32xbf16, #tpu.memory_space<vmem>>, vector<1x1x32x32xbf16>
    %217 = vector.shape_cast %216 : vector<1x1x32x32xbf16> to vector<32x32xbf16>
    %218 = vector.shape_cast %215 : vector<32x32xbf16> to vector<1x1x32x32xbf16>
    tpu.vector_store %arg10[%c0_112, %c3_113, %c0_114, %c0_115], %218 {strides = array<i32>} : memref<1x4x32x32xbf16, #tpu.memory_space<vmem>>, vector<1x1x32x32xbf16>,
    return
  }
  func.func @transform_0(%arg0: i32, %arg1: i32) -> (i32, i32, i32) {
    %c0_i32 = arith.constant 0 : i32
    %c0_i32_0 = arith.constant 0 : i32
    return %arg0, %arg1, %c0_i32 : i32, i32, i32
  }
  func.func @transform_1(%arg0: i32, %arg1: i32) -> (i32, i32) {
    %c0_i32 = arith.constant 0 : i32
    %c0_i32_0 = arith.constant 0 : i32
    return %arg1, %c0_i32 : i32, i32
  }
  func.func @transform_2(%arg0: i32, %arg1: i32) -> (i32, i32) {
    %c0_i32 = arith.constant 0 : i32
    %c0_i32_0 = arith.constant 0 : i32
    return %arg1, %c0_i32 : i32, i32
  }
  func.func @transform_3(%arg0: i32, %arg1: i32) -> (i32, i32, i32) {
    %c2_i32 = arith.constant 2 : i32
    %0 = arith.cmpi sge, %arg1, %c2_i32 : i32
    %1 = arith.extui %0 : i1 to i32
    %c0_i32 = arith.constant 0 : i32
    %c0_i32_0 = arith.constant 0 : i32
    %c0_i32_1 = arith.constant 0 : i32
    return %1, %c0_i32, %c0_i32_0 : i32, i32, i32
  }
  func.func @transform_4(%arg0: i32, %arg1: i32) -> (i32, i32, i32) {
    %c2_i32 = arith.constant 2 : i32
    %0 = arith.cmpi sge, %arg1, %c2_i32 : i32
    %1 = arith.extui %0 : i1 to i32
    %c0_i32 = arith.constant 0 : i32
    %c0_i32_0 = arith.constant 0 : i32
    %c0_i32_1 = arith.constant 0 : i32
    return %1, %c0_i32, %c0_i32_0 : i32, i32, i32
  }
  func.func @transform_5(%arg0: i32, %arg1: i32) -> (i32, i32) {
    %c0_i32 = arith.constant 0 : i32
    %c0_i32_0 = arith.constant 0 : i32
    %c0_i32_1 = arith.constant 0 : i32
    return %c0_i32, %c0_i32_0 : i32, i32
  }
  func.func @transform_6(%arg0: i32, %arg1: i32) -> (i32, i32, i32, i32) {
    %c0_i32 = arith.constant 0 : i32
    %c0_i32_0 = arith.constant 0 : i32
    %c0_i32_1 = arith.constant 0 : i32
    return %arg0, %c0_i32, %arg1, %c0_i32_0 : i32, i32, i32, i32
  }
  func.func @transform_7(%arg0: i32, %arg1: i32) -> (i32, i32, i32, i32) {
    %c0_i32 = arith.constant 0 : i32
    %c0_i32_0 = arith.constant 0 : i32
    %c0_i32_1 = arith.constant 0 : i32
    return %arg0, %c0_i32, %arg1, %c0_i32_0 : i32, i32, i32, i32
  }
  func.func @transform_8(%arg0: i32, %arg1: i32) -> (i32, i32, i32, i32) {
    %c0_i32 = arith.constant 0 : i32
    %c0_i32_0 = arith.constant 0 : i32
    %c0_i32_1 = arith.constant 0 : i32
    return %arg0, %c0_i32, %arg1, %c0_i32_0 : i32, i32, i32, i32
  }
}

module attributes {stable_mosaic.version = 11 : i64} {
  func.func @_flash_kernel(%arg0: i32, %arg1: i32, %arg2: i32, %arg3: i32, %arg4: memref<1x1x32x32xbf16, #tpu.memory_space<vmem>>, %arg5: memref<1x1x32x32xbf16, #tpu.memory_space<vmem>>, %arg6: memref<1x1x32x32xbf16, #tpu.memory_space<vmem>>, %arg7: memref<1x1x32x32xbf16, #tpu.memory_space<vmem>>, %arg8: memref<32x32xf32, #tpu.memory_space<vmem>>, %arg9: memref<32x1xf32, #tpu.memory_space<vmem>>, %arg10: memref<32x1xf32, #tpu.memory_space<vmem>>) attributes {dimension_semantics = [#tpu.dimension_semantics<parallel>, #tpu.dimension_semantics<parallel>, #tpu.dimension_semantics<parallel>, #tpu.dimension_semantics<arbitrary>], iteration_bounds = array<i64: 2, 4, 3, 3>, scalar_prefetch = 0 : i64, scratch_operands = 3 : i64, tpu.core_type = #tpu.core_type<tc>, window_params = [{transform_indices = @transform_0, window_bounds = array<i64: 1, 1, 32, 32>}, {transform_indices = @transform_1, window_bounds = array<i64: 1, 1, 32, 32>}, {transform_indices = @transform_2, window_bounds = array<i64: 1, 1, 32, 32>}, {transform_indices = @transform_3, window_bounds = array<i64: 1, 1, 32, 32>}]} {
    %c0_i32 = arith.constant 0 : i32
    %0 = arith.cmpi eq, %arg3, %c0_i32 : i32
    %1 = arith.extui %0 : i1 to i32
    %c0_i32_0 = arith.constant 0 : i32
    %2 = arith.cmpi ne, %1, %c0_i32_0 : i32
    scf.if %2 {
      %cst_28 = arith.constant 0xFF800000 : f32
      %36 = vector.broadcast %cst_28 : f32 to vector<32x1xf32>
      %c0_29 = arith.constant 0 : index
      %c0_30 = arith.constant 0 : index
      %37 = vector.load %arg9[%c0_29, %c0_30] : memref<32x1xf32, #tpu.memory_space<vmem>>, vector<32x1xf32>
      tpu.vector_store %arg9[%c0_29, %c0_30], %36 {strides = array<i32>} : memref<32x1xf32, #tpu.memory_space<vmem>>, vector<32x1xf32>,
      %cst_31 = arith.constant 0.000000e+00 : f32
      %38 = vector.broadcast %cst_31 : f32 to vector<32x1xf32>
      %c0_32 = arith.constant 0 : index
      %c0_33 = arith.constant 0 : index
      %39 = vector.load %arg10[%c0_32, %c0_33] : memref<32x1xf32, #tpu.memory_space<vmem>>, vector<32x1xf32>
      tpu.vector_store %arg10[%c0_32, %c0_33], %38 {strides = array<i32>} : memref<32x1xf32, #tpu.memory_space<vmem>>, vector<32x1xf32>,
      %cst_34 = arith.constant 0.000000e+00 : f32
      %40 = vector.broadcast %cst_34 : f32 to vector<32x32xf32>
      %c0_35 = arith.constant 0 : index
      %c0_36 = arith.constant 0 : index
      %41 = vector.load %arg8[%c0_35, %c0_36] : memref<32x32xf32, #tpu.memory_space<vmem>>, vector<32x32xf32>
      tpu.vector_store %arg8[%c0_35, %c0_36], %40 {strides = array<i32>} : memref<32x32xf32, #tpu.memory_space<vmem>>, vector<32x32xf32>,
    } else {
    }
    %c0 = arith.constant 0 : index
    %c0_1 = arith.constant 0 : index
    %c0_2 = arith.constant 0 : index
    %c0_3 = arith.constant 0 : index
    %3 = vector.load %arg4[%c0, %c0_1, %c0_2, %c0_3] : memref<1x1x32x32xbf16, #tpu.memory_space<vmem>>, vector<1x1x32x32xbf16>
    %4 = vector.shape_cast %3 : vector<1x1x32x32xbf16> to vector<32x32xbf16>
    %c0_4 = arith.constant 0 : index
    %c0_5 = arith.constant 0 : index
    %c0_6 = arith.constant 0 : index
    %c0_7 = arith.constant 0 : index
    %5 = vector.load %arg5[%c0_4, %c0_5, %c0_6, %c0_7] : memref<1x1x32x32xbf16, #tpu.memory_space<vmem>>, vector<1x1x32x32xbf16>
    %6 = vector.shape_cast %5 : vector<1x1x32x32xbf16> to vector<32x32xbf16>
    %cst = arith.constant dense<0.000000e+00> : vector<32x32xf32>
    %7 = tpu.matmul %4, %6, %cst {dimension_numbers = #tpu.dot_dimension_numbers<[1], [1], [0], [0], [0, 0, 1, 0], [], []>} : vector<32x32xbf16>, vector<32x32xbf16>, vector<32x32xf32> -> vector<32x32xf32>
    %c0_8 = arith.constant 0 : index
    %c0_9 = arith.constant 0 : index
    %8 = vector.load %arg9[%c0_8, %c0_9] : memref<32x1xf32, #tpu.memory_space<vmem>>, vector<32x1xf32>
    %cst_10 = arith.constant dense<0xFF800000> : vector<32xf32>
    %9 = vector.multi_reduction <maximumf>, %7, %cst_10 [1] : vector<32x32xf32> to vector<32xf32>
    %10 = vector.shape_cast %9 : vector<32xf32> to vector<32x1xf32>
    %11 = arith.maximumf %8, %10 : vector<32x1xf32>
    %12 = arith.subf %8, %11 : vector<32x1xf32>
    %13 = math.exp %12 : vector<32x1xf32>
    %14 = vector.broadcast %11 : vector<32x1xf32> to vector<32x32xf32>
    %15 = arith.subf %7, %14 : vector<32x32xf32>
    %16 = math.exp %15 : vector<32x32xf32>
    %c0_11 = arith.constant 0 : index
    %c0_12 = arith.constant 0 : index
    %17 = vector.load %arg10[%c0_11, %c0_12] : memref<32x1xf32, #tpu.memory_space<vmem>>, vector<32x1xf32>
    %18 = arith.mulf %13, %17 : vector<32x1xf32>
    %cst_13 = arith.constant dense<0.000000e+00> : vector<32xf32>
    %19 = vector.multi_reduction <add>, %16, %cst_13 [1] : vector<32x32xf32> to vector<32xf32>
    %20 = vector.shape_cast %19 : vector<32xf32> to vector<32x1xf32>
    %21 = arith.addf %18, %20 : vector<32x1xf32>
    %c0_14 = arith.constant 0 : index
    %c0_15 = arith.constant 0 : index
    %22 = vector.load %arg10[%c0_14, %c0_15] : memref<32x1xf32, #tpu.memory_space<vmem>>, vector<32x1xf32>
    tpu.vector_store %arg10[%c0_14, %c0_15], %21 {strides = array<i32>} : memref<32x1xf32, #tpu.memory_space<vmem>>, vector<32x1xf32>,
    %c0_16 = arith.constant 0 : index
    %c0_17 = arith.constant 0 : index
    %23 = vector.load %arg9[%c0_16, %c0_17] : memref<32x1xf32, #tpu.memory_space<vmem>>, vector<32x1xf32>
    tpu.vector_store %arg9[%c0_16, %c0_17], %11 {strides = array<i32>} : memref<32x1xf32, #tpu.memory_space<vmem>>, vector<32x1xf32>,
    %c0_18 = arith.constant 0 : index
    %c0_19 = arith.constant 0 : index
    %24 = vector.load %arg8[%c0_18, %c0_19] : memref<32x32xf32, #tpu.memory_space<vmem>>, vector<32x32xf32>
    %25 = vector.broadcast %13 : vector<32x1xf32> to vector<32x32xf32>
    %26 = arith.mulf %25, %24 : vector<32x32xf32>
    %27 = arith.truncf %16 : vector<32x32xf32> to vector<32x32xbf16>
    %c0_20 = arith.constant 0 : index
    %c0_21 = arith.constant 0 : index
    %c0_22 = arith.constant 0 : index
    %c0_23 = arith.constant 0 : index
    %28 = vector.load %arg6[%c0_20, %c0_21, %c0_22, %c0_23] : memref<1x1x32x32xbf16, #tpu.memory_space<vmem>>, vector<1x1x32x32xbf16>
    %29 = vector.shape_cast %28 : vector<1x1x32x32xbf16> to vector<32x32xbf16>
    %cst_24 = arith.constant dense<0.000000e+00> : vector<32x32xf32>
    %30 = tpu.matmul %27, %29, %cst_24 {dimension_numbers = #tpu.dot_dimension_numbers<[1], [0], [0], [1], [0, 0, 1, 1], [], []>} : vector<32x32xbf16>, vector<32x32xbf16>, vector<32x32xf32> -> vector<32x32xf32>
    %31 = arith.addf %26, %30 : vector<32x32xf32>
    %c0_25 = arith.constant 0 : index
    %c0_26 = arith.constant 0 : index
    %32 = vector.load %arg8[%c0_25, %c0_26] : memref<32x32xf32, #tpu.memory_space<vmem>>, vector<32x32xf32>
    tpu.vector_store %arg8[%c0_25, %c0_26], %31 {strides = array<i32>} : memref<32x32xf32, #tpu.memory_space<vmem>>, vector<32x32xf32>,
    %c2_i32 = arith.constant 2 : i32
    %33 = arith.cmpi eq, %arg3, %c2_i32 : i32
    %34 = arith.extui %33 : i1 to i32
    %c0_i32_27 = arith.constant 0 : i32
    %35 = arith.cmpi ne, %34, %c0_i32_27 : i32
    scf.if %35 {
      %c0_28 = arith.constant 0 : index
      %c0_29 = arith.constant 0 : index
      %36 = vector.load %arg8[%c0_28, %c0_29] : memref<32x32xf32, #tpu.memory_space<vmem>>, vector<32x32xf32>
      %c0_30 = arith.constant 0 : index
      %c0_31 = arith.constant 0 : index
      %37 = vector.load %arg10[%c0_30, %c0_31] : memref<32x1xf32, #tpu.memory_space<vmem>>, vector<32x1xf32>
      %38 = vector.broadcast %37 : vector<32x1xf32> to vector<32x32xf32>
      %39 = arith.divf %36, %38 : vector<32x32xf32>
      %40 = arith.truncf %39 : vector<32x32xf32> to vector<32x32xbf16>
      %c0_32 = arith.constant 0 : index
      %c0_33 = arith.constant 0 : index
      %c0_34 = arith.constant 0 : index
      %c0_35 = arith.constant 0 : index
      %41 = vector.load %arg7[%c0_32, %c0_33, %c0_34, %c0_35] : memref<1x1x32x32xbf16, #tpu.memory_space<vmem>>, vector<1x1x32x32xbf16>
      %42 = vector.shape_cast %41 : vector<1x1x32x32xbf16> to vector<32x32xbf16>
      %43 = vector.shape_cast %40 : vector<32x32xbf16> to vector<1x1x32x32xbf16>
      tpu.vector_store %arg7[%c0_32, %c0_33, %c0_34, %c0_35], %43 {strides = array<i32>} : memref<1x1x32x32xbf16, #tpu.memory_space<vmem>>, vector<1x1x32x32xbf16>,
    } else {
    }
    return
  }
  func.func @transform_0(%arg0: i32, %arg1: i32, %arg2: i32, %arg3: i32) -> (i32, i32, i32, i32) {
    %c0_i32 = arith.constant 0 : i32
    %c0_i32_0 = arith.constant 0 : i32
    return %arg0, %arg1, %arg2, %c0_i32 : i32, i32, i32, i32
  }
  func.func @transform_1(%arg0: i32, %arg1: i32, %arg2: i32, %arg3: i32) -> (i32, i32, i32, i32) {
    %c0_i32 = arith.constant 0 : i32
    %c0_i32_0 = arith.constant 0 : i32
    return %arg0, %arg1, %arg3, %c0_i32 : i32, i32, i32, i32
  }
  func.func @transform_2(%arg0: i32, %arg1: i32, %arg2: i32, %arg3: i32) -> (i32, i32, i32, i32) {
    %c0_i32 = arith.constant 0 : i32
    %c0_i32_0 = arith.constant 0 : i32
    return %arg0, %arg1, %arg3, %c0_i32 : i32, i32, i32, i32
  }
  func.func @transform_3(%arg0: i32, %arg1: i32, %arg2: i32, %arg3: i32) -> (i32, i32, i32, i32) {
    %c0_i32 = arith.constant 0 : i32
    %c0_i32_0 = arith.constant 0 : i32
    return %arg0, %arg1, %arg2, %c0_i32 : i32, i32, i32, i32
  }
}

module attributes {stable_mosaic.version = 11 : i64} {
  func.func @_out_proj_kernel(%arg0: i32, %arg1: i32, %arg2: i32, %arg3: memref<1x1x32x32xbf16, #tpu.memory_space<vmem>>, %arg4: memref<1x1x32x128xbf16, #tpu.memory_space<vmem>>, %arg5: memref<1x1x128xf32, #tpu.memory_space<vmem>>, %arg6: memref<1x32x128xbf16, #tpu.memory_space<vmem>>, %arg7: memref<1x1x1x128xf32, #tpu.memory_space<vmem>>, %arg8: memref<1x32x128xbf16, #tpu.memory_space<vmem>>, %arg9: memref<32x128xf32, #tpu.memory_space<vmem>>) attributes {dimension_semantics = [#tpu.dimension_semantics<parallel>, #tpu.dimension_semantics<parallel>, #tpu.dimension_semantics<arbitrary>], iteration_bounds = array<i64: 2, 3, 4>, scalar_prefetch = 0 : i64, scratch_operands = 1 : i64, tpu.core_type = #tpu.core_type<tc>, window_params = [{transform_indices = @transform_0, window_bounds = array<i64: 1, 1, 32, 32>}, {transform_indices = @transform_1, window_bounds = array<i64: 1, 1, 32, 128>}, {transform_indices = @transform_2, window_bounds = array<i64: 1, 1, 128>}, {transform_indices = @transform_3, window_bounds = array<i64: 1, 32, 128>}, {transform_indices = @transform_4, window_bounds = array<i64: 1, 1, 1, 128>}, {transform_indices = @transform_5, window_bounds = array<i64: 1, 32, 128>}]} {
    %c0_i32 = arith.constant 0 : i32
    %0 = arith.cmpi eq, %arg2, %c0_i32 : i32
    %1 = arith.extui %0 : i1 to i32
    %c0_i32_0 = arith.constant 0 : i32
    %2 = arith.cmpi ne, %1, %c0_i32_0 : i32
    scf.if %2 {
      %cst_13 = arith.constant 0.000000e+00 : f32
      %14 = vector.broadcast %cst_13 : f32 to vector<32x128xf32>
      %c0_14 = arith.constant 0 : index
      %c0_15 = arith.constant 0 : index
      %15 = vector.load %arg9[%c0_14, %c0_15] : memref<32x128xf32, #tpu.memory_space<vmem>>, vector<32x128xf32>
      tpu.vector_store %arg9[%c0_14, %c0_15], %14 {strides = array<i32>} : memref<32x128xf32, #tpu.memory_space<vmem>>, vector<32x128xf32>,
    } else {
    }
    %c0 = arith.constant 0 : index
    %c0_1 = arith.constant 0 : index
    %3 = vector.load %arg9[%c0, %c0_1] : memref<32x128xf32, #tpu.memory_space<vmem>>, vector<32x128xf32>
    %c0_2 = arith.constant 0 : index
    %c0_3 = arith.constant 0 : index
    %c0_4 = arith.constant 0 : index
    %c0_5 = arith.constant 0 : index
    %4 = vector.load %arg3[%c0_2, %c0_3, %c0_4, %c0_5] : memref<1x1x32x32xbf16, #tpu.memory_space<vmem>>, vector<1x1x32x32xbf16>
    %5 = vector.shape_cast %4 : vector<1x1x32x32xbf16> to vector<32x32xbf16>
    %c0_6 = arith.constant 0 : index
    %c0_7 = arith.constant 0 : index
    %c0_8 = arith.constant 0 : index
    %c0_9 = arith.constant 0 : index
    %6 = vector.load %arg4[%c0_6, %c0_7, %c0_8, %c0_9] : memref<1x1x32x128xbf16, #tpu.memory_space<vmem>>, vector<1x1x32x128xbf16>
    %7 = vector.shape_cast %6 : vector<1x1x32x128xbf16> to vector<32x128xbf16>
    %cst = arith.constant dense<0.000000e+00> : vector<32x128xf32>
    %8 = tpu.matmul %5, %7, %cst {dimension_numbers = #tpu.dot_dimension_numbers<[1], [0], [0], [1], [0, 0, 1, 1], [], []>} : vector<32x32xbf16>, vector<32x128xbf16>, vector<32x128xf32> -> vector<32x128xf32>
    %9 = arith.addf %3, %8 : vector<32x128xf32>
    %c0_10 = arith.constant 0 : index
    %c0_11 = arith.constant 0 : index
    %10 = vector.load %arg9[%c0_10, %c0_11] : memref<32x128xf32, #tpu.memory_space<vmem>>, vector<32x128xf32>
    tpu.vector_store %arg9[%c0_10, %c0_11], %9 {strides = array<i32>} : memref<32x128xf32, #tpu.memory_space<vmem>>, vector<32x128xf32>,
    %c3_i32 = arith.constant 3 : i32
    %11 = arith.cmpi eq, %arg2, %c3_i32 : i32
    %12 = arith.extui %11 : i1 to i32
    %c0_i32_12 = arith.constant 0 : i32
    %13 = arith.cmpi ne, %12, %c0_i32_12 : i32
    scf.if %13 {
      %c0_13 = arith.constant 0 : index
      %c0_14 = arith.constant 0 : index
      %c0_15 = arith.constant 0 : index
      %14 = vector.load %arg6[%c0_13, %c0_14, %c0_15] : memref<1x32x128xbf16, #tpu.memory_space<vmem>>, vector<1x32x128xbf16>
      %15 = vector.shape_cast %14 : vector<1x32x128xbf16> to vector<32x128xbf16>
      %16 = arith.extf %15 : vector<32x128xbf16> to vector<32x128xf32>
      %c0_16 = arith.constant 0 : index
      %c0_17 = arith.constant 0 : index
      %c0_18 = arith.constant 0 : index
      %c0_19 = arith.constant 0 : index
      %17 = vector.load %arg7[%c0_16, %c0_17, %c0_18, %c0_19] : memref<1x1x1x128xf32, #tpu.memory_space<vmem>>, vector<1x1x1x128xf32>
      %18 = vector.shape_cast %17 : vector<1x1x1x128xf32> to vector<1x128xf32>
      %c0_20 = arith.constant 0 : index
      %c0_21 = arith.constant 0 : index
      %19 = vector.load %arg9[%c0_20, %c0_21] : memref<32x128xf32, #tpu.memory_space<vmem>>, vector<32x128xf32>
      %c0_22 = arith.constant 0 : index
      %c0_23 = arith.constant 0 : index
      %c0_24 = arith.constant 0 : index
      %20 = vector.load %arg5[%c0_22, %c0_23, %c0_24] : memref<1x1x128xf32, #tpu.memory_space<vmem>>, vector<1x1x128xf32>
      %21 = vector.shape_cast %20 : vector<1x1x128xf32> to vector<1x128xf32>
      %22 = vector.broadcast %21 : vector<1x128xf32> to vector<32x128xf32>
      %23 = arith.addf %19, %22 : vector<32x128xf32>
      %24 = vector.broadcast %18 : vector<1x128xf32> to vector<32x128xf32>
      %25 = arith.mulf %24, %23 : vector<32x128xf32>
      %26 = arith.addf %16, %25 : vector<32x128xf32>
      %27 = arith.truncf %26 : vector<32x128xf32> to vector<32x128xbf16>
      %c0_25 = arith.constant 0 : index
      %c0_26 = arith.constant 0 : index
      %c0_27 = arith.constant 0 : index
      %28 = vector.load %arg8[%c0_25, %c0_26, %c0_27] : memref<1x32x128xbf16, #tpu.memory_space<vmem>>, vector<1x32x128xbf16>
      %29 = vector.shape_cast %28 : vector<1x32x128xbf16> to vector<32x128xbf16>
      %30 = vector.shape_cast %27 : vector<32x128xbf16> to vector<1x32x128xbf16>
      tpu.vector_store %arg8[%c0_25, %c0_26, %c0_27], %30 {strides = array<i32>} : memref<1x32x128xbf16, #tpu.memory_space<vmem>>, vector<1x32x128xbf16>,
    } else {
    }
    return
  }
  func.func @transform_0(%arg0: i32, %arg1: i32, %arg2: i32) -> (i32, i32, i32, i32) {
    %c0_i32 = arith.constant 0 : i32
    %c0_i32_0 = arith.constant 0 : i32
    return %arg0, %arg2, %arg1, %c0_i32 : i32, i32, i32, i32
  }
  func.func @transform_1(%arg0: i32, %arg1: i32, %arg2: i32) -> (i32, i32, i32, i32) {
    %c2_i32 = arith.constant 2 : i32
    %0 = arith.cmpi sge, %arg1, %c2_i32 : i32
    %1 = arith.extui %0 : i1 to i32
    %c0_i32 = arith.constant 0 : i32
    %c0_i32_0 = arith.constant 0 : i32
    %c0_i32_1 = arith.constant 0 : i32
    return %1, %arg2, %c0_i32, %c0_i32_0 : i32, i32, i32, i32
  }
  func.func @transform_2(%arg0: i32, %arg1: i32, %arg2: i32) -> (i32, i32, i32) {
    %c2_i32 = arith.constant 2 : i32
    %0 = arith.cmpi sge, %arg1, %c2_i32 : i32
    %1 = arith.extui %0 : i1 to i32
    %c0_i32 = arith.constant 0 : i32
    %c0_i32_0 = arith.constant 0 : i32
    %c0_i32_1 = arith.constant 0 : i32
    return %1, %c0_i32, %c0_i32_0 : i32, i32, i32
  }
  func.func @transform_3(%arg0: i32, %arg1: i32, %arg2: i32) -> (i32, i32, i32) {
    %c0_i32 = arith.constant 0 : i32
    %c0_i32_0 = arith.constant 0 : i32
    return %arg0, %arg1, %c0_i32 : i32, i32, i32
  }
  func.func @transform_4(%arg0: i32, %arg1: i32, %arg2: i32) -> (i32, i32, i32, i32) {
    %c2_i32 = arith.constant 2 : i32
    %0 = arith.cmpi sge, %arg1, %c2_i32 : i32
    %1 = arith.extui %0 : i1 to i32
    %c0_i32 = arith.constant 0 : i32
    %c0_i32_0 = arith.constant 0 : i32
    %c0_i32_1 = arith.constant 0 : i32
    return %1, %arg0, %c0_i32, %c0_i32_0 : i32, i32, i32, i32
  }
  func.func @transform_5(%arg0: i32, %arg1: i32, %arg2: i32) -> (i32, i32, i32) {
    %c0_i32 = arith.constant 0 : i32
    %c0_i32_0 = arith.constant 0 : i32
    return %arg0, %arg1, %c0_i32 : i32, i32, i32
  }
}

module attributes {stable_mosaic.version = 11 : i64} {
  func.func @_adaln_ff_kernel(%arg0: i32, %arg1: i32, %arg2: i32, %arg3: memref<1x32x128xbf16, #tpu.memory_space<vmem>>, %arg4: memref<1x1x128xf32, #tpu.memory_space<vmem>>, %arg5: memref<1x1x1x128xf32, #tpu.memory_space<vmem>>, %arg6: memref<1x1x1x128xf32, #tpu.memory_space<vmem>>, %arg7: memref<128x128xbf16, #tpu.memory_space<vmem>>, %arg8: memref<1x128xf32, #tpu.memory_space<vmem>>, %arg9: memref<128x128xbf16, #tpu.memory_space<vmem>>, %arg10: memref<1x128xf32, #tpu.memory_space<vmem>>, %arg11: memref<128x128xbf16, #tpu.memory_space<vmem>>, %arg12: memref<1x128xf32, #tpu.memory_space<vmem>>, %arg13: memref<1x1x1x128xf32, #tpu.memory_space<vmem>>, %arg14: memref<1x32x128xbf16, #tpu.memory_space<vmem>>, %arg15: memref<32x128xbf16, #tpu.memory_space<vmem>>, %arg16: memref<32x128xf32, #tpu.memory_space<vmem>>) attributes {dimension_semantics = [#tpu.dimension_semantics<parallel>, #tpu.dimension_semantics<parallel>, #tpu.dimension_semantics<arbitrary>], iteration_bounds = array<i64: 2, 3, 4>, scalar_prefetch = 0 : i64, scratch_operands = 2 : i64, tpu.core_type = #tpu.core_type<tc>, window_params = [{transform_indices = @transform_0, window_bounds = array<i64: 1, 32, 128>}, {transform_indices = @transform_1, window_bounds = array<i64: 1, 1, 128>}, {transform_indices = @transform_2, window_bounds = array<i64: 1, 1, 1, 128>}, {transform_indices = @transform_3, window_bounds = array<i64: 1, 1, 1, 128>}, {transform_indices = @transform_4, window_bounds = array<i64: 128, 128>}, {transform_indices = @transform_5, window_bounds = array<i64: 1, 128>}, {transform_indices = @transform_6, window_bounds = array<i64: 128, 128>}, {transform_indices = @transform_7, window_bounds = array<i64: 1, 128>}, {transform_indices = @transform_8, window_bounds = array<i64: 128, 128>}, {pipeline_mode = #tpu.pipeline_mode<synchronous>, transform_indices = @transform_9, window_bounds = array<i64: 1, 128>}, {transform_indices = @transform_10, window_bounds = array<i64: 1, 1, 1, 128>}, {transform_indices = @transform_11, window_bounds = array<i64: 1, 32, 128>}]} {
    %c0_i32 = arith.constant 0 : i32
    %0 = arith.cmpi eq, %arg2, %c0_i32 : i32
    %1 = arith.extui %0 : i1 to i32
    %c0_i32_0 = arith.constant 0 : i32
    %2 = arith.cmpi ne, %1, %c0_i32_0 : i32
    scf.if %2 {
      %c0_22 = arith.constant 0 : index
      %c0_23 = arith.constant 0 : index
      %c0_24 = arith.constant 0 : index
      %32 = vector.load %arg3[%c0_22, %c0_23, %c0_24] : memref<1x32x128xbf16, #tpu.memory_space<vmem>>, vector<1x32x128xbf16>
      %33 = vector.shape_cast %32 : vector<1x32x128xbf16> to vector<32x128xbf16>
      %34 = arith.extf %33 : vector<32x128xbf16> to vector<32x128xf32>
      %35 = arith.mulf %34, %34 : vector<32x128xf32>
      %cst_25 = arith.constant dense<0.000000e+00> : vector<32xf32>
      %36 = vector.multi_reduction <add>, %35, %cst_25 [1] : vector<32x128xf32> to vector<32xf32>
      %37 = vector.shape_cast %36 : vector<32xf32> to vector<32x1xf32>
      %cst_26 = arith.constant 1.280000e+02 : f32
      %38 = vector.broadcast %cst_26 : f32 to vector<32x1xf32>
      %39 = arith.divf %37, %38 : vector<32x1xf32>
      %cst_27 = arith.constant 9.99999974E-6 : f32
      %40 = vector.broadcast %cst_27 : f32 to vector<32x1xf32>
      %41 = arith.addf %39, %40 : vector<32x1xf32>
      %42 = math.rsqrt %41 : vector<32x1xf32>
      %43 = vector.broadcast %42 : vector<32x1xf32> to vector<32x128xf32>
      %44 = arith.mulf %34, %43 : vector<32x128xf32>
      %c0_28 = arith.constant 0 : index
      %c0_29 = arith.constant 0 : index
      %c0_30 = arith.constant 0 : index
      %45 = vector.load %arg4[%c0_28, %c0_29, %c0_30] : memref<1x1x128xf32, #tpu.memory_space<vmem>>, vector<1x1x128xf32>
      %46 = vector.shape_cast %45 : vector<1x1x128xf32> to vector<1x128xf32>
      %47 = vector.broadcast %46 : vector<1x128xf32> to vector<32x128xf32>
      %48 = arith.mulf %44, %47 : vector<32x128xf32>
      %c0_31 = arith.constant 0 : index
      %c0_32 = arith.constant 0 : index
      %c0_33 = arith.constant 0 : index
      %c0_34 = arith.constant 0 : index
      %49 = vector.load %arg5[%c0_31, %c0_32, %c0_33, %c0_34] : memref<1x1x1x128xf32, #tpu.memory_space<vmem>>, vector<1x1x1x128xf32>
      %50 = vector.shape_cast %49 : vector<1x1x1x128xf32> to vector<1x128xf32>
      %cst_35 = arith.constant 1.000000e+00 : f32
      %51 = vector.broadcast %cst_35 : f32 to vector<1x128xf32>
      %52 = arith.addf %51, %50 : vector<1x128xf32>
      %53 = vector.broadcast %52 : vector<1x128xf32> to vector<32x128xf32>
      %54 = arith.mulf %48, %53 : vector<32x128xf32>
      %c0_36 = arith.constant 0 : index
      %c0_37 = arith.constant 0 : index
      %c0_38 = arith.constant 0 : index
      %c0_39 = arith.constant 0 : index
      %55 = vector.load %arg6[%c0_36, %c0_37, %c0_38, %c0_39] : memref<1x1x1x128xf32, #tpu.memory_space<vmem>>, vector<1x1x1x128xf32>
      %56 = vector.shape_cast %55 : vector<1x1x1x128xf32> to vector<1x128xf32>
      %57 = vector.broadcast %56 : vector<1x128xf32> to vector<32x128xf32>
      %58 = arith.addf %54, %57 : vector<32x128xf32>
      %59 = arith.truncf %58 : vector<32x128xf32> to vector<32x128xbf16>
      %c0_40 = arith.constant 0 : index
      %c0_41 = arith.constant 0 : index
      %60 = vector.load %arg15[%c0_40, %c0_41] : memref<32x128xbf16, #tpu.memory_space<vmem>>, vector<32x128xbf16>
      tpu.vector_store %arg15[%c0_40, %c0_41], %59 {strides = array<i32>} : memref<32x128xbf16, #tpu.memory_space<vmem>>, vector<32x128xbf16>,
      %cst_42 = arith.constant 0.000000e+00 : f32
      %61 = vector.broadcast %cst_42 : f32 to vector<32x128xf32>
      %c0_43 = arith.constant 0 : index
      %c0_44 = arith.constant 0 : index
      %62 = vector.load %arg16[%c0_43, %c0_44] : memref<32x128xf32, #tpu.memory_space<vmem>>, vector<32x128xf32>
      tpu.vector_store %arg16[%c0_43, %c0_44], %61 {strides = array<i32>} : memref<32x128xf32, #tpu.memory_space<vmem>>, vector<32x128xf32>,
    } else {
    }
    %c0 = arith.constant 0 : index
    %c0_1 = arith.constant 0 : index
    %3 = vector.load %arg15[%c0, %c0_1] : memref<32x128xbf16, #tpu.memory_space<vmem>>, vector<32x128xbf16>
    %c0_2 = arith.constant 0 : index
    %c0_3 = arith.constant 0 : index
    %4 = vector.load %arg7[%c0_2, %c0_3] : memref<128x128xbf16, #tpu.memory_space<vmem>>, vector<128x128xbf16>
    %cst = arith.constant dense<0.000000e+00> : vector<32x128xf32>
    %5 = tpu.matmul %3, %4, %cst {dimension_numbers = #tpu.dot_dimension_numbers<[1], [0], [0], [1], [0, 0, 1, 1], [], []>} : vector<32x128xbf16>, vector<128x128xbf16>, vector<32x128xf32> -> vector<32x128xf32>
    %c0_4 = arith.constant 0 : index
    %c0_5 = arith.constant 0 : index
    %6 = vector.load %arg8[%c0_4, %c0_5] : memref<1x128xf32, #tpu.memory_space<vmem>>, vector<1x128xf32>
    %7 = vector.broadcast %6 : vector<1x128xf32> to vector<32x128xf32>
    %8 = arith.addf %5, %7 : vector<32x128xf32>
    %c0_6 = arith.constant 0 : index
    %c0_7 = arith.constant 0 : index
    %9 = vector.load %arg9[%c0_6, %c0_7] : memref<128x128xbf16, #tpu.memory_space<vmem>>, vector<128x128xbf16>
    %cst_8 = arith.constant dense<0.000000e+00> : vector<32x128xf32>
    %10 = tpu.matmul %3, %9, %cst_8 {dimension_numbers = #tpu.dot_dimension_numbers<[1], [0], [0], [1], [0, 0, 1, 1], [], []>} : vector<32x128xbf16>, vector<128x128xbf16>, vector<32x128xf32> -> vector<32x128xf32>
    %c0_9 = arith.constant 0 : index
    %c0_10 = arith.constant 0 : index
    %11 = vector.load %arg10[%c0_9, %c0_10] : memref<1x128xf32, #tpu.memory_space<vmem>>, vector<1x128xf32>
    %12 = vector.broadcast %11 : vector<1x128xf32> to vector<32x128xf32>
    %13 = arith.addf %10, %12 : vector<32x128xf32>
    %cst_11 = arith.constant 5.000000e-01 : f32
    %14 = vector.broadcast %cst_11 : f32 to vector<32x128xf32>
    %15 = arith.mulf %14, %13 : vector<32x128xf32>
    %cst_12 = arith.constant 0.707106769 : f32
    %16 = vector.broadcast %cst_12 : f32 to vector<32x128xf32>
    %17 = arith.mulf %13, %16 : vector<32x128xf32>
    %18 = math.erf %17 : vector<32x128xf32>
    %cst_13 = arith.constant 1.000000e+00 : f32
    %19 = vector.broadcast %cst_13 : f32 to vector<32x128xf32>
    %20 = arith.addf %19, %18 : vector<32x128xf32>
    %21 = arith.mulf %15, %20 : vector<32x128xf32>
    %c0_14 = arith.constant 0 : index
    %c0_15 = arith.constant 0 : index
    %22 = vector.load %arg16[%c0_14, %c0_15] : memref<32x128xf32, #tpu.memory_space<vmem>>, vector<32x128xf32>
    %23 = arith.mulf %8, %21 : vector<32x128xf32>
    %24 = arith.truncf %23 : vector<32x128xf32> to vector<32x128xbf16>
    %c0_16 = arith.constant 0 : index
    %c0_17 = arith.constant 0 : index
    %25 = vector.load %arg11[%c0_16, %c0_17] : memref<128x128xbf16, #tpu.memory_space<vmem>>, vector<128x128xbf16>
    %cst_18 = arith.constant dense<0.000000e+00> : vector<32x128xf32>
    %26 = tpu.matmul %24, %25, %cst_18 {dimension_numbers = #tpu.dot_dimension_numbers<[1], [0], [0], [1], [0, 0, 1, 1], [], []>} : vector<32x128xbf16>, vector<128x128xbf16>, vector<32x128xf32> -> vector<32x128xf32>
    %27 = arith.addf %22, %26 : vector<32x128xf32>
    %c0_19 = arith.constant 0 : index
    %c0_20 = arith.constant 0 : index
    %28 = vector.load %arg16[%c0_19, %c0_20] : memref<32x128xf32, #tpu.memory_space<vmem>>, vector<32x128xf32>
    tpu.vector_store %arg16[%c0_19, %c0_20], %27 {strides = array<i32>} : memref<32x128xf32, #tpu.memory_space<vmem>>, vector<32x128xf32>,
    %c3_i32 = arith.constant 3 : i32
    %29 = arith.cmpi eq, %arg2, %c3_i32 : i32
    %30 = arith.extui %29 : i1 to i32
    %c0_i32_21 = arith.constant 0 : i32
    %31 = arith.cmpi ne, %30, %c0_i32_21 : i32
    scf.if %31 {
      %c0_22 = arith.constant 0 : index
      %c0_23 = arith.constant 0 : index
      %c0_24 = arith.constant 0 : index
      %32 = vector.load %arg3[%c0_22, %c0_23, %c0_24] : memref<1x32x128xbf16, #tpu.memory_space<vmem>>, vector<1x32x128xbf16>
      %33 = vector.shape_cast %32 : vector<1x32x128xbf16> to vector<32x128xbf16>
      %34 = arith.extf %33 : vector<32x128xbf16> to vector<32x128xf32>
      %c0_25 = arith.constant 0 : index
      %c0_26 = arith.constant 0 : index
      %c0_27 = arith.constant 0 : index
      %c0_28 = arith.constant 0 : index
      %35 = vector.load %arg13[%c0_25, %c0_26, %c0_27, %c0_28] : memref<1x1x1x128xf32, #tpu.memory_space<vmem>>, vector<1x1x1x128xf32>
      %36 = vector.shape_cast %35 : vector<1x1x1x128xf32> to vector<1x128xf32>
      %c0_29 = arith.constant 0 : index
      %c0_30 = arith.constant 0 : index
      %37 = vector.load %arg16[%c0_29, %c0_30] : memref<32x128xf32, #tpu.memory_space<vmem>>, vector<32x128xf32>
      %c0_31 = arith.constant 0 : index
      %c0_32 = arith.constant 0 : index
      %38 = vector.load %arg12[%c0_31, %c0_32] : memref<1x128xf32, #tpu.memory_space<vmem>>, vector<1x128xf32>
      %39 = vector.broadcast %38 : vector<1x128xf32> to vector<32x128xf32>
      %40 = arith.addf %37, %39 : vector<32x128xf32>
      %41 = vector.broadcast %36 : vector<1x128xf32> to vector<32x128xf32>
      %42 = arith.mulf %41, %40 : vector<32x128xf32>
      %43 = arith.addf %34, %42 : vector<32x128xf32>
      %44 = arith.truncf %43 : vector<32x128xf32> to vector<32x128xbf16>
      %c0_33 = arith.constant 0 : index
      %c0_34 = arith.constant 0 : index
      %c0_35 = arith.constant 0 : index
      %45 = vector.load %arg14[%c0_33, %c0_34, %c0_35] : memref<1x32x128xbf16, #tpu.memory_space<vmem>>, vector<1x32x128xbf16>
      %46 = vector.shape_cast %45 : vector<1x32x128xbf16> to vector<32x128xbf16>
      %47 = vector.shape_cast %44 : vector<32x128xbf16> to vector<1x32x128xbf16>
      tpu.vector_store %arg14[%c0_33, %c0_34, %c0_35], %47 {strides = array<i32>} : memref<1x32x128xbf16, #tpu.memory_space<vmem>>, vector<1x32x128xbf16>,
    } else {
    }
    return
  }
  func.func @transform_0(%arg0: i32, %arg1: i32, %arg2: i32) -> (i32, i32, i32) {
    %c0_i32 = arith.constant 0 : i32
    %c0_i32_0 = arith.constant 0 : i32
    return %arg0, %arg1, %c0_i32 : i32, i32, i32
  }
  func.func @transform_1(%arg0: i32, %arg1: i32, %arg2: i32) -> (i32, i32, i32) {
    %c2_i32 = arith.constant 2 : i32
    %0 = arith.cmpi sge, %arg1, %c2_i32 : i32
    %1 = arith.extui %0 : i1 to i32
    %c0_i32 = arith.constant 0 : i32
    %c0_i32_0 = arith.constant 0 : i32
    %c0_i32_1 = arith.constant 0 : i32
    return %1, %c0_i32, %c0_i32_0 : i32, i32, i32
  }
  func.func @transform_2(%arg0: i32, %arg1: i32, %arg2: i32) -> (i32, i32, i32, i32) {
    %c2_i32 = arith.constant 2 : i32
    %0 = arith.cmpi sge, %arg1, %c2_i32 : i32
    %1 = arith.extui %0 : i1 to i32
    %c0_i32 = arith.constant 0 : i32
    %c0_i32_0 = arith.constant 0 : i32
    %c0_i32_1 = arith.constant 0 : i32
    return %1, %arg0, %c0_i32, %c0_i32_0 : i32, i32, i32, i32
  }
  func.func @transform_3(%arg0: i32, %arg1: i32, %arg2: i32) -> (i32, i32, i32, i32) {
    %c2_i32 = arith.constant 2 : i32
    %0 = arith.cmpi sge, %arg1, %c2_i32 : i32
    %1 = arith.extui %0 : i1 to i32
    %c0_i32 = arith.constant 0 : i32
    %c0_i32_0 = arith.constant 0 : i32
    %c0_i32_1 = arith.constant 0 : i32
    return %1, %arg0, %c0_i32, %c0_i32_0 : i32, i32, i32, i32
  }
  func.func @transform_4(%arg0: i32, %arg1: i32, %arg2: i32) -> (i32, i32) {
    %c0_i32 = arith.constant 0 : i32
    %c0_i32_0 = arith.constant 0 : i32
    return %c0_i32, %arg2 : i32, i32
  }
  func.func @transform_5(%arg0: i32, %arg1: i32, %arg2: i32) -> (i32, i32) {
    %c0_i32 = arith.constant 0 : i32
    %c0_i32_0 = arith.constant 0 : i32
    return %c0_i32, %arg2 : i32, i32
  }
  func.func @transform_6(%arg0: i32, %arg1: i32, %arg2: i32) -> (i32, i32) {
    %c0_i32 = arith.constant 0 : i32
    %c0_i32_0 = arith.constant 0 : i32
    return %c0_i32, %arg2 : i32, i32
  }
  func.func @transform_7(%arg0: i32, %arg1: i32, %arg2: i32) -> (i32, i32) {
    %c0_i32 = arith.constant 0 : i32
    %c0_i32_0 = arith.constant 0 : i32
    return %c0_i32, %arg2 : i32, i32
  }
  func.func @transform_8(%arg0: i32, %arg1: i32, %arg2: i32) -> (i32, i32) {
    %c0_i32 = arith.constant 0 : i32
    %c0_i32_0 = arith.constant 0 : i32
    return %arg2, %c0_i32 : i32, i32
  }
  func.func @transform_9(%arg0: i32, %arg1: i32, %arg2: i32) -> (i32, i32) {
    %c0_i32 = arith.constant 0 : i32
    %c0_i32_0 = arith.constant 0 : i32
    %c0_i32_1 = arith.constant 0 : i32
    return %c0_i32, %c0_i32_0 : i32, i32
  }
  func.func @transform_10(%arg0: i32, %arg1: i32, %arg2: i32) -> (i32, i32, i32, i32) {
    %c2_i32 = arith.constant 2 : i32
    %0 = arith.cmpi sge, %arg1, %c2_i32 : i32
    %1 = arith.extui %0 : i1 to i32
    %c0_i32 = arith.constant 0 : i32
    %c0_i32_0 = arith.constant 0 : i32
    %c0_i32_1 = arith.constant 0 : i32
    return %1, %arg0, %c0_i32, %c0_i32_0 : i32, i32, i32, i32
  }
  func.func @transform_11(%arg0: i32, %arg1: i32, %arg2: i32) -> (i32, i32, i32) {
    %c0_i32 = arith.constant 0 : i32
    %c0_i32_0 = arith.constant 0 : i32
    return %arg0, %arg1, %c0_i32 : i32, i32, i32
  }
}

</mosaic_0001>

<llo_original>
// kernel: sparse_mmdit_block_forward.5
$region0: #{sparse_mmdit_block_forward.5}
  #allocation0 [shape = 'u32[]', space=smem, size = 0x4, offset = 0x4, fixed_abs, tag = 'smem constant byte address 0x4 - core index']
  #allocation1 [shape = 'u32[144,128]{1,0:T(1,128)}', space=vmem, size = 0x12000, scoped, tag = 'internal scratch']
  #allocation2 [shape = 'bf16[32,128]{1,0:T(16,128)(2,1)}', space=vmem, size = 0x2000, scoped, tag = 'scratch operand']
  %s0 = inlined_call_operand.hbm [shape: bf16[2,96,128], index: 0, kind: input, shape index: {}]
  %s1 = inlined_call_operand.hbm [shape: f32[2,1,128], index: 1, kind: input, shape index: {}]
  %s2 = inlined_call_operand.hbm [shape: f32[2,2,1,128], index: 2, kind: input, shape index: {}]
  %s3 = inlined_call_operand.hbm [shape: f32[2,2,1,128], index: 3, kind: input, shape index: {}]
  %s4 = inlined_call_operand.hbm [shape: bf16[2,128,384], index: 4, kind: input, shape index: {}]
  %s5 = inlined_call_operand.hbm [shape: bf16[2,96,384], index: 5, kind: output, shape index: {}]
  %s6 = sld [smem:[#allocation0]]
  $region77: #{sparse_mmdit_block_forward.5} parent=0
    _
  %s8 = ssub.s32 1, %s6
  %s9 = scalar_select 0, %s8, %s6
  $region1: #{sparse_mmdit_block_forward.5} parent=0
    #allocation3 [shape = 'u8[16384]{0}', space=vmem, size = 0x4000, scoped, tag = 'input window, operand 0']
    #allocation4 [shape = 's32[2]{0}', space=sflag, size = 0x8, scoped, tag = 'scoped memory for sparse_mmdit_block_forward.5']
    #allocation5 [shape = 's32[2]{0}', space=sflag, size = 0x8, scoped, tag = 'scoped memory for sparse_mmdit_block_forward.5']
    #allocation6 [shape = 'u8[1024]{0}', space=vmem, size = 0x400, scoped, tag = 'input window, operand 1']
    #allocation7 [shape = 's32[2]{0}', space=sflag, size = 0x8, scoped, tag = 'scoped memory for sparse_mmdit_block_forward.5']
    #allocation8 [shape = 'u8[1024]{0}', space=vmem, size = 0x400, scoped, tag = 'input window, operand 2']
    #allocation9 [shape = 'u8[1024]{0}', space=vmem, size = 0x400, scoped, tag = 'input window, operand 3']
    #allocation10 [shape = 's32[2]{0}', space=sflag, size = 0x8, scoped, tag = 'scoped memory for sparse_mmdit_block_forward.5']
    #allocation11 [shape = 'u8[65536]{0}', space=vmem, size = 0x10000, scoped, tag = 'input window, operand 4']
    #allocation12 [shape = 'u8[16384]{0}', space=vmem, size = 0x4000, scoped, tag = 'output window, operand 0']
    %10 = vsyncpa [#allocation4], 0
    %s11 = scalar_lea.sflag [#allocation4], 1
    %12 = vsyncpa %s11, 0
    %13 = vsyncpa [#allocation7], 0
    %s14 = scalar_lea.sflag [#allocation7], 1
    %15 = vsyncpa %s14, 0
    %16 = vsyncpa [#allocation10], 0
    %s17 = scalar_lea.sflag [#allocation10], 1
    %18 = vsyncpa %s17, 0
    %19 = vsyncpa [#allocation5], 0
    %s20 = scalar_lea.sflag [#allocation5], 1
    %21 = vsyncpa %s20, 0
    loop: start=0, step=1, limit=20
    $region2: #{sparse_mmdit_block_forward.5} parent=1 // loop_pre_header
      _
    $region3: #{sparse_mmdit_block_forward.5} parent=1 // loop_header
      %s23 = sphi 0, %s27
      %p24 = scmp.ge.s32.totalorder %s23, 20
      %s30 = sphi 0, %s49
      %s31 = sphi 0, %s45
      %s32 = sphi 0, %s41
      %s33 = sphi 0, %s30
      %s34 = sphi 0, %s31
      %s35 = sphi 0, %s32
      %s36 = sphi 0, %s33
      %s37 = sphi 0, %s34
      %s38 = sphi 0, %s35
      %s54 = sphi 0, %s56
      %s57 = sphi 0, %s54
      %s58 = sphi 0, %s57
      %s74 = sphi 0, %s58
      %s84 = sphi 0, %s86
      %s87 = sphi 0, %s84
      %s88 = sphi 0, %s87
      %s104 = sphi 0, %s88
      %s116 = sphi 0, %s118
      %s119 = sphi 0, %s116
      %s120 = sphi 0, %s119
      %s136 = sphi 0, %s120
      %s148 = sphi 0, %s150
      %s151 = sphi 0, %s148
      %s152 = sphi 0, %s151
      %s168 = sphi 0, %s152
      %s180 = sphi 0, %s182
      %s183 = sphi 0, %s180
      %s184 = sphi 0, %s183
      %s200 = sphi 0, %s184
      %s210 = sphi 0, %s212
      %s213 = sphi 0, %s210
      %s214 = sphi 0, %s213
      %s230 = sphi 0, %s214
    $region4: #{sparse_mmdit_block_forward.5} parent=1 // loop_header_branch
      %26 = sbr.rel (%p24) target = $region8
    $region5: #{sparse_mmdit_block_forward.5} parent=1 // loop_body
      %s28 = ssub.s32 %s23, 1
      %s29 = ssub.s32 %s23, 2
      %s39 = sadd.s32 1, %s32
      %p40 = scmp.ge.s32.totalorder %s39, 3
      %s41 = scalar_select %p40, 0, %s39
      %s42 = sadd.s32 1, %s31
      %s43 = scalar_select %p40, %s42, %s31
      %p44 = scmp.ge.s32.totalorder %s43, 3
      %s45 = scalar_select %p44, 0, %s43
      %s46 = sadd.s32 1, %s30
      %s47 = scalar_select %p44, %s46, %s30
      %p48 = scmp.ge.s32.totalorder %s47, 2
      %s49 = scalar_select %p48, 0, %s47
      %s50 = ssub.s32 %s30, %s49
      %s51 = ssub.s32 %s31, %s45
      %s52 = sor.u32 %s50, %s51
      %p53 = scmp.eq.s32.totalorder %s52, 0
      %s55 = sadd.s32 %s54, 1
      %s56 = scalar_select %p53, %s54, %s55
      %p59 = pneg %p53
      %p60 = scmp.eq.s32.totalorder %s23, 17
      %p61 = por %p59, %p60
      %p62 = scmp.ne.s32.totalorder %s54, %s57
      %p63 = scmp.eq.s32.totalorder %s23, 0
      %p64 = por %p62, %p63
      %p65 = scmp.ne.s32.totalorder %s54, %s57
      %p66 = scmp.eq.s32.totalorder %s28, 17
      %p67 = por %p65, %p66
      %p68 = scmp.ne.s32.totalorder %s57, %s58
      %p69 = scmp.eq.s32.totalorder %s28, 0
      %p70 = por %p68, %p69
      %p71 = scmp.ne.s32.totalorder %s57, %s58
      %p72 = scmp.eq.s32.totalorder %s29, 17
      %p73 = por %p71, %p72
      %p75 = scmp.ne.s32.totalorder %s58, %s74
      %p76 = scmp.eq.s32.totalorder %s29, 0
      %p77 = por %p75, %p76
      %p78 = scmp.ge.s32.totalorder %s31, 2
      %s79 = scalar_select %p78, 1, 0
      %p80 = scmp.ge.s32.totalorder %s45, 2
      %s81 = scalar_select %p80, 1, 0
      %s82 = ssub.s32 %s79, %s81
      %p83 = scmp.eq.s32.totalorder %s82, 0
      %s85 = sadd.s32 %s84, 1
      %s86 = scalar_select %p83, %s84, %s85
      %p89 = pneg %p83
      %p90 = scmp.eq.s32.totalorder %s23, 17
      %p91 = por %p89, %p90
      %p92 = scmp.ne.s32.totalorder %s84, %s87
      %p93 = scmp.eq.s32.totalorder %s23, 0
      %p94 = por %p92, %p93
      %p95 = scmp.ne.s32.totalorder %s84, %s87
      %p96 = scmp.eq.s32.totalorder %s28, 17
      %p97 = por %p95, %p96
      %p98 = scmp.ne.s32.totalorder %s87, %s88
      %p99 = scmp.eq.s32.totalorder %s28, 0
      %p100 = por %p98, %p99
      %p101 = scmp.ne.s32.totalorder %s87, %s88
      %p102 = scmp.eq.s32.totalorder %s29, 17
      %p103 = por %p101, %p102
      %p105 = scmp.ne.s32.totalorder %s88, %s104
      %p106 = scmp.eq.s32.totalorder %s29, 0
      %p107 = por %p105, %p106
      %p108 = scmp.ge.s32.totalorder %s31, 2
      %s109 = scalar_select %p108, 1, 0
      %p110 = scmp.ge.s32.totalorder %s45, 2
      %s111 = scalar_select %p110, 1, 0
      %s112 = ssub.s32 %s109, %s111
      %s113 = ssub.s32 %s30, %s49
      %s114 = sor.u32 %s112, %s113
      %p115 = scmp.eq.s32.totalorder %s114, 0
      %s117 = sadd.s32 %s116, 1
      %s118 = scalar_select %p115, %s116, %s117
      %p121 = pneg %p115
      %p122 = scmp.eq.s32.totalorder %s23, 17
      %p123 = por %p121, %p122
      %p124 = scmp.ne.s32.totalorder %s116, %s119
      %p125 = scmp.eq.s32.totalorder %s23, 0
      %p126 = por %p124, %p125
      %p127 = scmp.ne.s32.totalorder %s116, %s119
      %p128 = scmp.eq.s32.totalorder %s28, 17
      %p129 = por %p127, %p128
      %p130 = scmp.ne.s32.totalorder %s119, %s120
      %p131 = scmp.eq.s32.totalorder %s28, 0
      %p132 = por %p130, %p131
      %p133 = scmp.ne.s32.totalorder %s119, %s120
      %p134 = scmp.eq.s32.totalorder %s29, 17
      %p135 = por %p133, %p134
      %p137 = scmp.ne.s32.totalorder %s120, %s136
      %p138 = scmp.eq.s32.totalorder %s29, 0
      %p139 = por %p137, %p138
      %p140 = scmp.ge.s32.totalorder %s31, 2
      %s141 = scalar_select %p140, 1, 0
      %p142 = scmp.ge.s32.totalorder %s45, 2
      %s143 = scalar_select %p142, 1, 0
      %s144 = ssub.s32 %s141, %s143
      %s145 = ssub.s32 %s30, %s49
      %s146 = sor.u32 %s144, %s145
      %p147 = scmp.eq.s32.totalorder %s146, 0
      %s149 = sadd.s32 %s148, 1
      %s150 = scalar_select %p147, %s148, %s149
      %p153 = pneg %p147
      %p154 = scmp.eq.s32.totalorder %s23, 17
      %p155 = por %p153, %p154
      %p156 = scmp.ne.s32.totalorder %s148, %s151
      %p157 = scmp.eq.s32.totalorder %s23, 0
      %p158 = por %p156, %p157
      %p159 = scmp.ne.s32.totalorder %s148, %s151
      %p160 = scmp.eq.s32.totalorder %s28, 17
      %p161 = por %p159, %p160
      %p162 = scmp.ne.s32.totalorder %s151, %s152
      %p163 = scmp.eq.s32.totalorder %s28, 0
      %p164 = por %p162, %p163
      %p165 = scmp.ne.s32.totalorder %s151, %s152
      %p166 = scmp.eq.s32.totalorder %s29, 17
      %p167 = por %p165, %p166
      %p169 = scmp.ne.s32.totalorder %s152, %s168
      %p170 = scmp.eq.s32.totalorder %s29, 0
      %p171 = por %p169, %p170
      %p172 = scmp.ge.s32.totalorder %s31, 2
      %s173 = scalar_select %p172, 1, 0
      %p174 = scmp.ge.s32.totalorder %s45, 2
      %s175 = scalar_select %p174, 1, 0
      %s176 = ssub.s32 %s173, %s175
      %s177 = ssub.s32 %s32, %s41
      %s178 = sor.u32 %s176, %s177
      %p179 = scmp.eq.s32.totalorder %s178, 0
      %s181 = sadd.s32 %s180, 1
      %s182 = scalar_select %p179, %s180, %s181
      %p185 = pneg %p179
      %p186 = scmp.eq.s32.totalorder %s23, 17
      %p187 = por %p185, %p186
      %p188 = scmp.ne.s32.totalorder %s180, %s183
      %p189 = scmp.eq.s32.totalorder %s23, 0
      %p190 = por %p188, %p189
      %p191 = scmp.ne.s32.totalorder %s180, %s183
      %p192 = scmp.eq.s32.totalorder %s28, 17
      %p193 = por %p191, %p192
      %p194 = scmp.ne.s32.totalorder %s183, %s184
      %p195 = scmp.eq.s32.totalorder %s28, 0
      %p196 = por %p194, %p195
      %p197 = scmp.ne.s32.totalorder %s183, %s184
      %p198 = scmp.eq.s32.totalorder %s29, 17
      %p199 = por %p197, %p198
      %p201 = scmp.ne.s32.totalorder %s184, %s200
      %p202 = scmp.eq.s32.totalorder %s29, 0
      %p203 = por %p201, %p202
      %s204 = ssub.s32 %s30, %s49
      %s205 = ssub.s32 %s31, %s45
      %s206 = sor.u32 %s204, %s205
      %s207 = ssub.s32 %s32, %s41
      %s208 = sor.u32 %s206, %s207
      %p209 = scmp.eq.s32.totalorder %s208, 0
      %s211 = sadd.s32 %s210, 1
      %s212 = scalar_select %p209, %s210, %s211
      %p215 = pneg %p209
      %p216 = scmp.eq.s32.totalorder %s23, 17
      %p217 = por %p215, %p216
      %p218 = scmp.ne.s32.totalorder %s210, %s213
      %p219 = scmp.eq.s32.totalorder %s23, 0
      %p220 = por %p218, %p219
      %p221 = scmp.ne.s32.totalorder %s210, %s213
      %p222 = scmp.eq.s32.totalorder %s28, 17
      %p223 = por %p221, %p222
      %p224 = scmp.ne.s32.totalorder %s213, %s214
      %p225 = scmp.eq.s32.totalorder %s28, 0
      %p226 = por %p224, %p225
      %p227 = scmp.ne.s32.totalorder %s213, %s214
      %p228 = scmp.eq.s32.totalorder %s29, 17
      %p229 = por %p227, %p228
      %p231 = scmp.ne.s32.totalorder %s214, %s230
      %p232 = scmp.eq.s32.totalorder %s29, 0
      %p233 = por %p231, %p232
      %p234 = scmp.le.s32.totalorder 1, %s23
      %p235 = scmp.lt.s32.totalorder %s23, 19
      %p236 = pnand %p234, %p235
      %p237 = pneg %p236
      // Predicated region
      $region9: #{sparse_mmdit_block_forward.5} parent=5 // pred_check
        _
      $region10: #{sparse_mmdit_block_forward.5} parent=5 // pred_check_branch
        %239 = sbr.rel (%p236) target = $region12
      $region11: #{sparse_mmdit_block_forward.5} parent=5 // pred_region
        %s240 = ssub.s32 %s23, 1
      $region12: #{sparse_mmdit_block_forward.5} parent=5 // pred_fallthru
        _
      %p241 = scmp.lt.s32.totalorder %s23, 18
      // Predicated region
      $region13: #{sparse_mmdit_block_forward.5} parent=5 // pred_check
        %p242 = pneg %p241
      $region14: #{sparse_mmdit_block_forward.5} parent=5 // pred_check_branch
        %244 = sbr.rel (%p242) target = $region16
      $region15: #{sparse_mmdit_block_forward.5} parent=5 // pred_region
        // Predicated region
        $region17: #{sparse_mmdit_block_forward.5} parent=15 // pred_check
          %p245 = pneg %p64
        $region18: #{sparse_mmdit_block_forward.5} parent=15 // pred_check_branch
          %247 = sbr.rel (%p245) target = $region20
        $region19: #{sparse_mmdit_block_forward.5} parent=15 // pred_region
          %s248 = sand.u32 %s54, 1
          %s249 = scalar_lea.sflag [#allocation4], %s248
          %s250 = sand.u32 %s54, 1
          %s251 = smul.addr %s250, 16
          %s252 = scalar_lea.vmem [#allocation3], %s251
          %s253 = smul.u32 4, %s31
          %s255 = ssub.s32 256, 256
          %256 = vsyncadd %s249, %s255
          %s257 = smul.addr %s30, 12
          %s258 = sadd.s32 %s253, %s257
          %s259 = smul.addr %s258, 64
          %s260 = scalar_lea.hbm %s0, %s259
          %s261 = sshll.u32 %s252, 4
          %s262 = int_to_ptr.vmem [resolvable:$true] %s261
          %267 = dma.hbm_to_vmem [thread:$0]  %s260, 256, %s262, %s249, 64, 64, 4
        $region20: #{sparse_mmdit_block_forward.5} parent=15 // pred_fallthru
          _
        // Predicated region
        $region21: #{sparse_mmdit_block_forward.5} parent=15 // pred_check
          %p268 = pneg %p94
        $region22: #{sparse_mmdit_block_forward.5} parent=15 // pred_check_branch
          %270 = sbr.rel (%p268) target = $region24
        $region23: #{sparse_mmdit_block_forward.5} parent=15 // pred_region
          %s271 = sand.u32 %s23, 1
          %s272 = scalar_lea.sflag [#allocation7], %s271
          %s273 = sand.u32 %s84, 1
          %s274 = scalar_lea.vmem [#allocation6], %s273
          %p275 = scmp.ge.s32.totalorder %s31, 2
          %s276 = scalar_select %p275, 1, 0
          %s278 = ssub.s32 16, 16
          %279 = vsyncadd %s272, %s278
          %s280 = smul.addr %s276, 16
          %s281 = scalar_lea.hbm %s1, %s280
          %s283 = sshll.u32 %s274, 4
          %s284 = int_to_ptr.vmem [resolvable:$true] %s283
          %286 = dma.hbm_to_vmem [thread:$0]  %s281, 16, %s284, %s272
        $region24: #{sparse_mmdit_block_forward.5} parent=15 // pred_fallthru
          _
        // Predicated region
        $region25: #{sparse_mmdit_block_forward.5} parent=15 // pred_check
          %p287 = pneg %p126
        $region26: #{sparse_mmdit_block_forward.5} parent=15 // pred_check_branch
          %289 = sbr.rel (%p287) target = $region28
        $region27: #{sparse_mmdit_block_forward.5} parent=15 // pred_region
          %s290 = sand.u32 %s23, 1
          %s291 = scalar_lea.sflag [#allocation7], %s290
          %s292 = sand.u32 %s116, 1
          %s293 = scalar_lea.vmem [#allocation8], %s292
          %p294 = scmp.ge.s32.totalorder %s31, 2
          %s295 = scalar_select %p294, 1, 0
          %s297 = ssub.s32 16, 16
          %298 = vsyncadd %s291, %s297
          %s299 = smul.addr %s295, 2
          %s300 = sadd.s32 %s30, %s299
          %s301 = smul.addr %s300, 16
          %s302 = scalar_lea.hbm %s2, %s301
          %s304 = sshll.u32 %s293, 4
          %s305 = int_to_ptr.vmem [resolvable:$true] %s304
          %307 = dma.hbm_to_vmem [thread:$0]  %s302, 16, %s305, %s291
        $region28: #{sparse_mmdit_block_forward.5} parent=15 // pred_fallthru
          _
        // Predicated region
        $region29: #{sparse_mmdit_block_forward.5} parent=15 // pred_check
          %p308 = pneg %p158
        $region30: #{sparse_mmdit_block_forward.5} parent=15 // pred_check_branch
          %310 = sbr.rel (%p308) target = $region32
        $region31: #{sparse_mmdit_block_forward.5} parent=15 // pred_region
          %s311 = sand.u32 %s23, 1
          %s312 = scalar_lea.sflag [#allocation10], %s311
          %s313 = sand.u32 %s148, 1
          %s314 = scalar_lea.vmem [#allocation9], %s313
          %p315 = scmp.ge.s32.totalorder %s31, 2
          %s316 = scalar_select %p315, 1, 0
          %s318 = ssub.s32 16, 16
          %319 = vsyncadd %s312, %s318
          %s320 = smul.addr %s316, 2
          %s321 = sadd.s32 %s30, %s320
          %s322 = smul.addr %s321, 16
          %s323 = scalar_lea.hbm %s3, %s322
          %s325 = sshll.u32 %s314, 4
          %s326 = int_to_ptr.vmem [resolvable:$true] %s325
          %328 = dma.hbm_to_vmem [thread:$0]  %s323, 16, %s326, %s312
        $region32: #{sparse_mmdit_block_forward.5} parent=15 // pred_fallthru
          _
        // Predicated region
        $region33: #{sparse_mmdit_block_forward.5} parent=15 // pred_check
          %p329 = pneg %p190
        $region34: #{sparse_mmdit_block_forward.5} parent=15 // pred_check_branch
          %331 = sbr.rel (%p329) target = $region36
        $region35: #{sparse_mmdit_block_forward.5} parent=15 // pred_region
          %s332 = sand.u32 %s23, 1
          %s333 = scalar_lea.sflag [#allocation10], %s332
          %s334 = sand.u32 %s180, 1
          %s335 = smul.addr %s334, 64
          %s336 = scalar_lea.vmem [#allocation11], %s335
          %p337 = scmp.ge.s32.totalorder %s31, 2
          %s338 = scalar_select %p337, 1, 0
          %s340 = ssub.s32 1024, 1024
          %341 = vsyncadd %s333, %s340
          %s342 = smul.addr %s338, 48
          %s343 = sadd.s32 %s32, %s342
          %s344 = smul.addr %s343, 64
          %s345 = scalar_lea.hbm %s4, %s344
          %s346 = sshll.u32 %s336, 4
          %s347 = int_to_ptr.vmem [resolvable:$true] %s346
          %352 = dma.hbm_to_vmem [thread:$0]  %s345, 1024, %s347, %s333, 192, 64, 4
        $region36: #{sparse_mmdit_block_forward.5} parent=15 // pred_fallthru
          _
      $region16: #{sparse_mmdit_block_forward.5} parent=5 // pred_fallthru
        _
      %p353 = scmp.le.s32.totalorder 1, %s23
      %p354 = scmp.lt.s32.totalorder %s23, 19
      %p355 = pnand %p353, %p354
      %p356 = pneg %p355
      // Predicated region
      $region37: #{sparse_mmdit_block_forward.5} parent=5 // pred_check
        _
      $region38: #{sparse_mmdit_block_forward.5} parent=5 // pred_check_branch
        %358 = sbr.rel (%p355) target = $region40
      $region39: #{sparse_mmdit_block_forward.5} parent=5 // pred_region
        %s359 = ssub.s32 %s23, 1
        %s360 = sand.u32 %s57, 1
        %s361 = scalar_lea.sflag [#allocation4], %s360
        %s362 = sand.u32 %s57, 1
        %s363 = smul.addr %s362, 16
        %s364 = scalar_lea.vmem [#allocation3], %s363
        // Predicated region
        $region41: #{sparse_mmdit_block_forward.5} parent=39 // pred_check
          %p365 = pneg %p70
        $region42: #{sparse_mmdit_block_forward.5} parent=39 // pred_check_branch
          %367 = sbr.rel (%p365) target = $region44
        $region43: #{sparse_mmdit_block_forward.5} parent=39 // pred_region
          %368 = dma.done %s361, 256
        $region44: #{sparse_mmdit_block_forward.5} parent=39 // pred_fallthru
          _
        %s369 = sand.u32 %s28, 1
        %s370 = scalar_lea.sflag [#allocation7], %s369
        %s371 = sand.u32 %s87, 1
        %s372 = scalar_lea.vmem [#allocation6], %s371
        // Predicated region
        $region45: #{sparse_mmdit_block_forward.5} parent=39 // pred_check
          %p373 = pneg %p100
        $region46: #{sparse_mmdit_block_forward.5} parent=39 // pred_check_branch
          %375 = sbr.rel (%p373) target = $region48
        $region47: #{sparse_mmdit_block_forward.5} parent=39 // pred_region
          %376 = dma.done %s370, 16
        $region48: #{sparse_mmdit_block_forward.5} parent=39 // pred_fallthru
          _
        %s377 = sand.u32 %s28, 1
        %s378 = scalar_lea.sflag [#allocation7], %s377
        %s379 = sand.u32 %s119, 1
        %s380 = scalar_lea.vmem [#allocation8], %s379
        // Predicated region
        $region49: #{sparse_mmdit_block_forward.5} parent=39 // pred_check
          %p381 = pneg %p132
        $region50: #{sparse_mmdit_block_forward.5} parent=39 // pred_check_branch
          %383 = sbr.rel (%p381) target = $region52
        $region51: #{sparse_mmdit_block_forward.5} parent=39 // pred_region
          %384 = dma.done %s378, 16
        $region52: #{sparse_mmdit_block_forward.5} parent=39 // pred_fallthru
          _
        %s385 = sand.u32 %s28, 1
        %s386 = scalar_lea.sflag [#allocation10], %s385
        %s387 = sand.u32 %s151, 1
        %s388 = scalar_lea.vmem [#allocation9], %s387
        // Predicated region
        $region53: #{sparse_mmdit_block_forward.5} parent=39 // pred_check
          %p389 = pneg %p164
        $region54: #{sparse_mmdit_block_forward.5} parent=39 // pred_check_branch
          %391 = sbr.rel (%p389) target = $region56
        $region55: #{sparse_mmdit_block_forward.5} parent=39 // pred_region
          %392 = dma.done %s386, 16
        $region56: #{sparse_mmdit_block_forward.5} parent=39 // pred_fallthru
          _
        %s393 = sand.u32 %s28, 1
        %s394 = scalar_lea.sflag [#allocation10], %s393
        %s395 = sand.u32 %s183, 1
        %s396 = smul.addr %s395, 64
        %s397 = scalar_lea.vmem [#allocation11], %s396
        // Predicated region
        $region57: #{sparse_mmdit_block_forward.5} parent=39 // pred_check
          %p398 = pneg %p196
        $region58: #{sparse_mmdit_block_forward.5} parent=39 // pred_check_branch
          %400 = sbr.rel (%p398) target = $region60
        $region59: #{sparse_mmdit_block_forward.5} parent=39 // pred_region
          %401 = dma.done %s394, 1024
        $region60: #{sparse_mmdit_block_forward.5} parent=39 // pred_fallthru
          _
        %s402 = sand.u32 %s57, 1
        %s403 = scalar_lea.sflag [#allocation4], %s402
        %s404 = sand.u32 %s57, 1
        %s405 = smul.addr %s404, 16
        %s406 = scalar_lea.vmem [#allocation3], %s405
        %p407 = pneg %p70
        %p408 = pneg %p67
        %s409 = sand.u32 %s28, 1
        %s410 = scalar_lea.sflag [#allocation7], %s409
        %s411 = sand.u32 %s87, 1
        %s412 = scalar_lea.vmem [#allocation6], %s411
        %p413 = pneg %p100
        %p414 = pneg %p97
        %s415 = sand.u32 %s28, 1
        %s416 = scalar_lea.sflag [#allocation7], %s415
        %s417 = sand.u32 %s119, 1
        %s418 = scalar_lea.vmem [#allocation8], %s417
        %p419 = pneg %p132
        %p420 = pneg %p129
        %s421 = sand.u32 %s28, 1
        %s422 = scalar_lea.sflag [#allocation10], %s421
        %s423 = sand.u32 %s151, 1
        %s424 = scalar_lea.vmem [#allocation9], %s423
        %p425 = pneg %p164
        %p426 = pneg %p161
        %s427 = sand.u32 %s28, 1
        %s428 = scalar_lea.sflag [#allocation10], %s427
        %s429 = sand.u32 %s183, 1
        %s430 = smul.addr %s429, 64
        %s431 = scalar_lea.vmem [#allocation11], %s430
        %p432 = pneg %p196
        %p433 = pneg %p193
        %p434 = pneg %p226
        %p435 = pneg %p223
        %s436 = sand.u32 %s213, 1
        %s437 = scalar_lea.sflag [#allocation5], %s436
        %s438 = sand.u32 %s213, 1
        %s439 = smul.addr %s438, 16
        %s440 = scalar_lea.vmem [#allocation12], %s439
        %s441 = smul.u32 4, %s34
        %p442 = scmp.ge.s32.totalorder %s34, 2
        %s443 = scalar_select %p442, 1, 0
        %p444 = scmp.ge.s32.totalorder %s34, 2
        %s445 = scalar_select %p444, 1, 0
        %p446 = scmp.ge.s32.totalorder %s34, 2
        %s447 = scalar_select %p446, 1, 0
        %p448 = scmp.ge.s32.totalorder %s34, 2
        %s449 = scalar_select %p448, 1, 0
        %s450 = smul.u32 4, %s34
        %p452 = scmp.eq.s32.totalorder %s35, 0
        // Predicated region
        $region61: #{sparse_mmdit_block_forward.5} parent=39 // pred_check
          %p453 = pneg %p452
        $region62: #{sparse_mmdit_block_forward.5} parent=39 // pred_check_branch
          %455 = sbr.rel (%p453) target = $region64
        $region63: #{sparse_mmdit_block_forward.5} parent=39 // pred_region
          %v456 = vld [vmem:[%s364] sm:$0xf]
          %v457 = vld [vmem:[%s364 + $0x4] sm:$0xf]
          %v458 = vld [vmem:[%s364 + $0x8] sm:$0xf]
          %v459 = vld [vmem:[%s364 + $0xc] sm:$0xf]
          %v460 = vunpack.c.l.bf16 %v456
          %v461 = vunpack.c.l.bf16 %v457
          %v462 = vunpack.c.l.bf16 %v458
          %v463 = vunpack.c.l.bf16 %v459
          %v464 = vmul.f32 %v460, %v460
          %v465 = vmul.f32 %v461, %v461
          %v466 = vmul.f32 %v462, %v462
          %v467 = vmul.f32 %v463, %v463
          %468 = vadd.xlane.f32.xlu0 %v464
          %v469 = vpop.xlane.xlu0 %468
          %470 = vadd.xlane.f32.xlu0 %v465
          %v471 = vpop.xlane.xlu0 %470
          %472 = vadd.xlane.f32.xlu0 %v466
          %v473 = vpop.xlane.xlu0 %472
          %474 = vadd.xlane.f32.xlu0 %v467
          %v475 = vpop.xlane.xlu0 %474
          %v476 = vrcp.pop 128.0
          %v477 = vmul.f32 %v469, %v476
          %v478 = vmul.f32 %v471, %v476
          %v479 = vmul.f32 %v473, %v476
          %v480 = vmul.f32 %v475, %v476
          %v481 = vadd.f32 %v477, 1e-05
          %v482 = vadd.f32 %v478, 1e-05
          %v483 = vadd.f32 %v479, 1e-05
          %v484 = vadd.f32 %v480, 1e-05
          %v485 = vrsqrt.pop %v481
          %v486 = vrsqrt.pop %v482
          %v487 = vrsqrt.pop %v483
          %v488 = vrsqrt.pop %v484
          %v489 = vmul.f32 %v460, %v485
          %v490 = vmul.f32 %v461, %v486
          %v491 = vmul.f32 %v462, %v487
          %v492 = vmul.f32 %v463, %v488
          %v493 = vld [vmem:[%s372] sm:$0x1]
          %v495 = vlaneseq
          %v496 = vshrl.u32 %v495, 7
          %v497 = vsub.s32 0, %v496
          %v498 = vrot.slane %v493, %v497
          %v500 = vmul.f32 %v489, %v498
          %v501 = vmul.f32 %v490, %v498
          %v502 = vmul.f32 %v491, %v498
          %v503 = vmul.f32 %v492, %v498
          %v504 = vld [vmem:[%s380] sm:$0x1]
          %v505 = vadd.f32 %v504, 1.0
          %v507 = vlaneseq
          %v508 = vshrl.u32 %v507, 7
          %v509 = vsub.s32 0, %v508
          %v510 = vrot.slane %v505, %v509
          %v512 = vmul.f32 %v500, %v510
          %v513 = vmul.f32 %v501, %v510
          %v514 = vmul.f32 %v502, %v510
          %v515 = vmul.f32 %v503, %v510
          %v516 = vld [vmem:[%s388] sm:$0x1]
          %v518 = vlaneseq
          %v519 = vshrl.u32 %v518, 7
          %v520 = vsub.s32 0, %v519
          %v521 = vrot.slane %v516, %v520
          %v523 = vadd.f32 %v512, %v521
          %v524 = vadd.f32 %v513, %v521
          %v525 = vadd.f32 %v514, %v521
          %v526 = vadd.f32 %v515, %v521
          %v527 = vpack.c.bf16 %v524, %v523
          %v528 = vpack.c.bf16 %v526, %v525
          %529 = vst [vmem:[#allocation2] sm:$0xff] %v527
          %530 = vst [vmem:[#allocation2 + $0x8] sm:$0xff] %v528
        $region64: #{sparse_mmdit_block_forward.5} parent=39 // pred_fallthru
          _
        %v531 = vld [vmem:[#allocation2] sm:$0xff]
        %v532 = vld [vmem:[#allocation2 + $0x8] sm:$0xff]
        %v533 = vld [vmem:[%s397] sm:$0xf]
        %v534 = vld [vmem:[%s397 + $0x4] sm:$0xf]
        %v535 = vld [vmem:[%s397 + $0x8] sm:$0xf]
        %v536 = vld [vmem:[%s397 + $0xc] sm:$0xf]
        %v537 = vld [vmem:[%s397 + $0x10] sm:$0xf]
        %v538 = vld [vmem:[%s397 + $0x14] sm:$0xf]
        %v539 = vld [vmem:[%s397 + $0x18] sm:$0xf]
        %v540 = vld [vmem:[%s397 + $0x1c] sm:$0xf]
        %v541 = vld [vmem:[%s397 + $0x20] sm:$0xf]
        %v542 = vld [vmem:[%s397 + $0x24] sm:$0xf]
        %v543 = vld [vmem:[%s397 + $0x28] sm:$0xf]
        %v544 = vld [vmem:[%s397 + $0x2c] sm:$0xf]
        %v545 = vld [vmem:[%s397 + $0x30] sm:$0xf]
        %v546 = vld [vmem:[%s397 + $0x34] sm:$0xf]
        %v547 = vld [vmem:[%s397 + $0x38] sm:$0xf]
        %v548 = vld [vmem:[%s397 + $0x3c] sm:$0xf]
        %v565 = vunpack.c.l.b16 %v533
        %v566 = vunpack.c.l.b16 %v534
        %v567 = vunpack.c.l.b16 %v535
        %v568 = vunpack.c.l.b16 %v536
        %v569 = vunpack.c.l.b16 %v537
        %v570 = vunpack.c.l.b16 %v538
        %v571 = vunpack.c.l.b16 %v539
        %v572 = vunpack.c.l.b16 %v540
        %v573 = vunpack.c.l.b16 %v541
        %v574 = vunpack.c.l.b16 %v542
        %v575 = vunpack.c.l.b16 %v543
        %v576 = vunpack.c.l.b16 %v544
        %v577 = vunpack.c.l.b16 %v545
        %v578 = vunpack.c.l.b16 %v546
        %v579 = vunpack.c.l.b16 %v547
        %v580 = vunpack.c.l.b16 %v548
        %v581 = vpack.c.b16 %v566, %v565
        %v582 = vpack.c.b16 %v568, %v567
        %v583 = vpack.c.b16 %v570, %v569
        %v584 = vpack.c.b16 %v572, %v571
        %v585 = vpack.c.b16 %v574, %v573
        %v586 = vpack.c.b16 %v576, %v575
        %v587 = vpack.c.b16 %v578, %v577
        %v588 = vpack.c.b16 %v580, %v579
        %597 = vmatprep.subr.bf16.mxu0 0
        %598 = vmatpush1.bf16.msra.mxu0 %v581
        %599 = vmatprep.subr.bf16.mxu0 0
        %600 = vmatpush1.bf16.msra.mxu0 %v582
        %601 = vmatprep.subr.bf16.mxu0 0
        %602 = vmatpush1.bf16.msra.mxu0 %v583
        %603 = vmatprep.subr.bf16.mxu0 0
        %604 = vmatpush1.bf16.msra.mxu0 %v584
        %605 = vmatprep.subr.bf16.mxu0 0
        %606 = vmatpush1.bf16.msra.mxu0 %v585
        %607 = vmatprep.subr.bf16.mxu0 0
        %608 = vmatpush1.bf16.msra.mxu0 %v586
        %609 = vmatprep.subr.bf16.mxu0 0
        %610 = vmatpush1.bf16.msra.mxu0 %v587
        %611 = vmatprep.subr.bf16.mxu0 0
        %612 = vmatpush1.bf16.msra.mxu0 %v588
        %613 = vmatprep.subr.bf16.mxu0 0
        %614 = vmatpush1.bf16.msra.mxu0 0
        %615 = vmatprep.subr.bf16.mxu0 0
        %616 = vmatpush1.bf16.msra.mxu0 0
        %617 = vmatprep.subr.bf16.mxu0 0
        %618 = vmatpush1.bf16.msra.mxu0 0
        %619 = vmatprep.subr.bf16.mxu0 0
        %620 = vmatpush1.bf16.msra.mxu0 0
        %621 = vmatprep.subr.bf16.mxu0 0
        %622 = vmatpush1.bf16.msra.mxu0 0
        %623 = vmatprep.subr.bf16.mxu0 0
        %624 = vmatpush1.bf16.msra.mxu0 0
        %625 = vmatprep.subr.bf16.mxu0 0
        %626 = vmatpush1.bf16.msra.mxu0 0
        %627 = vmatprep.subr.bf16.mxu0 0
        %628 = vmatpush1.bf16.msra.mxu0 0
        %629 = vmatprep.mubr.bf16.mxu0 0
        %630 = vmatmul.mubr.bf16.gmra.mrb[0].mxu0 %v531
        %v631 = vpop.f32.mrb[0].mxu0
        %v632 = vadd.f32 0.0, %v631
        %v633 = vpop.f32.mrb[0].mxu0
        %v634 = vpop.f32.mrb[0].mxu0
        %v635 = vadd.f32 0.0, %v634
        %v636 = vpop.f32.mrb[0].mxu0
        %637 = vmatprep.mubr.bf16.mxu0 0
        %638 = vmatmul.mubr.bf16.gmra.mrb[0].mxu0 %v532
        %v639 = vpop.f32.mrb[0].mxu0
        %v640 = vadd.f32 0.0, %v639
        %v641 = vpop.f32.mrb[0].mxu0
        %v642 = vpop.f32.mrb[0].mxu0
        %v643 = vadd.f32 0.0, %v642
        %v644 = vpop.f32.mrb[0].mxu0
        %645 = vdwg.mxu0
        %v646 = vpack.c.bf16 %v635, %v632
        %v647 = vpack.c.bf16 %v643, %v640
        %v650 = vunpack.c.l.b16 %v646
        %v651 = vunpack.c.h.b16 %v646
        %v652 = vunpack.c.l.b16 %v647
        %v653 = vunpack.c.h.b16 %v647
        %v654 = vpack.c.b16 %v650, %v650
        %v655 = vpack.c.b16 %v651, %v651
        %v656 = vpack.c.b16 %v652, %v652
        %v657 = vpack.c.b16 %v653, %v653
        %662 = vst [vmem:[%s440] sm:$0xf] %v654
        %663 = vst [vmem:[%s440 + $0x4] sm:$0xf] %v655
        %664 = vst [vmem:[%s440 + $0x8] sm:$0xf] %v656
        %665 = vst [vmem:[%s440 + $0xc] sm:$0xf] %v657
        %s666 = sand.u32 %s213, 1
        %s667 = scalar_lea.sflag [#allocation5], %s666
        %s668 = sand.u32 %s213, 1
        %s669 = smul.addr %s668, 16
        %s670 = scalar_lea.vmem [#allocation12], %s669
        // Predicated region
        $region65: #{sparse_mmdit_block_forward.5} parent=39 // pred_check
          %p671 = pneg %p223
        $region66: #{sparse_mmdit_block_forward.5} parent=39 // pred_check_branch
          %673 = sbr.rel (%p671) target = $region68
        $region67: #{sparse_mmdit_block_forward.5} parent=39 // pred_region
          %s674 = smul.u32 4, %s34
          %s676 = ssub.s32 256, 256
          %677 = vsyncadd %s667, %s676
          %s678 = smul.addr %s674, 3
          %s679 = sadd.s32 %s35, %s678
          %s680 = smul.addr %s33, 36
          %s681 = sadd.s32 %s679, %s680
          %s682 = smul.addr %s681, 64
          %s683 = scalar_lea.hbm %s5, %s682
          %s684 = sshll.u32 %s670, 4
          %s685 = int_to_ptr.vmem [resolvable:$true] %s684
          %690 = dma.vmem_to_hbm [thread:$0]  %s685, 256, %s683, %s667, 64, 192, 4
        $region68: #{sparse_mmdit_block_forward.5} parent=39 // pred_fallthru
          _
      $region40: #{sparse_mmdit_block_forward.5} parent=5 // pred_fallthru
        _
      %p691 = scmp.le.s32.totalorder 2, %s23
      // Predicated region
      $region69: #{sparse_mmdit_block_forward.5} parent=5 // pred_check
        %p692 = pneg %p691
      $region70: #{sparse_mmdit_block_forward.5} parent=5 // pred_check_branch
        %694 = sbr.rel (%p692) target = $region72
      $region71: #{sparse_mmdit_block_forward.5} parent=5 // pred_region
        %s695 = ssub.s32 %s23, 2
        // Predicated region
        $region73: #{sparse_mmdit_block_forward.5} parent=71 // pred_check
          %p696 = pneg %p229
        $region74: #{sparse_mmdit_block_forward.5} parent=71 // pred_check_branch
          %698 = sbr.rel (%p696) target = $region76
        $region75: #{sparse_mmdit_block_forward.5} parent=71 // pred_region
          %s699 = sand.u32 %s214, 1
          %s700 = scalar_lea.sflag [#allocation5], %s699
          %s701 = sand.u32 %s214, 1
          %s702 = smul.addr %s701, 16
          %s703 = scalar_lea.vmem [#allocation12], %s702
          %704 = dma.done %s700, 256
        $region76: #{sparse_mmdit_block_forward.5} parent=71 // pred_fallthru
          _
      $region72: #{sparse_mmdit_block_forward.5} parent=5 // pred_fallthru
        _
    $region6: #{sparse_mmdit_block_forward.5} parent=1 // loop_footer
      %s27 = sadd.s32 1, %s23
    $region7: #{sparse_mmdit_block_forward.5} parent=1 // loop_footer_branch
      %22 = sbr.rel target = $region3
    $region8: #{sparse_mmdit_block_forward.5} parent=1 // loop_exit
      _
    %705 = vsyncpa [#allocation4], 1
    %s706 = scalar_lea.sflag [#allocation4], 1
    %707 = vsyncpa %s706, 1
    %708 = vsyncpa [#allocation7], 1
    %s709 = scalar_lea.sflag [#allocation7], 1
    %710 = vsyncpa %s709, 1
    %711 = vsyncpa [#allocation10], 1
    %s712 = scalar_lea.sflag [#allocation10], 1
    %713 = vsyncpa %s712, 1
    %714 = vsyncpa [#allocation5], 1
    %s715 = scalar_lea.sflag [#allocation5], 1
    %716 = vsyncpa %s715, 1

// kernel: sparse_mmdit_block_forward.7
$region0: #{sparse_mmdit_block_forward.7}
  #allocation0 [shape = 'u32[]', space=smem, size = 0x4, offset = 0x4, fixed_abs, tag = 'smem constant byte address 0x4 - core index']
  #allocation1 [shape = 'u32[144,128]{1,0:T(1,128)}', space=vmem, size = 0x12000, scoped, tag = 'internal scratch']
  #allocation2 [shape = 'f32[32,32]{1,0:T(8,128)}', space=vmem, size = 0x4000, scoped, tag = 'scratch operand']
  #allocation3 [shape = 'f32[32,1]{1,0:T(8,128)}', space=vmem, size = 0x4000, scoped, tag = 'scratch operand']
  #allocation4 [shape = 'f32[32,1]{1,0:T(8,128)}', space=vmem, size = 0x4000, scoped, tag = 'scratch operand']
  %s0 = inlined_call_operand.hbm [shape: bf16[2,4,96,32], index: 0, kind: input, shape index: {}]
  %s1 = inlined_call_operand.hbm [shape: bf16[2,4,96,32], index: 1, kind: input, shape index: {}]
  %s2 = inlined_call_operand.hbm [shape: bf16[2,4,96,32], index: 2, kind: input, shape index: {}]
  %s3 = inlined_call_operand.hbm [shape: bf16[2,4,96,32], index: 3, kind: output, shape index: {}]
  %s4 = sld [smem:[#allocation0]]
  $region65: #{sparse_mmdit_block_forward.7} parent=0
    _
  %s6 = ssub.s32 1, %s4
  %s7 = scalar_select 0, %s6, %s4
  $region1: #{sparse_mmdit_block_forward.7} parent=0
    #allocation5 [shape = 'u8[16384]{0}', space=vmem, size = 0x4000, scoped, tag = 'input window, operand 0']
    #allocation6 [shape = 's32[2]{0}', space=sflag, size = 0x8, scoped, tag = 'scoped memory for sparse_mmdit_block_forward.7']
    #allocation7 [shape = 's32[2]{0}', space=sflag, size = 0x8, scoped, tag = 'scoped memory for sparse_mmdit_block_forward.7']
    #allocation8 [shape = 'u8[16384]{0}', space=vmem, size = 0x4000, scoped, tag = 'input window, operand 1']
    #allocation9 [shape = 's32[2]{0}', space=sflag, size = 0x8, scoped, tag = 'scoped memory for sparse_mmdit_block_forward.7']
    #allocation10 [shape = 'u8[16384]{0}', space=vmem, size = 0x4000, scoped, tag = 'input window, operand 2']
    #allocation11 [shape = 'u8[16384]{0}', space=vmem, size = 0x4000, scoped, tag = 'output window, operand 0']
    %8 = vsyncpa [#allocation6], 0
    %s9 = scalar_lea.sflag [#allocation6], 1
    %10 = vsyncpa %s9, 0
    %11 = vsyncpa [#allocation9], 0
    %s12 = scalar_lea.sflag [#allocation9], 1
    %13 = vsyncpa %s12, 0
    %14 = vsyncpa [#allocation7], 0
    %s15 = scalar_lea.sflag [#allocation7], 1
    %16 = vsyncpa %s15, 0
    loop: start=0, step=1, limit=74
    $region2: #{sparse_mmdit_block_forward.7} parent=1 // loop_pre_header
      _
    $region3: #{sparse_mmdit_block_forward.7} parent=1 // loop_header
      %s18 = sphi 0, %s22
      %p19 = scmp.ge.s32.totalorder %s18, 74
      %s25 = sphi 0, %s51
      %s26 = sphi 0, %s47
      %s27 = sphi 0, %s43
      %s28 = sphi 0, %s39
      %s29 = sphi 0, %s25
      %s30 = sphi 0, %s26
      %s31 = sphi 0, %s27
      %s32 = sphi 0, %s28
      %s33 = sphi 0, %s29
      %s34 = sphi 0, %s30
      %s35 = sphi 0, %s31
      %s36 = sphi 0, %s32
      %s58 = sphi 0, %s60
      %s61 = sphi 0, %s58
      %s62 = sphi 0, %s61
      %s78 = sphi 0, %s62
      %s88 = sphi 0, %s90
      %s91 = sphi 0, %s88
      %s92 = sphi 0, %s91
      %s108 = sphi 0, %s92
      %s118 = sphi 0, %s120
      %s121 = sphi 0, %s118
      %s122 = sphi 0, %s121
      %s138 = sphi 0, %s122
      %s148 = sphi 0, %s150
      %s151 = sphi 0, %s148
      %s152 = sphi 0, %s151
      %s168 = sphi 0, %s152
    $region4: #{sparse_mmdit_block_forward.7} parent=1 // loop_header_branch
      %21 = sbr.rel (%p19) target = $region8
    $region5: #{sparse_mmdit_block_forward.7} parent=1 // loop_body
      %s23 = ssub.s32 %s18, 1
      %s24 = ssub.s32 %s18, 2
      %s37 = sadd.s32 1, %s28
      %p38 = scmp.ge.s32.totalorder %s37, 3
      %s39 = scalar_select %p38, 0, %s37
      %s40 = sadd.s32 1, %s27
      %s41 = scalar_select %p38, %s40, %s27
      %p42 = scmp.ge.s32.totalorder %s41, 3
      %s43 = scalar_select %p42, 0, %s41
      %s44 = sadd.s32 1, %s26
      %s45 = scalar_select %p42, %s44, %s26
      %p46 = scmp.ge.s32.totalorder %s45, 4
      %s47 = scalar_select %p46, 0, %s45
      %s48 = sadd.s32 1, %s25
      %s49 = scalar_select %p46, %s48, %s25
      %p50 = scmp.ge.s32.totalorder %s49, 2
      %s51 = scalar_select %p50, 0, %s49
      %s52 = ssub.s32 %s25, %s51
      %s53 = ssub.s32 %s26, %s47
      %s54 = sor.u32 %s52, %s53
      %s55 = ssub.s32 %s27, %s43
      %s56 = sor.u32 %s54, %s55
      %p57 = scmp.eq.s32.totalorder %s56, 0
      %s59 = sadd.s32 %s58, 1
      %s60 = scalar_select %p57, %s58, %s59
      %p63 = pneg %p57
      %p64 = scmp.eq.s32.totalorder %s18, 71
      %p65 = por %p63, %p64
      %p66 = scmp.ne.s32.totalorder %s58, %s61
      %p67 = scmp.eq.s32.totalorder %s18, 0
      %p68 = por %p66, %p67
      %p69 = scmp.ne.s32.totalorder %s58, %s61
      %p70 = scmp.eq.s32.totalorder %s23, 71
      %p71 = por %p69, %p70
      %p72 = scmp.ne.s32.totalorder %s61, %s62
      %p73 = scmp.eq.s32.totalorder %s23, 0
      %p74 = por %p72, %p73
      %p75 = scmp.ne.s32.totalorder %s61, %s62
      %p76 = scmp.eq.s32.totalorder %s24, 71
      %p77 = por %p75, %p76
      %p79 = scmp.ne.s32.totalorder %s62, %s78
      %p80 = scmp.eq.s32.totalorder %s24, 0
      %p81 = por %p79, %p80
      %s82 = ssub.s32 %s25, %s51
      %s83 = ssub.s32 %s26, %s47
      %s84 = sor.u32 %s82, %s83
      %s85 = ssub.s32 %s28, %s39
      %s86 = sor.u32 %s84, %s85
      %p87 = scmp.eq.s32.totalorder %s86, 0
      %s89 = sadd.s32 %s88, 1
      %s90 = scalar_select %p87, %s88, %s89
      %p93 = pneg %p87
      %p94 = scmp.eq.s32.totalorder %s18, 71
      %p95 = por %p93, %p94
      %p96 = scmp.ne.s32.totalorder %s88, %s91
      %p97 = scmp.eq.s32.totalorder %s18, 0
      %p98 = por %p96, %p97
      %p99 = scmp.ne.s32.totalorder %s88, %s91
      %p100 = scmp.eq.s32.totalorder %s23, 71
      %p101 = por %p99, %p100
      %p102 = scmp.ne.s32.totalorder %s91, %s92
      %p103 = scmp.eq.s32.totalorder %s23, 0
      %p104 = por %p102, %p103
      %p105 = scmp.ne.s32.totalorder %s91, %s92
      %p106 = scmp.eq.s32.totalorder %s24, 71
      %p107 = por %p105, %p106
      %p109 = scmp.ne.s32.totalorder %s92, %s108
      %p110 = scmp.eq.s32.totalorder %s24, 0
      %p111 = por %p109, %p110
      %s112 = ssub.s32 %s25, %s51
      %s113 = ssub.s32 %s26, %s47
      %s114 = sor.u32 %s112, %s113
      %s115 = ssub.s32 %s28, %s39
      %s116 = sor.u32 %s114, %s115
      %p117 = scmp.eq.s32.totalorder %s116, 0
      %s119 = sadd.s32 %s118, 1
      %s120 = scalar_select %p117, %s118, %s119
      %p123 = pneg %p117
      %p124 = scmp.eq.s32.totalorder %s18, 71
      %p125 = por %p123, %p124
      %p126 = scmp.ne.s32.totalorder %s118, %s121
      %p127 = scmp.eq.s32.totalorder %s18, 0
      %p128 = por %p126, %p127
      %p129 = scmp.ne.s32.totalorder %s118, %s121
      %p130 = scmp.eq.s32.totalorder %s23, 71
      %p131 = por %p129, %p130
      %p132 = scmp.ne.s32.totalorder %s121, %s122
      %p133 = scmp.eq.s32.totalorder %s23, 0
      %p134 = por %p132, %p133
      %p135 = scmp.ne.s32.totalorder %s121, %s122
      %p136 = scmp.eq.s32.totalorder %s24, 71
      %p137 = por %p135, %p136
      %p139 = scmp.ne.s32.totalorder %s122, %s138
      %p140 = scmp.eq.s32.totalorder %s24, 0
      %p141 = por %p139, %p140
      %s142 = ssub.s32 %s25, %s51
      %s143 = ssub.s32 %s26, %s47
      %s144 = sor.u32 %s142, %s143
      %s145 = ssub.s32 %s27, %s43
      %s146 = sor.u32 %s144, %s145
      %p147 = scmp.eq.s32.totalorder %s146, 0
      %s149 = sadd.s32 %s148, 1
      %s150 = scalar_select %p147, %s148, %s149
      %p153 = pneg %p147
      %p154 = scmp.eq.s32.totalorder %s18, 71
      %p155 = por %p153, %p154
      %p156 = scmp.ne.s32.totalorder %s148, %s151
      %p157 = scmp.eq.s32.totalorder %s18, 0
      %p158 = por %p156, %p157
      %p159 = scmp.ne.s32.totalorder %s148, %s151
      %p160 = scmp.eq.s32.totalorder %s23, 71
      %p161 = por %p159, %p160
      %p162 = scmp.ne.s32.totalorder %s151, %s152
      %p163 = scmp.eq.s32.totalorder %s23, 0
      %p164 = por %p162, %p163
      %p165 = scmp.ne.s32.totalorder %s151, %s152
      %p166 = scmp.eq.s32.totalorder %s24, 71
      %p167 = por %p165, %p166
      %p169 = scmp.ne.s32.totalorder %s152, %s168
      %p170 = scmp.eq.s32.totalorder %s24, 0
      %p171 = por %p169, %p170
      %p172 = scmp.le.s32.totalorder 1, %s18
      %p173 = scmp.lt.s32.totalorder %s18, 73
      %p174 = pnand %p172, %p173
      %p175 = pneg %p174
      // Predicated region
      $region9: #{sparse_mmdit_block_forward.7} parent=5 // pred_check
        _
      $region10: #{sparse_mmdit_block_forward.7} parent=5 // pred_check_branch
        %177 = sbr.rel (%p174) target = $region12
      $region11: #{sparse_mmdit_block_forward.7} parent=5 // pred_region
        %s178 = ssub.s32 %s18, 1
      $region12: #{sparse_mmdit_block_forward.7} parent=5 // pred_fallthru
        _
      %p179 = scmp.lt.s32.totalorder %s18, 72
      // Predicated region
      $region13: #{sparse_mmdit_block_forward.7} parent=5 // pred_check
        %p180 = pneg %p179
      $region14: #{sparse_mmdit_block_forward.7} parent=5 // pred_check_branch
        %182 = sbr.rel (%p180) target = $region16
      $region15: #{sparse_mmdit_block_forward.7} parent=5 // pred_region
        // Predicated region
        $region17: #{sparse_mmdit_block_forward.7} parent=15 // pred_check
          %p183 = pneg %p68
        $region18: #{sparse_mmdit_block_forward.7} parent=15 // pred_check_branch
          %185 = sbr.rel (%p183) target = $region20
        $region19: #{sparse_mmdit_block_forward.7} parent=15 // pred_region
          %s186 = sand.u32 %s58, 1
          %s187 = scalar_lea.sflag [#allocation6], %s186
          %s188 = sand.u32 %s58, 1
          %s189 = smul.addr %s188, 16
          %s190 = scalar_lea.vmem [#allocation5], %s189
          %s191 = smul.u32 4, %s27
          %s193 = ssub.s32 256, 256
          %194 = vsyncadd %s187, %s193
          %s195 = smul.addr %s26, 12
          %s196 = sadd.s32 %s191, %s195
          %s197 = smul.addr %s25, 48
          %s198 = sadd.s32 %s196, %s197
          %s199 = smul.addr %s198, 64
          %s200 = scalar_lea.hbm %s0, %s199
          %s201 = sshll.u32 %s190, 4
          %s202 = int_to_ptr.vmem [resolvable:$true] %s201
          %207 = dma.hbm_to_vmem [thread:$0]  %s200, 256, %s202, %s187, 64, 64, 4
        $region20: #{sparse_mmdit_block_forward.7} parent=15 // pred_fallthru
          _
        // Predicated region
        $region21: #{sparse_mmdit_block_forward.7} parent=15 // pred_check
          %p208 = pneg %p98
        $region22: #{sparse_mmdit_block_forward.7} parent=15 // pred_check_branch
          %210 = sbr.rel (%p208) target = $region24
        $region23: #{sparse_mmdit_block_forward.7} parent=15 // pred_region
          %s211 = sand.u32 %s18, 1
          %s212 = scalar_lea.sflag [#allocation9], %s211
          %s213 = sand.u32 %s88, 1
          %s214 = smul.addr %s213, 16
          %s215 = scalar_lea.vmem [#allocation8], %s214
          %s216 = smul.u32 4, %s28
          %s218 = ssub.s32 256, 256
          %219 = vsyncadd %s212, %s218
          %s220 = smul.addr %s26, 12
          %s221 = sadd.s32 %s216, %s220
          %s222 = smul.addr %s25, 48
          %s223 = sadd.s32 %s221, %s222
          %s224 = smul.addr %s223, 64
          %s225 = scalar_lea.hbm %s1, %s224
          %s226 = sshll.u32 %s215, 4
          %s227 = int_to_ptr.vmem [resolvable:$true] %s226
          %232 = dma.hbm_to_vmem [thread:$0]  %s225, 256, %s227, %s212, 64, 64, 4
        $region24: #{sparse_mmdit_block_forward.7} parent=15 // pred_fallthru
          _
        // Predicated region
        $region25: #{sparse_mmdit_block_forward.7} parent=15 // pred_check
          %p233 = pneg %p128
        $region26: #{sparse_mmdit_block_forward.7} parent=15 // pred_check_branch
          %235 = sbr.rel (%p233) target = $region28
        $region27: #{sparse_mmdit_block_forward.7} parent=15 // pred_region
          %s236 = sand.u32 %s18, 1
          %s237 = scalar_lea.sflag [#allocation9], %s236
          %s238 = sand.u32 %s118, 1
          %s239 = smul.addr %s238, 16
          %s240 = scalar_lea.vmem [#allocation10], %s239
          %s241 = smul.u32 4, %s28
          %s243 = ssub.s32 256, 256
          %244 = vsyncadd %s237, %s243
          %s245 = smul.addr %s26, 12
          %s246 = sadd.s32 %s241, %s245
          %s247 = smul.addr %s25, 48
          %s248 = sadd.s32 %s246, %s247
          %s249 = smul.addr %s248, 64
          %s250 = scalar_lea.hbm %s2, %s249
          %s251 = sshll.u32 %s240, 4
          %s252 = int_to_ptr.vmem [resolvable:$true] %s251
          %257 = dma.hbm_to_vmem [thread:$0]  %s250, 256, %s252, %s237, 64, 64, 4
        $region28: #{sparse_mmdit_block_forward.7} parent=15 // pred_fallthru
          _
      $region16: #{sparse_mmdit_block_forward.7} parent=5 // pred_fallthru
        _
      %p258 = scmp.le.s32.totalorder 1, %s18
      %p259 = scmp.lt.s32.totalorder %s18, 73
      %p260 = pnand %p258, %p259
      %p261 = pneg %p260
      // Predicated region
      $region29: #{sparse_mmdit_block_forward.7} parent=5 // pred_check
        _
      $region30: #{sparse_mmdit_block_forward.7} parent=5 // pred_check_branch
        %263 = sbr.rel (%p260) target = $region32
      $region31: #{sparse_mmdit_block_forward.7} parent=5 // pred_region
        %s264 = ssub.s32 %s18, 1
        %s265 = sand.u32 %s61, 1
        %s266 = scalar_lea.sflag [#allocation6], %s265
        %s267 = sand.u32 %s61, 1
        %s268 = smul.addr %s267, 16
        %s269 = scalar_lea.vmem [#allocation5], %s268
        // Predicated region
        $region33: #{sparse_mmdit_block_forward.7} parent=31 // pred_check
          %p270 = pneg %p74
        $region34: #{sparse_mmdit_block_forward.7} parent=31 // pred_check_branch
          %272 = sbr.rel (%p270) target = $region36
        $region35: #{sparse_mmdit_block_forward.7} parent=31 // pred_region
          %273 = dma.done %s266, 256
        $region36: #{sparse_mmdit_block_forward.7} parent=31 // pred_fallthru
          _
        %s274 = sand.u32 %s23, 1
        %s275 = scalar_lea.sflag [#allocation9], %s274
        %s276 = sand.u32 %s91, 1
        %s277 = smul.addr %s276, 16
        %s278 = scalar_lea.vmem [#allocation8], %s277
        // Predicated region
        $region37: #{sparse_mmdit_block_forward.7} parent=31 // pred_check
          %p279 = pneg %p104
        $region38: #{sparse_mmdit_block_forward.7} parent=31 // pred_check_branch
          %281 = sbr.rel (%p279) target = $region40
        $region39: #{sparse_mmdit_block_forward.7} parent=31 // pred_region
          %282 = dma.done %s275, 256
        $region40: #{sparse_mmdit_block_forward.7} parent=31 // pred_fallthru
          _
        %s283 = sand.u32 %s23, 1
        %s284 = scalar_lea.sflag [#allocation9], %s283
        %s285 = sand.u32 %s121, 1
        %s286 = smul.addr %s285, 16
        %s287 = scalar_lea.vmem [#allocation10], %s286
        // Predicated region
        $region41: #{sparse_mmdit_block_forward.7} parent=31 // pred_check
          %p288 = pneg %p134
        $region42: #{sparse_mmdit_block_forward.7} parent=31 // pred_check_branch
          %290 = sbr.rel (%p288) target = $region44
        $region43: #{sparse_mmdit_block_forward.7} parent=31 // pred_region
          %291 = dma.done %s284, 256
        $region44: #{sparse_mmdit_block_forward.7} parent=31 // pred_fallthru
          _
        %s292 = sand.u32 %s61, 1
        %s293 = scalar_lea.sflag [#allocation6], %s292
        %s294 = sand.u32 %s61, 1
        %s295 = smul.addr %s294, 16
        %s296 = scalar_lea.vmem [#allocation5], %s295
        %p297 = pneg %p74
        %p298 = pneg %p71
        %s299 = sand.u32 %s23, 1
        %s300 = scalar_lea.sflag [#allocation9], %s299
        %s301 = sand.u32 %s91, 1
        %s302 = smul.addr %s301, 16
        %s303 = scalar_lea.vmem [#allocation8], %s302
        %p304 = pneg %p104
        %p305 = pneg %p101
        %s306 = sand.u32 %s23, 1
        %s307 = scalar_lea.sflag [#allocation9], %s306
        %s308 = sand.u32 %s121, 1
        %s309 = smul.addr %s308, 16
        %s310 = scalar_lea.vmem [#allocation10], %s309
        %p311 = pneg %p134
        %p312 = pneg %p131
        %p313 = pneg %p164
        %p314 = pneg %p161
        %s315 = sand.u32 %s151, 1
        %s316 = scalar_lea.sflag [#allocation7], %s315
        %s317 = sand.u32 %s151, 1
        %s318 = smul.addr %s317, 16
        %s319 = scalar_lea.vmem [#allocation11], %s318
        %s320 = smul.u32 4, %s31
        %s321 = smul.u32 4, %s32
        %s322 = smul.u32 4, %s32
        %s323 = smul.u32 4, %s31
        %p325 = scmp.eq.s32.totalorder %s32, 0
        // Predicated region
        $region45: #{sparse_mmdit_block_forward.7} parent=31 // pred_check
          %p326 = pneg %p325
        $region46: #{sparse_mmdit_block_forward.7} parent=31 // pred_check_branch
          %328 = sbr.rel (%p326) target = $region48
        $region47: #{sparse_mmdit_block_forward.7} parent=31 // pred_region
          %vm329 = vcmask 7168
          %330 = vst.msk [vmem:[#allocation3] sm:$0xff] %vm329, -inf
          %331 = vst.msk [vmem:[#allocation3 + $0x8] sm:$0xff] %vm329, -inf
          %332 = vst.msk [vmem:[#allocation3 + $0x10] sm:$0xff] %vm329, -inf
          %333 = vst.msk [vmem:[#allocation3 + $0x18] sm:$0xff] %vm329, -inf
          %334 = vst.msk [vmem:[#allocation4] sm:$0xff] %vm329, 0.0
          %335 = vst.msk [vmem:[#allocation4 + $0x8] sm:$0xff] %vm329, 0.0
          %336 = vst.msk [vmem:[#allocation4 + $0x10] sm:$0xff] %vm329, 0.0
          %337 = vst.msk [vmem:[#allocation4 + $0x18] sm:$0xff] %vm329, 0.0
          %vm338 = vcmask 261120
          %339 = vst.msk [vmem:[#allocation2] sm:$0xff] %vm338, 0.0
          %340 = vst.msk [vmem:[#allocation2 + $0x8] sm:$0xff] %vm338, 0.0
          %341 = vst.msk [vmem:[#allocation2 + $0x10] sm:$0xff] %vm338, 0.0
          %342 = vst.msk [vmem:[#allocation2 + $0x18] sm:$0xff] %vm338, 0.0
        $region48: #{sparse_mmdit_block_forward.7} parent=31 // pred_fallthru
          _
        %v343 = vld [vmem:[%s269] sm:$0xf]
        %v344 = vld [vmem:[%s269 + $0x4] sm:$0xf]
        %v345 = vld [vmem:[%s269 + $0x8] sm:$0xf]
        %v346 = vld [vmem:[%s269 + $0xc] sm:$0xf]
        %v347 = vld [vmem:[%s278] sm:$0xf]
        %v348 = vld [vmem:[%s278 + $0x4] sm:$0xf]
        %v349 = vld [vmem:[%s278 + $0x8] sm:$0xf]
        %v350 = vld [vmem:[%s278 + $0xc] sm:$0xf]
        %v355 = vunpack.c.l.b16 %v343
        %v356 = vunpack.c.l.b16 %v344
        %v357 = vunpack.c.l.b16 %v345
        %v358 = vunpack.c.l.b16 %v346
        %v359 = vpack.c.b16 %v356, %v355
        %v360 = vpack.c.b16 %v358, %v357
        %v365 = vunpack.c.l.b16 %v347
        %v366 = vunpack.c.l.b16 %v348
        %v367 = vunpack.c.l.b16 %v349
        %v368 = vunpack.c.l.b16 %v350
        %v369 = vpack.c.b16 %v366, %v365
        %v370 = vpack.c.b16 %v368, %v367
        %vm371 = vcmask 261120
        %v373 = vsel %vm371, %v359, 0
        %v376 = vsel %vm371, %v360, 0
        %v379 = vsel %vm371, %v369, 0
        %v382 = vsel %vm371, %v370, 0
        %384 = vmatprep.subr.bf16.mxu0 0
        %385 = vmatpush1.bf16.xpose.msra.mxu0 %v379
        %386 = vmatprep.subr.bf16.mxu0 0
        %387 = vmatpush1.bf16.xpose.msra.mxu0 %v382
        %388 = vmatprep.subr.bf16.mxu0 0
        %389 = vmatpush1.bf16.xpose.msra.mxu0 0
        %390 = vmatprep.subr.bf16.mxu0 0
        %391 = vmatpush1.bf16.xpose.msra.mxu0 0
        %392 = vmatprep.subr.bf16.mxu0 0
        %393 = vmatpush1.bf16.xpose.msra.mxu0 0
        %394 = vmatprep.subr.bf16.mxu0 0
        %395 = vmatpush1.bf16.xpose.msra.mxu0 0
        %396 = vmatprep.subr.bf16.mxu0 0
        %397 = vmatpush1.bf16.xpose.msra.mxu0 0
        %398 = vmatprep.subr.bf16.mxu0 0
        %399 = vmatpush1.bf16.xpose.msra.mxu0 0
        %400 = vmatprep.subr.bf16.mxu0 0
        %401 = vmatpush1.bf16.xpose.msra.mxu0 0
        %402 = vmatprep.subr.bf16.mxu0 0
        %403 = vmatpush1.bf16.xpose.msra.mxu0 0
        %404 = vmatprep.subr.bf16.mxu0 0
        %405 = vmatpush1.bf16.xpose.msra.mxu0 0
        %406 = vmatprep.subr.bf16.mxu0 0
        %407 = vmatpush1.bf16.xpose.msra.mxu0 0
        %408 = vmatprep.subr.bf16.mxu0 0
        %409 = vmatpush1.bf16.xpose.msra.mxu0 0
        %410 = vmatprep.subr.bf16.mxu0 0
        %411 = vmatpush1.bf16.xpose.msra.mxu0 0
        %412 = vmatprep.subr.bf16.mxu0 0
        %413 = vmatpush1.bf16.xpose.msra.mxu0 0
        %414 = vmatprep.subr.bf16.mxu0 0
        %415 = vmatpush1.bf16.xpose.msra.mxu0 0
        %416 = vmatprep.mubr.bf16.mxu0 0
        %417 = vmatmul.mubr.bf16.gmra.mrb[0].mxu0 %v373
        %v418 = vpop.f32.mrb[0].mxu0
        %v419 = vadd.f32 0.0, %v418
        %v420 = vpop.f32.mrb[0].mxu0
        %v421 = vpop.f32.mrb[0].mxu0
        %v422 = vadd.f32 0.0, %v421
        %v423 = vpop.f32.mrb[0].mxu0
        %424 = vmatprep.mubr.bf16.mxu0 0
        %425 = vmatmul.mubr.bf16.gmra.mrb[0].mxu0 %v376
        %v426 = vpop.f32.mrb[0].mxu0
        %v427 = vadd.f32 0.0, %v426
        %v428 = vpop.f32.mrb[0].mxu0
        %v429 = vpop.f32.mrb[0].mxu0
        %v430 = vadd.f32 0.0, %v429
        %v431 = vpop.f32.mrb[0].mxu0
        %432 = vdwg.mxu0
        %v433 = vld [vmem:[#allocation3] sm:$0xff]
        %v434 = vld [vmem:[#allocation3 + $0x8] sm:$0xff]
        %v435 = vld [vmem:[#allocation3 + $0x10] sm:$0xff]
        %v436 = vld [vmem:[#allocation3 + $0x18] sm:$0xff]
        %v437 = vsel %vm371, %v419, -inf
        %438 = vmax.xlane.f32.xlu0 %v437
        %v439 = vpop.xlane.xlu0 %438
        %v440 = vsel %vm371, %v422, -inf
        %441 = vmax.xlane.f32.xlu0 %v440
        %v442 = vpop.xlane.xlu0 %441
        %v443 = vsel %vm371, %v427, -inf
        %444 = vmax.xlane.f32.xlu0 %v443
        %v445 = vpop.xlane.xlu0 %444
        %v446 = vsel %vm371, %v430, -inf
        %447 = vmax.xlane.f32.xlu0 %v446
        %v448 = vpop.xlane.xlu0 %447
        %v449 = vmax.f32 %v433, %v439
        %v450 = vmax.f32 %v434, %v442
        %v451 = vmax.f32 %v435, %v445
        %v452 = vmax.f32 %v436, %v448
        %v453 = vsub.f32 %v433, %v449
        %v454 = vsub.f32 %v434, %v450
        %v455 = vsub.f32 %v435, %v451
        %v456 = vsub.f32 %v436, %v452
        %v457 = vmul.f32 %v453, 1.442695
        %v458 = vpow.pop %v457
        %v459 = vmul.f32 %v454, 1.442695
        %v460 = vpow.pop %v459
        %v461 = vmul.f32 %v455, 1.442695
        %v462 = vpow.pop %v461
        %v463 = vmul.f32 %v456, 1.442695
        %v464 = vpow.pop %v463
        %466 = vset.pattern.permute.xlu0 0
        %467 = vperm.xlu0 %466, %v449
        %v468 = vpop.permute.xlu0 %467
        %471 = vset.pattern.permute.xlu0 0
        %472 = vperm.xlu0 %471, %v450
        %v473 = vpop.permute.xlu0 %472
        %476 = vset.pattern.permute.xlu0 0
        %477 = vperm.xlu0 %476, %v451
        %v478 = vpop.permute.xlu0 %477
        %481 = vset.pattern.permute.xlu0 0
        %482 = vperm.xlu0 %481, %v452
        %v483 = vpop.permute.xlu0 %482
        %v485 = vsub.f32 %v419, %v468
        %v486 = vsub.f32 %v422, %v473
        %v487 = vsub.f32 %v427, %v478
        %v488 = vsub.f32 %v430, %v483
        %v489 = vmul.f32 %v485, 1.442695
        %v490 = vpow.pop %v489
        %v491 = vmul.f32 %v486, 1.442695
        %v492 = vpow.pop %v491
        %v493 = vmul.f32 %v487, 1.442695
        %v494 = vpow.pop %v493
        %v495 = vmul.f32 %v488, 1.442695
        %v496 = vpow.pop %v495
        %v497 = vld [vmem:[#allocation4] sm:$0xff]
        %v498 = vld [vmem:[#allocation4 + $0x8] sm:$0xff]
        %v499 = vld [vmem:[#allocation4 + $0x10] sm:$0xff]
        %v500 = vld [vmem:[#allocation4 + $0x18] sm:$0xff]
        %v501 = vmul.f32 %v458, %v497
        %v502 = vmul.f32 %v460, %v498
        %v503 = vmul.f32 %v462, %v499
        %v504 = vmul.f32 %v464, %v500
        %v505 = vsel %vm371, %v490, 0.0
        %506 = vadd.xlane.f32.xlu0 %v505
        %v507 = vpop.xlane.xlu0 %506
        %v508 = vsel %vm371, %v492, 0.0
        %509 = vadd.xlane.f32.xlu0 %v508
        %v510 = vpop.xlane.xlu0 %509
        %v511 = vsel %vm371, %v494, 0.0
        %512 = vadd.xlane.f32.xlu0 %v511
        %v513 = vpop.xlane.xlu0 %512
        %v514 = vsel %vm371, %v496, 0.0
        %515 = vadd.xlane.f32.xlu0 %v514
        %v516 = vpop.xlane.xlu0 %515
        %v517 = vadd.f32 %v501, %v507
        %v518 = vadd.f32 %v502, %v510
        %v519 = vadd.f32 %v503, %v513
        %v520 = vadd.f32 %v504, %v516
        %vm521 = vcmask 7168
        %522 = vst.msk [vmem:[#allocation4] sm:$0xff] %vm521, %v517
        %523 = vst.msk [vmem:[#allocation4 + $0x8] sm:$0xff] %vm521, %v518
        %524 = vst.msk [vmem:[#allocation4 + $0x10] sm:$0xff] %vm521, %v519
        %525 = vst.msk [vmem:[#allocation4 + $0x18] sm:$0xff] %vm521, %v520
        %526 = vst.msk [vmem:[#allocation3] sm:$0xff] %vm521, %v449
        %527 = vst.msk [vmem:[#allocation3 + $0x8] sm:$0xff] %vm521, %v450
        %528 = vst.msk [vmem:[#allocation3 + $0x10] sm:$0xff] %vm521, %v451
        %529 = vst.msk [vmem:[#allocation3 + $0x18] sm:$0xff] %vm521, %v452
        %v530 = vld [vmem:[#allocation2] sm:$0xff]
        %v531 = vld [vmem:[#allocation2 + $0x8] sm:$0xff]
        %v532 = vld [vmem:[#allocation2 + $0x10] sm:$0xff]
        %v533 = vld [vmem:[#allocation2 + $0x18] sm:$0xff]
        %535 = vset.pattern.permute.xlu0 0
        %536 = vperm.xlu0 %535, %v458
        %v537 = vpop.permute.xlu0 %536
        %540 = vset.pattern.permute.xlu0 0
        %541 = vperm.xlu0 %540, %v460
        %v542 = vpop.permute.xlu0 %541
        %545 = vset.pattern.permute.xlu0 0
        %546 = vperm.xlu0 %545, %v462
        %v547 = vpop.permute.xlu0 %546
        %550 = vset.pattern.permute.xlu0 0
        %551 = vperm.xlu0 %550, %v464
        %v552 = vpop.permute.xlu0 %551
        %v554 = vmul.f32 %v537, %v530
        %v555 = vmul.f32 %v542, %v531
        %v556 = vmul.f32 %v547, %v532
        %v557 = vmul.f32 %v552, %v533
        %v558 = vpack.c.bf16 %v492, %v490
        %v559 = vpack.c.bf16 %v496, %v494
        %v560 = vld [vmem:[%s287] sm:$0xf]
        %v561 = vld [vmem:[%s287 + $0x4] sm:$0xf]
        %v562 = vld [vmem:[%s287 + $0x8] sm:$0xf]
        %v563 = vld [vmem:[%s287 + $0xc] sm:$0xf]
        %v568 = vunpack.c.l.b16 %v560
        %v569 = vunpack.c.l.b16 %v561
        %v570 = vunpack.c.l.b16 %v562
        %v571 = vunpack.c.l.b16 %v563
        %v572 = vpack.c.b16 %v569, %v568
        %v573 = vpack.c.b16 %v571, %v570
        %v577 = vsel %vm371, %v558, 0
        %v580 = vsel %vm371, %v559, 0
        %582 = vmatprep.subr.bf16.mxu0 0
        %583 = vmatpush1.bf16.msra.mxu0 %v572
        %584 = vmatprep.subr.bf16.mxu0 0
        %585 = vmatpush1.bf16.msra.mxu0 %v573
        %586 = vmatprep.subr.bf16.mxu0 0
        %587 = vmatpush1.bf16.msra.mxu0 0
        %588 = vmatprep.subr.bf16.mxu0 0
        %589 = vmatpush1.bf16.msra.mxu0 0
        %590 = vmatprep.subr.bf16.mxu0 0
        %591 = vmatpush1.bf16.msra.mxu0 0
        %592 = vmatprep.subr.bf16.mxu0 0
        %593 = vmatpush1.bf16.msra.mxu0 0
        %594 = vmatprep.subr.bf16.mxu0 0
        %595 = vmatpush1.bf16.msra.mxu0 0
        %596 = vmatprep.subr.bf16.mxu0 0
        %597 = vmatpush1.bf16.msra.mxu0 0
        %598 = vmatprep.subr.bf16.mxu0 0
        %599 = vmatpush1.bf16.msra.mxu0 0
        %600 = vmatprep.subr.bf16.mxu0 0
        %601 = vmatpush1.bf16.msra.mxu0 0
        %602 = vmatprep.subr.bf16.mxu0 0
        %603 = vmatpush1.bf16.msra.mxu0 0
        %604 = vmatprep.subr.bf16.mxu0 0
        %605 = vmatpush1.bf16.msra.mxu0 0
        %606 = vmatprep.subr.bf16.mxu0 0
        %607 = vmatpush1.bf16.msra.mxu0 0
        %608 = vmatprep.subr.bf16.mxu0 0
        %609 = vmatpush1.bf16.msra.mxu0 0
        %610 = vmatprep.subr.bf16.mxu0 0
        %611 = vmatpush1.bf16.msra.mxu0 0
        %612 = vmatprep.subr.bf16.mxu0 0
        %613 = vmatpush1.bf16.msra.mxu0 0
        %614 = vmatprep.mubr.bf16.mxu0 0
        %615 = vmatmul.mubr.bf16.gmra.mrb[0].mxu0 %v577
        %v616 = vpop.f32.mrb[0].mxu0
        %v617 = vadd.f32 0.0, %v616
        %v618 = vpop.f32.mrb[0].mxu0
        %v619 = vpop.f32.mrb[0].mxu0
        %v620 = vadd.f32 0.0, %v619
        %v621 = vpop.f32.mrb[0].mxu0
        %622 = vmatprep.mubr.bf16.mxu0 0
        %623 = vmatmul.mubr.bf16.gmra.mrb[0].mxu0 %v580
        %v624 = vpop.f32.mrb[0].mxu0
        %v625 = vadd.f32 0.0, %v624
        %v626 = vpop.f32.mrb[0].mxu0
        %v627 = vpop.f32.mrb[0].mxu0
        %v628 = vadd.f32 0.0, %v627
        %v629 = vpop.f32.mrb[0].mxu0
        %630 = vdwg.mxu0
        %v631 = vadd.f32 %v554, %v617
        %v632 = vadd.f32 %v555, %v620
        %v633 = vadd.f32 %v556, %v625
        %v634 = vadd.f32 %v557, %v628
        %635 = vst.msk [vmem:[#allocation2] sm:$0xff] %vm371, %v631
        %636 = vst.msk [vmem:[#allocation2 + $0x8] sm:$0xff] %vm371, %v632
        %637 = vst.msk [vmem:[#allocation2 + $0x10] sm:$0xff] %vm371, %v633
        %638 = vst.msk [vmem:[#allocation2 + $0x18] sm:$0xff] %vm371, %v634
        %p639 = scmp.eq.s32.totalorder %s32, 2
        // Predicated region
        $region49: #{sparse_mmdit_block_forward.7} parent=31 // pred_check
          %p640 = pneg %p639
        $region50: #{sparse_mmdit_block_forward.7} parent=31 // pred_check_branch
          %642 = sbr.rel (%p640) target = $region52
        $region51: #{sparse_mmdit_block_forward.7} parent=31 // pred_region
          %v643 = vld [vmem:[#allocation2] sm:$0xff]
          %v644 = vld [vmem:[#allocation2 + $0x8] sm:$0xff]
          %v645 = vld [vmem:[#allocation2 + $0x10] sm:$0xff]
          %v646 = vld [vmem:[#allocation2 + $0x18] sm:$0xff]
          %v647 = vld [vmem:[#allocation4] sm:$0xff]
          %v648 = vld [vmem:[#allocation4 + $0x8] sm:$0xff]
          %v649 = vld [vmem:[#allocation4 + $0x10] sm:$0xff]
          %v650 = vld [vmem:[#allocation4 + $0x18] sm:$0xff]
          %652 = vset.pattern.permute.xlu0 0
          %653 = vperm.xlu0 %652, %v647
          %v654 = vpop.permute.xlu0 %653
          %657 = vset.pattern.permute.xlu0 0
          %658 = vperm.xlu0 %657, %v648
          %v659 = vpop.permute.xlu0 %658
          %662 = vset.pattern.permute.xlu0 0
          %663 = vperm.xlu0 %662, %v649
          %v664 = vpop.permute.xlu0 %663
          %667 = vset.pattern.permute.xlu0 0
          %668 = vperm.xlu0 %667, %v650
          %v669 = vpop.permute.xlu0 %668
          %v671 = vrcp.pop %v654
          %v672 = vmul.f32 %v643, %v671
          %v673 = vrcp.pop %v659
          %v674 = vmul.f32 %v644, %v673
          %v675 = vrcp.pop %v664
          %v676 = vmul.f32 %v645, %v675
          %v677 = vrcp.pop %v669
          %v678 = vmul.f32 %v646, %v677
          %v679 = vpack.c.bf16 %v674, %v672
          %v680 = vpack.c.bf16 %v678, %v676
          %v683 = vunpack.c.l.b16 %v679
          %v684 = vunpack.c.h.b16 %v679
          %v685 = vunpack.c.l.b16 %v680
          %v686 = vunpack.c.h.b16 %v680
          %v687 = vpack.c.b16 %v683, %v683
          %v688 = vpack.c.b16 %v684, %v684
          %v689 = vpack.c.b16 %v685, %v685
          %v690 = vpack.c.b16 %v686, %v686
          %vm695 = vcmask 257024
          %696 = vst.msk [vmem:[%s319] sm:$0xf] %vm695, %v687
          %697 = vst.msk [vmem:[%s319 + $0x4] sm:$0xf] %vm695, %v688
          %698 = vst.msk [vmem:[%s319 + $0x8] sm:$0xf] %vm695, %v689
          %699 = vst.msk [vmem:[%s319 + $0xc] sm:$0xf] %vm695, %v690
        $region52: #{sparse_mmdit_block_forward.7} parent=31 // pred_fallthru
          _
        %s700 = sand.u32 %s151, 1
        %s701 = scalar_lea.sflag [#allocation7], %s700
        %s702 = sand.u32 %s151, 1
        %s703 = smul.addr %s702, 16
        %s704 = scalar_lea.vmem [#allocation11], %s703
        // Predicated region
        $region53: #{sparse_mmdit_block_forward.7} parent=31 // pred_check
          %p705 = pneg %p161
        $region54: #{sparse_mmdit_block_forward.7} parent=31 // pred_check_branch
          %707 = sbr.rel (%p705) target = $region56
        $region55: #{sparse_mmdit_block_forward.7} parent=31 // pred_region
          %s708 = smul.u32 4, %s31
          %s710 = ssub.s32 256, 256
          %711 = vsyncadd %s701, %s710
          %s712 = smul.addr %s30, 12
          %s713 = sadd.s32 %s708, %s712
          %s714 = smul.addr %s29, 48
          %s715 = sadd.s32 %s713, %s714
          %s716 = smul.addr %s715, 64
          %s717 = scalar_lea.hbm %s3, %s716
          %s718 = sshll.u32 %s704, 4
          %s719 = int_to_ptr.vmem [resolvable:$true] %s718
          %724 = dma.vmem_to_hbm [thread:$0]  %s719, 256, %s717, %s701, 64, 64, 4
        $region56: #{sparse_mmdit_block_forward.7} parent=31 // pred_fallthru
          _
      $region32: #{sparse_mmdit_block_forward.7} parent=5 // pred_fallthru
        _
      %p725 = scmp.le.s32.totalorder 2, %s18
      // Predicated region
      $region57: #{sparse_mmdit_block_forward.7} parent=5 // pred_check
        %p726 = pneg %p725
      $region58: #{sparse_mmdit_block_forward.7} parent=5 // pred_check_branch
        %728 = sbr.rel (%p726) target = $region60
      $region59: #{sparse_mmdit_block_forward.7} parent=5 // pred_region
        %s729 = ssub.s32 %s18, 2
        // Predicated region
        $region61: #{sparse_mmdit_block_forward.7} parent=59 // pred_check
          %p730 = pneg %p167
        $region62: #{sparse_mmdit_block_forward.7} parent=59 // pred_check_branch
          %732 = sbr.rel (%p730) target = $region64
        $region63: #{sparse_mmdit_block_forward.7} parent=59 // pred_region
          %s733 = sand.u32 %s152, 1
          %s734 = scalar_lea.sflag [#allocation7], %s733
          %s735 = sand.u32 %s152, 1
          %s736 = smul.addr %s735, 16
          %s737 = scalar_lea.vmem [#allocation11], %s736
          %738 = dma.done %s734, 256
        $region64: #{sparse_mmdit_block_forward.7} parent=59 // pred_fallthru
          _
      $region60: #{sparse_mmdit_block_forward.7} parent=5 // pred_fallthru
        _
    $region6: #{sparse_mmdit_block_forward.7} parent=1 // loop_footer
      %s22 = sadd.s32 1, %s18
    $region7: #{sparse_mmdit_block_forward.7} parent=1 // loop_footer_branch
      %17 = sbr.rel target = $region3
    $region8: #{sparse_mmdit_block_forward.7} parent=1 // loop_exit
      _
    %739 = vsyncpa [#allocation6], 1
    %s740 = scalar_lea.sflag [#allocation6], 1
    %741 = vsyncpa %s740, 1
    %742 = vsyncpa [#allocation9], 1
    %s743 = scalar_lea.sflag [#allocation9], 1
    %744 = vsyncpa %s743, 1
    %745 = vsyncpa [#allocation7], 1
    %s746 = scalar_lea.sflag [#allocation7], 1
    %747 = vsyncpa %s746, 1

// kernel: sparse_mmdit_block_forward.8
$region0: #{sparse_mmdit_block_forward.8}
  #allocation0 [shape = 'u32[]', space=smem, size = 0x4, offset = 0x4, fixed_abs, tag = 'smem constant byte address 0x4 - core index']
  #allocation1 [shape = 'u32[144,128]{1,0:T(1,128)}', space=vmem, size = 0x12000, scoped, tag = 'internal scratch']
  #allocation2 [shape = 'f32[32,128]{1,0:T(8,128)}', space=vmem, size = 0x4000, scoped, tag = 'scratch operand']
  %s0 = inlined_call_operand.hbm [shape: bf16[2,4,96,32], index: 0, kind: input, shape index: {}]
  %s1 = inlined_call_operand.hbm [shape: bf16[2,4,32,128], index: 1, kind: input, shape index: {}]
  %s2 = inlined_call_operand.hbm [shape: f32[2,1,128], index: 2, kind: input, shape index: {}]
  %s3 = inlined_call_operand.hbm [shape: bf16[2,96,128], index: 3, kind: input, shape index: {}]
  %s4 = inlined_call_operand.hbm [shape: f32[2,2,1,128], index: 4, kind: input, shape index: {}]
  %s5 = inlined_call_operand.hbm [shape: bf16[2,96,128], index: 5, kind: output, shape index: {}]
  %s6 = sld [smem:[#allocation0]]
  $region81: #{sparse_mmdit_block_forward.8} parent=0
    _
  %s8 = ssub.s32 1, %s6
  %s9 = scalar_select 0, %s8, %s6
  $region1: #{sparse_mmdit_block_forward.8} parent=0
    #allocation3 [shape = 'u8[16384]{0}', space=vmem, size = 0x4000, scoped, tag = 'input window, operand 0']
    #allocation4 [shape = 's32[2]{0}', space=sflag, size = 0x8, scoped, tag = 'scoped memory for sparse_mmdit_block_forward.8']
    #allocation5 [shape = 's32[2]{0}', space=sflag, size = 0x8, scoped, tag = 'scoped memory for sparse_mmdit_block_forward.8']
    #allocation6 [shape = 'u8[16384]{0}', space=vmem, size = 0x4000, scoped, tag = 'input window, operand 1']
    #allocation7 [shape = 's32[2]{0}', space=sflag, size = 0x8, scoped, tag = 'scoped memory for sparse_mmdit_block_forward.8']
    #allocation8 [shape = 'u8[1024]{0}', space=vmem, size = 0x400, scoped, tag = 'input window, operand 2']
    #allocation9 [shape = 'u8[16384]{0}', space=vmem, size = 0x4000, scoped, tag = 'input window, operand 3']
    #allocation10 [shape = 's32[2]{0}', space=sflag, size = 0x8, scoped, tag = 'scoped memory for sparse_mmdit_block_forward.8']
    #allocation11 [shape = 'u8[1024]{0}', space=vmem, size = 0x400, scoped, tag = 'input window, operand 4']
    #allocation12 [shape = 'u8[16384]{0}', space=vmem, size = 0x4000, scoped, tag = 'output window, operand 0']
    %10 = vsyncpa [#allocation4], 0
    %s11 = scalar_lea.sflag [#allocation4], 1
    %12 = vsyncpa %s11, 0
    %13 = vsyncpa [#allocation7], 0
    %s14 = scalar_lea.sflag [#allocation7], 1
    %15 = vsyncpa %s14, 0
    %16 = vsyncpa [#allocation10], 0
    %s17 = scalar_lea.sflag [#allocation10], 1
    %18 = vsyncpa %s17, 0
    %19 = vsyncpa [#allocation5], 0
    %s20 = scalar_lea.sflag [#allocation5], 1
    %21 = vsyncpa %s20, 0
    loop: start=0, step=1, limit=26
    $region2: #{sparse_mmdit_block_forward.8} parent=1 // loop_pre_header
      _
    $region3: #{sparse_mmdit_block_forward.8} parent=1 // loop_header
      %s23 = sphi 0, %s27
      %p24 = scmp.ge.s32.totalorder %s23, 26
      %s30 = sphi 0, %s49
      %s31 = sphi 0, %s45
      %s32 = sphi 0, %s41
      %s33 = sphi 0, %s30
      %s34 = sphi 0, %s31
      %s35 = sphi 0, %s32
      %s36 = sphi 0, %s33
      %s37 = sphi 0, %s34
      %s38 = sphi 0, %s35
      %s56 = sphi 0, %s58
      %s59 = sphi 0, %s56
      %s60 = sphi 0, %s59
      %s76 = sphi 0, %s60
      %s88 = sphi 0, %s90
      %s91 = sphi 0, %s88
      %s92 = sphi 0, %s91
      %s108 = sphi 0, %s92
      %s118 = sphi 0, %s120
      %s121 = sphi 0, %s118
      %s122 = sphi 0, %s121
      %s138 = sphi 0, %s122
      %s146 = sphi 0, %s148
      %s149 = sphi 0, %s146
      %s150 = sphi 0, %s149
      %s166 = sphi 0, %s150
      %s178 = sphi 0, %s180
      %s181 = sphi 0, %s178
      %s182 = sphi 0, %s181
      %s198 = sphi 0, %s182
      %s206 = sphi 0, %s208
      %s209 = sphi 0, %s206
      %s210 = sphi 0, %s209
      %s226 = sphi 0, %s210
    $region4: #{sparse_mmdit_block_forward.8} parent=1 // loop_header_branch
      %26 = sbr.rel (%p24) target = $region8
    $region5: #{sparse_mmdit_block_forward.8} parent=1 // loop_body
      %s28 = ssub.s32 %s23, 1
      %s29 = ssub.s32 %s23, 2
      %s39 = sadd.s32 1, %s32
      %p40 = scmp.ge.s32.totalorder %s39, 4
      %s41 = scalar_select %p40, 0, %s39
      %s42 = sadd.s32 1, %s31
      %s43 = scalar_select %p40, %s42, %s31
      %p44 = scmp.ge.s32.totalorder %s43, 3
      %s45 = scalar_select %p44, 0, %s43
      %s46 = sadd.s32 1, %s30
      %s47 = scalar_select %p44, %s46, %s30
      %p48 = scmp.ge.s32.totalorder %s47, 2
      %s49 = scalar_select %p48, 0, %s47
      %s50 = ssub.s32 %s30, %s49
      %s51 = ssub.s32 %s32, %s41
      %s52 = sor.u32 %s50, %s51
      %s53 = ssub.s32 %s31, %s45
      %s54 = sor.u32 %s52, %s53
      %p55 = scmp.eq.s32.totalorder %s54, 0
      %s57 = sadd.s32 %s56, 1
      %s58 = scalar_select %p55, %s56, %s57
      %p61 = pneg %p55
      %p62 = scmp.eq.s32.totalorder %s23, 23
      %p63 = por %p61, %p62
      %p64 = scmp.ne.s32.totalorder %s56, %s59
      %p65 = scmp.eq.s32.totalorder %s23, 0
      %p66 = por %p64, %p65
      %p67 = scmp.ne.s32.totalorder %s56, %s59
      %p68 = scmp.eq.s32.totalorder %s28, 23
      %p69 = por %p67, %p68
      %p70 = scmp.ne.s32.totalorder %s59, %s60
      %p71 = scmp.eq.s32.totalorder %s28, 0
      %p72 = por %p70, %p71
      %p73 = scmp.ne.s32.totalorder %s59, %s60
      %p74 = scmp.eq.s32.totalorder %s29, 23
      %p75 = por %p73, %p74
      %p77 = scmp.ne.s32.totalorder %s60, %s76
      %p78 = scmp.eq.s32.totalorder %s29, 0
      %p79 = por %p77, %p78
      %p80 = scmp.ge.s32.totalorder %s31, 2
      %s81 = scalar_select %p80, 1, 0
      %p82 = scmp.ge.s32.totalorder %s45, 2
      %s83 = scalar_select %p82, 1, 0
      %s84 = ssub.s32 %s81, %s83
      %s85 = ssub.s32 %s32, %s41
      %s86 = sor.u32 %s84, %s85
      %p87 = scmp.eq.s32.totalorder %s86, 0
      %s89 = sadd.s32 %s88, 1
      %s90 = scalar_select %p87, %s88, %s89
      %p93 = pneg %p87
      %p94 = scmp.eq.s32.totalorder %s23, 23
      %p95 = por %p93, %p94
      %p96 = scmp.ne.s32.totalorder %s88, %s91
      %p97 = scmp.eq.s32.totalorder %s23, 0
      %p98 = por %p96, %p97
      %p99 = scmp.ne.s32.totalorder %s88, %s91
      %p100 = scmp.eq.s32.totalorder %s28, 23
      %p101 = por %p99, %p100
      %p102 = scmp.ne.s32.totalorder %s91, %s92
      %p103 = scmp.eq.s32.totalorder %s28, 0
      %p104 = por %p102, %p103
      %p105 = scmp.ne.s32.totalorder %s91, %s92
      %p106 = scmp.eq.s32.totalorder %s29, 23
      %p107 = por %p105, %p106
      %p109 = scmp.ne.s32.totalorder %s92, %s108
      %p110 = scmp.eq.s32.totalorder %s29, 0
      %p111 = por %p109, %p110
      %p112 = scmp.ge.s32.totalorder %s31, 2
      %s113 = scalar_select %p112, 1, 0
      %p114 = scmp.ge.s32.totalorder %s45, 2
      %s115 = scalar_select %p114, 1, 0
      %s116 = ssub.s32 %s113, %s115
      %p117 = scmp.eq.s32.totalorder %s116, 0
      %s119 = sadd.s32 %s118, 1
      %s120 = scalar_select %p117, %s118, %s119
      %p123 = pneg %p117
      %p124 = scmp.eq.s32.totalorder %s23, 23
      %p125 = por %p123, %p124
      %p126 = scmp.ne.s32.totalorder %s118, %s121
      %p127 = scmp.eq.s32.totalorder %s23, 0
      %p128 = por %p126, %p127
      %p129 = scmp.ne.s32.totalorder %s118, %s121
      %p130 = scmp.eq.s32.totalorder %s28, 23
      %p131 = por %p129, %p130
      %p132 = scmp.ne.s32.totalorder %s121, %s122
      %p133 = scmp.eq.s32.totalorder %s28, 0
      %p134 = por %p132, %p133
      %p135 = scmp.ne.s32.totalorder %s121, %s122
      %p136 = scmp.eq.s32.totalorder %s29, 23
      %p137 = por %p135, %p136
      %p139 = scmp.ne.s32.totalorder %s122, %s138
      %p140 = scmp.eq.s32.totalorder %s29, 0
      %p141 = por %p139, %p140
      %s142 = ssub.s32 %s30, %s49
      %s143 = ssub.s32 %s31, %s45
      %s144 = sor.u32 %s142, %s143
      %p145 = scmp.eq.s32.totalorder %s144, 0
      %s147 = sadd.s32 %s146, 1
      %s148 = scalar_select %p145, %s146, %s147
      %p151 = pneg %p145
      %p152 = scmp.eq.s32.totalorder %s23, 23
      %p153 = por %p151, %p152
      %p154 = scmp.ne.s32.totalorder %s146, %s149
      %p155 = scmp.eq.s32.totalorder %s23, 0
      %p156 = por %p154, %p155
      %p157 = scmp.ne.s32.totalorder %s146, %s149
      %p158 = scmp.eq.s32.totalorder %s28, 23
      %p159 = por %p157, %p158
      %p160 = scmp.ne.s32.totalorder %s149, %s150
      %p161 = scmp.eq.s32.totalorder %s28, 0
      %p162 = por %p160, %p161
      %p163 = scmp.ne.s32.totalorder %s149, %s150
      %p164 = scmp.eq.s32.totalorder %s29, 23
      %p165 = por %p163, %p164
      %p167 = scmp.ne.s32.totalorder %s150, %s166
      %p168 = scmp.eq.s32.totalorder %s29, 0
      %p169 = por %p167, %p168
      %p170 = scmp.ge.s32.totalorder %s31, 2
      %s171 = scalar_select %p170, 1, 0
      %p172 = scmp.ge.s32.totalorder %s45, 2
      %s173 = scalar_select %p172, 1, 0
      %s174 = ssub.s32 %s171, %s173
      %s175 = ssub.s32 %s30, %s49
      %s176 = sor.u32 %s174, %s175
      %p177 = scmp.eq.s32.totalorder %s176, 0
      %s179 = sadd.s32 %s178, 1
      %s180 = scalar_select %p177, %s178, %s179
      %p183 = pneg %p177
      %p184 = scmp.eq.s32.totalorder %s23, 23
      %p185 = por %p183, %p184
      %p186 = scmp.ne.s32.totalorder %s178, %s181
      %p187 = scmp.eq.s32.totalorder %s23, 0
      %p188 = por %p186, %p187
      %p189 = scmp.ne.s32.totalorder %s178, %s181
      %p190 = scmp.eq.s32.totalorder %s28, 23
      %p191 = por %p189, %p190
      %p192 = scmp.ne.s32.totalorder %s181, %s182
      %p193 = scmp.eq.s32.totalorder %s28, 0
      %p194 = por %p192, %p193
      %p195 = scmp.ne.s32.totalorder %s181, %s182
      %p196 = scmp.eq.s32.totalorder %s29, 23
      %p197 = por %p195, %p196
      %p199 = scmp.ne.s32.totalorder %s182, %s198
      %p200 = scmp.eq.s32.totalorder %s29, 0
      %p201 = por %p199, %p200
      %s202 = ssub.s32 %s30, %s49
      %s203 = ssub.s32 %s31, %s45
      %s204 = sor.u32 %s202, %s203
      %p205 = scmp.eq.s32.totalorder %s204, 0
      %s207 = sadd.s32 %s206, 1
      %s208 = scalar_select %p205, %s206, %s207
      %p211 = pneg %p205
      %p212 = scmp.eq.s32.totalorder %s23, 23
      %p213 = por %p211, %p212
      %p214 = scmp.ne.s32.totalorder %s206, %s209
      %p215 = scmp.eq.s32.totalorder %s23, 0
      %p216 = por %p214, %p215
      %p217 = scmp.ne.s32.totalorder %s206, %s209
      %p218 = scmp.eq.s32.totalorder %s28, 23
      %p219 = por %p217, %p218
      %p220 = scmp.ne.s32.totalorder %s209, %s210
      %p221 = scmp.eq.s32.totalorder %s28, 0
      %p222 = por %p220, %p221
      %p223 = scmp.ne.s32.totalorder %s209, %s210
      %p224 = scmp.eq.s32.totalorder %s29, 23
      %p225 = por %p223, %p224
      %p227 = scmp.ne.s32.totalorder %s210, %s226
      %p228 = scmp.eq.s32.totalorder %s29, 0
      %p229 = por %p227, %p228
      %p230 = scmp.le.s32.totalorder 1, %s23
      %p231 = scmp.lt.s32.totalorder %s23, 25
      %p232 = pnand %p230, %p231
      %p233 = pneg %p232
      // Predicated region
      $region9: #{sparse_mmdit_block_forward.8} parent=5 // pred_check
        _
      $region10: #{sparse_mmdit_block_forward.8} parent=5 // pred_check_branch
        %235 = sbr.rel (%p232) target = $region12
      $region11: #{sparse_mmdit_block_forward.8} parent=5 // pred_region
        %s236 = ssub.s32 %s23, 1
      $region12: #{sparse_mmdit_block_forward.8} parent=5 // pred_fallthru
        _
      %p237 = scmp.lt.s32.totalorder %s23, 24
      // Predicated region
      $region13: #{sparse_mmdit_block_forward.8} parent=5 // pred_check
        %p238 = pneg %p237
      $region14: #{sparse_mmdit_block_forward.8} parent=5 // pred_check_branch
        %240 = sbr.rel (%p238) target = $region16
      $region15: #{sparse_mmdit_block_forward.8} parent=5 // pred_region
        // Predicated region
        $region17: #{sparse_mmdit_block_forward.8} parent=15 // pred_check
          %p241 = pneg %p66
        $region18: #{sparse_mmdit_block_forward.8} parent=15 // pred_check_branch
          %243 = sbr.rel (%p241) target = $region20
        $region19: #{sparse_mmdit_block_forward.8} parent=15 // pred_region
          %s244 = sand.u32 %s56, 1
          %s245 = scalar_lea.sflag [#allocation4], %s244
          %s246 = sand.u32 %s56, 1
          %s247 = smul.addr %s246, 16
          %s248 = scalar_lea.vmem [#allocation3], %s247
          %s249 = smul.u32 4, %s31
          %s251 = ssub.s32 256, 256
          %252 = vsyncadd %s245, %s251
          %s253 = smul.addr %s32, 12
          %s254 = sadd.s32 %s249, %s253
          %s255 = smul.addr %s30, 48
          %s256 = sadd.s32 %s254, %s255
          %s257 = smul.addr %s256, 64
          %s258 = scalar_lea.hbm %s0, %s257
          %s259 = sshll.u32 %s248, 4
          %s260 = int_to_ptr.vmem [resolvable:$true] %s259
          %265 = dma.hbm_to_vmem [thread:$0]  %s258, 256, %s260, %s245, 64, 64, 4
        $region20: #{sparse_mmdit_block_forward.8} parent=15 // pred_fallthru
          _
        // Predicated region
        $region21: #{sparse_mmdit_block_forward.8} parent=15 // pred_check
          %p266 = pneg %p98
        $region22: #{sparse_mmdit_block_forward.8} parent=15 // pred_check_branch
          %268 = sbr.rel (%p266) target = $region24
        $region23: #{sparse_mmdit_block_forward.8} parent=15 // pred_region
          %s269 = sand.u32 %s23, 1
          %s270 = scalar_lea.sflag [#allocation7], %s269
          %s271 = sand.u32 %s88, 1
          %s272 = smul.addr %s271, 16
          %s273 = scalar_lea.vmem [#allocation6], %s272
          %p274 = scmp.ge.s32.totalorder %s31, 2
          %s275 = scalar_select %p274, 1, 0
          %s277 = ssub.s32 256, 256
          %278 = vsyncadd %s270, %s277
          %s279 = smul.addr %s32, 4
          %s280 = smul.addr %s275, 16
          %s281 = sadd.s32 %s279, %s280
          %s282 = smul.addr %s281, 64
          %s283 = scalar_lea.hbm %s1, %s282
          %s284 = sshll.u32 %s273, 4
          %s285 = int_to_ptr.vmem [resolvable:$true] %s284
          %290 = dma.hbm_to_vmem [thread:$0]  %s283, 256, %s285, %s270, 64, 64, 4
        $region24: #{sparse_mmdit_block_forward.8} parent=15 // pred_fallthru
          _
        // Predicated region
        $region25: #{sparse_mmdit_block_forward.8} parent=15 // pred_check
          %p291 = pneg %p128
        $region26: #{sparse_mmdit_block_forward.8} parent=15 // pred_check_branch
          %293 = sbr.rel (%p291) target = $region28
        $region27: #{sparse_mmdit_block_forward.8} parent=15 // pred_region
          %s294 = sand.u32 %s23, 1
          %s295 = scalar_lea.sflag [#allocation7], %s294
          %s296 = sand.u32 %s118, 1
          %s297 = scalar_lea.vmem [#allocation8], %s296
          %p298 = scmp.ge.s32.totalorder %s31, 2
          %s299 = scalar_select %p298, 1, 0
          %s301 = ssub.s32 16, 16
          %302 = vsyncadd %s295, %s301
          %s303 = smul.addr %s299, 16
          %s304 = scalar_lea.hbm %s2, %s303
          %s306 = sshll.u32 %s297, 4
          %s307 = int_to_ptr.vmem [resolvable:$true] %s306
          %309 = dma.hbm_to_vmem [thread:$0]  %s304, 16, %s307, %s295
        $region28: #{sparse_mmdit_block_forward.8} parent=15 // pred_fallthru
          _
        // Predicated region
        $region29: #{sparse_mmdit_block_forward.8} parent=15 // pred_check
          %p310 = pneg %p156
        $region30: #{sparse_mmdit_block_forward.8} parent=15 // pred_check_branch
          %312 = sbr.rel (%p310) target = $region32
        $region31: #{sparse_mmdit_block_forward.8} parent=15 // pred_region
          %s313 = sand.u32 %s23, 1
          %s314 = scalar_lea.sflag [#allocation10], %s313
          %s315 = sand.u32 %s146, 1
          %s316 = smul.addr %s315, 16
          %s317 = scalar_lea.vmem [#allocation9], %s316
          %s318 = smul.u32 4, %s31
          %s320 = ssub.s32 256, 256
          %321 = vsyncadd %s314, %s320
          %s322 = smul.addr %s30, 12
          %s323 = sadd.s32 %s318, %s322
          %s324 = smul.addr %s323, 64
          %s325 = scalar_lea.hbm %s3, %s324
          %s326 = sshll.u32 %s317, 4
          %s327 = int_to_ptr.vmem [resolvable:$true] %s326
          %332 = dma.hbm_to_vmem [thread:$0]  %s325, 256, %s327, %s314, 64, 64, 4
        $region32: #{sparse_mmdit_block_forward.8} parent=15 // pred_fallthru
          _
        // Predicated region
        $region33: #{sparse_mmdit_block_forward.8} parent=15 // pred_check
          %p333 = pneg %p188
        $region34: #{sparse_mmdit_block_forward.8} parent=15 // pred_check_branch
          %335 = sbr.rel (%p333) target = $region36
        $region35: #{sparse_mmdit_block_forward.8} parent=15 // pred_region
          %s336 = sand.u32 %s23, 1
          %s337 = scalar_lea.sflag [#allocation10], %s336
          %s338 = sand.u32 %s178, 1
          %s339 = scalar_lea.vmem [#allocation11], %s338
          %p340 = scmp.ge.s32.totalorder %s31, 2
          %s341 = scalar_select %p340, 1, 0
          %s343 = ssub.s32 16, 16
          %344 = vsyncadd %s337, %s343
          %s345 = smul.addr %s341, 2
          %s346 = sadd.s32 %s30, %s345
          %s347 = smul.addr %s346, 16
          %s348 = scalar_lea.hbm %s4, %s347
          %s350 = sshll.u32 %s339, 4
          %s351 = int_to_ptr.vmem [resolvable:$true] %s350
          %353 = dma.hbm_to_vmem [thread:$0]  %s348, 16, %s351, %s337
        $region36: #{sparse_mmdit_block_forward.8} parent=15 // pred_fallthru
          _
      $region16: #{sparse_mmdit_block_forward.8} parent=5 // pred_fallthru
        _
      %p354 = scmp.le.s32.totalorder 1, %s23
      %p355 = scmp.lt.s32.totalorder %s23, 25
      %p356 = pnand %p354, %p355
      %p357 = pneg %p356
      // Predicated region
      $region37: #{sparse_mmdit_block_forward.8} parent=5 // pred_check
        _
      $region38: #{sparse_mmdit_block_forward.8} parent=5 // pred_check_branch
        %359 = sbr.rel (%p356) target = $region40
      $region39: #{sparse_mmdit_block_forward.8} parent=5 // pred_region
        %s360 = ssub.s32 %s23, 1
        %s361 = sand.u32 %s59, 1
        %s362 = scalar_lea.sflag [#allocation4], %s361
        %s363 = sand.u32 %s59, 1
        %s364 = smul.addr %s363, 16
        %s365 = scalar_lea.vmem [#allocation3], %s364
        // Predicated region
        $region41: #{sparse_mmdit_block_forward.8} parent=39 // pred_check
          %p366 = pneg %p72
        $region42: #{sparse_mmdit_block_forward.8} parent=39 // pred_check_branch
          %368 = sbr.rel (%p366) target = $region44
        $region43: #{sparse_mmdit_block_forward.8} parent=39 // pred_region
          %369 = dma.done %s362, 256
        $region44: #{sparse_mmdit_block_forward.8} parent=39 // pred_fallthru
          _
        %s370 = sand.u32 %s28, 1
        %s371 = scalar_lea.sflag [#allocation7], %s370
        %s372 = sand.u32 %s91, 1
        %s373 = smul.addr %s372, 16
        %s374 = scalar_lea.vmem [#allocation6], %s373
        // Predicated region
        $region45: #{sparse_mmdit_block_forward.8} parent=39 // pred_check
          %p375 = pneg %p104
        $region46: #{sparse_mmdit_block_forward.8} parent=39 // pred_check_branch
          %377 = sbr.rel (%p375) target = $region48
        $region47: #{sparse_mmdit_block_forward.8} parent=39 // pred_region
          %378 = dma.done %s371, 256
        $region48: #{sparse_mmdit_block_forward.8} parent=39 // pred_fallthru
          _
        %s379 = sand.u32 %s28, 1
        %s380 = scalar_lea.sflag [#allocation7], %s379
        %s381 = sand.u32 %s121, 1
        %s382 = scalar_lea.vmem [#allocation8], %s381
        // Predicated region
        $region49: #{sparse_mmdit_block_forward.8} parent=39 // pred_check
          %p383 = pneg %p134
        $region50: #{sparse_mmdit_block_forward.8} parent=39 // pred_check_branch
          %385 = sbr.rel (%p383) target = $region52
        $region51: #{sparse_mmdit_block_forward.8} parent=39 // pred_region
          %386 = dma.done %s380, 16
        $region52: #{sparse_mmdit_block_forward.8} parent=39 // pred_fallthru
          _
        %s387 = sand.u32 %s28, 1
        %s388 = scalar_lea.sflag [#allocation10], %s387
        %s389 = sand.u32 %s149, 1
        %s390 = smul.addr %s389, 16
        %s391 = scalar_lea.vmem [#allocation9], %s390
        // Predicated region
        $region53: #{sparse_mmdit_block_forward.8} parent=39 // pred_check
          %p392 = pneg %p162
        $region54: #{sparse_mmdit_block_forward.8} parent=39 // pred_check_branch
          %394 = sbr.rel (%p392) target = $region56
        $region55: #{sparse_mmdit_block_forward.8} parent=39 // pred_region
          %395 = dma.done %s388, 256
        $region56: #{sparse_mmdit_block_forward.8} parent=39 // pred_fallthru
          _
        %s396 = sand.u32 %s28, 1
        %s397 = scalar_lea.sflag [#allocation10], %s396
        %s398 = sand.u32 %s181, 1
        %s399 = scalar_lea.vmem [#allocation11], %s398
        // Predicated region
        $region57: #{sparse_mmdit_block_forward.8} parent=39 // pred_check
          %p400 = pneg %p194
        $region58: #{sparse_mmdit_block_forward.8} parent=39 // pred_check_branch
          %402 = sbr.rel (%p400) target = $region60
        $region59: #{sparse_mmdit_block_forward.8} parent=39 // pred_region
          %403 = dma.done %s397, 16
        $region60: #{sparse_mmdit_block_forward.8} parent=39 // pred_fallthru
          _
        %s404 = sand.u32 %s59, 1
        %s405 = scalar_lea.sflag [#allocation4], %s404
        %s406 = sand.u32 %s59, 1
        %s407 = smul.addr %s406, 16
        %s408 = scalar_lea.vmem [#allocation3], %s407
        %p409 = pneg %p72
        %p410 = pneg %p69
        %s411 = sand.u32 %s28, 1
        %s412 = scalar_lea.sflag [#allocation7], %s411
        %s413 = sand.u32 %s91, 1
        %s414 = smul.addr %s413, 16
        %s415 = scalar_lea.vmem [#allocation6], %s414
        %p416 = pneg %p104
        %p417 = pneg %p101
        %s418 = sand.u32 %s28, 1
        %s419 = scalar_lea.sflag [#allocation7], %s418
        %s420 = sand.u32 %s121, 1
        %s421 = scalar_lea.vmem [#allocation8], %s420
        %p422 = pneg %p134
        %p423 = pneg %p131
        %s424 = sand.u32 %s28, 1
        %s425 = scalar_lea.sflag [#allocation10], %s424
        %s426 = sand.u32 %s149, 1
        %s427 = smul.addr %s426, 16
        %s428 = scalar_lea.vmem [#allocation9], %s427
        %p429 = pneg %p162
        %p430 = pneg %p159
        %s431 = sand.u32 %s28, 1
        %s432 = scalar_lea.sflag [#allocation10], %s431
        %s433 = sand.u32 %s181, 1
        %s434 = scalar_lea.vmem [#allocation11], %s433
        %p435 = pneg %p194
        %p436 = pneg %p191
        %p437 = pneg %p222
        %p438 = pneg %p219
        %s439 = sand.u32 %s209, 1
        %s440 = scalar_lea.sflag [#allocation5], %s439
        %s441 = sand.u32 %s209, 1
        %s442 = smul.addr %s441, 16
        %s443 = scalar_lea.vmem [#allocation12], %s442
        %s444 = smul.u32 4, %s34
        %p445 = scmp.ge.s32.totalorder %s34, 2
        %s446 = scalar_select %p445, 1, 0
        %p447 = scmp.ge.s32.totalorder %s34, 2
        %s448 = scalar_select %p447, 1, 0
        %s449 = smul.u32 4, %s34
        %p450 = scmp.ge.s32.totalorder %s34, 2
        %s451 = scalar_select %p450, 1, 0
        %s452 = smul.u32 4, %s34
        %p454 = scmp.eq.s32.totalorder %s35, 0
        // Predicated region
        $region61: #{sparse_mmdit_block_forward.8} parent=39 // pred_check
          %p455 = pneg %p454
        $region62: #{sparse_mmdit_block_forward.8} parent=39 // pred_check_branch
          %457 = sbr.rel (%p455) target = $region64
        $region63: #{sparse_mmdit_block_forward.8} parent=39 // pred_region
          %458 = vst [vmem:[#allocation2] sm:$0xff] 0.0
          %459 = vst [vmem:[#allocation2 + $0x8] sm:$0xff] 0.0
          %460 = vst [vmem:[#allocation2 + $0x10] sm:$0xff] 0.0
          %461 = vst [vmem:[#allocation2 + $0x18] sm:$0xff] 0.0
        $region64: #{sparse_mmdit_block_forward.8} parent=39 // pred_fallthru
          _
        %v462 = vld [vmem:[#allocation2] sm:$0xff]
        %v463 = vld [vmem:[#allocation2 + $0x8] sm:$0xff]
        %v464 = vld [vmem:[#allocation2 + $0x10] sm:$0xff]
        %v465 = vld [vmem:[#allocation2 + $0x18] sm:$0xff]
        %v466 = vld [vmem:[%s365] sm:$0xf]
        %v467 = vld [vmem:[%s365 + $0x4] sm:$0xf]
        %v468 = vld [vmem:[%s365 + $0x8] sm:$0xf]
        %v469 = vld [vmem:[%s365 + $0xc] sm:$0xf]
        %v470 = vld [vmem:[%s374] sm:$0xf]
        %v471 = vld [vmem:[%s374 + $0x4] sm:$0xf]
        %v472 = vld [vmem:[%s374 + $0x8] sm:$0xf]
        %v473 = vld [vmem:[%s374 + $0xc] sm:$0xf]
        %v478 = vunpack.c.l.b16 %v466
        %v479 = vunpack.c.l.b16 %v467
        %v480 = vunpack.c.l.b16 %v468
        %v481 = vunpack.c.l.b16 %v469
        %v482 = vpack.c.b16 %v479, %v478
        %v483 = vpack.c.b16 %v481, %v480
        %v488 = vunpack.c.l.b16 %v470
        %v489 = vunpack.c.l.b16 %v471
        %v490 = vunpack.c.l.b16 %v472
        %v491 = vunpack.c.l.b16 %v473
        %v492 = vpack.c.b16 %v489, %v488
        %v493 = vpack.c.b16 %v491, %v490
        %vm496 = vcmask 261120
        %v498 = vsel %vm496, %v482, 0
        %v501 = vsel %vm496, %v483, 0
        %503 = vmatprep.subr.bf16.mxu0 0
        %504 = vmatpush1.bf16.msra.mxu0 %v492
        %505 = vmatprep.subr.bf16.mxu0 0
        %506 = vmatpush1.bf16.msra.mxu0 %v493
        %507 = vmatprep.subr.bf16.mxu0 0
        %508 = vmatpush1.bf16.msra.mxu0 0
        %509 = vmatprep.subr.bf16.mxu0 0
        %510 = vmatpush1.bf16.msra.mxu0 0
        %511 = vmatprep.subr.bf16.mxu0 0
        %512 = vmatpush1.bf16.msra.mxu0 0
        %513 = vmatprep.subr.bf16.mxu0 0
        %514 = vmatpush1.bf16.msra.mxu0 0
        %515 = vmatprep.subr.bf16.mxu0 0
        %516 = vmatpush1.bf16.msra.mxu0 0
        %517 = vmatprep.subr.bf16.mxu0 0
        %518 = vmatpush1.bf16.msra.mxu0 0
        %519 = vmatprep.subr.bf16.mxu0 0
        %520 = vmatpush1.bf16.msra.mxu0 0
        %521 = vmatprep.subr.bf16.mxu0 0
        %522 = vmatpush1.bf16.msra.mxu0 0
        %523 = vmatprep.subr.bf16.mxu0 0
        %524 = vmatpush1.bf16.msra.mxu0 0
        %525 = vmatprep.subr.bf16.mxu0 0
        %526 = vmatpush1.bf16.msra.mxu0 0
        %527 = vmatprep.subr.bf16.mxu0 0
        %528 = vmatpush1.bf16.msra.mxu0 0
        %529 = vmatprep.subr.bf16.mxu0 0
        %530 = vmatpush1.bf16.msra.mxu0 0
        %531 = vmatprep.subr.bf16.mxu0 0
        %532 = vmatpush1.bf16.msra.mxu0 0
        %533 = vmatprep.subr.bf16.mxu0 0
        %534 = vmatpush1.bf16.msra.mxu0 0
        %535 = vmatprep.mubr.bf16.mxu0 0
        %536 = vmatmul.mubr.bf16.gmra.mrb[0].mxu0 %v498
        %v537 = vpop.f32.mrb[0].mxu0
        %v538 = vadd.f32 0.0, %v537
        %v539 = vpop.f32.mrb[0].mxu0
        %v540 = vpop.f32.mrb[0].mxu0
        %v541 = vadd.f32 0.0, %v540
        %v542 = vpop.f32.mrb[0].mxu0
        %543 = vmatprep.mubr.bf16.mxu0 0
        %544 = vmatmul.mubr.bf16.gmra.mrb[0].mxu0 %v501
        %v545 = vpop.f32.mrb[0].mxu0
        %v546 = vadd.f32 0.0, %v545
        %v547 = vpop.f32.mrb[0].mxu0
        %v548 = vpop.f32.mrb[0].mxu0
        %v549 = vadd.f32 0.0, %v548
        %v550 = vpop.f32.mrb[0].mxu0
        %551 = vdwg.mxu0
        %v552 = vadd.f32 %v462, %v538
        %v553 = vadd.f32 %v463, %v541
        %v554 = vadd.f32 %v464, %v546
        %v555 = vadd.f32 %v465, %v549
        %556 = vst [vmem:[#allocation2] sm:$0xff] %v552
        %557 = vst [vmem:[#allocation2 + $0x8] sm:$0xff] %v553
        %558 = vst [vmem:[#allocation2 + $0x10] sm:$0xff] %v554
        %559 = vst [vmem:[#allocation2 + $0x18] sm:$0xff] %v555
        %p560 = scmp.eq.s32.totalorder %s35, 3
        // Predicated region
        $region65: #{sparse_mmdit_block_forward.8} parent=39 // pred_check
          %p561 = pneg %p560
        $region66: #{sparse_mmdit_block_forward.8} parent=39 // pred_check_branch
          %563 = sbr.rel (%p561) target = $region68
        $region67: #{sparse_mmdit_block_forward.8} parent=39 // pred_region
          %v564 = vld [vmem:[%s391] sm:$0xf]
          %v565 = vld [vmem:[%s391 + $0x4] sm:$0xf]
          %v566 = vld [vmem:[%s391 + $0x8] sm:$0xf]
          %v567 = vld [vmem:[%s391 + $0xc] sm:$0xf]
          %v568 = vunpack.c.l.bf16 %v564
          %v569 = vunpack.c.l.bf16 %v565
          %v570 = vunpack.c.l.bf16 %v566
          %v571 = vunpack.c.l.bf16 %v567
          %v572 = vld [vmem:[%s399] sm:$0x1]
          %v573 = vld [vmem:[#allocation2] sm:$0xff]
          %v574 = vld [vmem:[#allocation2 + $0x8] sm:$0xff]
          %v575 = vld [vmem:[#allocation2 + $0x10] sm:$0xff]
          %v576 = vld [vmem:[#allocation2 + $0x18] sm:$0xff]
          %v577 = vld [vmem:[%s382] sm:$0x1]
          %v579 = vlaneseq
          %v580 = vshrl.u32 %v579, 7
          %v581 = vsub.s32 0, %v580
          %v582 = vrot.slane %v577, %v581
          %v584 = vadd.f32 %v573, %v582
          %v585 = vadd.f32 %v574, %v582
          %v586 = vadd.f32 %v575, %v582
          %v587 = vadd.f32 %v576, %v582
          %v589 = vlaneseq
          %v590 = vshrl.u32 %v589, 7
          %v591 = vsub.s32 0, %v590
          %v592 = vrot.slane %v572, %v591
          %v594 = vmul.f32 %v592, %v584
          %v595 = vmul.f32 %v592, %v585
          %v596 = vmul.f32 %v592, %v586
          %v597 = vmul.f32 %v592, %v587
          %v598 = vadd.f32 %v568, %v594
          %v599 = vadd.f32 %v569, %v595
          %v600 = vadd.f32 %v570, %v596
          %v601 = vadd.f32 %v571, %v597
          %v602 = vpack.c.bf16 %v599, %v598
          %v603 = vpack.c.bf16 %v601, %v600
          %v606 = vunpack.c.l.b16 %v602
          %v607 = vunpack.c.h.b16 %v602
          %v608 = vunpack.c.l.b16 %v603
          %v609 = vunpack.c.h.b16 %v603
          %v610 = vpack.c.b16 %v606, %v606
          %v611 = vpack.c.b16 %v607, %v607
          %v612 = vpack.c.b16 %v608, %v608
          %v613 = vpack.c.b16 %v609, %v609
          %618 = vst [vmem:[%s443] sm:$0xf] %v610
          %619 = vst [vmem:[%s443 + $0x4] sm:$0xf] %v611
          %620 = vst [vmem:[%s443 + $0x8] sm:$0xf] %v612
          %621 = vst [vmem:[%s443 + $0xc] sm:$0xf] %v613
        $region68: #{sparse_mmdit_block_forward.8} parent=39 // pred_fallthru
          _
        %s622 = sand.u32 %s209, 1
        %s623 = scalar_lea.sflag [#allocation5], %s622
        %s624 = sand.u32 %s209, 1
        %s625 = smul.addr %s624, 16
        %s626 = scalar_lea.vmem [#allocation12], %s625
        // Predicated region
        $region69: #{sparse_mmdit_block_forward.8} parent=39 // pred_check
          %p627 = pneg %p219
        $region70: #{sparse_mmdit_block_forward.8} parent=39 // pred_check_branch
          %629 = sbr.rel (%p627) target = $region72
        $region71: #{sparse_mmdit_block_forward.8} parent=39 // pred_region
          %s630 = smul.u32 4, %s34
          %s632 = ssub.s32 256, 256
          %633 = vsyncadd %s623, %s632
          %s634 = smul.addr %s33, 12
          %s635 = sadd.s32 %s630, %s634
          %s636 = smul.addr %s635, 64
          %s637 = scalar_lea.hbm %s5, %s636
          %s638 = sshll.u32 %s626, 4
          %s639 = int_to_ptr.vmem [resolvable:$true] %s638
          %644 = dma.vmem_to_hbm [thread:$0]  %s639, 256, %s637, %s623, 64, 64, 4
        $region72: #{sparse_mmdit_block_forward.8} parent=39 // pred_fallthru
          _
      $region40: #{sparse_mmdit_block_forward.8} parent=5 // pred_fallthru
        _
      %p645 = scmp.le.s32.totalorder 2, %s23
      // Predicated region
      $region73: #{sparse_mmdit_block_forward.8} parent=5 // pred_check
        %p646 = pneg %p645
      $region74: #{sparse_mmdit_block_forward.8} parent=5 // pred_check_branch
        %648 = sbr.rel (%p646) target = $region76
      $region75: #{sparse_mmdit_block_forward.8} parent=5 // pred_region
        %s649 = ssub.s32 %s23, 2
        // Predicated region
        $region77: #{sparse_mmdit_block_forward.8} parent=75 // pred_check
          %p650 = pneg %p225
        $region78: #{sparse_mmdit_block_forward.8} parent=75 // pred_check_branch
          %652 = sbr.rel (%p650) target = $region80
        $region79: #{sparse_mmdit_block_forward.8} parent=75 // pred_region
          %s653 = sand.u32 %s210, 1
          %s654 = scalar_lea.sflag [#allocation5], %s653
          %s655 = sand.u32 %s210, 1
          %s656 = smul.addr %s655, 16
          %s657 = scalar_lea.vmem [#allocation12], %s656
          %658 = dma.done %s654, 256
        $region80: #{sparse_mmdit_block_forward.8} parent=75 // pred_fallthru
          _
      $region76: #{sparse_mmdit_block_forward.8} parent=5 // pred_fallthru
        _
    $region6: #{sparse_mmdit_block_forward.8} parent=1 // loop_footer
      %s27 = sadd.s32 1, %s23
    $region7: #{sparse_mmdit_block_forward.8} parent=1 // loop_footer_branch
      %22 = sbr.rel target = $region3
    $region8: #{sparse_mmdit_block_forward.8} parent=1 // loop_exit
      _
    %659 = vsyncpa [#allocation4], 1
    %s660 = scalar_lea.sflag [#allocation4], 1
    %661 = vsyncpa %s660, 1
    %662 = vsyncpa [#allocation7], 1
    %s663 = scalar_lea.sflag [#allocation7], 1
    %664 = vsyncpa %s663, 1
    %665 = vsyncpa [#allocation10], 1
    %s666 = scalar_lea.sflag [#allocation10], 1
    %667 = vsyncpa %s666, 1
    %668 = vsyncpa [#allocation5], 1
    %s669 = scalar_lea.sflag [#allocation5], 1
    %670 = vsyncpa %s669, 1

// kernel: sparse_mmdit_block_forward.6
$region0: #{sparse_mmdit_block_forward.6}
  #allocation0 [shape = 'u32[]', space=smem, size = 0x4, offset = 0x4, fixed_abs, tag = 'smem constant byte address 0x4 - core index']
  #allocation1 [shape = 'u32[144,128]{1,0:T(1,128)}', space=vmem, size = 0x12000, scoped, tag = 'internal scratch']
  #allocation17 [shape = 's32[]', space=sflag, size = 0x4, offset = 0, fixed_abs, tag = 'sflag constant byte address 0x0 - dummy sync flag']
  #allocation19 [shape = 's32[]', space=sflag, size = 0x4, offset = 0, fixed_abs, tag = 'sflag constant byte address 0x0 - dummy sync flag']
  #allocation21 [shape = 's32[]', space=sflag, size = 0x4, offset = 0, fixed_abs, tag = 'sflag constant byte address 0x0 - dummy sync flag']
  %s0 = inlined_call_operand.hbm [shape: bf16[2,96,384], index: 0, kind: input, shape index: {}]
  %s1 = inlined_call_operand.hbm [shape: f32[96,32], index: 1, kind: input, shape index: {}]
  %s2 = inlined_call_operand.hbm [shape: f32[96,32], index: 2, kind: input, shape index: {}]
  %s3 = inlined_call_operand.hbm [shape: f32[2,1,32], index: 3, kind: input, shape index: {}]
  %s4 = inlined_call_operand.hbm [shape: f32[2,1,32], index: 4, kind: input, shape index: {}]
  %s5 = inlined_call_operand.hbm [shape: f32[32,32], index: 5, kind: input, shape index: {}]
  %s6 = inlined_call_operand.hbm [shape: bf16[2,4,96,32], index: 6, kind: output, shape index: {0}]
  %s7 = inlined_call_operand.hbm [shape: bf16[2,4,96,32], index: 7, kind: output, shape index: {1}]
  %s8 = inlined_call_operand.hbm [shape: bf16[2,4,96,32], index: 8, kind: output, shape index: {2}]
  %9 = xla_tuple %s6, %s7, %s8
  %s10 = sld [smem:[#allocation0]]
  $region97: #{sparse_mmdit_block_forward.6} parent=0
    _
  %s12 = ssub.s32 1, %s10
  %s13 = scalar_select 0, %s12, %s10
  $region1: #{sparse_mmdit_block_forward.6} parent=0
    #allocation2 [shape = 'u8[49152]{0}', space=vmem, size = 0xc000, scoped, tag = 'input window, operand 0']
    #allocation3 [shape = 's32[2]{0}', space=sflag, size = 0x8, scoped, tag = 'scoped memory for sparse_mmdit_block_forward.6']
    #allocation4 [shape = 's32[2]{0}', space=sflag, size = 0x8, scoped, tag = 'scoped memory for sparse_mmdit_block_forward.6']
    #allocation5 [shape = 'u8[32768]{0}', space=vmem, size = 0x8000, scoped, tag = 'input window, operand 1']
    #allocation6 [shape = 's32[2]{0}', space=sflag, size = 0x8, scoped, tag = 'scoped memory for sparse_mmdit_block_forward.6']
    #allocation7 [shape = 'u8[32768]{0}', space=vmem, size = 0x8000, scoped, tag = 'input window, operand 2']
    #allocation8 [shape = 'u8[1024]{0}', space=vmem, size = 0x400, scoped, tag = 'input window, operand 3']
    #allocation9 [shape = 's32[2]{0}', space=sflag, size = 0x8, scoped, tag = 'scoped memory for sparse_mmdit_block_forward.6']
    #allocation10 [shape = 'u8[1024]{0}', space=vmem, size = 0x400, scoped, tag = 'input window, operand 4']
    #allocation11 [shape = 'u8[16384]{0}', space=vmem, size = 0x4000, scoped, tag = 'input window, operand 5, single buffered']
    #allocation12 [shape = 's32[1]{0}', space=sflag, size = 0x4, scoped, tag = 'scoped memory for sparse_mmdit_block_forward.6']
    #allocation13 [shape = 'u8[65536]{0}', space=vmem, size = 0x10000, scoped, tag = 'output window, operand 0']
    #allocation14 [shape = 'u8[65536]{0}', space=vmem, size = 0x10000, scoped, tag = 'output window, operand 1']
    #allocation15 [shape = 's32[2]{0}', space=sflag, size = 0x8, scoped, tag = 'scoped memory for sparse_mmdit_block_forward.6']
    #allocation16 [shape = 'u8[65536]{0}', space=vmem, size = 0x10000, scoped, tag = 'output window, operand 2']
    %14 = vsyncpa [#allocation3], 0
    %s15 = scalar_lea.sflag [#allocation3], 1
    %16 = vsyncpa %s15, 0
    %17 = vsyncpa [#allocation6], 0
    %s18 = scalar_lea.sflag [#allocation6], 1
    %19 = vsyncpa %s18, 0
    %20 = vsyncpa [#allocation9], 0
    %s21 = scalar_lea.sflag [#allocation9], 1
    %22 = vsyncpa %s21, 0
    %23 = vsyncpa [#allocation12], 0
    %24 = vsyncpa [#allocation4], 0
    %s25 = scalar_lea.sflag [#allocation4], 1
    %26 = vsyncpa %s25, 0
    %27 = vsyncpa [#allocation15], 0
    %s28 = scalar_lea.sflag [#allocation15], 1
    %29 = vsyncpa %s28, 0
    loop: start=0, step=1, limit=8
    $region2: #{sparse_mmdit_block_forward.6} parent=1 // loop_pre_header
      _
    $region3: #{sparse_mmdit_block_forward.6} parent=1 // loop_header
      %s31 = sphi 0, %s35
      %p32 = scmp.ge.s32.totalorder %s31, 8
      %s38 = sphi 0, %s50
      %s39 = sphi 0, %s46
      %s40 = sphi 0, %s38
      %s41 = sphi 0, %s39
      %s42 = sphi 0, %s40
      %s43 = sphi 0, %s41
      %s55 = sphi 0, %s57
      %s58 = sphi 0, %s55
      %s59 = sphi 0, %s58
      %s75 = sphi 0, %s59
      %s81 = sphi 0, %s83
      %s84 = sphi 0, %s81
      %s85 = sphi 0, %s84
      %s101 = sphi 0, %s85
      %s107 = sphi 0, %s109
      %s110 = sphi 0, %s107
      %s111 = sphi 0, %s110
      %s127 = sphi 0, %s111
      %s137 = sphi 0, %s139
      %s140 = sphi 0, %s137
      %s141 = sphi 0, %s140
      %s157 = sphi 0, %s141
      %s167 = sphi 0, %s169
      %s170 = sphi 0, %s167
      %s171 = sphi 0, %s170
      %s187 = sphi 0, %s171
      %s191 = sphi 0, %s191
      %s193 = sphi 0, %s191
      %s194 = sphi 0, %s193
      %s208 = sphi 0, %s194
      %s216 = sphi 0, %s218
      %s219 = sphi 0, %s216
      %s220 = sphi 0, %s219
      %s236 = sphi 0, %s220
      %s244 = sphi 0, %s246
      %s247 = sphi 0, %s244
      %s248 = sphi 0, %s247
      %s264 = sphi 0, %s248
      %s272 = sphi 0, %s274
      %s275 = sphi 0, %s272
      %s276 = sphi 0, %s275
      %s292 = sphi 0, %s276
    $region4: #{sparse_mmdit_block_forward.6} parent=1 // loop_header_branch
      %34 = sbr.rel (%p32) target = $region8
    $region5: #{sparse_mmdit_block_forward.6} parent=1 // loop_body
      %s36 = ssub.s32 %s31, 1
      %s37 = ssub.s32 %s31, 2
      %s44 = sadd.s32 1, %s39
      %p45 = scmp.ge.s32.totalorder %s44, 3
      %s46 = scalar_select %p45, 0, %s44
      %s47 = sadd.s32 1, %s38
      %s48 = scalar_select %p45, %s47, %s38
      %p49 = scmp.ge.s32.totalorder %s48, 2
      %s50 = scalar_select %p49, 0, %s48
      %s51 = ssub.s32 %s38, %s50
      %s52 = ssub.s32 %s39, %s46
      %s53 = sor.u32 %s51, %s52
      %p54 = scmp.eq.s32.totalorder %s53, 0
      %s56 = sadd.s32 %s55, 1
      %s57 = scalar_select %p54, %s55, %s56
      %p60 = pneg %p54
      %p61 = scmp.eq.s32.totalorder %s31, 5
      %p62 = por %p60, %p61
      %p63 = scmp.ne.s32.totalorder %s55, %s58
      %p64 = scmp.eq.s32.totalorder %s31, 0
      %p65 = por %p63, %p64
      %p66 = scmp.ne.s32.totalorder %s55, %s58
      %p67 = scmp.eq.s32.totalorder %s36, 5
      %p68 = por %p66, %p67
      %p69 = scmp.ne.s32.totalorder %s58, %s59
      %p70 = scmp.eq.s32.totalorder %s36, 0
      %p71 = por %p69, %p70
      %p72 = scmp.ne.s32.totalorder %s58, %s59
      %p73 = scmp.eq.s32.totalorder %s37, 5
      %p74 = por %p72, %p73
      %p76 = scmp.ne.s32.totalorder %s59, %s75
      %p77 = scmp.eq.s32.totalorder %s37, 0
      %p78 = por %p76, %p77
      %s79 = ssub.s32 %s39, %s46
      %p80 = scmp.eq.s32.totalorder %s79, 0
      %s82 = sadd.s32 %s81, 1
      %s83 = scalar_select %p80, %s81, %s82
      %p86 = pneg %p80
      %p87 = scmp.eq.s32.totalorder %s31, 5
      %p88 = por %p86, %p87
      %p89 = scmp.ne.s32.totalorder %s81, %s84
      %p90 = scmp.eq.s32.totalorder %s31, 0
      %p91 = por %p89, %p90
      %p92 = scmp.ne.s32.totalorder %s81, %s84
      %p93 = scmp.eq.s32.totalorder %s36, 5
      %p94 = por %p92, %p93
      %p95 = scmp.ne.s32.totalorder %s84, %s85
      %p96 = scmp.eq.s32.totalorder %s36, 0
      %p97 = por %p95, %p96
      %p98 = scmp.ne.s32.totalorder %s84, %s85
      %p99 = scmp.eq.s32.totalorder %s37, 5
      %p100 = por %p98, %p99
      %p102 = scmp.ne.s32.totalorder %s85, %s101
      %p103 = scmp.eq.s32.totalorder %s37, 0
      %p104 = por %p102, %p103
      %s105 = ssub.s32 %s39, %s46
      %p106 = scmp.eq.s32.totalorder %s105, 0
      %s108 = sadd.s32 %s107, 1
      %s109 = scalar_select %p106, %s107, %s108
      %p112 = pneg %p106
      %p113 = scmp.eq.s32.totalorder %s31, 5
      %p114 = por %p112, %p113
      %p115 = scmp.ne.s32.totalorder %s107, %s110
      %p116 = scmp.eq.s32.totalorder %s31, 0
      %p117 = por %p115, %p116
      %p118 = scmp.ne.s32.totalorder %s107, %s110
      %p119 = scmp.eq.s32.totalorder %s36, 5
      %p120 = por %p118, %p119
      %p121 = scmp.ne.s32.totalorder %s110, %s111
      %p122 = scmp.eq.s32.totalorder %s36, 0
      %p123 = por %p121, %p122
      %p124 = scmp.ne.s32.totalorder %s110, %s111
      %p125 = scmp.eq.s32.totalorder %s37, 5
      %p126 = por %p124, %p125
      %p128 = scmp.ne.s32.totalorder %s111, %s127
      %p129 = scmp.eq.s32.totalorder %s37, 0
      %p130 = por %p128, %p129
      %p131 = scmp.ge.s32.totalorder %s39, 2
      %s132 = scalar_select %p131, 1, 0
      %p133 = scmp.ge.s32.totalorder %s46, 2
      %s134 = scalar_select %p133, 1, 0
      %s135 = ssub.s32 %s132, %s134
      %p136 = scmp.eq.s32.totalorder %s135, 0
      %s138 = sadd.s32 %s137, 1
      %s139 = scalar_select %p136, %s137, %s138
      %p142 = pneg %p136
      %p143 = scmp.eq.s32.totalorder %s31, 5
      %p144 = por %p142, %p143
      %p145 = scmp.ne.s32.totalorder %s137, %s140
      %p146 = scmp.eq.s32.totalorder %s31, 0
      %p147 = por %p145, %p146
      %p148 = scmp.ne.s32.totalorder %s137, %s140
      %p149 = scmp.eq.s32.totalorder %s36, 5
      %p150 = por %p148, %p149
      %p151 = scmp.ne.s32.totalorder %s140, %s141
      %p152 = scmp.eq.s32.totalorder %s36, 0
      %p153 = por %p151, %p152
      %p154 = scmp.ne.s32.totalorder %s140, %s141
      %p155 = scmp.eq.s32.totalorder %s37, 5
      %p156 = por %p154, %p155
      %p158 = scmp.ne.s32.totalorder %s141, %s157
      %p159 = scmp.eq.s32.totalorder %s37, 0
      %p160 = por %p158, %p159
      %p161 = scmp.ge.s32.totalorder %s39, 2
      %s162 = scalar_select %p161, 1, 0
      %p163 = scmp.ge.s32.totalorder %s46, 2
      %s164 = scalar_select %p163, 1, 0
      %s165 = ssub.s32 %s162, %s164
      %p166 = scmp.eq.s32.totalorder %s165, 0
      %s168 = sadd.s32 %s167, 1
      %s169 = scalar_select %p166, %s167, %s168
      %p172 = pneg %p166
      %p173 = scmp.eq.s32.totalorder %s31, 5
      %p174 = por %p172, %p173
      %p175 = scmp.ne.s32.totalorder %s167, %s170
      %p176 = scmp.eq.s32.totalorder %s31, 0
      %p177 = por %p175, %p176
      %p178 = scmp.ne.s32.totalorder %s167, %s170
      %p179 = scmp.eq.s32.totalorder %s36, 5
      %p180 = por %p178, %p179
      %p181 = scmp.ne.s32.totalorder %s170, %s171
      %p182 = scmp.eq.s32.totalorder %s36, 0
      %p183 = por %p181, %p182
      %p184 = scmp.ne.s32.totalorder %s170, %s171
      %p185 = scmp.eq.s32.totalorder %s37, 5
      %p186 = por %p184, %p185
      %p188 = scmp.ne.s32.totalorder %s171, %s187
      %p189 = scmp.eq.s32.totalorder %s37, 0
      %p190 = por %p188, %p189
      %s192 = sadd.s32 %s191, 1
      %p195 = scmp.eq.s32.totalorder %s31, 5
      %p196 = scmp.ne.s32.totalorder %s191, %s193
      %p197 = scmp.eq.s32.totalorder %s31, 0
      %p198 = por %p196, %p197
      %p199 = scmp.ne.s32.totalorder %s191, %s193
      %p200 = scmp.eq.s32.totalorder %s36, 5
      %p201 = por %p199, %p200
      %p202 = scmp.ne.s32.totalorder %s193, %s194
      %p203 = scmp.eq.s32.totalorder %s36, 0
      %p204 = por %p202, %p203
      %p205 = scmp.ne.s32.totalorder %s193, %s194
      %p206 = scmp.eq.s32.totalorder %s37, 5
      %p207 = por %p205, %p206
      %p209 = scmp.ne.s32.totalorder %s194, %s208
      %p210 = scmp.eq.s32.totalorder %s37, 0
      %p211 = por %p209, %p210
      %s212 = ssub.s32 %s38, %s50
      %s213 = ssub.s32 %s39, %s46
      %s214 = sor.u32 %s212, %s213
      %p215 = scmp.eq.s32.totalorder %s214, 0
      %s217 = sadd.s32 %s216, 1
      %s218 = scalar_select %p215, %s216, %s217
      %p221 = pneg %p215
      %p222 = scmp.eq.s32.totalorder %s31, 5
      %p223 = por %p221, %p222
      %p224 = scmp.ne.s32.totalorder %s216, %s219
      %p225 = scmp.eq.s32.totalorder %s31, 0
      %p226 = por %p224, %p225
      %p227 = scmp.ne.s32.totalorder %s216, %s219
      %p228 = scmp.eq.s32.totalorder %s36, 5
      %p229 = por %p227, %p228
      %p230 = scmp.ne.s32.totalorder %s219, %s220
      %p231 = scmp.eq.s32.totalorder %s36, 0
      %p232 = por %p230, %p231
      %p233 = scmp.ne.s32.totalorder %s219, %s220
      %p234 = scmp.eq.s32.totalorder %s37, 5
      %p235 = por %p233, %p234
      %p237 = scmp.ne.s32.totalorder %s220, %s236
      %p238 = scmp.eq.s32.totalorder %s37, 0
      %p239 = por %p237, %p238
      %s240 = ssub.s32 %s38, %s50
      %s241 = ssub.s32 %s39, %s46
      %s242 = sor.u32 %s240, %s241
      %p243 = scmp.eq.s32.totalorder %s242, 0
      %s245 = sadd.s32 %s244, 1
      %s246 = scalar_select %p243, %s244, %s245
      %p249 = pneg %p243
      %p250 = scmp.eq.s32.totalorder %s31, 5
      %p251 = por %p249, %p250
      %p252 = scmp.ne.s32.totalorder %s244, %s247
      %p253 = scmp.eq.s32.totalorder %s31, 0
      %p254 = por %p252, %p253
      %p255 = scmp.ne.s32.totalorder %s244, %s247
      %p256 = scmp.eq.s32.totalorder %s36, 5
      %p257 = por %p255, %p256
      %p258 = scmp.ne.s32.totalorder %s247, %s248
      %p259 = scmp.eq.s32.totalorder %s36, 0
      %p260 = por %p258, %p259
      %p261 = scmp.ne.s32.totalorder %s247, %s248
      %p262 = scmp.eq.s32.totalorder %s37, 5
      %p263 = por %p261, %p262
      %p265 = scmp.ne.s32.totalorder %s248, %s264
      %p266 = scmp.eq.s32.totalorder %s37, 0
      %p267 = por %p265, %p266
      %s268 = ssub.s32 %s38, %s50
      %s269 = ssub.s32 %s39, %s46
      %s270 = sor.u32 %s268, %s269
      %p271 = scmp.eq.s32.totalorder %s270, 0
      %s273 = sadd.s32 %s272, 1
      %s274 = scalar_select %p271, %s272, %s273
      %p277 = pneg %p271
      %p278 = scmp.eq.s32.totalorder %s31, 5
      %p279 = por %p277, %p278
      %p280 = scmp.ne.s32.totalorder %s272, %s275
      %p281 = scmp.eq.s32.totalorder %s31, 0
      %p282 = por %p280, %p281
      %p283 = scmp.ne.s32.totalorder %s272, %s275
      %p284 = scmp.eq.s32.totalorder %s36, 5
      %p285 = por %p283, %p284
      %p286 = scmp.ne.s32.totalorder %s275, %s276
      %p287 = scmp.eq.s32.totalorder %s36, 0
      %p288 = por %p286, %p287
      %p289 = scmp.ne.s32.totalorder %s275, %s276
      %p290 = scmp.eq.s32.totalorder %s37, 5
      %p291 = por %p289, %p290
      %p293 = scmp.ne.s32.totalorder %s276, %s292
      %p294 = scmp.eq.s32.totalorder %s37, 0
      %p295 = por %p293, %p294
      %p296 = scmp.le.s32.totalorder 1, %s31
      %p297 = scmp.lt.s32.totalorder %s31, 7
      %p298 = pnand %p296, %p297
      %p299 = pneg %p298
      // Predicated region
      $region9: #{sparse_mmdit_block_forward.6} parent=5 // pred_check
        _
      $region10: #{sparse_mmdit_block_forward.6} parent=5 // pred_check_branch
        %301 = sbr.rel (%p298) target = $region12
      $region11: #{sparse_mmdit_block_forward.6} parent=5 // pred_region
        %s302 = ssub.s32 %s31, 1
        // Predicated region
        $region13: #{sparse_mmdit_block_forward.6} parent=11 // pred_check
          %p303 = pneg %p204
        $region14: #{sparse_mmdit_block_forward.6} parent=11 // pred_check_branch
          %305 = sbr.rel (%p303) target = $region16
        $region15: #{sparse_mmdit_block_forward.6} parent=11 // pred_region
          %s307 = ssub.s32 512, 512
          %308 = vsyncadd [#allocation12], %s307
          %s309 = sshll.u32 [#allocation11], 4
          %s310 = int_to_ptr.vmem [resolvable:$true] %s309
          %315 = dma.hbm_to_vmem [thread:$0]  %s5, 512, %s310, [#allocation12], 128, 128, 8
        $region16: #{sparse_mmdit_block_forward.6} parent=11 // pred_fallthru
          _
      $region12: #{sparse_mmdit_block_forward.6} parent=5 // pred_fallthru
        _
      %p316 = scmp.lt.s32.totalorder %s31, 6
      // Predicated region
      $region17: #{sparse_mmdit_block_forward.6} parent=5 // pred_check
        %p317 = pneg %p316
      $region18: #{sparse_mmdit_block_forward.6} parent=5 // pred_check_branch
        %319 = sbr.rel (%p317) target = $region20
      $region19: #{sparse_mmdit_block_forward.6} parent=5 // pred_region
        // Predicated region
        $region21: #{sparse_mmdit_block_forward.6} parent=19 // pred_check
          %p320 = pneg %p65
        $region22: #{sparse_mmdit_block_forward.6} parent=19 // pred_check_branch
          %322 = sbr.rel (%p320) target = $region24
        $region23: #{sparse_mmdit_block_forward.6} parent=19 // pred_region
          %s323 = sand.u32 %s55, 1
          %s324 = scalar_lea.sflag [#allocation3], %s323
          %s325 = sand.u32 %s55, 1
          %s326 = smul.addr %s325, 48
          %s327 = scalar_lea.vmem [#allocation2], %s326
          %s328 = smul.u32 4, %s39
          %s330 = ssub.s32 768, 768
          %331 = vsyncadd %s324, %s330
          %s332 = smul.addr %s328, 3
          %s333 = smul.addr %s38, 36
          %s334 = sadd.s32 %s332, %s333
          %s335 = smul.addr %s334, 64
          %s336 = scalar_lea.hbm %s0, %s335
          %s337 = sshll.u32 %s327, 4
          %s338 = int_to_ptr.vmem [resolvable:$true] %s337
          %343 = dma.hbm_to_vmem [thread:$0]  %s336, 768, %s338, %s324, 192, 192, 12
        $region24: #{sparse_mmdit_block_forward.6} parent=19 // pred_fallthru
          _
        // Predicated region
        $region25: #{sparse_mmdit_block_forward.6} parent=19 // pred_check
          %p344 = pneg %p91
        $region26: #{sparse_mmdit_block_forward.6} parent=19 // pred_check_branch
          %346 = sbr.rel (%p344) target = $region28
        $region27: #{sparse_mmdit_block_forward.6} parent=19 // pred_region
          %s347 = sand.u32 %s31, 1
          %s348 = scalar_lea.sflag [#allocation6], %s347
          %s349 = sand.u32 %s81, 1
          %s350 = smul.addr %s349, 32
          %s351 = scalar_lea.vmem [#allocation5], %s350
          %s352 = smul.u32 4, %s39
          %s354 = ssub.s32 512, 512
          %355 = vsyncadd %s348, %s354
          %s356 = smul.addr %s352, 128
          %s357 = scalar_lea.hbm %s1, %s356
          %s358 = sshll.u32 %s351, 4
          %s359 = int_to_ptr.vmem [resolvable:$true] %s358
          %364 = dma.hbm_to_vmem [thread:$0]  %s357, 512, %s359, %s348, 128, 128, 8
        $region28: #{sparse_mmdit_block_forward.6} parent=19 // pred_fallthru
          _
        // Predicated region
        $region29: #{sparse_mmdit_block_forward.6} parent=19 // pred_check
          %p365 = pneg %p117
        $region30: #{sparse_mmdit_block_forward.6} parent=19 // pred_check_branch
          %367 = sbr.rel (%p365) target = $region32
        $region31: #{sparse_mmdit_block_forward.6} parent=19 // pred_region
          %s368 = sand.u32 %s31, 1
          %s369 = scalar_lea.sflag [#allocation6], %s368
          %s370 = sand.u32 %s107, 1
          %s371 = smul.addr %s370, 32
          %s372 = scalar_lea.vmem [#allocation7], %s371
          %s373 = smul.u32 4, %s39
          %s375 = ssub.s32 512, 512
          %376 = vsyncadd %s369, %s375
          %s377 = smul.addr %s373, 128
          %s378 = scalar_lea.hbm %s2, %s377
          %s379 = sshll.u32 %s372, 4
          %s380 = int_to_ptr.vmem [resolvable:$true] %s379
          %385 = dma.hbm_to_vmem [thread:$0]  %s378, 512, %s380, %s369, 128, 128, 8
        $region32: #{sparse_mmdit_block_forward.6} parent=19 // pred_fallthru
          _
        // Predicated region
        $region33: #{sparse_mmdit_block_forward.6} parent=19 // pred_check
          %p386 = pneg %p147
        $region34: #{sparse_mmdit_block_forward.6} parent=19 // pred_check_branch
          %388 = sbr.rel (%p386) target = $region36
        $region35: #{sparse_mmdit_block_forward.6} parent=19 // pred_region
          %s389 = sand.u32 %s31, 1
          %s390 = scalar_lea.sflag [#allocation9], %s389
          %s391 = sand.u32 %s137, 1
          %s392 = scalar_lea.vmem [#allocation8], %s391
          %p393 = scmp.ge.s32.totalorder %s39, 2
          %s394 = scalar_select %p393, 1, 0
          %s396 = ssub.s32 16, 16
          %397 = vsyncadd %s390, %s396
          %s398 = smul.addr %s394, 16
          %s399 = scalar_lea.hbm %s3, %s398
          %s401 = sshll.u32 %s392, 4
          %s402 = int_to_ptr.vmem [resolvable:$true] %s401
          %404 = dma.hbm_to_vmem [thread:$0]  %s399, 16, %s402, %s390
        $region36: #{sparse_mmdit_block_forward.6} parent=19 // pred_fallthru
          _
        // Predicated region
        $region37: #{sparse_mmdit_block_forward.6} parent=19 // pred_check
          %p405 = pneg %p177
        $region38: #{sparse_mmdit_block_forward.6} parent=19 // pred_check_branch
          %407 = sbr.rel (%p405) target = $region40
        $region39: #{sparse_mmdit_block_forward.6} parent=19 // pred_region
          %s408 = sand.u32 %s31, 1
          %s409 = scalar_lea.sflag [#allocation9], %s408
          %s410 = sand.u32 %s167, 1
          %s411 = scalar_lea.vmem [#allocation10], %s410
          %p412 = scmp.ge.s32.totalorder %s39, 2
          %s413 = scalar_select %p412, 1, 0
          %s415 = ssub.s32 16, 16
          %416 = vsyncadd %s409, %s415
          %s417 = smul.addr %s413, 16
          %s418 = scalar_lea.hbm %s4, %s417
          %s420 = sshll.u32 %s411, 4
          %s421 = int_to_ptr.vmem [resolvable:$true] %s420
          %423 = dma.hbm_to_vmem [thread:$0]  %s418, 16, %s421, %s409
        $region40: #{sparse_mmdit_block_forward.6} parent=19 // pred_fallthru
          _
      $region20: #{sparse_mmdit_block_forward.6} parent=5 // pred_fallthru
        _
      %p424 = scmp.le.s32.totalorder 1, %s31
      %p425 = scmp.lt.s32.totalorder %s31, 7
      %p426 = pnand %p424, %p425
      %p427 = pneg %p426
      // Predicated region
      $region41: #{sparse_mmdit_block_forward.6} parent=5 // pred_check
        _
      $region42: #{sparse_mmdit_block_forward.6} parent=5 // pred_check_branch
        %429 = sbr.rel (%p426) target = $region44
      $region43: #{sparse_mmdit_block_forward.6} parent=5 // pred_region
        %s430 = ssub.s32 %s31, 1
        %s431 = sand.u32 %s58, 1
        %s432 = scalar_lea.sflag [#allocation3], %s431
        %s433 = sand.u32 %s58, 1
        %s434 = smul.addr %s433, 48
        %s435 = scalar_lea.vmem [#allocation2], %s434
        // Predicated region
        $region45: #{sparse_mmdit_block_forward.6} parent=43 // pred_check
          %p436 = pneg %p71
        $region46: #{sparse_mmdit_block_forward.6} parent=43 // pred_check_branch
          %438 = sbr.rel (%p436) target = $region48
        $region47: #{sparse_mmdit_block_forward.6} parent=43 // pred_region
          %439 = dma.done %s432, 768
        $region48: #{sparse_mmdit_block_forward.6} parent=43 // pred_fallthru
          _
        %s440 = sand.u32 %s36, 1
        %s441 = scalar_lea.sflag [#allocation6], %s440
        %s442 = sand.u32 %s84, 1
        %s443 = smul.addr %s442, 32
        %s444 = scalar_lea.vmem [#allocation5], %s443
        // Predicated region
        $region49: #{sparse_mmdit_block_forward.6} parent=43 // pred_check
          %p445 = pneg %p97
        $region50: #{sparse_mmdit_block_forward.6} parent=43 // pred_check_branch
          %447 = sbr.rel (%p445) target = $region52
        $region51: #{sparse_mmdit_block_forward.6} parent=43 // pred_region
          %448 = dma.done %s441, 512
        $region52: #{sparse_mmdit_block_forward.6} parent=43 // pred_fallthru
          _
        %s449 = sand.u32 %s36, 1
        %s450 = scalar_lea.sflag [#allocation6], %s449
        %s451 = sand.u32 %s110, 1
        %s452 = smul.addr %s451, 32
        %s453 = scalar_lea.vmem [#allocation7], %s452
        // Predicated region
        $region53: #{sparse_mmdit_block_forward.6} parent=43 // pred_check
          %p454 = pneg %p123
        $region54: #{sparse_mmdit_block_forward.6} parent=43 // pred_check_branch
          %456 = sbr.rel (%p454) target = $region56
        $region55: #{sparse_mmdit_block_forward.6} parent=43 // pred_region
          %457 = dma.done %s450, 512
        $region56: #{sparse_mmdit_block_forward.6} parent=43 // pred_fallthru
          _
        %s458 = sand.u32 %s36, 1
        %s459 = scalar_lea.sflag [#allocation9], %s458
        %s460 = sand.u32 %s140, 1
        %s461 = scalar_lea.vmem [#allocation8], %s460
        // Predicated region
        $region57: #{sparse_mmdit_block_forward.6} parent=43 // pred_check
          %p462 = pneg %p153
        $region58: #{sparse_mmdit_block_forward.6} parent=43 // pred_check_branch
          %464 = sbr.rel (%p462) target = $region60
        $region59: #{sparse_mmdit_block_forward.6} parent=43 // pred_region
          %465 = dma.done %s459, 16
        $region60: #{sparse_mmdit_block_forward.6} parent=43 // pred_fallthru
          _
        %s466 = sand.u32 %s36, 1
        %s467 = scalar_lea.sflag [#allocation9], %s466
        %s468 = sand.u32 %s170, 1
        %s469 = scalar_lea.vmem [#allocation10], %s468
        // Predicated region
        $region61: #{sparse_mmdit_block_forward.6} parent=43 // pred_check
          %p470 = pneg %p183
        $region62: #{sparse_mmdit_block_forward.6} parent=43 // pred_check_branch
          %472 = sbr.rel (%p470) target = $region64
        $region63: #{sparse_mmdit_block_forward.6} parent=43 // pred_region
          %473 = dma.done %s467, 16
        $region64: #{sparse_mmdit_block_forward.6} parent=43 // pred_fallthru
          _
        // Predicated region
        $region65: #{sparse_mmdit_block_forward.6} parent=43 // pred_check
          %p474 = pneg %p204
        $region66: #{sparse_mmdit_block_forward.6} parent=43 // pred_check_branch
          %476 = sbr.rel (%p474) target = $region68
        $region67: #{sparse_mmdit_block_forward.6} parent=43 // pred_region
          %477 = dma.done [#allocation12], 512
        $region68: #{sparse_mmdit_block_forward.6} parent=43 // pred_fallthru
          _
        %s478 = sand.u32 %s58, 1
        %s479 = scalar_lea.sflag [#allocation3], %s478
        %s480 = sand.u32 %s58, 1
        %s481 = smul.addr %s480, 48
        %s482 = scalar_lea.vmem [#allocation2], %s481
        %p483 = pneg %p71
        %p484 = pneg %p68
        %s485 = sand.u32 %s36, 1
        %s486 = scalar_lea.sflag [#allocation6], %s485
        %s487 = sand.u32 %s84, 1
        %s488 = smul.addr %s487, 32
        %s489 = scalar_lea.vmem [#allocation5], %s488
        %p490 = pneg %p97
        %p491 = pneg %p94
        %s492 = sand.u32 %s36, 1
        %s493 = scalar_lea.sflag [#allocation6], %s492
        %s494 = sand.u32 %s110, 1
        %s495 = smul.addr %s494, 32
        %s496 = scalar_lea.vmem [#allocation7], %s495
        %p497 = pneg %p123
        %p498 = pneg %p120
        %s499 = sand.u32 %s36, 1
        %s500 = scalar_lea.sflag [#allocation9], %s499
        %s501 = sand.u32 %s140, 1
        %s502 = scalar_lea.vmem [#allocation8], %s501
        %p503 = pneg %p153
        %p504 = pneg %p150
        %s505 = sand.u32 %s36, 1
        %s506 = scalar_lea.sflag [#allocation9], %s505
        %s507 = sand.u32 %s170, 1
        %s508 = scalar_lea.vmem [#allocation10], %s507
        %p509 = pneg %p183
        %p510 = pneg %p180
        %p511 = pneg %p204
        %p512 = pneg %p201
        %p513 = pneg %p232
        %p514 = pneg %p229
        %s515 = sand.u32 %s219, 1
        %s516 = scalar_lea.sflag [#allocation4], %s515
        %s517 = sand.u32 %s219, 1
        %s518 = smul.addr %s517, 64
        %s519 = scalar_lea.vmem [#allocation13], %s518
        %p520 = pneg %p260
        %p521 = pneg %p257
        %s522 = sand.u32 %s36, 1
        %s523 = scalar_lea.sflag [#allocation15], %s522
        %s524 = sand.u32 %s247, 1
        %s525 = smul.addr %s524, 64
        %s526 = scalar_lea.vmem [#allocation14], %s525
        %p527 = pneg %p288
        %p528 = pneg %p285
        %s529 = sand.u32 %s36, 1
        %s530 = scalar_lea.sflag [#allocation15], %s529
        %s531 = sand.u32 %s275, 1
        %s532 = smul.addr %s531, 64
        %s533 = scalar_lea.vmem [#allocation16], %s532
        %s534 = smul.u32 4, %s41
        %s535 = smul.u32 4, %s41
        %s536 = smul.u32 4, %s41
        %p537 = scmp.ge.s32.totalorder %s41, 2
        %s538 = scalar_select %p537, 1, 0
        %p539 = scmp.ge.s32.totalorder %s41, 2
        %s540 = scalar_select %p539, 1, 0
        %s541 = smul.u32 4, %s41
        %s542 = smul.u32 4, %s41
        %s543 = smul.u32 4, %s41
        %v544 = vld [vmem:[%s444] sm:$0xff]
        %v545 = vld [vmem:[%s444 + $0x8] sm:$0xff]
        %v546 = vld [vmem:[%s444 + $0x10] sm:$0xff]
        %v547 = vld [vmem:[%s444 + $0x18] sm:$0xff]
        %v548 = vld [vmem:[%s453] sm:$0xff]
        %v549 = vld [vmem:[%s453 + $0x8] sm:$0xff]
        %v550 = vld [vmem:[%s453 + $0x10] sm:$0xff]
        %v551 = vld [vmem:[%s453 + $0x18] sm:$0xff]
        %v552 = vld [vmem:[#allocation11] sm:$0xff]
        %v553 = vld [vmem:[#allocation11 + $0x8] sm:$0xff]
        %v554 = vld [vmem:[#allocation11 + $0x10] sm:$0xff]
        %v555 = vld [vmem:[#allocation11 + $0x18] sm:$0xff]
        %v556 = vld [vmem:[%s461] sm:$0x1]
        %v557 = vld [vmem:[%s469] sm:$0x1]
        %v558 = vld [vmem:[%s435] sm:$0xf]
        %v559 = vld [vmem:[%s435 + $0xc] sm:$0xf]
        %v560 = vld [vmem:[%s435 + $0x18] sm:$0xf]
        %v561 = vld [vmem:[%s435 + $0x24] sm:$0xf]
        %v562 = vunpack.c.l.bf16 %v558
        %v563 = vunpack.c.l.bf16 %v559
        %v564 = vunpack.c.l.bf16 %v560
        %v565 = vunpack.c.l.bf16 %v561
        %v566 = vld [vmem:[%s435 + $0x4] sm:$0xf]
        %v567 = vld [vmem:[%s435 + $0x10] sm:$0xf]
        %v568 = vld [vmem:[%s435 + $0x1c] sm:$0xf]
        %v569 = vld [vmem:[%s435 + $0x28] sm:$0xf]
        %v570 = vunpack.c.l.bf16 %v566
        %v571 = vunpack.c.l.bf16 %v567
        %v572 = vunpack.c.l.bf16 %v568
        %v573 = vunpack.c.l.bf16 %v569
        %v574 = vmul.f32 %v562, %v562
        %v575 = vmul.f32 %v563, %v563
        %v576 = vmul.f32 %v564, %v564
        %v577 = vmul.f32 %v565, %v565
        %vm578 = vcmask 261120
        %v579 = vsel %vm578, %v574, 0.0
        %580 = vadd.xlane.f32.xlu0 %v579
        %v581 = vpop.xlane.xlu0 %580
        %v582 = vsel %vm578, %v575, 0.0
        %583 = vadd.xlane.f32.xlu0 %v582
        %v584 = vpop.xlane.xlu0 %583
        %v585 = vsel %vm578, %v576, 0.0
        %586 = vadd.xlane.f32.xlu0 %v585
        %v587 = vpop.xlane.xlu0 %586
        %v588 = vsel %vm578, %v577, 0.0
        %589 = vadd.xlane.f32.xlu0 %v588
        %v590 = vpop.xlane.xlu0 %589
        %v591 = vrcp.pop 32.0
        %v592 = vmul.f32 %v581, %v591
        %v593 = vmul.f32 %v584, %v591
        %v594 = vmul.f32 %v587, %v591
        %v595 = vmul.f32 %v590, %v591
        %v596 = vadd.f32 %v592, 1e-05
        %v597 = vadd.f32 %v593, 1e-05
        %v598 = vadd.f32 %v594, 1e-05
        %v599 = vadd.f32 %v595, 1e-05
        %v600 = vrsqrt.pop %v596
        %v601 = vrsqrt.pop %v597
        %v602 = vrsqrt.pop %v598
        %v603 = vrsqrt.pop %v599
        %v604 = vmul.f32 %v562, %v600
        %v605 = vmul.f32 %v563, %v601
        %v606 = vmul.f32 %v564, %v602
        %v607 = vmul.f32 %v565, %v603
        %v609 = vlaneseq
        %v610 = vshrl.u32 %v609, 7
        %v611 = vsub.s32 0, %v610
        %v612 = vrot.slane %v556, %v611
        %v614 = vmul.f32 %v604, %v612
        %v615 = vmul.f32 %v605, %v612
        %v616 = vmul.f32 %v606, %v612
        %v617 = vmul.f32 %v607, %v612
        %v618 = vmul.f32 %v614, %v544
        %v619 = vmul.f32 %v615, %v545
        %v620 = vmul.f32 %v616, %v546
        %v621 = vmul.f32 %v617, %v547
        %v623 = vsel %vm578, %v614, 0
        %v626 = vsel %vm578, %v615, 0
        %v629 = vsel %vm578, %v616, 0
        %v632 = vsel %vm578, %v617, 0
        %634 = vmatprep.subr.mxu0 0.0
        %635 = vmatpush1.msra.mxu0 %v552
        %636 = vmatprep.subr.mxu0 0.0
        %637 = vmatpush1.msra.mxu0 %v553
        %638 = vmatprep.subr.mxu0 0.0
        %639 = vmatpush1.msra.mxu0 %v554
        %640 = vmatprep.subr.mxu0 0.0
        %641 = vmatpush1.msra.mxu0 %v555
        %642 = vmatprep.subr.mxu0 0.0
        %643 = vmatpush1.msra.mxu0 0.0
        %644 = vmatprep.subr.mxu0 0.0
        %645 = vmatpush1.msra.mxu0 0.0
        %646 = vmatprep.subr.mxu0 0.0
        %647 = vmatpush1.msra.mxu0 0.0
        %648 = vmatprep.subr.mxu0 0.0
        %649 = vmatpush1.msra.mxu0 0.0
        %650 = vmatprep.subr.mxu0 0.0
        %651 = vmatpush1.msra.mxu0 0.0
        %652 = vmatprep.subr.mxu0 0.0
        %653 = vmatpush1.msra.mxu0 0.0
        %654 = vmatprep.subr.mxu0 0.0
        %655 = vmatpush1.msra.mxu0 0.0
        %656 = vmatprep.subr.mxu0 0.0
        %657 = vmatpush1.msra.mxu0 0.0
        %658 = vmatprep.subr.mxu0 0.0
        %659 = vmatpush1.msra.mxu0 0.0
        %660 = vmatprep.subr.mxu0 0.0
        %661 = vmatpush1.msra.mxu0 0.0
        %662 = vmatprep.subr.mxu0 0.0
        %663 = vmatpush1.msra.mxu0 0.0
        %664 = vmatprep.subr.mxu0 0.0
        %665 = vmatpush1.msra.mxu0 0.0
        %666 = vmatprep.subr.mxu0 0.0
        %667 = vmatpush1.msra.mxu0 0.0
        %668 = vmatprep.subr.mxu0 0.0
        %669 = vmatpush1.msra.mxu0 0.0
        %670 = vmatprep.subr.mxu0 0.0
        %671 = vmatpush1.msra.mxu0 0.0
        %672 = vmatprep.subr.mxu0 0.0
        %673 = vmatpush1.msra.mxu0 0.0
        %674 = vmatprep.subr.mxu0 0.0
        %675 = vmatpush1.msra.mxu0 0.0
        %676 = vmatprep.subr.mxu0 0.0
        %677 = vmatpush1.msra.mxu0 0.0
        %678 = vmatprep.subr.mxu0 0.0
        %679 = vmatpush1.msra.mxu0 0.0
        %680 = vmatprep.subr.mxu0 0.0
        %681 = vmatpush1.msra.mxu0 0.0
        %682 = vmatprep.subr.mxu0 0.0
        %683 = vmatpush1.msra.mxu0 0.0
        %684 = vmatprep.subr.mxu0 0.0
        %685 = vmatpush1.msra.mxu0 0.0
        %686 = vmatprep.subr.mxu0 0.0
        %687 = vmatpush1.msra.mxu0 0.0
        %688 = vmatprep.subr.mxu0 0.0
        %689 = vmatpush1.msra.mxu0 0.0
        %690 = vmatprep.subr.mxu0 0.0
        %691 = vmatpush1.msra.mxu0 0.0
        %692 = vmatprep.subr.mxu0 0.0
        %693 = vmatpush1.msra.mxu0 0.0
        %694 = vmatprep.subr.mxu0 0.0
        %695 = vmatpush1.msra.mxu0 0.0
        %696 = vmatprep.subr.mxu0 0.0
        %697 = vmatpush1.msra.mxu0 0.0
        %698 = vmatprep.mubr.f32.mxu0 0.0
        %699 = vmatmul.mubr.f32.gmra.mrb[0].mxu0 %v623
        %v700 = vpop.f32.mrb[0].mxu0
        %v701 = vadd.f32 0.0, %v700
        %v702 = vpop.f32.mrb[0].mxu0
        %703 = vmatprep.mubr.f32.mxu0 0.0
        %704 = vmatmul.mubr.f32.gmra.mrb[0].mxu0 %v626
        %v705 = vpop.f32.mrb[0].mxu0
        %v706 = vadd.f32 0.0, %v705
        %v707 = vpop.f32.mrb[0].mxu0
        %708 = vmatprep.mubr.f32.mxu0 0.0
        %709 = vmatmul.mubr.f32.gmra.mrb[0].mxu0 %v629
        %v710 = vpop.f32.mrb[0].mxu0
        %v711 = vadd.f32 0.0, %v710
        %v712 = vpop.f32.mrb[0].mxu0
        %713 = vmatprep.mubr.f32.mxu0 0.0
        %714 = vmatmul.mubr.f32.gmra.mrb[0].mxu0 %v632
        %v715 = vpop.f32.mrb[0].mxu0
        %v716 = vadd.f32 0.0, %v715
        %v717 = vpop.f32.mrb[0].mxu0
        %718 = vdwg.mxu0
        %v719 = vmul.f32 %v701, %v548
        %v720 = vmul.f32 %v706, %v549
        %v721 = vmul.f32 %v711, %v550
        %v722 = vmul.f32 %v716, %v551
        %v723 = vadd.f32 %v618, %v719
        %v724 = vadd.f32 %v619, %v720
        %v725 = vadd.f32 %v620, %v721
        %v726 = vadd.f32 %v621, %v722
        %v727 = vmul.f32 %v723, 0.17677669
        %v728 = vmul.f32 %v724, 0.17677669
        %v729 = vmul.f32 %v725, 0.17677669
        %v730 = vmul.f32 %v726, 0.17677669
        %v731 = vpack.c.bf16 %v728, %v727
        %v732 = vpack.c.bf16 %v730, %v729
        %v735 = vunpack.c.l.b16 %v731
        %v736 = vunpack.c.h.b16 %v731
        %v737 = vunpack.c.l.b16 %v732
        %v738 = vunpack.c.h.b16 %v732
        %v739 = vpack.c.b16 %v735, %v735
        %v740 = vpack.c.b16 %v736, %v736
        %v741 = vpack.c.b16 %v737, %v737
        %v742 = vpack.c.b16 %v738, %v738
        %vm747 = vcmask 257024
        %748 = vst.msk [vmem:[%s519] sm:$0xf] %vm747, %v739
        %749 = vst.msk [vmem:[%s519 + $0x4] sm:$0xf] %vm747, %v740
        %750 = vst.msk [vmem:[%s519 + $0x8] sm:$0xf] %vm747, %v741
        %751 = vst.msk [vmem:[%s519 + $0xc] sm:$0xf] %vm747, %v742
        %v752 = vmul.f32 %v570, %v570
        %v753 = vmul.f32 %v571, %v571
        %v754 = vmul.f32 %v572, %v572
        %v755 = vmul.f32 %v573, %v573
        %v756 = vsel %vm578, %v752, 0.0
        %757 = vadd.xlane.f32.xlu0 %v756
        %v758 = vpop.xlane.xlu0 %757
        %v759 = vsel %vm578, %v753, 0.0
        %760 = vadd.xlane.f32.xlu0 %v759
        %v761 = vpop.xlane.xlu0 %760
        %v762 = vsel %vm578, %v754, 0.0
        %763 = vadd.xlane.f32.xlu0 %v762
        %v764 = vpop.xlane.xlu0 %763
        %v765 = vsel %vm578, %v755, 0.0
        %766 = vadd.xlane.f32.xlu0 %v765
        %v767 = vpop.xlane.xlu0 %766
        %v768 = vmul.f32 %v758, %v591
        %v769 = vmul.f32 %v761, %v591
        %v770 = vmul.f32 %v764, %v591
        %v771 = vmul.f32 %v767, %v591
        %v772 = vadd.f32 %v768, 1e-05
        %v773 = vadd.f32 %v769, 1e-05
        %v774 = vadd.f32 %v770, 1e-05
        %v775 = vadd.f32 %v771, 1e-05
        %v776 = vrsqrt.pop %v772
        %v777 = vrsqrt.pop %v773
        %v778 = vrsqrt.pop %v774
        %v779 = vrsqrt.pop %v775
        %v780 = vmul.f32 %v570, %v776
        %v781 = vmul.f32 %v571, %v777
        %v782 = vmul.f32 %v572, %v778
        %v783 = vmul.f32 %v573, %v779
        %v785 = vlaneseq
        %v786 = vshrl.u32 %v785, 7
        %v787 = vsub.s32 0, %v786
        %v788 = vrot.slane %v557, %v787
        %v790 = vmul.f32 %v780, %v788
        %v791 = vmul.f32 %v781, %v788
        %v792 = vmul.f32 %v782, %v788
        %v793 = vmul.f32 %v783, %v788
        %v794 = vmul.f32 %v790, %v544
        %v795 = vmul.f32 %v791, %v545
        %v796 = vmul.f32 %v792, %v546
        %v797 = vmul.f32 %v793, %v547
        %v799 = vsel %vm578, %v790, 0
        %v802 = vsel %vm578, %v791, 0
        %v805 = vsel %vm578, %v792, 0
        %v808 = vsel %vm578, %v793, 0
        %810 = vmatprep.subr.mxu0 0.0
        %811 = vmatpush1.msra.mxu0 %v552
        %812 = vmatprep.subr.mxu0 0.0
        %813 = vmatpush1.msra.mxu0 %v553
        %814 = vmatprep.subr.mxu0 0.0
        %815 = vmatpush1.msra.mxu0 %v554
        %816 = vmatprep.subr.mxu0 0.0
        %817 = vmatpush1.msra.mxu0 %v555
        %818 = vmatprep.subr.mxu0 0.0
        %819 = vmatpush1.msra.mxu0 0.0
        %820 = vmatprep.subr.mxu0 0.0
        %821 = vmatpush1.msra.mxu0 0.0
        %822 = vmatprep.subr.mxu0 0.0
        %823 = vmatpush1.msra.mxu0 0.0
        %824 = vmatprep.subr.mxu0 0.0
        %825 = vmatpush1.msra.mxu0 0.0
        %826 = vmatprep.subr.mxu0 0.0
        %827 = vmatpush1.msra.mxu0 0.0
        %828 = vmatprep.subr.mxu0 0.0
        %829 = vmatpush1.msra.mxu0 0.0
        %830 = vmatprep.subr.mxu0 0.0
        %831 = vmatpush1.msra.mxu0 0.0
        %832 = vmatprep.subr.mxu0 0.0
        %833 = vmatpush1.msra.mxu0 0.0
        %834 = vmatprep.subr.mxu0 0.0
        %835 = vmatpush1.msra.mxu0 0.0
        %836 = vmatprep.subr.mxu0 0.0
        %837 = vmatpush1.msra.mxu0 0.0
        %838 = vmatprep.subr.mxu0 0.0
        %839 = vmatpush1.msra.mxu0 0.0
        %840 = vmatprep.subr.mxu0 0.0
        %841 = vmatpush1.msra.mxu0 0.0
        %842 = vmatprep.subr.mxu0 0.0
        %843 = vmatpush1.msra.mxu0 0.0
        %844 = vmatprep.subr.mxu0 0.0
        %845 = vmatpush1.msra.mxu0 0.0
        %846 = vmatprep.subr.mxu0 0.0
        %847 = vmatpush1.msra.mxu0 0.0
        %848 = vmatprep.subr.mxu0 0.0
        %849 = vmatpush1.msra.mxu0 0.0
        %850 = vmatprep.subr.mxu0 0.0
        %851 = vmatpush1.msra.mxu0 0.0
        %852 = vmatprep.subr.mxu0 0.0
        %853 = vmatpush1.msra.mxu0 0.0
        %854 = vmatprep.subr.mxu0 0.0
        %855 = vmatpush1.msra.mxu0 0.0
        %856 = vmatprep.subr.mxu0 0.0
        %857 = vmatpush1.msra.mxu0 0.0
        %858 = vmatprep.subr.mxu0 0.0
        %859 = vmatpush1.msra.mxu0 0.0
        %860 = vmatprep.subr.mxu0 0.0
        %861 = vmatpush1.msra.mxu0 0.0
        %862 = vmatprep.subr.mxu0 0.0
        %863 = vmatpush1.msra.mxu0 0.0
        %864 = vmatprep.subr.mxu0 0.0
        %865 = vmatpush1.msra.mxu0 0.0
        %866 = vmatprep.subr.mxu0 0.0
        %867 = vmatpush1.msra.mxu0 0.0
        %868 = vmatprep.subr.mxu0 0.0
        %869 = vmatpush1.msra.mxu0 0.0
        %870 = vmatprep.subr.mxu0 0.0
        %871 = vmatpush1.msra.mxu0 0.0
        %872 = vmatprep.subr.mxu0 0.0
        %873 = vmatpush1.msra.mxu0 0.0
        %874 = vmatprep.mubr.f32.mxu0 0.0
        %875 = vmatmul.mubr.f32.gmra.mrb[0].mxu0 %v799
        %v876 = vpop.f32.mrb[0].mxu0
        %v877 = vadd.f32 0.0, %v876
        %v878 = vpop.f32.mrb[0].mxu0
        %879 = vmatprep.mubr.f32.mxu0 0.0
        %880 = vmatmul.mubr.f32.gmra.mrb[0].mxu0 %v802
        %v881 = vpop.f32.mrb[0].mxu0
        %v882 = vadd.f32 0.0, %v881
        %v883 = vpop.f32.mrb[0].mxu0
        %884 = vmatprep.mubr.f32.mxu0 0.0
        %885 = vmatmul.mubr.f32.gmra.mrb[0].mxu0 %v805
        %v886 = vpop.f32.mrb[0].mxu0
        %v887 = vadd.f32 0.0, %v886
        %v888 = vpop.f32.mrb[0].mxu0
        %889 = vmatprep.mubr.f32.mxu0 0.0
        %890 = vmatmul.mubr.f32.gmra.mrb[0].mxu0 %v808
        %v891 = vpop.f32.mrb[0].mxu0
        %v892 = vadd.f32 0.0, %v891
        %v893 = vpop.f32.mrb[0].mxu0
        %894 = vdwg.mxu0
        %v895 = vmul.f32 %v877, %v548
        %v896 = vmul.f32 %v882, %v549
        %v897 = vmul.f32 %v887, %v550
        %v898 = vmul.f32 %v892, %v551
        %v899 = vadd.f32 %v794, %v895
        %v900 = vadd.f32 %v795, %v896
        %v901 = vadd.f32 %v796, %v897
        %v902 = vadd.f32 %v797, %v898
        %v903 = vpack.c.bf16 %v900, %v899
        %v904 = vpack.c.bf16 %v902, %v901
        %v907 = vunpack.c.l.b16 %v903
        %v908 = vunpack.c.h.b16 %v903
        %v909 = vunpack.c.l.b16 %v904
        %v910 = vunpack.c.h.b16 %v904
        %v911 = vpack.c.b16 %v907, %v907
        %v912 = vpack.c.b16 %v908, %v908
        %v913 = vpack.c.b16 %v909, %v909
        %v914 = vpack.c.b16 %v910, %v910
        %919 = vst.msk [vmem:[%s526] sm:$0xf] %vm747, %v911
        %920 = vst.msk [vmem:[%s526 + $0x4] sm:$0xf] %vm747, %v912
        %921 = vst.msk [vmem:[%s526 + $0x8] sm:$0xf] %vm747, %v913
        %922 = vst.msk [vmem:[%s526 + $0xc] sm:$0xf] %vm747, %v914
        %v923 = vld [vmem:[%s435 + $0x8] sm:$0xf]
        %v924 = vld [vmem:[%s435 + $0x14] sm:$0xf]
        %v925 = vld [vmem:[%s435 + $0x20] sm:$0xf]
        %v926 = vld [vmem:[%s435 + $0x2c] sm:$0xf]
        %927 = vst.msk [vmem:[%s533] sm:$0xf] %vm747, %v923
        %928 = vst.msk [vmem:[%s533 + $0x4] sm:$0xf] %vm747, %v924
        %929 = vst.msk [vmem:[%s533 + $0x8] sm:$0xf] %vm747, %v925
        %930 = vst.msk [vmem:[%s533 + $0xc] sm:$0xf] %vm747, %v926
        %v931 = vld [vmem:[%s435] sm:$0xf]
        %v932 = vld [vmem:[%s435 + $0xc] sm:$0xf]
        %v933 = vld [vmem:[%s435 + $0x18] sm:$0xf]
        %v934 = vld [vmem:[%s435 + $0x24] sm:$0xf]
        %v935 = vunpack.c.l.bf16 %v931
        %v936 = vunpack.c.l.bf16 %v932
        %v937 = vunpack.c.l.bf16 %v933
        %v938 = vunpack.c.l.bf16 %v934
        %v939 = vld [vmem:[%s435 + $0x4] sm:$0xf]
        %v940 = vld [vmem:[%s435 + $0x10] sm:$0xf]
        %v941 = vld [vmem:[%s435 + $0x1c] sm:$0xf]
        %v942 = vld [vmem:[%s435 + $0x28] sm:$0xf]
        %v943 = vunpack.c.l.bf16 %v939
        %v944 = vunpack.c.l.bf16 %v940
        %v945 = vunpack.c.l.bf16 %v941
        %v946 = vunpack.c.l.bf16 %v942
        %v947 = vmul.f32 %v935, %v935
        %v948 = vmul.f32 %v936, %v936
        %v949 = vmul.f32 %v937, %v937
        %v950 = vmul.f32 %v938, %v938
        %955 = vrot.lane.b32.xlu0 %v947, 96
        %v956 = vpop.permute.xlu0 %955
        %957 = vrot.lane.b32.xlu0 %v948, 96
        %v958 = vpop.permute.xlu0 %957
        %959 = vrot.lane.b32.xlu0 %v949, 96
        %v960 = vpop.permute.xlu0 %959
        %961 = vrot.lane.b32.xlu0 %v950, 96
        %v962 = vpop.permute.xlu0 %961
        %v967 = vsel %vm578, %v956, 0.0
        %968 = vadd.xlane.f32.xlu0 %v967
        %v969 = vpop.xlane.xlu0 %968
        %v970 = vsel %vm578, %v958, 0.0
        %971 = vadd.xlane.f32.xlu0 %v970
        %v972 = vpop.xlane.xlu0 %971
        %v973 = vsel %vm578, %v960, 0.0
        %974 = vadd.xlane.f32.xlu0 %v973
        %v975 = vpop.xlane.xlu0 %974
        %v976 = vsel %vm578, %v962, 0.0
        %977 = vadd.xlane.f32.xlu0 %v976
        %v978 = vpop.xlane.xlu0 %977
        %v979 = vmul.f32 %v969, %v591
        %v980 = vmul.f32 %v972, %v591
        %v981 = vmul.f32 %v975, %v591
        %v982 = vmul.f32 %v978, %v591
        %v983 = vadd.f32 %v979, 1e-05
        %v984 = vadd.f32 %v980, 1e-05
        %v985 = vadd.f32 %v981, 1e-05
        %v986 = vadd.f32 %v982, 1e-05
        %v987 = vrsqrt.pop %v983
        %v988 = vrsqrt.pop %v984
        %v989 = vrsqrt.pop %v985
        %v990 = vrsqrt.pop %v986
        %v991 = vmul.f32 %v935, %v987
        %v992 = vmul.f32 %v936, %v988
        %v993 = vmul.f32 %v937, %v989
        %v994 = vmul.f32 %v938, %v990
        %995 = vrot.lane.b32.xlu0 %v612, 32
        %v996 = vpop.permute.xlu0 %995
        %v998 = vmul.f32 %v991, %v996
        %v999 = vmul.f32 %v992, %v996
        %v1000 = vmul.f32 %v993, %v996
        %v1001 = vmul.f32 %v994, %v996
        %1006 = vrot.lane.b32.xlu0 %v544, 32
        %v1007 = vpop.permute.xlu0 %1006
        %1008 = vrot.lane.b32.xlu0 %v545, 32
        %v1009 = vpop.permute.xlu0 %1008
        %1010 = vrot.lane.b32.xlu0 %v546, 32
        %v1011 = vpop.permute.xlu0 %1010
        %1012 = vrot.lane.b32.xlu0 %v547, 32
        %v1013 = vpop.permute.xlu0 %1012
        %v1018 = vmul.f32 %v998, %v1007
        %v1019 = vmul.f32 %v999, %v1009
        %v1020 = vmul.f32 %v1000, %v1011
        %v1021 = vmul.f32 %v1001, %v1013
        %1026 = vrot.lane.b32.xlu0 %v998, 96
        %v1027 = vpop.permute.xlu0 %1026
        %1028 = vrot.lane.b32.xlu0 %v999, 96
        %v1029 = vpop.permute.xlu0 %1028
        %1030 = vrot.lane.b32.xlu0 %v1000, 96
        %v1031 = vpop.permute.xlu0 %1030
        %1032 = vrot.lane.b32.xlu0 %v1001, 96
        %v1033 = vpop.permute.xlu0 %1032
        %v1034 = vsel %vm578, %v1027, 0
        %v1036 = vsel %vm578, %v1029, 0
        %v1038 = vsel %vm578, %v1031, 0
        %v1040 = vsel %vm578, %v1033, 0
        %1042 = vmatprep.subr.mxu0 0.0
        %1043 = vmatpush1.msra.mxu0 %v552
        %1044 = vmatprep.subr.mxu0 0.0
        %1045 = vmatpush1.msra.mxu0 %v553
        %1046 = vmatprep.subr.mxu0 0.0
        %1047 = vmatpush1.msra.mxu0 %v554
        %1048 = vmatprep.subr.mxu0 0.0
        %1049 = vmatpush1.msra.mxu0 %v555
        %1050 = vmatprep.subr.mxu0 0.0
        %1051 = vmatpush1.msra.mxu0 0.0
        %1052 = vmatprep.subr.mxu0 0.0
        %1053 = vmatpush1.msra.mxu0 0.0
        %1054 = vmatprep.subr.mxu0 0.0
        %1055 = vmatpush1.msra.mxu0 0.0
        %1056 = vmatprep.subr.mxu0 0.0
        %1057 = vmatpush1.msra.mxu0 0.0
        %1058 = vmatprep.subr.mxu0 0.0
        %1059 = vmatpush1.msra.mxu0 0.0
        %1060 = vmatprep.subr.mxu0 0.0
        %1061 = vmatpush1.msra.mxu0 0.0
        %1062 = vmatprep.subr.mxu0 0.0
        %1063 = vmatpush1.msra.mxu0 0.0
        %1064 = vmatprep.subr.mxu0 0.0
        %1065 = vmatpush1.msra.mxu0 0.0
        %1066 = vmatprep.subr.mxu0 0.0
        %1067 = vmatpush1.msra.mxu0 0.0
        %1068 = vmatprep.subr.mxu0 0.0
        %1069 = vmatpush1.msra.mxu0 0.0
        %1070 = vmatprep.subr.mxu0 0.0
        %1071 = vmatpush1.msra.mxu0 0.0
        %1072 = vmatprep.subr.mxu0 0.0
        %1073 = vmatpush1.msra.mxu0 0.0
        %1074 = vmatprep.subr.mxu0 0.0
        %1075 = vmatpush1.msra.mxu0 0.0
        %1076 = vmatprep.subr.mxu0 0.0
        %1077 = vmatpush1.msra.mxu0 0.0
        %1078 = vmatprep.subr.mxu0 0.0
        %1079 = vmatpush1.msra.mxu0 0.0
        %1080 = vmatprep.subr.mxu0 0.0
        %1081 = vmatpush1.msra.mxu0 0.0
        %1082 = vmatprep.subr.mxu0 0.0
        %1083 = vmatpush1.msra.mxu0 0.0
        %1084 = vmatprep.subr.mxu0 0.0
        %1085 = vmatpush1.msra.mxu0 0.0
        %1086 = vmatprep.subr.mxu0 0.0
        %1087 = vmatpush1.msra.mxu0 0.0
        %1088 = vmatprep.subr.mxu0 0.0
        %1089 = vmatpush1.msra.mxu0 0.0
        %1090 = vmatprep.subr.mxu0 0.0
        %1091 = vmatpush1.msra.mxu0 0.0
        %1092 = vmatprep.subr.mxu0 0.0
        %1093 = vmatpush1.msra.mxu0 0.0
        %1094 = vmatprep.subr.mxu0 0.0
        %1095 = vmatpush1.msra.mxu0 0.0
        %1096 = vmatprep.subr.mxu0 0.0
        %1097 = vmatpush1.msra.mxu0 0.0
        %1098 = vmatprep.subr.mxu0 0.0
        %1099 = vmatpush1.msra.mxu0 0.0
        %1100 = vmatprep.subr.mxu0 0.0
        %1101 = vmatpush1.msra.mxu0 0.0
        %1102 = vmatprep.subr.mxu0 0.0
        %1103 = vmatpush1.msra.mxu0 0.0
        %1104 = vmatprep.subr.mxu0 0.0
        %1105 = vmatpush1.msra.mxu0 0.0
        %1106 = vmatprep.mubr.f32.mxu0 0.0
        %1107 = vmatmul.mubr.f32.gmra.mrb[0].mxu0 %v1034
        %v1108 = vpop.f32.mrb[0].mxu0
        %v1109 = vadd.f32 0.0, %v1108
        %v1110 = vpop.f32.mrb[0].mxu0
        %1111 = vmatprep.mubr.f32.mxu0 0.0
        %1112 = vmatmul.mubr.f32.gmra.mrb[0].mxu0 %v1036
        %v1113 = vpop.f32.mrb[0].mxu0
        %v1114 = vadd.f32 0.0, %v1113
        %v1115 = vpop.f32.mrb[0].mxu0
        %1116 = vmatprep.mubr.f32.mxu0 0.0
        %1117 = vmatmul.mubr.f32.gmra.mrb[0].mxu0 %v1038
        %v1118 = vpop.f32.mrb[0].mxu0
        %v1119 = vadd.f32 0.0, %v1118
        %v1120 = vpop.f32.mrb[0].mxu0
        %1121 = vmatprep.mubr.f32.mxu0 0.0
        %1122 = vmatmul.mubr.f32.gmra.mrb[0].mxu0 %v1040
        %v1123 = vpop.f32.mrb[0].mxu0
        %v1124 = vadd.f32 0.0, %v1123
        %v1125 = vpop.f32.mrb[0].mxu0
        %1126 = vdwg.mxu0
        %v1127 = vmul.f32 %v1109, %v548
        %v1128 = vmul.f32 %v1114, %v549
        %v1129 = vmul.f32 %v1119, %v550
        %v1130 = vmul.f32 %v1124, %v551
        %1135 = vrot.lane.b32.xlu0 %v1127, 32
        %v1136 = vpop.permute.xlu0 %1135
        %1137 = vrot.lane.b32.xlu0 %v1128, 32
        %v1138 = vpop.permute.xlu0 %1137
        %1139 = vrot.lane.b32.xlu0 %v1129, 32
        %v1140 = vpop.permute.xlu0 %1139
        %1141 = vrot.lane.b32.xlu0 %v1130, 32
        %v1142 = vpop.permute.xlu0 %1141
        %v1147 = vadd.f32 %v1018, %v1136
        %v1148 = vadd.f32 %v1019, %v1138
        %v1149 = vadd.f32 %v1020, %v1140
        %v1150 = vadd.f32 %v1021, %v1142
        %v1151 = vmul.f32 %v1147, 0.17677669
        %v1152 = vmul.f32 %v1148, 0.17677669
        %v1153 = vmul.f32 %v1149, 0.17677669
        %v1154 = vmul.f32 %v1150, 0.17677669
        %v1155 = vpack.c.bf16 %v1152, %v1151
        %v1156 = vpack.c.bf16 %v1154, %v1153
        %v1159 = vunpack.c.l.b16 %v1155
        %v1160 = vunpack.c.h.b16 %v1155
        %v1161 = vunpack.c.l.b16 %v1156
        %v1162 = vunpack.c.h.b16 %v1156
        %v1163 = vpack.c.b16 %v1159, %v1159
        %v1164 = vpack.c.b16 %v1160, %v1160
        %v1165 = vpack.c.b16 %v1161, %v1161
        %v1166 = vpack.c.b16 %v1162, %v1162
        %1167 = vrot.lane.b32.xlu0 %v1163, 96
        %v1168 = vpop.permute.xlu0 %1167
        %1169 = vrot.lane.b32.xlu0 %v1164, 96
        %v1170 = vpop.permute.xlu0 %1169
        %1171 = vrot.lane.b32.xlu0 %v1165, 96
        %v1172 = vpop.permute.xlu0 %1171
        %1173 = vrot.lane.b32.xlu0 %v1166, 96
        %v1174 = vpop.permute.xlu0 %1173
        %s1179 = scalar_lea.vmem %s519, 16 [#allocation13]
        %1180 = vst.msk [vmem:[%s1179] sm:$0xf] %vm747, %v1168
        %1181 = vst.msk [vmem:[%s1179 + $0x4] sm:$0xf] %vm747, %v1170
        %1182 = vst.msk [vmem:[%s1179 + $0x8] sm:$0xf] %vm747, %v1172
        %1183 = vst.msk [vmem:[%s1179 + $0xc] sm:$0xf] %vm747, %v1174
        %v1184 = vmul.f32 %v943, %v943
        %v1185 = vmul.f32 %v944, %v944
        %v1186 = vmul.f32 %v945, %v945
        %v1187 = vmul.f32 %v946, %v946
        %1192 = vrot.lane.b32.xlu0 %v1184, 96
        %v1193 = vpop.permute.xlu0 %1192
        %1194 = vrot.lane.b32.xlu0 %v1185, 96
        %v1195 = vpop.permute.xlu0 %1194
        %1196 = vrot.lane.b32.xlu0 %v1186, 96
        %v1197 = vpop.permute.xlu0 %1196
        %1198 = vrot.lane.b32.xlu0 %v1187, 96
        %v1199 = vpop.permute.xlu0 %1198
        %v1204 = vsel %vm578, %v1193, 0.0
        %1205 = vadd.xlane.f32.xlu0 %v1204
        %v1206 = vpop.xlane.xlu0 %1205
        %v1207 = vsel %vm578, %v1195, 0.0
        %1208 = vadd.xlane.f32.xlu0 %v1207
        %v1209 = vpop.xlane.xlu0 %1208
        %v1210 = vsel %vm578, %v1197, 0.0
        %1211 = vadd.xlane.f32.xlu0 %v1210
        %v1212 = vpop.xlane.xlu0 %1211
        %v1213 = vsel %vm578, %v1199, 0.0
        %1214 = vadd.xlane.f32.xlu0 %v1213
        %v1215 = vpop.xlane.xlu0 %1214
        %v1216 = vmul.f32 %v1206, %v591
        %v1217 = vmul.f32 %v1209, %v591
        %v1218 = vmul.f32 %v1212, %v591
        %v1219 = vmul.f32 %v1215, %v591
        %v1220 = vadd.f32 %v1216, 1e-05
        %v1221 = vadd.f32 %v1217, 1e-05
        %v1222 = vadd.f32 %v1218, 1e-05
        %v1223 = vadd.f32 %v1219, 1e-05
        %v1224 = vrsqrt.pop %v1220
        %v1225 = vrsqrt.pop %v1221
        %v1226 = vrsqrt.pop %v1222
        %v1227 = vrsqrt.pop %v1223
        %v1228 = vmul.f32 %v943, %v1224
        %v1229 = vmul.f32 %v944, %v1225
        %v1230 = vmul.f32 %v945, %v1226
        %v1231 = vmul.f32 %v946, %v1227
        %1232 = vrot.lane.b32.xlu0 %v788, 32
        %v1233 = vpop.permute.xlu0 %1232
        %v1235 = vmul.f32 %v1228, %v1233
        %v1236 = vmul.f32 %v1229, %v1233
        %v1237 = vmul.f32 %v1230, %v1233
        %v1238 = vmul.f32 %v1231, %v1233
        %v1239 = vmul.f32 %v1235, %v1007
        %v1240 = vmul.f32 %v1236, %v1009
        %v1241 = vmul.f32 %v1237, %v1011
        %v1242 = vmul.f32 %v1238, %v1013
        %1247 = vrot.lane.b32.xlu0 %v1235, 96
        %v1248 = vpop.permute.xlu0 %1247
        %1249 = vrot.lane.b32.xlu0 %v1236, 96
        %v1250 = vpop.permute.xlu0 %1249
        %1251 = vrot.lane.b32.xlu0 %v1237, 96
        %v1252 = vpop.permute.xlu0 %1251
        %1253 = vrot.lane.b32.xlu0 %v1238, 96
        %v1254 = vpop.permute.xlu0 %1253
        %v1255 = vsel %vm578, %v1248, 0
        %v1257 = vsel %vm578, %v1250, 0
        %v1259 = vsel %vm578, %v1252, 0
        %v1261 = vsel %vm578, %v1254, 0
        %1263 = vmatprep.subr.mxu0 0.0
        %1264 = vmatpush1.msra.mxu0 %v552
        %1265 = vmatprep.subr.mxu0 0.0
        %1266 = vmatpush1.msra.mxu0 %v553
        %1267 = vmatprep.subr.mxu0 0.0
        %1268 = vmatpush1.msra.mxu0 %v554
        %1269 = vmatprep.subr.mxu0 0.0
        %1270 = vmatpush1.msra.mxu0 %v555
        %1271 = vmatprep.subr.mxu0 0.0
        %1272 = vmatpush1.msra.mxu0 0.0
        %1273 = vmatprep.subr.mxu0 0.0
        %1274 = vmatpush1.msra.mxu0 0.0
        %1275 = vmatprep.subr.mxu0 0.0
        %1276 = vmatpush1.msra.mxu0 0.0
        %1277 = vmatprep.subr.mxu0 0.0
        %1278 = vmatpush1.msra.mxu0 0.0
        %1279 = vmatprep.subr.mxu0 0.0
        %1280 = vmatpush1.msra.mxu0 0.0
        %1281 = vmatprep.subr.mxu0 0.0
        %1282 = vmatpush1.msra.mxu0 0.0
        %1283 = vmatprep.subr.mxu0 0.0
        %1284 = vmatpush1.msra.mxu0 0.0
        %1285 = vmatprep.subr.mxu0 0.0
        %1286 = vmatpush1.msra.mxu0 0.0
        %1287 = vmatprep.subr.mxu0 0.0
        %1288 = vmatpush1.msra.mxu0 0.0
        %1289 = vmatprep.subr.mxu0 0.0
        %1290 = vmatpush1.msra.mxu0 0.0
        %1291 = vmatprep.subr.mxu0 0.0
        %1292 = vmatpush1.msra.mxu0 0.0
        %1293 = vmatprep.subr.mxu0 0.0
        %1294 = vmatpush1.msra.mxu0 0.0
        %1295 = vmatprep.subr.mxu0 0.0
        %1296 = vmatpush1.msra.mxu0 0.0
        %1297 = vmatprep.subr.mxu0 0.0
        %1298 = vmatpush1.msra.mxu0 0.0
        %1299 = vmatprep.subr.mxu0 0.0
        %1300 = vmatpush1.msra.mxu0 0.0
        %1301 = vmatprep.subr.mxu0 0.0
        %1302 = vmatpush1.msra.mxu0 0.0
        %1303 = vmatprep.subr.mxu0 0.0
        %1304 = vmatpush1.msra.mxu0 0.0
        %1305 = vmatprep.subr.mxu0 0.0
        %1306 = vmatpush1.msra.mxu0 0.0
        %1307 = vmatprep.subr.mxu0 0.0
        %1308 = vmatpush1.msra.mxu0 0.0
        %1309 = vmatprep.subr.mxu0 0.0
        %1310 = vmatpush1.msra.mxu0 0.0
        %1311 = vmatprep.subr.mxu0 0.0
        %1312 = vmatpush1.msra.mxu0 0.0
        %1313 = vmatprep.subr.mxu0 0.0
        %1314 = vmatpush1.msra.mxu0 0.0
        %1315 = vmatprep.subr.mxu0 0.0
        %1316 = vmatpush1.msra.mxu0 0.0
        %1317 = vmatprep.subr.mxu0 0.0
        %1318 = vmatpush1.msra.mxu0 0.0
        %1319 = vmatprep.subr.mxu0 0.0
        %1320 = vmatpush1.msra.mxu0 0.0
        %1321 = vmatprep.subr.mxu0 0.0
        %1322 = vmatpush1.msra.mxu0 0.0
        %1323 = vmatprep.subr.mxu0 0.0
        %1324 = vmatpush1.msra.mxu0 0.0
        %1325 = vmatprep.subr.mxu0 0.0
        %1326 = vmatpush1.msra.mxu0 0.0
        %1327 = vmatprep.mubr.f32.mxu0 0.0
        %1328 = vmatmul.mubr.f32.gmra.mrb[0].mxu0 %v1255
        %v1329 = vpop.f32.mrb[0].mxu0
        %v1330 = vadd.f32 0.0, %v1329
        %v1331 = vpop.f32.mrb[0].mxu0
        %1332 = vmatprep.mubr.f32.mxu0 0.0
        %1333 = vmatmul.mubr.f32.gmra.mrb[0].mxu0 %v1257
        %v1334 = vpop.f32.mrb[0].mxu0
        %v1335 = vadd.f32 0.0, %v1334
        %v1336 = vpop.f32.mrb[0].mxu0
        %1337 = vmatprep.mubr.f32.mxu0 0.0
        %1338 = vmatmul.mubr.f32.gmra.mrb[0].mxu0 %v1259
        %v1339 = vpop.f32.mrb[0].mxu0
        %v1340 = vadd.f32 0.0, %v1339
        %v1341 = vpop.f32.mrb[0].mxu0
        %1342 = vmatprep.mubr.f32.mxu0 0.0
        %1343 = vmatmul.mubr.f32.gmra.mrb[0].mxu0 %v1261
        %v1344 = vpop.f32.mrb[0].mxu0
        %v1345 = vadd.f32 0.0, %v1344
        %v1346 = vpop.f32.mrb[0].mxu0
        %1347 = vdwg.mxu0
        %v1348 = vmul.f32 %v1330, %v548
        %v1349 = vmul.f32 %v1335, %v549
        %v1350 = vmul.f32 %v1340, %v550
        %v1351 = vmul.f32 %v1345, %v551
        %1356 = vrot.lane.b32.xlu0 %v1348, 32
        %v1357 = vpop.permute.xlu0 %1356
        %1358 = vrot.lane.b32.xlu0 %v1349, 32
        %v1359 = vpop.permute.xlu0 %1358
        %1360 = vrot.lane.b32.xlu0 %v1350, 32
        %v1361 = vpop.permute.xlu0 %1360
        %1362 = vrot.lane.b32.xlu0 %v1351, 32
        %v1363 = vpop.permute.xlu0 %1362
        %v1368 = vadd.f32 %v1239, %v1357
        %v1369 = vadd.f32 %v1240, %v1359
        %v1370 = vadd.f32 %v1241, %v1361
        %v1371 = vadd.f32 %v1242, %v1363
        %v1372 = vpack.c.bf16 %v1369, %v1368
        %v1373 = vpack.c.bf16 %v1371, %v1370
        %v1376 = vunpack.c.l.b16 %v1372
        %v1377 = vunpack.c.h.b16 %v1372
        %v1378 = vunpack.c.l.b16 %v1373
        %v1379 = vunpack.c.h.b16 %v1373
        %v1380 = vpack.c.b16 %v1376, %v1376
        %v1381 = vpack.c.b16 %v1377, %v1377
        %v1382 = vpack.c.b16 %v1378, %v1378
        %v1383 = vpack.c.b16 %v1379, %v1379
        %1384 = vrot.lane.b32.xlu0 %v1380, 96
        %v1385 = vpop.permute.xlu0 %1384
        %1386 = vrot.lane.b32.xlu0 %v1381, 96
        %v1387 = vpop.permute.xlu0 %1386
        %1388 = vrot.lane.b32.xlu0 %v1382, 96
        %v1389 = vpop.permute.xlu0 %1388
        %1390 = vrot.lane.b32.xlu0 %v1383, 96
        %v1391 = vpop.permute.xlu0 %1390
        %s1396 = scalar_lea.vmem %s526, 16 [#allocation14]
        %1397 = vst.msk [vmem:[%s1396] sm:$0xf] %vm747, %v1385
        %1398 = vst.msk [vmem:[%s1396 + $0x4] sm:$0xf] %vm747, %v1387
        %1399 = vst.msk [vmem:[%s1396 + $0x8] sm:$0xf] %vm747, %v1389
        %1400 = vst.msk [vmem:[%s1396 + $0xc] sm:$0xf] %vm747, %v1391
        %v1401 = vld [vmem:[%s435 + $0x8] sm:$0xf]
        %v1402 = vld [vmem:[%s435 + $0x14] sm:$0xf]
        %v1403 = vld [vmem:[%s435 + $0x20] sm:$0xf]
        %v1404 = vld [vmem:[%s435 + $0x2c] sm:$0xf]
        %1409 = vrot.lane.b32.xlu0 %v1401, 96
        %v1410 = vpop.permute.xlu0 %1409
        %1411 = vrot.lane.b32.xlu0 %v1402, 96
        %v1412 = vpop.permute.xlu0 %1411
        %1413 = vrot.lane.b32.xlu0 %v1403, 96
        %v1414 = vpop.permute.xlu0 %1413
        %1415 = vrot.lane.b32.xlu0 %v1404, 96
        %v1416 = vpop.permute.xlu0 %1415
        %s1421 = scalar_lea.vmem %s533, 16 [#allocation16]
        %1422 = vst.msk [vmem:[%s1421] sm:$0xf] %vm747, %v1410
        %1423 = vst.msk [vmem:[%s1421 + $0x4] sm:$0xf] %vm747, %v1412
        %1424 = vst.msk [vmem:[%s1421 + $0x8] sm:$0xf] %vm747, %v1414
        %1425 = vst.msk [vmem:[%s1421 + $0xc] sm:$0xf] %vm747, %v1416
        %v1426 = vld [vmem:[%s435] sm:$0xf]
        %v1427 = vld [vmem:[%s435 + $0xc] sm:$0xf]
        %v1428 = vld [vmem:[%s435 + $0x18] sm:$0xf]
        %v1429 = vld [vmem:[%s435 + $0x24] sm:$0xf]
        %v1430 = vunpack.c.l.bf16 %v1426
        %v1431 = vunpack.c.l.bf16 %v1427
        %v1432 = vunpack.c.l.bf16 %v1428
        %v1433 = vunpack.c.l.bf16 %v1429
        %v1434 = vld [vmem:[%s435 + $0x4] sm:$0xf]
        %v1435 = vld [vmem:[%s435 + $0x10] sm:$0xf]
        %v1436 = vld [vmem:[%s435 + $0x1c] sm:$0xf]
        %v1437 = vld [vmem:[%s435 + $0x28] sm:$0xf]
        %v1438 = vunpack.c.l.bf16 %v1434
        %v1439 = vunpack.c.l.bf16 %v1435
        %v1440 = vunpack.c.l.bf16 %v1436
        %v1441 = vunpack.c.l.bf16 %v1437
        %v1442 = vmul.f32 %v1430, %v1430
        %v1443 = vmul.f32 %v1431, %v1431
        %v1444 = vmul.f32 %v1432, %v1432
        %v1445 = vmul.f32 %v1433, %v1433
        %1450 = vrot.lane.b32.xlu0 %v1442, 64
        %v1451 = vpop.permute.xlu0 %1450
        %1452 = vrot.lane.b32.xlu0 %v1443, 64
        %v1453 = vpop.permute.xlu0 %1452
        %1454 = vrot.lane.b32.xlu0 %v1444, 64
        %v1455 = vpop.permute.xlu0 %1454
        %1456 = vrot.lane.b32.xlu0 %v1445, 64
        %v1457 = vpop.permute.xlu0 %1456
        %v1462 = vsel %vm578, %v1451, 0.0
        %1463 = vadd.xlane.f32.xlu0 %v1462
        %v1464 = vpop.xlane.xlu0 %1463
        %v1465 = vsel %vm578, %v1453, 0.0
        %1466 = vadd.xlane.f32.xlu0 %v1465
        %v1467 = vpop.xlane.xlu0 %1466
        %v1468 = vsel %vm578, %v1455, 0.0
        %1469 = vadd.xlane.f32.xlu0 %v1468
        %v1470 = vpop.xlane.xlu0 %1469
        %v1471 = vsel %vm578, %v1457, 0.0
        %1472 = vadd.xlane.f32.xlu0 %v1471
        %v1473 = vpop.xlane.xlu0 %1472
        %v1474 = vmul.f32 %v1464, %v591
        %v1475 = vmul.f32 %v1467, %v591
        %v1476 = vmul.f32 %v1470, %v591
        %v1477 = vmul.f32 %v1473, %v591
        %v1478 = vadd.f32 %v1474, 1e-05
        %v1479 = vadd.f32 %v1475, 1e-05
        %v1480 = vadd.f32 %v1476, 1e-05
        %v1481 = vadd.f32 %v1477, 1e-05
        %v1482 = vrsqrt.pop %v1478
        %v1483 = vrsqrt.pop %v1479
        %v1484 = vrsqrt.pop %v1480
        %v1485 = vrsqrt.pop %v1481
        %v1486 = vmul.f32 %v1430, %v1482
        %v1487 = vmul.f32 %v1431, %v1483
        %v1488 = vmul.f32 %v1432, %v1484
        %v1489 = vmul.f32 %v1433, %v1485
        %1490 = vrot.lane.b32.xlu0 %v612, 64
        %v1491 = vpop.permute.xlu0 %1490
        %v1493 = vmul.f32 %v1486, %v1491
        %v1494 = vmul.f32 %v1487, %v1491
        %v1495 = vmul.f32 %v1488, %v1491
        %v1496 = vmul.f32 %v1489, %v1491
        %1497 = vrot.lane.b32.xlu0 %v544, 64
        %v1498 = vpop.permute.xlu0 %1497
        %1499 = vrot.lane.b32.xlu0 %v545, 64
        %v1500 = vpop.permute.xlu0 %1499
        %1501 = vrot.lane.b32.xlu0 %v546, 64
        %v1502 = vpop.permute.xlu0 %1501
        %1503 = vrot.lane.b32.xlu0 %v547, 64
        %v1504 = vpop.permute.xlu0 %1503
        %v1509 = vmul.f32 %v1493, %v1498
        %v1510 = vmul.f32 %v1494, %v1500
        %v1511 = vmul.f32 %v1495, %v1502
        %v1512 = vmul.f32 %v1496, %v1504
        %1517 = vrot.lane.b32.xlu0 %v1493, 64
        %v1518 = vpop.permute.xlu0 %1517
        %1519 = vrot.lane.b32.xlu0 %v1494, 64
        %v1520 = vpop.permute.xlu0 %1519
        %1521 = vrot.lane.b32.xlu0 %v1495, 64
        %v1522 = vpop.permute.xlu0 %1521
        %1523 = vrot.lane.b32.xlu0 %v1496, 64
        %v1524 = vpop.permute.xlu0 %1523
        %v1525 = vsel %vm578, %v1518, 0
        %v1527 = vsel %vm578, %v1520, 0
        %v1529 = vsel %vm578, %v1522, 0
        %v1531 = vsel %vm578, %v1524, 0
        %1533 = vmatprep.subr.mxu0 0.0
        %1534 = vmatpush1.msra.mxu0 %v552
        %1535 = vmatprep.subr.mxu0 0.0
        %1536 = vmatpush1.msra.mxu0 %v553
        %1537 = vmatprep.subr.mxu0 0.0
        %1538 = vmatpush1.msra.mxu0 %v554
        %1539 = vmatprep.subr.mxu0 0.0
        %1540 = vmatpush1.msra.mxu0 %v555
        %1541 = vmatprep.subr.mxu0 0.0
        %1542 = vmatpush1.msra.mxu0 0.0
        %1543 = vmatprep.subr.mxu0 0.0
        %1544 = vmatpush1.msra.mxu0 0.0
        %1545 = vmatprep.subr.mxu0 0.0
        %1546 = vmatpush1.msra.mxu0 0.0
        %1547 = vmatprep.subr.mxu0 0.0
        %1548 = vmatpush1.msra.mxu0 0.0
        %1549 = vmatprep.subr.mxu0 0.0
        %1550 = vmatpush1.msra.mxu0 0.0
        %1551 = vmatprep.subr.mxu0 0.0
        %1552 = vmatpush1.msra.mxu0 0.0
        %1553 = vmatprep.subr.mxu0 0.0
        %1554 = vmatpush1.msra.mxu0 0.0
        %1555 = vmatprep.subr.mxu0 0.0
        %1556 = vmatpush1.msra.mxu0 0.0
        %1557 = vmatprep.subr.mxu0 0.0
        %1558 = vmatpush1.msra.mxu0 0.0
        %1559 = vmatprep.subr.mxu0 0.0
        %1560 = vmatpush1.msra.mxu0 0.0
        %1561 = vmatprep.subr.mxu0 0.0
        %1562 = vmatpush1.msra.mxu0 0.0
        %1563 = vmatprep.subr.mxu0 0.0
        %1564 = vmatpush1.msra.mxu0 0.0
        %1565 = vmatprep.subr.mxu0 0.0
        %1566 = vmatpush1.msra.mxu0 0.0
        %1567 = vmatprep.subr.mxu0 0.0
        %1568 = vmatpush1.msra.mxu0 0.0
        %1569 = vmatprep.subr.mxu0 0.0
        %1570 = vmatpush1.msra.mxu0 0.0
        %1571 = vmatprep.subr.mxu0 0.0
        %1572 = vmatpush1.msra.mxu0 0.0
        %1573 = vmatprep.subr.mxu0 0.0
        %1574 = vmatpush1.msra.mxu0 0.0
        %1575 = vmatprep.subr.mxu0 0.0
        %1576 = vmatpush1.msra.mxu0 0.0
        %1577 = vmatprep.subr.mxu0 0.0
        %1578 = vmatpush1.msra.mxu0 0.0
        %1579 = vmatprep.subr.mxu0 0.0
        %1580 = vmatpush1.msra.mxu0 0.0
        %1581 = vmatprep.subr.mxu0 0.0
        %1582 = vmatpush1.msra.mxu0 0.0
        %1583 = vmatprep.subr.mxu0 0.0
        %1584 = vmatpush1.msra.mxu0 0.0
        %1585 = vmatprep.subr.mxu0 0.0
        %1586 = vmatpush1.msra.mxu0 0.0
        %1587 = vmatprep.subr.mxu0 0.0
        %1588 = vmatpush1.msra.mxu0 0.0
        %1589 = vmatprep.subr.mxu0 0.0
        %1590 = vmatpush1.msra.mxu0 0.0
        %1591 = vmatprep.subr.mxu0 0.0
        %1592 = vmatpush1.msra.mxu0 0.0
        %1593 = vmatprep.subr.mxu0 0.0
        %1594 = vmatpush1.msra.mxu0 0.0
        %1595 = vmatprep.subr.mxu0 0.0
        %1596 = vmatpush1.msra.mxu0 0.0
        %1597 = vmatprep.mubr.f32.mxu0 0.0
        %1598 = vmatmul.mubr.f32.gmra.mrb[0].mxu0 %v1525
        %v1599 = vpop.f32.mrb[0].mxu0
        %v1600 = vadd.f32 0.0, %v1599
        %v1601 = vpop.f32.mrb[0].mxu0
        %1602 = vmatprep.mubr.f32.mxu0 0.0
        %1603 = vmatmul.mubr.f32.gmra.mrb[0].mxu0 %v1527
        %v1604 = vpop.f32.mrb[0].mxu0
        %v1605 = vadd.f32 0.0, %v1604
        %v1606 = vpop.f32.mrb[0].mxu0
        %1607 = vmatprep.mubr.f32.mxu0 0.0
        %1608 = vmatmul.mubr.f32.gmra.mrb[0].mxu0 %v1529
        %v1609 = vpop.f32.mrb[0].mxu0
        %v1610 = vadd.f32 0.0, %v1609
        %v1611 = vpop.f32.mrb[0].mxu0
        %1612 = vmatprep.mubr.f32.mxu0 0.0
        %1613 = vmatmul.mubr.f32.gmra.mrb[0].mxu0 %v1531
        %v1614 = vpop.f32.mrb[0].mxu0
        %v1615 = vadd.f32 0.0, %v1614
        %v1616 = vpop.f32.mrb[0].mxu0
        %1617 = vdwg.mxu0
        %v1618 = vmul.f32 %v1600, %v548
        %v1619 = vmul.f32 %v1605, %v549
        %v1620 = vmul.f32 %v1610, %v550
        %v1621 = vmul.f32 %v1615, %v551
        %1626 = vrot.lane.b32.xlu0 %v1618, 64
        %v1627 = vpop.permute.xlu0 %1626
        %1628 = vrot.lane.b32.xlu0 %v1619, 64
        %v1629 = vpop.permute.xlu0 %1628
        %1630 = vrot.lane.b32.xlu0 %v1620, 64
        %v1631 = vpop.permute.xlu0 %1630
        %1632 = vrot.lane.b32.xlu0 %v1621, 64
        %v1633 = vpop.permute.xlu0 %1632
        %v1638 = vadd.f32 %v1509, %v1627
        %v1639 = vadd.f32 %v1510, %v1629
        %v1640 = vadd.f32 %v1511, %v1631
        %v1641 = vadd.f32 %v1512, %v1633
        %v1642 = vmul.f32 %v1638, 0.17677669
        %v1643 = vmul.f32 %v1639, 0.17677669
        %v1644 = vmul.f32 %v1640, 0.17677669
        %v1645 = vmul.f32 %v1641, 0.17677669
        %v1646 = vpack.c.bf16 %v1643, %v1642
        %v1647 = vpack.c.bf16 %v1645, %v1644
        %v1650 = vunpack.c.l.b16 %v1646
        %v1651 = vunpack.c.h.b16 %v1646
        %v1652 = vunpack.c.l.b16 %v1647
        %v1653 = vunpack.c.h.b16 %v1647
        %v1654 = vpack.c.b16 %v1650, %v1650
        %v1655 = vpack.c.b16 %v1651, %v1651
        %v1656 = vpack.c.b16 %v1652, %v1652
        %v1657 = vpack.c.b16 %v1653, %v1653
        %1658 = vrot.lane.b32.xlu0 %v1654, 64
        %v1659 = vpop.permute.xlu0 %1658
        %1660 = vrot.lane.b32.xlu0 %v1655, 64
        %v1661 = vpop.permute.xlu0 %1660
        %1662 = vrot.lane.b32.xlu0 %v1656, 64
        %v1663 = vpop.permute.xlu0 %1662
        %1664 = vrot.lane.b32.xlu0 %v1657, 64
        %v1665 = vpop.permute.xlu0 %1664
        %s1670 = scalar_lea.vmem %s519, 32 [#allocation13]
        %1671 = vst.msk [vmem:[%s1670] sm:$0xf] %vm747, %v1659
        %1672 = vst.msk [vmem:[%s1670 + $0x4] sm:$0xf] %vm747, %v1661
        %1673 = vst.msk [vmem:[%s1670 + $0x8] sm:$0xf] %vm747, %v1663
        %1674 = vst.msk [vmem:[%s1670 + $0xc] sm:$0xf] %vm747, %v1665
        %v1675 = vmul.f32 %v1438, %v1438
        %v1676 = vmul.f32 %v1439, %v1439
        %v1677 = vmul.f32 %v1440, %v1440
        %v1678 = vmul.f32 %v1441, %v1441
        %1683 = vrot.lane.b32.xlu0 %v1675, 64
        %v1684 = vpop.permute.xlu0 %1683
        %1685 = vrot.lane.b32.xlu0 %v1676, 64
        %v1686 = vpop.permute.xlu0 %1685
        %1687 = vrot.lane.b32.xlu0 %v1677, 64
        %v1688 = vpop.permute.xlu0 %1687
        %1689 = vrot.lane.b32.xlu0 %v1678, 64
        %v1690 = vpop.permute.xlu0 %1689
        %v1695 = vsel %vm578, %v1684, 0.0
        %1696 = vadd.xlane.f32.xlu0 %v1695
        %v1697 = vpop.xlane.xlu0 %1696
        %v1698 = vsel %vm578, %v1686, 0.0
        %1699 = vadd.xlane.f32.xlu0 %v1698
        %v1700 = vpop.xlane.xlu0 %1699
        %v1701 = vsel %vm578, %v1688, 0.0
        %1702 = vadd.xlane.f32.xlu0 %v1701
        %v1703 = vpop.xlane.xlu0 %1702
        %v1704 = vsel %vm578, %v1690, 0.0
        %1705 = vadd.xlane.f32.xlu0 %v1704
        %v1706 = vpop.xlane.xlu0 %1705
        %v1707 = vmul.f32 %v1697, %v591
        %v1708 = vmul.f32 %v1700, %v591
        %v1709 = vmul.f32 %v1703, %v591
        %v1710 = vmul.f32 %v1706, %v591
        %v1711 = vadd.f32 %v1707, 1e-05
        %v1712 = vadd.f32 %v1708, 1e-05
        %v1713 = vadd.f32 %v1709, 1e-05
        %v1714 = vadd.f32 %v1710, 1e-05
        %v1715 = vrsqrt.pop %v1711
        %v1716 = vrsqrt.pop %v1712
        %v1717 = vrsqrt.pop %v1713
        %v1718 = vrsqrt.pop %v1714
        %v1719 = vmul.f32 %v1438, %v1715
        %v1720 = vmul.f32 %v1439, %v1716
        %v1721 = vmul.f32 %v1440, %v1717
        %v1722 = vmul.f32 %v1441, %v1718
        %1723 = vrot.lane.b32.xlu0 %v788, 64
        %v1724 = vpop.permute.xlu0 %1723
        %v1726 = vmul.f32 %v1719, %v1724
        %v1727 = vmul.f32 %v1720, %v1724
        %v1728 = vmul.f32 %v1721, %v1724
        %v1729 = vmul.f32 %v1722, %v1724
        %v1730 = vmul.f32 %v1726, %v1498
        %v1731 = vmul.f32 %v1727, %v1500
        %v1732 = vmul.f32 %v1728, %v1502
        %v1733 = vmul.f32 %v1729, %v1504
        %1738 = vrot.lane.b32.xlu0 %v1726, 64
        %v1739 = vpop.permute.xlu0 %1738
        %1740 = vrot.lane.b32.xlu0 %v1727, 64
        %v1741 = vpop.permute.xlu0 %1740
        %1742 = vrot.lane.b32.xlu0 %v1728, 64
        %v1743 = vpop.permute.xlu0 %1742
        %1744 = vrot.lane.b32.xlu0 %v1729, 64
        %v1745 = vpop.permute.xlu0 %1744
        %v1746 = vsel %vm578, %v1739, 0
        %v1748 = vsel %vm578, %v1741, 0
        %v1750 = vsel %vm578, %v1743, 0
        %v1752 = vsel %vm578, %v1745, 0
        %1754 = vmatprep.subr.mxu0 0.0
        %1755 = vmatpush1.msra.mxu0 %v552
        %1756 = vmatprep.subr.mxu0 0.0
        %1757 = vmatpush1.msra.mxu0 %v553
        %1758 = vmatprep.subr.mxu0 0.0
        %1759 = vmatpush1.msra.mxu0 %v554
        %1760 = vmatprep.subr.mxu0 0.0
        %1761 = vmatpush1.msra.mxu0 %v555
        %1762 = vmatprep.subr.mxu0 0.0
        %1763 = vmatpush1.msra.mxu0 0.0
        %1764 = vmatprep.subr.mxu0 0.0
        %1765 = vmatpush1.msra.mxu0 0.0
        %1766 = vmatprep.subr.mxu0 0.0
        %1767 = vmatpush1.msra.mxu0 0.0
        %1768 = vmatprep.subr.mxu0 0.0
        %1769 = vmatpush1.msra.mxu0 0.0
        %1770 = vmatprep.subr.mxu0 0.0
        %1771 = vmatpush1.msra.mxu0 0.0
        %1772 = vmatprep.subr.mxu0 0.0
        %1773 = vmatpush1.msra.mxu0 0.0
        %1774 = vmatprep.subr.mxu0 0.0
        %1775 = vmatpush1.msra.mxu0 0.0
        %1776 = vmatprep.subr.mxu0 0.0
        %1777 = vmatpush1.msra.mxu0 0.0
        %1778 = vmatprep.subr.mxu0 0.0
        %1779 = vmatpush1.msra.mxu0 0.0
        %1780 = vmatprep.subr.mxu0 0.0
        %1781 = vmatpush1.msra.mxu0 0.0
        %1782 = vmatprep.subr.mxu0 0.0
        %1783 = vmatpush1.msra.mxu0 0.0
        %1784 = vmatprep.subr.mxu0 0.0
        %1785 = vmatpush1.msra.mxu0 0.0
        %1786 = vmatprep.subr.mxu0 0.0
        %1787 = vmatpush1.msra.mxu0 0.0
        %1788 = vmatprep.subr.mxu0 0.0
        %1789 = vmatpush1.msra.mxu0 0.0
        %1790 = vmatprep.subr.mxu0 0.0
        %1791 = vmatpush1.msra.mxu0 0.0
        %1792 = vmatprep.subr.mxu0 0.0
        %1793 = vmatpush1.msra.mxu0 0.0
        %1794 = vmatprep.subr.mxu0 0.0
        %1795 = vmatpush1.msra.mxu0 0.0
        %1796 = vmatprep.subr.mxu0 0.0
        %1797 = vmatpush1.msra.mxu0 0.0
        %1798 = vmatprep.subr.mxu0 0.0
        %1799 = vmatpush1.msra.mxu0 0.0
        %1800 = vmatprep.subr.mxu0 0.0
        %1801 = vmatpush1.msra.mxu0 0.0
        %1802 = vmatprep.subr.mxu0 0.0
        %1803 = vmatpush1.msra.mxu0 0.0
        %1804 = vmatprep.subr.mxu0 0.0
        %1805 = vmatpush1.msra.mxu0 0.0
        %1806 = vmatprep.subr.mxu0 0.0
        %1807 = vmatpush1.msra.mxu0 0.0
        %1808 = vmatprep.subr.mxu0 0.0
        %1809 = vmatpush1.msra.mxu0 0.0
        %1810 = vmatprep.subr.mxu0 0.0
        %1811 = vmatpush1.msra.mxu0 0.0
        %1812 = vmatprep.subr.mxu0 0.0
        %1813 = vmatpush1.msra.mxu0 0.0
        %1814 = vmatprep.subr.mxu0 0.0
        %1815 = vmatpush1.msra.mxu0 0.0
        %1816 = vmatprep.subr.mxu0 0.0
        %1817 = vmatpush1.msra.mxu0 0.0
        %1818 = vmatprep.mubr.f32.mxu0 0.0
        %1819 = vmatmul.mubr.f32.gmra.mrb[0].mxu0 %v1746
        %v1820 = vpop.f32.mrb[0].mxu0
        %v1821 = vadd.f32 0.0, %v1820
        %v1822 = vpop.f32.mrb[0].mxu0
        %1823 = vmatprep.mubr.f32.mxu0 0.0
        %1824 = vmatmul.mubr.f32.gmra.mrb[0].mxu0 %v1748
        %v1825 = vpop.f32.mrb[0].mxu0
        %v1826 = vadd.f32 0.0, %v1825
        %v1827 = vpop.f32.mrb[0].mxu0
        %1828 = vmatprep.mubr.f32.mxu0 0.0
        %1829 = vmatmul.mubr.f32.gmra.mrb[0].mxu0 %v1750
        %v1830 = vpop.f32.mrb[0].mxu0
        %v1831 = vadd.f32 0.0, %v1830
        %v1832 = vpop.f32.mrb[0].mxu0
        %1833 = vmatprep.mubr.f32.mxu0 0.0
        %1834 = vmatmul.mubr.f32.gmra.mrb[0].mxu0 %v1752
        %v1835 = vpop.f32.mrb[0].mxu0
        %v1836 = vadd.f32 0.0, %v1835
        %v1837 = vpop.f32.mrb[0].mxu0
        %1838 = vdwg.mxu0
        %v1839 = vmul.f32 %v1821, %v548
        %v1840 = vmul.f32 %v1826, %v549
        %v1841 = vmul.f32 %v1831, %v550
        %v1842 = vmul.f32 %v1836, %v551
        %1847 = vrot.lane.b32.xlu0 %v1839, 64
        %v1848 = vpop.permute.xlu0 %1847
        %1849 = vrot.lane.b32.xlu0 %v1840, 64
        %v1850 = vpop.permute.xlu0 %1849
        %1851 = vrot.lane.b32.xlu0 %v1841, 64
        %v1852 = vpop.permute.xlu0 %1851
        %1853 = vrot.lane.b32.xlu0 %v1842, 64
        %v1854 = vpop.permute.xlu0 %1853
        %v1859 = vadd.f32 %v1730, %v1848
        %v1860 = vadd.f32 %v1731, %v1850
        %v1861 = vadd.f32 %v1732, %v1852
        %v1862 = vadd.f32 %v1733, %v1854
        %v1863 = vpack.c.bf16 %v1860, %v1859
        %v1864 = vpack.c.bf16 %v1862, %v1861
        %v1867 = vunpack.c.l.b16 %v1863
        %v1868 = vunpack.c.h.b16 %v1863
        %v1869 = vunpack.c.l.b16 %v1864
        %v1870 = vunpack.c.h.b16 %v1864
        %v1871 = vpack.c.b16 %v1867, %v1867
        %v1872 = vpack.c.b16 %v1868, %v1868
        %v1873 = vpack.c.b16 %v1869, %v1869
        %v1874 = vpack.c.b16 %v1870, %v1870
        %1875 = vrot.lane.b32.xlu0 %v1871, 64
        %v1876 = vpop.permute.xlu0 %1875
        %1877 = vrot.lane.b32.xlu0 %v1872, 64
        %v1878 = vpop.permute.xlu0 %1877
        %1879 = vrot.lane.b32.xlu0 %v1873, 64
        %v1880 = vpop.permute.xlu0 %1879
        %1881 = vrot.lane.b32.xlu0 %v1874, 64
        %v1882 = vpop.permute.xlu0 %1881
        %s1887 = scalar_lea.vmem %s526, 32 [#allocation14]
        %1888 = vst.msk [vmem:[%s1887] sm:$0xf] %vm747, %v1876
        %1889 = vst.msk [vmem:[%s1887 + $0x4] sm:$0xf] %vm747, %v1878
        %1890 = vst.msk [vmem:[%s1887 + $0x8] sm:$0xf] %vm747, %v1880
        %1891 = vst.msk [vmem:[%s1887 + $0xc] sm:$0xf] %vm747, %v1882
        %v1892 = vld [vmem:[%s435 + $0x8] sm:$0xf]
        %v1893 = vld [vmem:[%s435 + $0x14] sm:$0xf]
        %v1894 = vld [vmem:[%s435 + $0x20] sm:$0xf]
        %v1895 = vld [vmem:[%s435 + $0x2c] sm:$0xf]
        %1900 = vrot.lane.b32.xlu0 %v1892, 64
        %v1901 = vpop.permute.xlu0 %1900
        %1902 = vrot.lane.b32.xlu0 %v1893, 64
        %v1903 = vpop.permute.xlu0 %1902
        %1904 = vrot.lane.b32.xlu0 %v1894, 64
        %v1905 = vpop.permute.xlu0 %1904
        %1906 = vrot.lane.b32.xlu0 %v1895, 64
        %v1907 = vpop.permute.xlu0 %1906
        %s1912 = scalar_lea.vmem %s533, 32 [#allocation16]
        %1913 = vst.msk [vmem:[%s1912] sm:$0xf] %vm747, %v1901
        %1914 = vst.msk [vmem:[%s1912 + $0x4] sm:$0xf] %vm747, %v1903
        %1915 = vst.msk [vmem:[%s1912 + $0x8] sm:$0xf] %vm747, %v1905
        %1916 = vst.msk [vmem:[%s1912 + $0xc] sm:$0xf] %vm747, %v1907
        %v1917 = vld [vmem:[%s435] sm:$0xf]
        %v1918 = vld [vmem:[%s435 + $0xc] sm:$0xf]
        %v1919 = vld [vmem:[%s435 + $0x18] sm:$0xf]
        %v1920 = vld [vmem:[%s435 + $0x24] sm:$0xf]
        %v1921 = vunpack.c.l.bf16 %v1917
        %v1922 = vunpack.c.l.bf16 %v1918
        %v1923 = vunpack.c.l.bf16 %v1919
        %v1924 = vunpack.c.l.bf16 %v1920
        %v1925 = vld [vmem:[%s435 + $0x4] sm:$0xf]
        %v1926 = vld [vmem:[%s435 + $0x10] sm:$0xf]
        %v1927 = vld [vmem:[%s435 + $0x1c] sm:$0xf]
        %v1928 = vld [vmem:[%s435 + $0x28] sm:$0xf]
        %v1929 = vunpack.c.l.bf16 %v1925
        %v1930 = vunpack.c.l.bf16 %v1926
        %v1931 = vunpack.c.l.bf16 %v1927
        %v1932 = vunpack.c.l.bf16 %v1928
        %v1933 = vmul.f32 %v1921, %v1921
        %v1934 = vmul.f32 %v1922, %v1922
        %v1935 = vmul.f32 %v1923, %v1923
        %v1936 = vmul.f32 %v1924, %v1924
        %1941 = vrot.lane.b32.xlu0 %v1933, 32
        %v1942 = vpop.permute.xlu0 %1941
        %1943 = vrot.lane.b32.xlu0 %v1934, 32
        %v1944 = vpop.permute.xlu0 %1943
        %1945 = vrot.lane.b32.xlu0 %v1935, 32
        %v1946 = vpop.permute.xlu0 %1945
        %1947 = vrot.lane.b32.xlu0 %v1936, 32
        %v1948 = vpop.permute.xlu0 %1947
        %v1953 = vsel %vm578, %v1942, 0.0
        %1954 = vadd.xlane.f32.xlu0 %v1953
        %v1955 = vpop.xlane.xlu0 %1954
        %v1956 = vsel %vm578, %v1944, 0.0
        %1957 = vadd.xlane.f32.xlu0 %v1956
        %v1958 = vpop.xlane.xlu0 %1957
        %v1959 = vsel %vm578, %v1946, 0.0
        %1960 = vadd.xlane.f32.xlu0 %v1959
        %v1961 = vpop.xlane.xlu0 %1960
        %v1962 = vsel %vm578, %v1948, 0.0
        %1963 = vadd.xlane.f32.xlu0 %v1962
        %v1964 = vpop.xlane.xlu0 %1963
        %v1965 = vmul.f32 %v1955, %v591
        %v1966 = vmul.f32 %v1958, %v591
        %v1967 = vmul.f32 %v1961, %v591
        %v1968 = vmul.f32 %v1964, %v591
        %v1969 = vadd.f32 %v1965, 1e-05
        %v1970 = vadd.f32 %v1966, 1e-05
        %v1971 = vadd.f32 %v1967, 1e-05
        %v1972 = vadd.f32 %v1968, 1e-05
        %v1973 = vrsqrt.pop %v1969
        %v1974 = vrsqrt.pop %v1970
        %v1975 = vrsqrt.pop %v1971
        %v1976 = vrsqrt.pop %v1972
        %v1977 = vmul.f32 %v1921, %v1973
        %v1978 = vmul.f32 %v1922, %v1974
        %v1979 = vmul.f32 %v1923, %v1975
        %v1980 = vmul.f32 %v1924, %v1976
        %1981 = vrot.lane.b32.xlu0 %v612, 96
        %v1982 = vpop.permute.xlu0 %1981
        %v1984 = vmul.f32 %v1977, %v1982
        %v1985 = vmul.f32 %v1978, %v1982
        %v1986 = vmul.f32 %v1979, %v1982
        %v1987 = vmul.f32 %v1980, %v1982
        %1988 = vrot.lane.b32.xlu0 %v544, 96
        %v1989 = vpop.permute.xlu0 %1988
        %1990 = vrot.lane.b32.xlu0 %v545, 96
        %v1991 = vpop.permute.xlu0 %1990
        %1992 = vrot.lane.b32.xlu0 %v546, 96
        %v1993 = vpop.permute.xlu0 %1992
        %1994 = vrot.lane.b32.xlu0 %v547, 96
        %v1995 = vpop.permute.xlu0 %1994
        %v2000 = vmul.f32 %v1984, %v1989
        %v2001 = vmul.f32 %v1985, %v1991
        %v2002 = vmul.f32 %v1986, %v1993
        %v2003 = vmul.f32 %v1987, %v1995
        %2008 = vrot.lane.b32.xlu0 %v1984, 32
        %v2009 = vpop.permute.xlu0 %2008
        %2010 = vrot.lane.b32.xlu0 %v1985, 32
        %v2011 = vpop.permute.xlu0 %2010
        %2012 = vrot.lane.b32.xlu0 %v1986, 32
        %v2013 = vpop.permute.xlu0 %2012
        %2014 = vrot.lane.b32.xlu0 %v1987, 32
        %v2015 = vpop.permute.xlu0 %2014
        %v2016 = vsel %vm578, %v2009, 0
        %v2018 = vsel %vm578, %v2011, 0
        %v2020 = vsel %vm578, %v2013, 0
        %v2022 = vsel %vm578, %v2015, 0
        %2024 = vmatprep.subr.mxu0 0.0
        %2025 = vmatpush1.msra.mxu0 %v552
        %2026 = vmatprep.subr.mxu0 0.0
        %2027 = vmatpush1.msra.mxu0 %v553
        %2028 = vmatprep.subr.mxu0 0.0
        %2029 = vmatpush1.msra.mxu0 %v554
        %2030 = vmatprep.subr.mxu0 0.0
        %2031 = vmatpush1.msra.mxu0 %v555
        %2032 = vmatprep.subr.mxu0 0.0
        %2033 = vmatpush1.msra.mxu0 0.0
        %2034 = vmatprep.subr.mxu0 0.0
        %2035 = vmatpush1.msra.mxu0 0.0
        %2036 = vmatprep.subr.mxu0 0.0
        %2037 = vmatpush1.msra.mxu0 0.0
        %2038 = vmatprep.subr.mxu0 0.0
        %2039 = vmatpush1.msra.mxu0 0.0
        %2040 = vmatprep.subr.mxu0 0.0
        %2041 = vmatpush1.msra.mxu0 0.0
        %2042 = vmatprep.subr.mxu0 0.0
        %2043 = vmatpush1.msra.mxu0 0.0
        %2044 = vmatprep.subr.mxu0 0.0
        %2045 = vmatpush1.msra.mxu0 0.0
        %2046 = vmatprep.subr.mxu0 0.0
        %2047 = vmatpush1.msra.mxu0 0.0
        %2048 = vmatprep.subr.mxu0 0.0
        %2049 = vmatpush1.msra.mxu0 0.0
        %2050 = vmatprep.subr.mxu0 0.0
        %2051 = vmatpush1.msra.mxu0 0.0
        %2052 = vmatprep.subr.mxu0 0.0
        %2053 = vmatpush1.msra.mxu0 0.0
        %2054 = vmatprep.subr.mxu0 0.0
        %2055 = vmatpush1.msra.mxu0 0.0
        %2056 = vmatprep.subr.mxu0 0.0
        %2057 = vmatpush1.msra.mxu0 0.0
        %2058 = vmatprep.subr.mxu0 0.0
        %2059 = vmatpush1.msra.mxu0 0.0
        %2060 = vmatprep.subr.mxu0 0.0
        %2061 = vmatpush1.msra.mxu0 0.0
        %2062 = vmatprep.subr.mxu0 0.0
        %2063 = vmatpush1.msra.mxu0 0.0
        %2064 = vmatprep.subr.mxu0 0.0
        %2065 = vmatpush1.msra.mxu0 0.0
        %2066 = vmatprep.subr.mxu0 0.0
        %2067 = vmatpush1.msra.mxu0 0.0
        %2068 = vmatprep.subr.mxu0 0.0
        %2069 = vmatpush1.msra.mxu0 0.0
        %2070 = vmatprep.subr.mxu0 0.0
        %2071 = vmatpush1.msra.mxu0 0.0
        %2072 = vmatprep.subr.mxu0 0.0
        %2073 = vmatpush1.msra.mxu0 0.0
        %2074 = vmatprep.subr.mxu0 0.0
        %2075 = vmatpush1.msra.mxu0 0.0
        %2076 = vmatprep.subr.mxu0 0.0
        %2077 = vmatpush1.msra.mxu0 0.0
        %2078 = vmatprep.subr.mxu0 0.0
        %2079 = vmatpush1.msra.mxu0 0.0
        %2080 = vmatprep.subr.mxu0 0.0
        %2081 = vmatpush1.msra.mxu0 0.0
        %2082 = vmatprep.subr.mxu0 0.0
        %2083 = vmatpush1.msra.mxu0 0.0
        %2084 = vmatprep.subr.mxu0 0.0
        %2085 = vmatpush1.msra.mxu0 0.0
        %2086 = vmatprep.subr.mxu0 0.0
        %2087 = vmatpush1.msra.mxu0 0.0
        %2088 = vmatprep.mubr.f32.mxu0 0.0
        %2089 = vmatmul.mubr.f32.gmra.mrb[0].mxu0 %v2016
        %v2090 = vpop.f32.mrb[0].mxu0
        %v2091 = vadd.f32 0.0, %v2090
        %v2092 = vpop.f32.mrb[0].mxu0
        %2093 = vmatprep.mubr.f32.mxu0 0.0
        %2094 = vmatmul.mubr.f32.gmra.mrb[0].mxu0 %v2018
        %v2095 = vpop.f32.mrb[0].mxu0
        %v2096 = vadd.f32 0.0, %v2095
        %v2097 = vpop.f32.mrb[0].mxu0
        %2098 = vmatprep.mubr.f32.mxu0 0.0
        %2099 = vmatmul.mubr.f32.gmra.mrb[0].mxu0 %v2020
        %v2100 = vpop.f32.mrb[0].mxu0
        %v2101 = vadd.f32 0.0, %v2100
        %v2102 = vpop.f32.mrb[0].mxu0
        %2103 = vmatprep.mubr.f32.mxu0 0.0
        %2104 = vmatmul.mubr.f32.gmra.mrb[0].mxu0 %v2022
        %v2105 = vpop.f32.mrb[0].mxu0
        %v2106 = vadd.f32 0.0, %v2105
        %v2107 = vpop.f32.mrb[0].mxu0
        %2108 = vdwg.mxu0
        %v2109 = vmul.f32 %v2091, %v548
        %v2110 = vmul.f32 %v2096, %v549
        %v2111 = vmul.f32 %v2101, %v550
        %v2112 = vmul.f32 %v2106, %v551
        %2117 = vrot.lane.b32.xlu0 %v2109, 96
        %v2118 = vpop.permute.xlu0 %2117
        %2119 = vrot.lane.b32.xlu0 %v2110, 96
        %v2120 = vpop.permute.xlu0 %2119
        %2121 = vrot.lane.b32.xlu0 %v2111, 96
        %v2122 = vpop.permute.xlu0 %2121
        %2123 = vrot.lane.b32.xlu0 %v2112, 96
        %v2124 = vpop.permute.xlu0 %2123
        %v2129 = vadd.f32 %v2000, %v2118
        %v2130 = vadd.f32 %v2001, %v2120
        %v2131 = vadd.f32 %v2002, %v2122
        %v2132 = vadd.f32 %v2003, %v2124
        %v2133 = vmul.f32 %v2129, 0.17677669
        %v2134 = vmul.f32 %v2130, 0.17677669
        %v2135 = vmul.f32 %v2131, 0.17677669
        %v2136 = vmul.f32 %v2132, 0.17677669
        %v2137 = vpack.c.bf16 %v2134, %v2133
        %v2138 = vpack.c.bf16 %v2136, %v2135
        %v2141 = vunpack.c.l.b16 %v2137
        %v2142 = vunpack.c.h.b16 %v2137
        %v2143 = vunpack.c.l.b16 %v2138
        %v2144 = vunpack.c.h.b16 %v2138
        %v2145 = vpack.c.b16 %v2141, %v2141
        %v2146 = vpack.c.b16 %v2142, %v2142
        %v2147 = vpack.c.b16 %v2143, %v2143
        %v2148 = vpack.c.b16 %v2144, %v2144
        %2149 = vrot.lane.b32.xlu0 %v2145, 32
        %v2150 = vpop.permute.xlu0 %2149
        %2151 = vrot.lane.b32.xlu0 %v2146, 32
        %v2152 = vpop.permute.xlu0 %2151
        %2153 = vrot.lane.b32.xlu0 %v2147, 32
        %v2154 = vpop.permute.xlu0 %2153
        %2155 = vrot.lane.b32.xlu0 %v2148, 32
        %v2156 = vpop.permute.xlu0 %2155
        %s2161 = scalar_lea.vmem %s519, 48 [#allocation13]
        %2162 = vst.msk [vmem:[%s2161] sm:$0xf] %vm747, %v2150
        %2163 = vst.msk [vmem:[%s2161 + $0x4] sm:$0xf] %vm747, %v2152
        %2164 = vst.msk [vmem:[%s2161 + $0x8] sm:$0xf] %vm747, %v2154
        %2165 = vst.msk [vmem:[%s2161 + $0xc] sm:$0xf] %vm747, %v2156
        %v2166 = vmul.f32 %v1929, %v1929
        %v2167 = vmul.f32 %v1930, %v1930
        %v2168 = vmul.f32 %v1931, %v1931
        %v2169 = vmul.f32 %v1932, %v1932
        %2174 = vrot.lane.b32.xlu0 %v2166, 32
        %v2175 = vpop.permute.xlu0 %2174
        %2176 = vrot.lane.b32.xlu0 %v2167, 32
        %v2177 = vpop.permute.xlu0 %2176
        %2178 = vrot.lane.b32.xlu0 %v2168, 32
        %v2179 = vpop.permute.xlu0 %2178
        %2180 = vrot.lane.b32.xlu0 %v2169, 32
        %v2181 = vpop.permute.xlu0 %2180
        %v2186 = vsel %vm578, %v2175, 0.0
        %2187 = vadd.xlane.f32.xlu0 %v2186
        %v2188 = vpop.xlane.xlu0 %2187
        %v2189 = vsel %vm578, %v2177, 0.0
        %2190 = vadd.xlane.f32.xlu0 %v2189
        %v2191 = vpop.xlane.xlu0 %2190
        %v2192 = vsel %vm578, %v2179, 0.0
        %2193 = vadd.xlane.f32.xlu0 %v2192
        %v2194 = vpop.xlane.xlu0 %2193
        %v2195 = vsel %vm578, %v2181, 0.0
        %2196 = vadd.xlane.f32.xlu0 %v2195
        %v2197 = vpop.xlane.xlu0 %2196
        %v2198 = vmul.f32 %v2188, %v591
        %v2199 = vmul.f32 %v2191, %v591
        %v2200 = vmul.f32 %v2194, %v591
        %v2201 = vmul.f32 %v2197, %v591
        %v2202 = vadd.f32 %v2198, 1e-05
        %v2203 = vadd.f32 %v2199, 1e-05
        %v2204 = vadd.f32 %v2200, 1e-05
        %v2205 = vadd.f32 %v2201, 1e-05
        %v2206 = vrsqrt.pop %v2202
        %v2207 = vrsqrt.pop %v2203
        %v2208 = vrsqrt.pop %v2204
        %v2209 = vrsqrt.pop %v2205
        %v2210 = vmul.f32 %v1929, %v2206
        %v2211 = vmul.f32 %v1930, %v2207
        %v2212 = vmul.f32 %v1931, %v2208
        %v2213 = vmul.f32 %v1932, %v2209
        %2214 = vrot.lane.b32.xlu0 %v788, 96
        %v2215 = vpop.permute.xlu0 %2214
        %v2217 = vmul.f32 %v2210, %v2215
        %v2218 = vmul.f32 %v2211, %v2215
        %v2219 = vmul.f32 %v2212, %v2215
        %v2220 = vmul.f32 %v2213, %v2215
        %v2221 = vmul.f32 %v2217, %v1989
        %v2222 = vmul.f32 %v2218, %v1991
        %v2223 = vmul.f32 %v2219, %v1993
        %v2224 = vmul.f32 %v2220, %v1995
        %2229 = vrot.lane.b32.xlu0 %v2217, 32
        %v2230 = vpop.permute.xlu0 %2229
        %2231 = vrot.lane.b32.xlu0 %v2218, 32
        %v2232 = vpop.permute.xlu0 %2231
        %2233 = vrot.lane.b32.xlu0 %v2219, 32
        %v2234 = vpop.permute.xlu0 %2233
        %2235 = vrot.lane.b32.xlu0 %v2220, 32
        %v2236 = vpop.permute.xlu0 %2235
        %v2237 = vsel %vm578, %v2230, 0
        %v2239 = vsel %vm578, %v2232, 0
        %v2241 = vsel %vm578, %v2234, 0
        %v2243 = vsel %vm578, %v2236, 0
        %2245 = vmatprep.subr.mxu0 0.0
        %2246 = vmatpush1.msra.mxu0 %v552
        %2247 = vmatprep.subr.mxu0 0.0
        %2248 = vmatpush1.msra.mxu0 %v553
        %2249 = vmatprep.subr.mxu0 0.0
        %2250 = vmatpush1.msra.mxu0 %v554
        %2251 = vmatprep.subr.mxu0 0.0
        %2252 = vmatpush1.msra.mxu0 %v555
        %2253 = vmatprep.subr.mxu0 0.0
        %2254 = vmatpush1.msra.mxu0 0.0
        %2255 = vmatprep.subr.mxu0 0.0
        %2256 = vmatpush1.msra.mxu0 0.0
        %2257 = vmatprep.subr.mxu0 0.0
        %2258 = vmatpush1.msra.mxu0 0.0
        %2259 = vmatprep.subr.mxu0 0.0
        %2260 = vmatpush1.msra.mxu0 0.0
        %2261 = vmatprep.subr.mxu0 0.0
        %2262 = vmatpush1.msra.mxu0 0.0
        %2263 = vmatprep.subr.mxu0 0.0
        %2264 = vmatpush1.msra.mxu0 0.0
        %2265 = vmatprep.subr.mxu0 0.0
        %2266 = vmatpush1.msra.mxu0 0.0
        %2267 = vmatprep.subr.mxu0 0.0
        %2268 = vmatpush1.msra.mxu0 0.0
        %2269 = vmatprep.subr.mxu0 0.0
        %2270 = vmatpush1.msra.mxu0 0.0
        %2271 = vmatprep.subr.mxu0 0.0
        %2272 = vmatpush1.msra.mxu0 0.0
        %2273 = vmatprep.subr.mxu0 0.0
        %2274 = vmatpush1.msra.mxu0 0.0
        %2275 = vmatprep.subr.mxu0 0.0
        %2276 = vmatpush1.msra.mxu0 0.0
        %2277 = vmatprep.subr.mxu0 0.0
        %2278 = vmatpush1.msra.mxu0 0.0
        %2279 = vmatprep.subr.mxu0 0.0
        %2280 = vmatpush1.msra.mxu0 0.0
        %2281 = vmatprep.subr.mxu0 0.0
        %2282 = vmatpush1.msra.mxu0 0.0
        %2283 = vmatprep.subr.mxu0 0.0
        %2284 = vmatpush1.msra.mxu0 0.0
        %2285 = vmatprep.subr.mxu0 0.0
        %2286 = vmatpush1.msra.mxu0 0.0
        %2287 = vmatprep.subr.mxu0 0.0
        %2288 = vmatpush1.msra.mxu0 0.0
        %2289 = vmatprep.subr.mxu0 0.0
        %2290 = vmatpush1.msra.mxu0 0.0
        %2291 = vmatprep.subr.mxu0 0.0
        %2292 = vmatpush1.msra.mxu0 0.0
        %2293 = vmatprep.subr.mxu0 0.0
        %2294 = vmatpush1.msra.mxu0 0.0
        %2295 = vmatprep.subr.mxu0 0.0
        %2296 = vmatpush1.msra.mxu0 0.0
        %2297 = vmatprep.subr.mxu0 0.0
        %2298 = vmatpush1.msra.mxu0 0.0
        %2299 = vmatprep.subr.mxu0 0.0
        %2300 = vmatpush1.msra.mxu0 0.0
        %2301 = vmatprep.subr.mxu0 0.0
        %2302 = vmatpush1.msra.mxu0 0.0
        %2303 = vmatprep.subr.mxu0 0.0
        %2304 = vmatpush1.msra.mxu0 0.0
        %2305 = vmatprep.subr.mxu0 0.0
        %2306 = vmatpush1.msra.mxu0 0.0
        %2307 = vmatprep.subr.mxu0 0.0
        %2308 = vmatpush1.msra.mxu0 0.0
        %2309 = vmatprep.mubr.f32.mxu0 0.0
        %2310 = vmatmul.mubr.f32.gmra.mrb[0].mxu0 %v2237
        %v2311 = vpop.f32.mrb[0].mxu0
        %v2312 = vadd.f32 0.0, %v2311
        %v2313 = vpop.f32.mrb[0].mxu0
        %2314 = vmatprep.mubr.f32.mxu0 0.0
        %2315 = vmatmul.mubr.f32.gmra.mrb[0].mxu0 %v2239
        %v2316 = vpop.f32.mrb[0].mxu0
        %v2317 = vadd.f32 0.0, %v2316
        %v2318 = vpop.f32.mrb[0].mxu0
        %2319 = vmatprep.mubr.f32.mxu0 0.0
        %2320 = vmatmul.mubr.f32.gmra.mrb[0].mxu0 %v2241
        %v2321 = vpop.f32.mrb[0].mxu0
        %v2322 = vadd.f32 0.0, %v2321
        %v2323 = vpop.f32.mrb[0].mxu0
        %2324 = vmatprep.mubr.f32.mxu0 0.0
        %2325 = vmatmul.mubr.f32.gmra.mrb[0].mxu0 %v2243
        %v2326 = vpop.f32.mrb[0].mxu0
        %v2327 = vadd.f32 0.0, %v2326
        %v2328 = vpop.f32.mrb[0].mxu0
        %2329 = vdwg.mxu0
        %v2330 = vmul.f32 %v2312, %v548
        %v2331 = vmul.f32 %v2317, %v549
        %v2332 = vmul.f32 %v2322, %v550
        %v2333 = vmul.f32 %v2327, %v551
        %2338 = vrot.lane.b32.xlu0 %v2330, 96
        %v2339 = vpop.permute.xlu0 %2338
        %2340 = vrot.lane.b32.xlu0 %v2331, 96
        %v2341 = vpop.permute.xlu0 %2340
        %2342 = vrot.lane.b32.xlu0 %v2332, 96
        %v2343 = vpop.permute.xlu0 %2342
        %2344 = vrot.lane.b32.xlu0 %v2333, 96
        %v2345 = vpop.permute.xlu0 %2344
        %v2350 = vadd.f32 %v2221, %v2339
        %v2351 = vadd.f32 %v2222, %v2341
        %v2352 = vadd.f32 %v2223, %v2343
        %v2353 = vadd.f32 %v2224, %v2345
        %v2354 = vpack.c.bf16 %v2351, %v2350
        %v2355 = vpack.c.bf16 %v2353, %v2352
        %v2358 = vunpack.c.l.b16 %v2354
        %v2359 = vunpack.c.h.b16 %v2354
        %v2360 = vunpack.c.l.b16 %v2355
        %v2361 = vunpack.c.h.b16 %v2355
        %v2362 = vpack.c.b16 %v2358, %v2358
        %v2363 = vpack.c.b16 %v2359, %v2359
        %v2364 = vpack.c.b16 %v2360, %v2360
        %v2365 = vpack.c.b16 %v2361, %v2361
        %2366 = vrot.lane.b32.xlu0 %v2362, 32
        %v2367 = vpop.permute.xlu0 %2366
        %2368 = vrot.lane.b32.xlu0 %v2363, 32
        %v2369 = vpop.permute.xlu0 %2368
        %2370 = vrot.lane.b32.xlu0 %v2364, 32
        %v2371 = vpop.permute.xlu0 %2370
        %2372 = vrot.lane.b32.xlu0 %v2365, 32
        %v2373 = vpop.permute.xlu0 %2372
        %s2378 = scalar_lea.vmem %s526, 48 [#allocation14]
        %2379 = vst.msk [vmem:[%s2378] sm:$0xf] %vm747, %v2367
        %2380 = vst.msk [vmem:[%s2378 + $0x4] sm:$0xf] %vm747, %v2369
        %2381 = vst.msk [vmem:[%s2378 + $0x8] sm:$0xf] %vm747, %v2371
        %2382 = vst.msk [vmem:[%s2378 + $0xc] sm:$0xf] %vm747, %v2373
        %v2383 = vld [vmem:[%s435 + $0x8] sm:$0xf]
        %v2384 = vld [vmem:[%s435 + $0x14] sm:$0xf]
        %v2385 = vld [vmem:[%s435 + $0x20] sm:$0xf]
        %v2386 = vld [vmem:[%s435 + $0x2c] sm:$0xf]
        %2391 = vrot.lane.b32.xlu0 %v2383, 32
        %v2392 = vpop.permute.xlu0 %2391
        %2393 = vrot.lane.b32.xlu0 %v2384, 32
        %v2394 = vpop.permute.xlu0 %2393
        %2395 = vrot.lane.b32.xlu0 %v2385, 32
        %v2396 = vpop.permute.xlu0 %2395
        %2397 = vrot.lane.b32.xlu0 %v2386, 32
        %v2398 = vpop.permute.xlu0 %2397
        %s2403 = scalar_lea.vmem %s533, 48 [#allocation16]
        %2404 = vst.msk [vmem:[%s2403] sm:$0xf] %vm747, %v2392
        %2405 = vst.msk [vmem:[%s2403 + $0x4] sm:$0xf] %vm747, %v2394
        %2406 = vst.msk [vmem:[%s2403 + $0x8] sm:$0xf] %vm747, %v2396
        %2407 = vst.msk [vmem:[%s2403 + $0xc] sm:$0xf] %vm747, %v2398
        %s2408 = sand.u32 %s219, 1
        %s2409 = scalar_lea.sflag [#allocation4], %s2408
        %s2410 = sand.u32 %s219, 1
        %s2411 = smul.addr %s2410, 64
        %s2412 = scalar_lea.vmem [#allocation13], %s2411
        %s2413 = sand.u32 %s36, 1
        %s2414 = scalar_lea.sflag [#allocation15], %s2413
        %s2415 = sand.u32 %s247, 1
        %s2416 = smul.addr %s2415, 64
        %s2417 = scalar_lea.vmem [#allocation14], %s2416
        %s2418 = sand.u32 %s36, 1
        %s2419 = scalar_lea.sflag [#allocation15], %s2418
        %s2420 = sand.u32 %s275, 1
        %s2421 = smul.addr %s2420, 64
        %s2422 = scalar_lea.vmem [#allocation16], %s2421
        // Predicated region
        $region69: #{sparse_mmdit_block_forward.6} parent=43 // pred_check
          %p2423 = pneg %p229
        $region70: #{sparse_mmdit_block_forward.6} parent=43 // pred_check_branch
          %2425 = sbr.rel (%p2423) target = $region72
        $region71: #{sparse_mmdit_block_forward.6} parent=43 // pred_region
          #allocation18 [shape = 'u32[6]{0}', space=smem, size = 0x18, scoped, tag = 'DMA stride descriptor']
          %s2426 = smul.u32 4, %s41
          %s2428 = ssub.s32 1024, 1024
          %2429 = vsyncadd %s2409, %s2428
          %s2430 = smul.addr %s40, 48
          %s2431 = sadd.s32 %s2426, %s2430
          %s2432 = smul.addr %s2431, 64
          %s2433 = scalar_lea.hbm %s6, %s2432
          %s2435 = sshll.u32 1, 14
          %s2436 = sxor.u32 4294967295, %s2435
          %s2439 = sshll.u32 7, 18
          %s2440 = sxor.u32 4294967295, %s2439
          %s2441 = sand.u32 0, %s2440
          %s2443 = sor.u32 %s2441, 0
          %s2445 = sshll.u32 3, 24
          %s2446 = sxor.u32 4294967295, %s2445
          %s2447 = sand.u32 %s2443, %s2446
          %s2449 = sor.u32 %s2447, 0
          %s2450 = sshll.u32 %s2412, 4
          %s2451 = int_to_ptr.vmem [resolvable:$true] %s2450
          %2457 = sst [smem:[#allocation18]] 256
          %s2458 = scalar_lea.smem [#allocation18], 1
          %2459 = sst [smem:[%s2458]] 768
          %s2460 = scalar_lea.smem [#allocation18], 2
          %2461 = sst [smem:[%s2460]] 4
          %s2462 = scalar_lea.smem [#allocation18], 3
          %2463 = sst [smem:[%s2462]] 64
          %s2464 = scalar_lea.smem [#allocation18], 4
          %2465 = sst [smem:[%s2464]] 64
          %s2466 = scalar_lea.smem [#allocation18], 5
          %2467 = sst [smem:[%s2466]] 4
          %2469 = dma.general %s2451, 1024, %s2433, %s2409, [#allocation17], [#allocation18], %s2449, 0
        $region72: #{sparse_mmdit_block_forward.6} parent=43 // pred_fallthru
          _
        // Predicated region
        $region73: #{sparse_mmdit_block_forward.6} parent=43 // pred_check
          %p2470 = pneg %p257
        $region74: #{sparse_mmdit_block_forward.6} parent=43 // pred_check_branch
          %2472 = sbr.rel (%p2470) target = $region76
        $region75: #{sparse_mmdit_block_forward.6} parent=43 // pred_region
          #allocation20 [shape = 'u32[6]{0}', space=smem, size = 0x18, scoped, tag = 'DMA stride descriptor']
          %s2473 = smul.u32 4, %s41
          %s2475 = ssub.s32 1024, 1024
          %2476 = vsyncadd %s2414, %s2475
          %s2477 = smul.addr %s40, 48
          %s2478 = sadd.s32 %s2473, %s2477
          %s2479 = smul.addr %s2478, 64
          %s2480 = scalar_lea.hbm %s7, %s2479
          %s2482 = sshll.u32 1, 14
          %s2483 = sxor.u32 4294967295, %s2482
          %s2486 = sshll.u32 7, 18
          %s2487 = sxor.u32 4294967295, %s2486
          %s2488 = sand.u32 0, %s2487
          %s2490 = sor.u32 %s2488, 0
          %s2492 = sshll.u32 3, 24
          %s2493 = sxor.u32 4294967295, %s2492
          %s2494 = sand.u32 %s2490, %s2493
          %s2496 = sor.u32 %s2494, 0
          %s2497 = sshll.u32 %s2417, 4
          %s2498 = int_to_ptr.vmem [resolvable:$true] %s2497
          %2504 = sst [smem:[#allocation20]] 256
          %s2505 = scalar_lea.smem [#allocation20], 1
          %2506 = sst [smem:[%s2505]] 768
          %s2507 = scalar_lea.smem [#allocation20], 2
          %2508 = sst [smem:[%s2507]] 4
          %s2509 = scalar_lea.smem [#allocation20], 3
          %2510 = sst [smem:[%s2509]] 64
          %s2511 = scalar_lea.smem [#allocation20], 4
          %2512 = sst [smem:[%s2511]] 64
          %s2513 = scalar_lea.smem [#allocation20], 5
          %2514 = sst [smem:[%s2513]] 4
          %2516 = dma.general %s2498, 1024, %s2480, %s2414, [#allocation19], [#allocation20], %s2496, 0
        $region76: #{sparse_mmdit_block_forward.6} parent=43 // pred_fallthru
          _
        // Predicated region
        $region77: #{sparse_mmdit_block_forward.6} parent=43 // pred_check
          %p2517 = pneg %p285
        $region78: #{sparse_mmdit_block_forward.6} parent=43 // pred_check_branch
          %2519 = sbr.rel (%p2517) target = $region80
        $region79: #{sparse_mmdit_block_forward.6} parent=43 // pred_region
          #allocation22 [shape = 'u32[6]{0}', space=smem, size = 0x18, scoped, tag = 'DMA stride descriptor']
          %s2520 = smul.u32 4, %s41
          %s2522 = ssub.s32 1024, 1024
          %2523 = vsyncadd %s2419, %s2522
          %s2524 = smul.addr %s40, 48
          %s2525 = sadd.s32 %s2520, %s2524
          %s2526 = smul.addr %s2525, 64
          %s2527 = scalar_lea.hbm %s8, %s2526
          %s2529 = sshll.u32 1, 14
          %s2530 = sxor.u32 4294967295, %s2529
          %s2533 = sshll.u32 7, 18
          %s2534 = sxor.u32 4294967295, %s2533
          %s2535 = sand.u32 0, %s2534
          %s2537 = sor.u32 %s2535, 0
          %s2539 = sshll.u32 3, 24
          %s2540 = sxor.u32 4294967295, %s2539
          %s2541 = sand.u32 %s2537, %s2540
          %s2543 = sor.u32 %s2541, 0
          %s2544 = sshll.u32 %s2422, 4
          %s2545 = int_to_ptr.vmem [resolvable:$true] %s2544
          %2551 = sst [smem:[#allocation22]] 256
          %s2552 = scalar_lea.smem [#allocation22], 1
          %2553 = sst [smem:[%s2552]] 768
          %s2554 = scalar_lea.smem [#allocation22], 2
          %2555 = sst [smem:[%s2554]] 4
          %s2556 = scalar_lea.smem [#allocation22], 3
          %2557 = sst [smem:[%s2556]] 64
          %s2558 = scalar_lea.smem [#allocation22], 4
          %2559 = sst [smem:[%s2558]] 64
          %s2560 = scalar_lea.smem [#allocation22], 5
          %2561 = sst [smem:[%s2560]] 4
          %2563 = dma.general %s2545, 1024, %s2527, %s2419, [#allocation21], [#allocation22], %s2543, 0
        $region80: #{sparse_mmdit_block_forward.6} parent=43 // pred_fallthru
          _
      $region44: #{sparse_mmdit_block_forward.6} parent=5 // pred_fallthru
        _
      %p2564 = scmp.le.s32.totalorder 2, %s31
      // Predicated region
      $region81: #{sparse_mmdit_block_forward.6} parent=5 // pred_check
        %p2565 = pneg %p2564
      $region82: #{sparse_mmdit_block_forward.6} parent=5 // pred_check_branch
        %2567 = sbr.rel (%p2565) target = $region84
      $region83: #{sparse_mmdit_block_forward.6} parent=5 // pred_region
        %s2568 = ssub.s32 %s31, 2
        // Predicated region
        $region85: #{sparse_mmdit_block_forward.6} parent=83 // pred_check
          %p2569 = pneg %p235
        $region86: #{sparse_mmdit_block_forward.6} parent=83 // pred_check_branch
          %2571 = sbr.rel (%p2569) target = $region88
        $region87: #{sparse_mmdit_block_forward.6} parent=83 // pred_region
          %s2572 = sand.u32 %s220, 1
          %s2573 = scalar_lea.sflag [#allocation4], %s2572
          %s2574 = sand.u32 %s220, 1
          %s2575 = smul.addr %s2574, 64
          %s2576 = scalar_lea.vmem [#allocation13], %s2575
          %2577 = dma.done %s2573, 1024
        $region88: #{sparse_mmdit_block_forward.6} parent=83 // pred_fallthru
          _
        // Predicated region
        $region89: #{sparse_mmdit_block_forward.6} parent=83 // pred_check
          %p2578 = pneg %p263
        $region90: #{sparse_mmdit_block_forward.6} parent=83 // pred_check_branch
          %2580 = sbr.rel (%p2578) target = $region92
        $region91: #{sparse_mmdit_block_forward.6} parent=83 // pred_region
          %s2581 = sand.u32 %s37, 1
          %s2582 = scalar_lea.sflag [#allocation15], %s2581
          %s2583 = sand.u32 %s248, 1
          %s2584 = smul.addr %s2583, 64
          %s2585 = scalar_lea.vmem [#allocation14], %s2584
          %2586 = dma.done %s2582, 1024
        $region92: #{sparse_mmdit_block_forward.6} parent=83 // pred_fallthru
          _
        // Predicated region
        $region93: #{sparse_mmdit_block_forward.6} parent=83 // pred_check
          %p2587 = pneg %p291
        $region94: #{sparse_mmdit_block_forward.6} parent=83 // pred_check_branch
          %2589 = sbr.rel (%p2587) target = $region96
        $region95: #{sparse_mmdit_block_forward.6} parent=83 // pred_region
          %s2590 = sand.u32 %s37, 1
          %s2591 = scalar_lea.sflag [#allocation15], %s2590
          %s2592 = sand.u32 %s276, 1
          %s2593 = smul.addr %s2592, 64
          %s2594 = scalar_lea.vmem [#allocation16], %s2593
          %2595 = dma.done %s2591, 1024
        $region96: #{sparse_mmdit_block_forward.6} parent=83 // pred_fallthru
          _
      $region84: #{sparse_mmdit_block_forward.6} parent=5 // pred_fallthru
        _
    $region6: #{sparse_mmdit_block_forward.6} parent=1 // loop_footer
      %s35 = sadd.s32 1, %s31
    $region7: #{sparse_mmdit_block_forward.6} parent=1 // loop_footer_branch
      %30 = sbr.rel target = $region3
    $region8: #{sparse_mmdit_block_forward.6} parent=1 // loop_exit
      _
    %2596 = vsyncpa [#allocation3], 1
    %s2597 = scalar_lea.sflag [#allocation3], 1
    %2598 = vsyncpa %s2597, 1
    %2599 = vsyncpa [#allocation6], 1
    %s2600 = scalar_lea.sflag [#allocation6], 1
    %2601 = vsyncpa %s2600, 1
    %2602 = vsyncpa [#allocation9], 1
    %s2603 = scalar_lea.sflag [#allocation9], 1
    %2604 = vsyncpa %s2603, 1
    %2605 = vsyncpa [#allocation12], 1
    %2606 = vsyncpa [#allocation4], 1
    %s2607 = scalar_lea.sflag [#allocation4], 1
    %2608 = vsyncpa %s2607, 1
    %2609 = vsyncpa [#allocation15], 1
    %s2610 = scalar_lea.sflag [#allocation15], 1
    %2611 = vsyncpa %s2610, 1

// kernel: sparse_mmdit_block_forward.9
$region0: #{sparse_mmdit_block_forward.9}
  #allocation0 [shape = 'u32[]', space=smem, size = 0x4, offset = 0x4, fixed_abs, tag = 'smem constant byte address 0x4 - core index']
  #allocation1 [shape = 'u32[144,128]{1,0:T(1,128)}', space=vmem, size = 0x12000, scoped, tag = 'internal scratch']
  #allocation2 [shape = 'bf16[32,128]{1,0:T(16,128)(2,1)}', space=vmem, size = 0x2000, scoped, tag = 'scratch operand']
  #allocation3 [shape = 'f32[32,128]{1,0:T(8,128)}', space=vmem, size = 0x4000, scoped, tag = 'scratch operand']
  %s0 = inlined_call_operand.hbm [shape: bf16[2,96,128], index: 0, kind: input, shape index: {}]
  %s1 = inlined_call_operand.hbm [shape: f32[2,1,128], index: 1, kind: input, shape index: {}]
  %s2 = inlined_call_operand.hbm [shape: f32[2,2,1,128], index: 2, kind: input, shape index: {}]
  %s3 = inlined_call_operand.hbm [shape: f32[2,2,1,128], index: 3, kind: input, shape index: {}]
  %s4 = inlined_call_operand.hbm [shape: bf16[128,512], index: 4, kind: input, shape index: {}]
  %s5 = inlined_call_operand.hbm [shape: f32[1,512], index: 5, kind: input, shape index: {}]
  %s6 = inlined_call_operand.hbm [shape: bf16[128,512], index: 6, kind: input, shape index: {}]
  %s7 = inlined_call_operand.hbm [shape: f32[1,512], index: 7, kind: input, shape index: {}]
  %s8 = inlined_call_operand.hbm [shape: bf16[512,128], index: 8, kind: input, shape index: {}]
  %s9 = inlined_call_operand.hbm [shape: f32[1,128], index: 9, kind: input, shape index: {}]
  %s10 = inlined_call_operand.hbm [shape: f32[2,2,1,128], index: 10, kind: input, shape index: {}]
  %s11 = inlined_call_operand.hbm [shape: bf16[2,96,128], index: 11, kind: output, shape index: {}]
  %s12 = sld [smem:[#allocation0]]
  $region129: #{sparse_mmdit_block_forward.9} parent=0
    _
  %s14 = ssub.s32 1, %s12
  %s15 = scalar_select 0, %s14, %s12
  $region1: #{sparse_mmdit_block_forward.9} parent=0
    #allocation4 [shape = 'u8[16384]{0}', space=vmem, size = 0x4000, scoped, tag = 'input window, operand 0']
    #allocation5 [shape = 's32[2]{0}', space=sflag, size = 0x8, scoped, tag = 'scoped memory for sparse_mmdit_block_forward.9']
    #allocation6 [shape = 's32[2]{0}', space=sflag, size = 0x8, scoped, tag = 'scoped memory for sparse_mmdit_block_forward.9']
    #allocation7 [shape = 'u8[1024]{0}', space=vmem, size = 0x400, scoped, tag = 'input window, operand 1']
    #allocation8 [shape = 's32[2]{0}', space=sflag, size = 0x8, scoped, tag = 'scoped memory for sparse_mmdit_block_forward.9']
    #allocation9 [shape = 'u8[1024]{0}', space=vmem, size = 0x400, scoped, tag = 'input window, operand 2']
    #allocation10 [shape = 'u8[1024]{0}', space=vmem, size = 0x400, scoped, tag = 'input window, operand 3']
    #allocation11 [shape = 's32[2]{0}', space=sflag, size = 0x8, scoped, tag = 'scoped memory for sparse_mmdit_block_forward.9']
    #allocation12 [shape = 'u8[65536]{0}', space=vmem, size = 0x10000, scoped, tag = 'input window, operand 4']
    #allocation13 [shape = 'u8[1024]{0}', space=vmem, size = 0x400, scoped, tag = 'input window, operand 5']
    #allocation14 [shape = 's32[2]{0}', space=sflag, size = 0x8, scoped, tag = 'scoped memory for sparse_mmdit_block_forward.9']
    #allocation15 [shape = 'u8[65536]{0}', space=vmem, size = 0x10000, scoped, tag = 'input window, operand 6']
    #allocation16 [shape = 'u8[1024]{0}', space=vmem, size = 0x400, scoped, tag = 'input window, operand 7']
    #allocation17 [shape = 's32[2]{0}', space=sflag, size = 0x8, scoped, tag = 'scoped memory for sparse_mmdit_block_forward.9']
    #allocation18 [shape = 'u8[65536]{0}', space=vmem, size = 0x10000, scoped, tag = 'input window, operand 8']
    #allocation19 [shape = 'u8[512]{0}', space=vmem, size = 0x400, scoped, tag = 'input window, operand 9, single buffered']
    #allocation20 [shape = 's32[1]{0}', space=sflag, size = 0x4, scoped, tag = 'scoped memory for sparse_mmdit_block_forward.9']
    #allocation21 [shape = 'u8[1024]{0}', space=vmem, size = 0x400, scoped, tag = 'input window, operand 10']
    #allocation22 [shape = 'u8[16384]{0}', space=vmem, size = 0x4000, scoped, tag = 'output window, operand 0']
    %16 = vsyncpa [#allocation5], 0
    %s17 = scalar_lea.sflag [#allocation5], 1
    %18 = vsyncpa %s17, 0
    %19 = vsyncpa [#allocation8], 0
    %s20 = scalar_lea.sflag [#allocation8], 1
    %21 = vsyncpa %s20, 0
    %22 = vsyncpa [#allocation11], 0
    %s23 = scalar_lea.sflag [#allocation11], 1
    %24 = vsyncpa %s23, 0
    %25 = vsyncpa [#allocation14], 0
    %s26 = scalar_lea.sflag [#allocation14], 1
    %27 = vsyncpa %s26, 0
    %28 = vsyncpa [#allocation17], 0
    %s29 = scalar_lea.sflag [#allocation17], 1
    %30 = vsyncpa %s29, 0
    %31 = vsyncpa [#allocation20], 0
    %32 = vsyncpa [#allocation6], 0
    %s33 = scalar_lea.sflag [#allocation6], 1
    %34 = vsyncpa %s33, 0
    loop: start=0, step=1, limit=26
    $region2: #{sparse_mmdit_block_forward.9} parent=1 // loop_pre_header
      _
    $region3: #{sparse_mmdit_block_forward.9} parent=1 // loop_header
      %s36 = sphi 0, %s40
      %p37 = scmp.ge.s32.totalorder %s36, 26
      %s43 = sphi 0, %s62
      %s44 = sphi 0, %s58
      %s45 = sphi 0, %s54
      %s46 = sphi 0, %s43
      %s47 = sphi 0, %s44
      %s48 = sphi 0, %s45
      %s49 = sphi 0, %s46
      %s50 = sphi 0, %s47
      %s51 = sphi 0, %s48
      %s67 = sphi 0, %s69
      %s70 = sphi 0, %s67
      %s71 = sphi 0, %s70
      %s87 = sphi 0, %s71
      %s97 = sphi 0, %s99
      %s100 = sphi 0, %s97
      %s101 = sphi 0, %s100
      %s117 = sphi 0, %s101
      %s129 = sphi 0, %s131
      %s132 = sphi 0, %s129
      %s133 = sphi 0, %s132
      %s149 = sphi 0, %s133
      %s161 = sphi 0, %s163
      %s164 = sphi 0, %s161
      %s165 = sphi 0, %s164
      %s181 = sphi 0, %s165
      %s187 = sphi 0, %s189
      %s190 = sphi 0, %s187
      %s191 = sphi 0, %s190
      %s207 = sphi 0, %s191
      %s213 = sphi 0, %s215
      %s216 = sphi 0, %s213
      %s217 = sphi 0, %s216
      %s233 = sphi 0, %s217
      %s239 = sphi 0, %s241
      %s242 = sphi 0, %s239
      %s243 = sphi 0, %s242
      %s259 = sphi 0, %s243
      %s265 = sphi 0, %s267
      %s268 = sphi 0, %s265
      %s269 = sphi 0, %s268
      %s285 = sphi 0, %s269
      %s291 = sphi 0, %s293
      %s294 = sphi 0, %s291
      %s295 = sphi 0, %s294
      %s311 = sphi 0, %s295
      %s315 = sphi 0, %s315
      %s317 = sphi 0, %s315
      %s318 = sphi 0, %s317
      %s332 = sphi 0, %s318
      %s344 = sphi 0, %s346
      %s347 = sphi 0, %s344
      %s348 = sphi 0, %s347
      %s364 = sphi 0, %s348
      %s372 = sphi 0, %s374
      %s375 = sphi 0, %s372
      %s376 = sphi 0, %s375
      %s392 = sphi 0, %s376
    $region4: #{sparse_mmdit_block_forward.9} parent=1 // loop_header_branch
      %39 = sbr.rel (%p37) target = $region8
    $region5: #{sparse_mmdit_block_forward.9} parent=1 // loop_body
      %s41 = ssub.s32 %s36, 1
      %s42 = ssub.s32 %s36, 2
      %s52 = sadd.s32 1, %s45
      %p53 = scmp.ge.s32.totalorder %s52, 4
      %s54 = scalar_select %p53, 0, %s52
      %s55 = sadd.s32 1, %s44
      %s56 = scalar_select %p53, %s55, %s44
      %p57 = scmp.ge.s32.totalorder %s56, 3
      %s58 = scalar_select %p57, 0, %s56
      %s59 = sadd.s32 1, %s43
      %s60 = scalar_select %p57, %s59, %s43
      %p61 = scmp.ge.s32.totalorder %s60, 2
      %s62 = scalar_select %p61, 0, %s60
      %s63 = ssub.s32 %s43, %s62
      %s64 = ssub.s32 %s44, %s58
      %s65 = sor.u32 %s63, %s64
      %p66 = scmp.eq.s32.totalorder %s65, 0
      %s68 = sadd.s32 %s67, 1
      %s69 = scalar_select %p66, %s67, %s68
      %p72 = pneg %p66
      %p73 = scmp.eq.s32.totalorder %s36, 23
      %p74 = por %p72, %p73
      %p75 = scmp.ne.s32.totalorder %s67, %s70
      %p76 = scmp.eq.s32.totalorder %s36, 0
      %p77 = por %p75, %p76
      %p78 = scmp.ne.s32.totalorder %s67, %s70
      %p79 = scmp.eq.s32.totalorder %s41, 23
      %p80 = por %p78, %p79
      %p81 = scmp.ne.s32.totalorder %s70, %s71
      %p82 = scmp.eq.s32.totalorder %s41, 0
      %p83 = por %p81, %p82
      %p84 = scmp.ne.s32.totalorder %s70, %s71
      %p85 = scmp.eq.s32.totalorder %s42, 23
      %p86 = por %p84, %p85
      %p88 = scmp.ne.s32.totalorder %s71, %s87
      %p89 = scmp.eq.s32.totalorder %s42, 0
      %p90 = por %p88, %p89
      %p91 = scmp.ge.s32.totalorder %s44, 2
      %s92 = scalar_select %p91, 1, 0
      %p93 = scmp.ge.s32.totalorder %s58, 2
      %s94 = scalar_select %p93, 1, 0
      %s95 = ssub.s32 %s92, %s94
      %p96 = scmp.eq.s32.totalorder %s95, 0
      %s98 = sadd.s32 %s97, 1
      %s99 = scalar_select %p96, %s97, %s98
      %p102 = pneg %p96
      %p103 = scmp.eq.s32.totalorder %s36, 23
      %p104 = por %p102, %p103
      %p105 = scmp.ne.s32.totalorder %s97, %s100
      %p106 = scmp.eq.s32.totalorder %s36, 0
      %p107 = por %p105, %p106
      %p108 = scmp.ne.s32.totalorder %s97, %s100
      %p109 = scmp.eq.s32.totalorder %s41, 23
      %p110 = por %p108, %p109
      %p111 = scmp.ne.s32.totalorder %s100, %s101
      %p112 = scmp.eq.s32.totalorder %s41, 0
      %p113 = por %p111, %p112
      %p114 = scmp.ne.s32.totalorder %s100, %s101
      %p115 = scmp.eq.s32.totalorder %s42, 23
      %p116 = por %p114, %p115
      %p118 = scmp.ne.s32.totalorder %s101, %s117
      %p119 = scmp.eq.s32.totalorder %s42, 0
      %p120 = por %p118, %p119
      %p121 = scmp.ge.s32.totalorder %s44, 2
      %s122 = scalar_select %p121, 1, 0
      %p123 = scmp.ge.s32.totalorder %s58, 2
      %s124 = scalar_select %p123, 1, 0
      %s125 = ssub.s32 %s122, %s124
      %s126 = ssub.s32 %s43, %s62
      %s127 = sor.u32 %s125, %s126
      %p128 = scmp.eq.s32.totalorder %s127, 0
      %s130 = sadd.s32 %s129, 1
      %s131 = scalar_select %p128, %s129, %s130
      %p134 = pneg %p128
      %p135 = scmp.eq.s32.totalorder %s36, 23
      %p136 = por %p134, %p135
      %p137 = scmp.ne.s32.totalorder %s129, %s132
      %p138 = scmp.eq.s32.totalorder %s36, 0
      %p139 = por %p137, %p138
      %p140 = scmp.ne.s32.totalorder %s129, %s132
      %p141 = scmp.eq.s32.totalorder %s41, 23
      %p142 = por %p140, %p141
      %p143 = scmp.ne.s32.totalorder %s132, %s133
      %p144 = scmp.eq.s32.totalorder %s41, 0
      %p145 = por %p143, %p144
      %p146 = scmp.ne.s32.totalorder %s132, %s133
      %p147 = scmp.eq.s32.totalorder %s42, 23
      %p148 = por %p146, %p147
      %p150 = scmp.ne.s32.totalorder %s133, %s149
      %p151 = scmp.eq.s32.totalorder %s42, 0
      %p152 = por %p150, %p151
      %p153 = scmp.ge.s32.totalorder %s44, 2
      %s154 = scalar_select %p153, 1, 0
      %p155 = scmp.ge.s32.totalorder %s58, 2
      %s156 = scalar_select %p155, 1, 0
      %s157 = ssub.s32 %s154, %s156
      %s158 = ssub.s32 %s43, %s62
      %s159 = sor.u32 %s157, %s158
      %p160 = scmp.eq.s32.totalorder %s159, 0
      %s162 = sadd.s32 %s161, 1
      %s163 = scalar_select %p160, %s161, %s162
      %p166 = pneg %p160
      %p167 = scmp.eq.s32.totalorder %s36, 23
      %p168 = por %p166, %p167
      %p169 = scmp.ne.s32.totalorder %s161, %s164
      %p170 = scmp.eq.s32.totalorder %s36, 0
      %p171 = por %p169, %p170
      %p172 = scmp.ne.s32.totalorder %s161, %s164
      %p173 = scmp.eq.s32.totalorder %s41, 23
      %p174 = por %p172, %p173
      %p175 = scmp.ne.s32.totalorder %s164, %s165
      %p176 = scmp.eq.s32.totalorder %s41, 0
      %p177 = por %p175, %p176
      %p178 = scmp.ne.s32.totalorder %s164, %s165
      %p179 = scmp.eq.s32.totalorder %s42, 23
      %p180 = por %p178, %p179
      %p182 = scmp.ne.s32.totalorder %s165, %s181
      %p183 = scmp.eq.s32.totalorder %s42, 0
      %p184 = por %p182, %p183
      %s185 = ssub.s32 %s45, %s54
      %p186 = scmp.eq.s32.totalorder %s185, 0
      %s188 = sadd.s32 %s187, 1
      %s189 = scalar_select %p186, %s187, %s188
      %p192 = pneg %p186
      %p193 = scmp.eq.s32.totalorder %s36, 23
      %p194 = por %p192, %p193
      %p195 = scmp.ne.s32.totalorder %s187, %s190
      %p196 = scmp.eq.s32.totalorder %s36, 0
      %p197 = por %p195, %p196
      %p198 = scmp.ne.s32.totalorder %s187, %s190
      %p199 = scmp.eq.s32.totalorder %s41, 23
      %p200 = por %p198, %p199
      %p201 = scmp.ne.s32.totalorder %s190, %s191
      %p202 = scmp.eq.s32.totalorder %s41, 0
      %p203 = por %p201, %p202
      %p204 = scmp.ne.s32.totalorder %s190, %s191
      %p205 = scmp.eq.s32.totalorder %s42, 23
      %p206 = por %p204, %p205
      %p208 = scmp.ne.s32.totalorder %s191, %s207
      %p209 = scmp.eq.s32.totalorder %s42, 0
      %p210 = por %p208, %p209
      %s211 = ssub.s32 %s45, %s54
      %p212 = scmp.eq.s32.totalorder %s211, 0
      %s214 = sadd.s32 %s213, 1
      %s215 = scalar_select %p212, %s213, %s214
      %p218 = pneg %p212
      %p219 = scmp.eq.s32.totalorder %s36, 23
      %p220 = por %p218, %p219
      %p221 = scmp.ne.s32.totalorder %s213, %s216
      %p222 = scmp.eq.s32.totalorder %s36, 0
      %p223 = por %p221, %p222
      %p224 = scmp.ne.s32.totalorder %s213, %s216
      %p225 = scmp.eq.s32.totalorder %s41, 23
      %p226 = por %p224, %p225
      %p227 = scmp.ne.s32.totalorder %s216, %s217
      %p228 = scmp.eq.s32.totalorder %s41, 0
      %p229 = por %p227, %p228
      %p230 = scmp.ne.s32.totalorder %s216, %s217
      %p231 = scmp.eq.s32.totalorder %s42, 23
      %p232 = por %p230, %p231
      %p234 = scmp.ne.s32.totalorder %s217, %s233
      %p235 = scmp.eq.s32.totalorder %s42, 0
      %p236 = por %p234, %p235
      %s237 = ssub.s32 %s45, %s54
      %p238 = scmp.eq.s32.totalorder %s237, 0
      %s240 = sadd.s32 %s239, 1
      %s241 = scalar_select %p238, %s239, %s240
      %p244 = pneg %p238
      %p245 = scmp.eq.s32.totalorder %s36, 23
      %p246 = por %p244, %p245
      %p247 = scmp.ne.s32.totalorder %s239, %s242
      %p248 = scmp.eq.s32.totalorder %s36, 0
      %p249 = por %p247, %p248
      %p250 = scmp.ne.s32.totalorder %s239, %s242
      %p251 = scmp.eq.s32.totalorder %s41, 23
      %p252 = por %p250, %p251
      %p253 = scmp.ne.s32.totalorder %s242, %s243
      %p254 = scmp.eq.s32.totalorder %s41, 0
      %p255 = por %p253, %p254
      %p256 = scmp.ne.s32.totalorder %s242, %s243
      %p257 = scmp.eq.s32.totalorder %s42, 23
      %p258 = por %p256, %p257
      %p260 = scmp.ne.s32.totalorder %s243, %s259
      %p261 = scmp.eq.s32.totalorder %s42, 0
      %p262 = por %p260, %p261
      %s263 = ssub.s32 %s45, %s54
      %p264 = scmp.eq.s32.totalorder %s263, 0
      %s266 = sadd.s32 %s265, 1
      %s267 = scalar_select %p264, %s265, %s266
      %p270 = pneg %p264
      %p271 = scmp.eq.s32.totalorder %s36, 23
      %p272 = por %p270, %p271
      %p273 = scmp.ne.s32.totalorder %s265, %s268
      %p274 = scmp.eq.s32.totalorder %s36, 0
      %p275 = por %p273, %p274
      %p276 = scmp.ne.s32.totalorder %s265, %s268
      %p277 = scmp.eq.s32.totalorder %s41, 23
      %p278 = por %p276, %p277
      %p279 = scmp.ne.s32.totalorder %s268, %s269
      %p280 = scmp.eq.s32.totalorder %s41, 0
      %p281 = por %p279, %p280
      %p282 = scmp.ne.s32.totalorder %s268, %s269
      %p283 = scmp.eq.s32.totalorder %s42, 23
      %p284 = por %p282, %p283
      %p286 = scmp.ne.s32.totalorder %s269, %s285
      %p287 = scmp.eq.s32.totalorder %s42, 0
      %p288 = por %p286, %p287
      %s289 = ssub.s32 %s45, %s54
      %p290 = scmp.eq.s32.totalorder %s289, 0
      %s292 = sadd.s32 %s291, 1
      %s293 = scalar_select %p290, %s291, %s292
      %p296 = pneg %p290
      %p297 = scmp.eq.s32.totalorder %s36, 23
      %p298 = por %p296, %p297
      %p299 = scmp.ne.s32.totalorder %s291, %s294
      %p300 = scmp.eq.s32.totalorder %s36, 0
      %p301 = por %p299, %p300
      %p302 = scmp.ne.s32.totalorder %s291, %s294
      %p303 = scmp.eq.s32.totalorder %s41, 23
      %p304 = por %p302, %p303
      %p305 = scmp.ne.s32.totalorder %s294, %s295
      %p306 = scmp.eq.s32.totalorder %s41, 0
      %p307 = por %p305, %p306
      %p308 = scmp.ne.s32.totalorder %s294, %s295
      %p309 = scmp.eq.s32.totalorder %s42, 23
      %p310 = por %p308, %p309
      %p312 = scmp.ne.s32.totalorder %s295, %s311
      %p313 = scmp.eq.s32.totalorder %s42, 0
      %p314 = por %p312, %p313
      %s316 = sadd.s32 %s315, 1
      %p319 = scmp.eq.s32.totalorder %s36, 23
      %p320 = scmp.ne.s32.totalorder %s315, %s317
      %p321 = scmp.eq.s32.totalorder %s36, 0
      %p322 = por %p320, %p321
      %p323 = scmp.ne.s32.totalorder %s315, %s317
      %p324 = scmp.eq.s32.totalorder %s41, 23
      %p325 = por %p323, %p324
      %p326 = scmp.ne.s32.totalorder %s317, %s318
      %p327 = scmp.eq.s32.totalorder %s41, 0
      %p328 = por %p326, %p327
      %p329 = scmp.ne.s32.totalorder %s317, %s318
      %p330 = scmp.eq.s32.totalorder %s42, 23
      %p331 = por %p329, %p330
      %p333 = scmp.ne.s32.totalorder %s318, %s332
      %p334 = scmp.eq.s32.totalorder %s42, 0
      %p335 = por %p333, %p334
      %p336 = scmp.ge.s32.totalorder %s44, 2
      %s337 = scalar_select %p336, 1, 0
      %p338 = scmp.ge.s32.totalorder %s58, 2
      %s339 = scalar_select %p338, 1, 0
      %s340 = ssub.s32 %s337, %s339
      %s341 = ssub.s32 %s43, %s62
      %s342 = sor.u32 %s340, %s341
      %p343 = scmp.eq.s32.totalorder %s342, 0
      %s345 = sadd.s32 %s344, 1
      %s346 = scalar_select %p343, %s344, %s345
      %p349 = pneg %p343
      %p350 = scmp.eq.s32.totalorder %s36, 23
      %p351 = por %p349, %p350
      %p352 = scmp.ne.s32.totalorder %s344, %s347
      %p353 = scmp.eq.s32.totalorder %s36, 0
      %p354 = por %p352, %p353
      %p355 = scmp.ne.s32.totalorder %s344, %s347
      %p356 = scmp.eq.s32.totalorder %s41, 23
      %p357 = por %p355, %p356
      %p358 = scmp.ne.s32.totalorder %s347, %s348
      %p359 = scmp.eq.s32.totalorder %s41, 0
      %p360 = por %p358, %p359
      %p361 = scmp.ne.s32.totalorder %s347, %s348
      %p362 = scmp.eq.s32.totalorder %s42, 23
      %p363 = por %p361, %p362
      %p365 = scmp.ne.s32.totalorder %s348, %s364
      %p366 = scmp.eq.s32.totalorder %s42, 0
      %p367 = por %p365, %p366
      %s368 = ssub.s32 %s43, %s62
      %s369 = ssub.s32 %s44, %s58
      %s370 = sor.u32 %s368, %s369
      %p371 = scmp.eq.s32.totalorder %s370, 0
      %s373 = sadd.s32 %s372, 1
      %s374 = scalar_select %p371, %s372, %s373
      %p377 = pneg %p371
      %p378 = scmp.eq.s32.totalorder %s36, 23
      %p379 = por %p377, %p378
      %p380 = scmp.ne.s32.totalorder %s372, %s375
      %p381 = scmp.eq.s32.totalorder %s36, 0
      %p382 = por %p380, %p381
      %p383 = scmp.ne.s32.totalorder %s372, %s375
      %p384 = scmp.eq.s32.totalorder %s41, 23
      %p385 = por %p383, %p384
      %p386 = scmp.ne.s32.totalorder %s375, %s376
      %p387 = scmp.eq.s32.totalorder %s41, 0
      %p388 = por %p386, %p387
      %p389 = scmp.ne.s32.totalorder %s375, %s376
      %p390 = scmp.eq.s32.totalorder %s42, 23
      %p391 = por %p389, %p390
      %p393 = scmp.ne.s32.totalorder %s376, %s392
      %p394 = scmp.eq.s32.totalorder %s42, 0
      %p395 = por %p393, %p394
      %p396 = scmp.le.s32.totalorder 1, %s36
      %p397 = scmp.lt.s32.totalorder %s36, 25
      %p398 = pnand %p396, %p397
      %p399 = pneg %p398
      // Predicated region
      $region9: #{sparse_mmdit_block_forward.9} parent=5 // pred_check
        _
      $region10: #{sparse_mmdit_block_forward.9} parent=5 // pred_check_branch
        %401 = sbr.rel (%p398) target = $region12
      $region11: #{sparse_mmdit_block_forward.9} parent=5 // pred_region
        %s402 = ssub.s32 %s36, 1
        // Predicated region
        $region13: #{sparse_mmdit_block_forward.9} parent=11 // pred_check
          %p403 = pneg %p328
        $region14: #{sparse_mmdit_block_forward.9} parent=11 // pred_check_branch
          %405 = sbr.rel (%p403) target = $region16
        $region15: #{sparse_mmdit_block_forward.9} parent=11 // pred_region
          %s407 = ssub.s32 16, 16
          %408 = vsyncadd [#allocation20], %s407
          %s410 = sshll.u32 [#allocation19], 4
          %s411 = int_to_ptr.vmem [resolvable:$true] %s410
          %413 = dma.hbm_to_vmem [thread:$0]  %s9, 16, %s411, [#allocation20]
        $region16: #{sparse_mmdit_block_forward.9} parent=11 // pred_fallthru
          _
      $region12: #{sparse_mmdit_block_forward.9} parent=5 // pred_fallthru
        _
      %p414 = scmp.lt.s32.totalorder %s36, 24
      // Predicated region
      $region17: #{sparse_mmdit_block_forward.9} parent=5 // pred_check
        %p415 = pneg %p414
      $region18: #{sparse_mmdit_block_forward.9} parent=5 // pred_check_branch
        %417 = sbr.rel (%p415) target = $region20
      $region19: #{sparse_mmdit_block_forward.9} parent=5 // pred_region
        // Predicated region
        $region21: #{sparse_mmdit_block_forward.9} parent=19 // pred_check
          %p418 = pneg %p77
        $region22: #{sparse_mmdit_block_forward.9} parent=19 // pred_check_branch
          %420 = sbr.rel (%p418) target = $region24
        $region23: #{sparse_mmdit_block_forward.9} parent=19 // pred_region
          %s421 = sand.u32 %s36, 1
          %s422 = scalar_lea.sflag [#allocation5], %s421
          %s423 = sand.u32 %s67, 1
          %s424 = smul.addr %s423, 16
          %s425 = scalar_lea.vmem [#allocation4], %s424
          %s426 = smul.u32 4, %s44
          %s428 = ssub.s32 256, 256
          %429 = vsyncadd %s422, %s428
          %s430 = smul.addr %s43, 12
          %s431 = sadd.s32 %s426, %s430
          %s432 = smul.addr %s431, 64
          %s433 = scalar_lea.hbm %s0, %s432
          %s434 = sshll.u32 %s425, 4
          %s435 = int_to_ptr.vmem [resolvable:$true] %s434
          %440 = dma.hbm_to_vmem [thread:$0]  %s433, 256, %s435, %s422, 64, 64, 4
        $region24: #{sparse_mmdit_block_forward.9} parent=19 // pred_fallthru
          _
        // Predicated region
        $region25: #{sparse_mmdit_block_forward.9} parent=19 // pred_check
          %p441 = pneg %p107
        $region26: #{sparse_mmdit_block_forward.9} parent=19 // pred_check_branch
          %443 = sbr.rel (%p441) target = $region28
        $region27: #{sparse_mmdit_block_forward.9} parent=19 // pred_region
          %s444 = sand.u32 %s36, 1
          %s445 = scalar_lea.sflag [#allocation8], %s444
          %s446 = sand.u32 %s97, 1
          %s447 = scalar_lea.vmem [#allocation7], %s446
          %p448 = scmp.ge.s32.totalorder %s44, 2
          %s449 = scalar_select %p448, 1, 0
          %s451 = ssub.s32 16, 16
          %452 = vsyncadd %s445, %s451
          %s453 = smul.addr %s449, 16
          %s454 = scalar_lea.hbm %s1, %s453
          %s456 = sshll.u32 %s447, 4
          %s457 = int_to_ptr.vmem [resolvable:$true] %s456
          %459 = dma.hbm_to_vmem [thread:$0]  %s454, 16, %s457, %s445
        $region28: #{sparse_mmdit_block_forward.9} parent=19 // pred_fallthru
          _
        // Predicated region
        $region29: #{sparse_mmdit_block_forward.9} parent=19 // pred_check
          %p460 = pneg %p139
        $region30: #{sparse_mmdit_block_forward.9} parent=19 // pred_check_branch
          %462 = sbr.rel (%p460) target = $region32
        $region31: #{sparse_mmdit_block_forward.9} parent=19 // pred_region
          %s463 = sand.u32 %s36, 1
          %s464 = scalar_lea.sflag [#allocation8], %s463
          %s465 = sand.u32 %s129, 1
          %s466 = scalar_lea.vmem [#allocation9], %s465
          %p467 = scmp.ge.s32.totalorder %s44, 2
          %s468 = scalar_select %p467, 1, 0
          %s470 = ssub.s32 16, 16
          %471 = vsyncadd %s464, %s470
          %s472 = smul.addr %s468, 2
          %s473 = sadd.s32 %s43, %s472
          %s474 = smul.addr %s473, 16
          %s475 = scalar_lea.hbm %s2, %s474
          %s477 = sshll.u32 %s466, 4
          %s478 = int_to_ptr.vmem [resolvable:$true] %s477
          %480 = dma.hbm_to_vmem [thread:$0]  %s475, 16, %s478, %s464
        $region32: #{sparse_mmdit_block_forward.9} parent=19 // pred_fallthru
          _
        // Predicated region
        $region33: #{sparse_mmdit_block_forward.9} parent=19 // pred_check
          %p481 = pneg %p171
        $region34: #{sparse_mmdit_block_forward.9} parent=19 // pred_check_branch
          %483 = sbr.rel (%p481) target = $region36
        $region35: #{sparse_mmdit_block_forward.9} parent=19 // pred_region
          %s484 = sand.u32 %s36, 1
          %s485 = scalar_lea.sflag [#allocation11], %s484
          %s486 = sand.u32 %s161, 1
          %s487 = scalar_lea.vmem [#allocation10], %s486
          %p488 = scmp.ge.s32.totalorder %s44, 2
          %s489 = scalar_select %p488, 1, 0
          %s491 = ssub.s32 16, 16
          %492 = vsyncadd %s485, %s491
          %s493 = smul.addr %s489, 2
          %s494 = sadd.s32 %s43, %s493
          %s495 = smul.addr %s494, 16
          %s496 = scalar_lea.hbm %s3, %s495
          %s498 = sshll.u32 %s487, 4
          %s499 = int_to_ptr.vmem [resolvable:$true] %s498
          %501 = dma.hbm_to_vmem [thread:$0]  %s496, 16, %s499, %s485
        $region36: #{sparse_mmdit_block_forward.9} parent=19 // pred_fallthru
          _
        // Predicated region
        $region37: #{sparse_mmdit_block_forward.9} parent=19 // pred_check
          %p502 = pneg %p197
        $region38: #{sparse_mmdit_block_forward.9} parent=19 // pred_check_branch
          %504 = sbr.rel (%p502) target = $region40
        $region39: #{sparse_mmdit_block_forward.9} parent=19 // pred_region
          %s505 = sand.u32 %s36, 1
          %s506 = scalar_lea.sflag [#allocation11], %s505
          %s507 = sand.u32 %s187, 1
          %s508 = smul.addr %s507, 64
          %s509 = scalar_lea.vmem [#allocation12], %s508
          %s511 = ssub.s32 1024, 1024
          %512 = vsyncadd %s506, %s511
          %s513 = smul.addr %s45, 64
          %s514 = scalar_lea.hbm %s4, %s513
          %s515 = sshll.u32 %s509, 4
          %s516 = int_to_ptr.vmem [resolvable:$true] %s515
          %521 = dma.hbm_to_vmem [thread:$0]  %s514, 1024, %s516, %s506, 256, 64, 4
        $region40: #{sparse_mmdit_block_forward.9} parent=19 // pred_fallthru
          _
        // Predicated region
        $region41: #{sparse_mmdit_block_forward.9} parent=19 // pred_check
          %p522 = pneg %p223
        $region42: #{sparse_mmdit_block_forward.9} parent=19 // pred_check_branch
          %524 = sbr.rel (%p522) target = $region44
        $region43: #{sparse_mmdit_block_forward.9} parent=19 // pred_region
          %s525 = sand.u32 %s36, 1
          %s526 = scalar_lea.sflag [#allocation14], %s525
          %s527 = sand.u32 %s213, 1
          %s528 = scalar_lea.vmem [#allocation13], %s527
          %s530 = ssub.s32 16, 16
          %531 = vsyncadd %s526, %s530
          %s532 = smul.addr %s45, 16
          %s533 = scalar_lea.hbm %s5, %s532
          %s535 = sshll.u32 %s528, 4
          %s536 = int_to_ptr.vmem [resolvable:$true] %s535
          %538 = dma.hbm_to_vmem [thread:$0]  %s533, 16, %s536, %s526
        $region44: #{sparse_mmdit_block_forward.9} parent=19 // pred_fallthru
          _
        // Predicated region
        $region45: #{sparse_mmdit_block_forward.9} parent=19 // pred_check
          %p539 = pneg %p249
        $region46: #{sparse_mmdit_block_forward.9} parent=19 // pred_check_branch
          %541 = sbr.rel (%p539) target = $region48
        $region47: #{sparse_mmdit_block_forward.9} parent=19 // pred_region
          %s542 = sand.u32 %s36, 1
          %s543 = scalar_lea.sflag [#allocation14], %s542
          %s544 = sand.u32 %s239, 1
          %s545 = smul.addr %s544, 64
          %s546 = scalar_lea.vmem [#allocation15], %s545
          %s548 = ssub.s32 1024, 1024
          %549 = vsyncadd %s543, %s548
          %s550 = smul.addr %s45, 64
          %s551 = scalar_lea.hbm %s6, %s550
          %s552 = sshll.u32 %s546, 4
          %s553 = int_to_ptr.vmem [resolvable:$true] %s552
          %558 = dma.hbm_to_vmem [thread:$0]  %s551, 1024, %s553, %s543, 256, 64, 4
        $region48: #{sparse_mmdit_block_forward.9} parent=19 // pred_fallthru
          _
        // Predicated region
        $region49: #{sparse_mmdit_block_forward.9} parent=19 // pred_check
          %p559 = pneg %p275
        $region50: #{sparse_mmdit_block_forward.9} parent=19 // pred_check_branch
          %561 = sbr.rel (%p559) target = $region52
        $region51: #{sparse_mmdit_block_forward.9} parent=19 // pred_region
          %s562 = sand.u32 %s36, 1
          %s563 = scalar_lea.sflag [#allocation17], %s562
          %s564 = sand.u32 %s265, 1
          %s565 = scalar_lea.vmem [#allocation16], %s564
          %s567 = ssub.s32 16, 16
          %568 = vsyncadd %s563, %s567
          %s569 = smul.addr %s45, 16
          %s570 = scalar_lea.hbm %s7, %s569
          %s572 = sshll.u32 %s565, 4
          %s573 = int_to_ptr.vmem [resolvable:$true] %s572
          %575 = dma.hbm_to_vmem [thread:$0]  %s570, 16, %s573, %s563
        $region52: #{sparse_mmdit_block_forward.9} parent=19 // pred_fallthru
          _
        // Predicated region
        $region53: #{sparse_mmdit_block_forward.9} parent=19 // pred_check
          %p576 = pneg %p301
        $region54: #{sparse_mmdit_block_forward.9} parent=19 // pred_check_branch
          %578 = sbr.rel (%p576) target = $region56
        $region55: #{sparse_mmdit_block_forward.9} parent=19 // pred_region
          %s579 = sand.u32 %s36, 1
          %s580 = scalar_lea.sflag [#allocation17], %s579
          %s581 = sand.u32 %s291, 1
          %s582 = smul.addr %s581, 64
          %s583 = scalar_lea.vmem [#allocation18], %s582
          %s584 = smul.u32 16, %s45
          %s586 = ssub.s32 1024, 1024
          %587 = vsyncadd %s580, %s586
          %s588 = smul.addr %s584, 64
          %s589 = scalar_lea.hbm %s8, %s588
          %s590 = sshll.u32 %s583, 4
          %s591 = int_to_ptr.vmem [resolvable:$true] %s590
          %596 = dma.hbm_to_vmem [thread:$0]  %s589, 1024, %s591, %s580, 64, 64, 4
        $region56: #{sparse_mmdit_block_forward.9} parent=19 // pred_fallthru
          _
        // Predicated region
        $region57: #{sparse_mmdit_block_forward.9} parent=19 // pred_check
          %p597 = pneg %p354
        $region58: #{sparse_mmdit_block_forward.9} parent=19 // pred_check_branch
          %599 = sbr.rel (%p597) target = $region60
        $region59: #{sparse_mmdit_block_forward.9} parent=19 // pred_region
          %s600 = sand.u32 %s36, 1
          %s601 = scalar_lea.sflag [#allocation5], %s600
          %s602 = sand.u32 %s344, 1
          %s603 = scalar_lea.vmem [#allocation21], %s602
          %p604 = scmp.ge.s32.totalorder %s44, 2
          %s605 = scalar_select %p604, 1, 0
          %s607 = ssub.s32 16, 16
          %608 = vsyncadd %s601, %s607
          %s609 = smul.addr %s605, 2
          %s610 = sadd.s32 %s43, %s609
          %s611 = smul.addr %s610, 16
          %s612 = scalar_lea.hbm %s10, %s611
          %s614 = sshll.u32 %s603, 4
          %s615 = int_to_ptr.vmem [resolvable:$true] %s614
          %617 = dma.hbm_to_vmem [thread:$0]  %s612, 16, %s615, %s601
        $region60: #{sparse_mmdit_block_forward.9} parent=19 // pred_fallthru
          _
      $region20: #{sparse_mmdit_block_forward.9} parent=5 // pred_fallthru
        _
      %p618 = scmp.le.s32.totalorder 1, %s36
      %p619 = scmp.lt.s32.totalorder %s36, 25
      %p620 = pnand %p618, %p619
      %p621 = pneg %p620
      // Predicated region
      $region61: #{sparse_mmdit_block_forward.9} parent=5 // pred_check
        _
      $region62: #{sparse_mmdit_block_forward.9} parent=5 // pred_check_branch
        %623 = sbr.rel (%p620) target = $region64
      $region63: #{sparse_mmdit_block_forward.9} parent=5 // pred_region
        %s624 = ssub.s32 %s36, 1
        %s625 = sand.u32 %s41, 1
        %s626 = scalar_lea.sflag [#allocation5], %s625
        %s627 = sand.u32 %s70, 1
        %s628 = smul.addr %s627, 16
        %s629 = scalar_lea.vmem [#allocation4], %s628
        // Predicated region
        $region65: #{sparse_mmdit_block_forward.9} parent=63 // pred_check
          %p630 = pneg %p83
        $region66: #{sparse_mmdit_block_forward.9} parent=63 // pred_check_branch
          %632 = sbr.rel (%p630) target = $region68
        $region67: #{sparse_mmdit_block_forward.9} parent=63 // pred_region
          %633 = dma.done %s626, 256
        $region68: #{sparse_mmdit_block_forward.9} parent=63 // pred_fallthru
          _
        %s634 = sand.u32 %s41, 1
        %s635 = scalar_lea.sflag [#allocation8], %s634
        %s636 = sand.u32 %s100, 1
        %s637 = scalar_lea.vmem [#allocation7], %s636
        // Predicated region
        $region69: #{sparse_mmdit_block_forward.9} parent=63 // pred_check
          %p638 = pneg %p113
        $region70: #{sparse_mmdit_block_forward.9} parent=63 // pred_check_branch
          %640 = sbr.rel (%p638) target = $region72
        $region71: #{sparse_mmdit_block_forward.9} parent=63 // pred_region
          %641 = dma.done %s635, 16
        $region72: #{sparse_mmdit_block_forward.9} parent=63 // pred_fallthru
          _
        %s642 = sand.u32 %s41, 1
        %s643 = scalar_lea.sflag [#allocation8], %s642
        %s644 = sand.u32 %s132, 1
        %s645 = scalar_lea.vmem [#allocation9], %s644
        // Predicated region
        $region73: #{sparse_mmdit_block_forward.9} parent=63 // pred_check
          %p646 = pneg %p145
        $region74: #{sparse_mmdit_block_forward.9} parent=63 // pred_check_branch
          %648 = sbr.rel (%p646) target = $region76
        $region75: #{sparse_mmdit_block_forward.9} parent=63 // pred_region
          %649 = dma.done %s643, 16
        $region76: #{sparse_mmdit_block_forward.9} parent=63 // pred_fallthru
          _
        %s650 = sand.u32 %s41, 1
        %s651 = scalar_lea.sflag [#allocation11], %s650
        %s652 = sand.u32 %s164, 1
        %s653 = scalar_lea.vmem [#allocation10], %s652
        // Predicated region
        $region77: #{sparse_mmdit_block_forward.9} parent=63 // pred_check
          %p654 = pneg %p177
        $region78: #{sparse_mmdit_block_forward.9} parent=63 // pred_check_branch
          %656 = sbr.rel (%p654) target = $region80
        $region79: #{sparse_mmdit_block_forward.9} parent=63 // pred_region
          %657 = dma.done %s651, 16
        $region80: #{sparse_mmdit_block_forward.9} parent=63 // pred_fallthru
          _
        %s658 = sand.u32 %s41, 1
        %s659 = scalar_lea.sflag [#allocation11], %s658
        %s660 = sand.u32 %s190, 1
        %s661 = smul.addr %s660, 64
        %s662 = scalar_lea.vmem [#allocation12], %s661
        // Predicated region
        $region81: #{sparse_mmdit_block_forward.9} parent=63 // pred_check
          %p663 = pneg %p203
        $region82: #{sparse_mmdit_block_forward.9} parent=63 // pred_check_branch
          %665 = sbr.rel (%p663) target = $region84
        $region83: #{sparse_mmdit_block_forward.9} parent=63 // pred_region
          %666 = dma.done %s659, 1024
        $region84: #{sparse_mmdit_block_forward.9} parent=63 // pred_fallthru
          _
        %s667 = sand.u32 %s41, 1
        %s668 = scalar_lea.sflag [#allocation14], %s667
        %s669 = sand.u32 %s216, 1
        %s670 = scalar_lea.vmem [#allocation13], %s669
        // Predicated region
        $region85: #{sparse_mmdit_block_forward.9} parent=63 // pred_check
          %p671 = pneg %p229
        $region86: #{sparse_mmdit_block_forward.9} parent=63 // pred_check_branch
          %673 = sbr.rel (%p671) target = $region88
        $region87: #{sparse_mmdit_block_forward.9} parent=63 // pred_region
          %674 = dma.done %s668, 16
        $region88: #{sparse_mmdit_block_forward.9} parent=63 // pred_fallthru
          _
        %s675 = sand.u32 %s41, 1
        %s676 = scalar_lea.sflag [#allocation14], %s675
        %s677 = sand.u32 %s242, 1
        %s678 = smul.addr %s677, 64
        %s679 = scalar_lea.vmem [#allocation15], %s678
        // Predicated region
        $region89: #{sparse_mmdit_block_forward.9} parent=63 // pred_check
          %p680 = pneg %p255
        $region90: #{sparse_mmdit_block_forward.9} parent=63 // pred_check_branch
          %682 = sbr.rel (%p680) target = $region92
        $region91: #{sparse_mmdit_block_forward.9} parent=63 // pred_region
          %683 = dma.done %s676, 1024
        $region92: #{sparse_mmdit_block_forward.9} parent=63 // pred_fallthru
          _
        %s684 = sand.u32 %s41, 1
        %s685 = scalar_lea.sflag [#allocation17], %s684
        %s686 = sand.u32 %s268, 1
        %s687 = scalar_lea.vmem [#allocation16], %s686
        // Predicated region
        $region93: #{sparse_mmdit_block_forward.9} parent=63 // pred_check
          %p688 = pneg %p281
        $region94: #{sparse_mmdit_block_forward.9} parent=63 // pred_check_branch
          %690 = sbr.rel (%p688) target = $region96
        $region95: #{sparse_mmdit_block_forward.9} parent=63 // pred_region
          %691 = dma.done %s685, 16
        $region96: #{sparse_mmdit_block_forward.9} parent=63 // pred_fallthru
          _
        %s692 = sand.u32 %s41, 1
        %s693 = scalar_lea.sflag [#allocation17], %s692
        %s694 = sand.u32 %s294, 1
        %s695 = smul.addr %s694, 64
        %s696 = scalar_lea.vmem [#allocation18], %s695
        // Predicated region
        $region97: #{sparse_mmdit_block_forward.9} parent=63 // pred_check
          %p697 = pneg %p307
        $region98: #{sparse_mmdit_block_forward.9} parent=63 // pred_check_branch
          %699 = sbr.rel (%p697) target = $region100
        $region99: #{sparse_mmdit_block_forward.9} parent=63 // pred_region
          %700 = dma.done %s693, 1024
        $region100: #{sparse_mmdit_block_forward.9} parent=63 // pred_fallthru
          _
        // Predicated region
        $region101: #{sparse_mmdit_block_forward.9} parent=63 // pred_check
          %p701 = pneg %p328
        $region102: #{sparse_mmdit_block_forward.9} parent=63 // pred_check_branch
          %703 = sbr.rel (%p701) target = $region104
        $region103: #{sparse_mmdit_block_forward.9} parent=63 // pred_region
          %704 = dma.done [#allocation20], 16
        $region104: #{sparse_mmdit_block_forward.9} parent=63 // pred_fallthru
          _
        %s705 = sand.u32 %s41, 1
        %s706 = scalar_lea.sflag [#allocation5], %s705
        %s707 = sand.u32 %s347, 1
        %s708 = scalar_lea.vmem [#allocation21], %s707
        // Predicated region
        $region105: #{sparse_mmdit_block_forward.9} parent=63 // pred_check
          %p709 = pneg %p360
        $region106: #{sparse_mmdit_block_forward.9} parent=63 // pred_check_branch
          %711 = sbr.rel (%p709) target = $region108
        $region107: #{sparse_mmdit_block_forward.9} parent=63 // pred_region
          %712 = dma.done %s706, 16
        $region108: #{sparse_mmdit_block_forward.9} parent=63 // pred_fallthru
          _
        %s713 = sand.u32 %s41, 1
        %s714 = scalar_lea.sflag [#allocation5], %s713
        %s715 = sand.u32 %s70, 1
        %s716 = smul.addr %s715, 16
        %s717 = scalar_lea.vmem [#allocation4], %s716
        %p718 = pneg %p83
        %p719 = pneg %p80
        %s720 = sand.u32 %s41, 1
        %s721 = scalar_lea.sflag [#allocation8], %s720
        %s722 = sand.u32 %s100, 1
        %s723 = scalar_lea.vmem [#allocation7], %s722
        %p724 = pneg %p113
        %p725 = pneg %p110
        %s726 = sand.u32 %s41, 1
        %s727 = scalar_lea.sflag [#allocation8], %s726
        %s728 = sand.u32 %s132, 1
        %s729 = scalar_lea.vmem [#allocation9], %s728
        %p730 = pneg %p145
        %p731 = pneg %p142
        %s732 = sand.u32 %s41, 1
        %s733 = scalar_lea.sflag [#allocation11], %s732
        %s734 = sand.u32 %s164, 1
        %s735 = scalar_lea.vmem [#allocation10], %s734
        %p736 = pneg %p177
        %p737 = pneg %p174
        %s738 = sand.u32 %s41, 1
        %s739 = scalar_lea.sflag [#allocation11], %s738
        %s740 = sand.u32 %s190, 1
        %s741 = smul.addr %s740, 64
        %s742 = scalar_lea.vmem [#allocation12], %s741
        %p743 = pneg %p203
        %p744 = pneg %p200
        %s745 = sand.u32 %s41, 1
        %s746 = scalar_lea.sflag [#allocation14], %s745
        %s747 = sand.u32 %s216, 1
        %s748 = scalar_lea.vmem [#allocation13], %s747
        %p749 = pneg %p229
        %p750 = pneg %p226
        %s751 = sand.u32 %s41, 1
        %s752 = scalar_lea.sflag [#allocation14], %s751
        %s753 = sand.u32 %s242, 1
        %s754 = smul.addr %s753, 64
        %s755 = scalar_lea.vmem [#allocation15], %s754
        %p756 = pneg %p255
        %p757 = pneg %p252
        %s758 = sand.u32 %s41, 1
        %s759 = scalar_lea.sflag [#allocation17], %s758
        %s760 = sand.u32 %s268, 1
        %s761 = scalar_lea.vmem [#allocation16], %s760
        %p762 = pneg %p281
        %p763 = pneg %p278
        %s764 = sand.u32 %s41, 1
        %s765 = scalar_lea.sflag [#allocation17], %s764
        %s766 = sand.u32 %s294, 1
        %s767 = smul.addr %s766, 64
        %s768 = scalar_lea.vmem [#allocation18], %s767
        %p769 = pneg %p307
        %p770 = pneg %p304
        %p771 = pneg %p328
        %p772 = pneg %p325
        %s773 = sand.u32 %s41, 1
        %s774 = scalar_lea.sflag [#allocation5], %s773
        %s775 = sand.u32 %s347, 1
        %s776 = scalar_lea.vmem [#allocation21], %s775
        %p777 = pneg %p360
        %p778 = pneg %p357
        %p779 = pneg %p388
        %p780 = pneg %p385
        %s781 = sand.u32 %s375, 1
        %s782 = scalar_lea.sflag [#allocation6], %s781
        %s783 = sand.u32 %s375, 1
        %s784 = smul.addr %s783, 16
        %s785 = scalar_lea.vmem [#allocation22], %s784
        %s786 = smul.u32 4, %s47
        %p787 = scmp.ge.s32.totalorder %s47, 2
        %s788 = scalar_select %p787, 1, 0
        %p789 = scmp.ge.s32.totalorder %s47, 2
        %s790 = scalar_select %p789, 1, 0
        %p791 = scmp.ge.s32.totalorder %s47, 2
        %s792 = scalar_select %p791, 1, 0
        %s793 = smul.u32 16, %s48
        %p794 = scmp.ge.s32.totalorder %s47, 2
        %s795 = scalar_select %p794, 1, 0
        %s796 = smul.u32 4, %s47
        %p798 = scmp.eq.s32.totalorder %s48, 0
        // Predicated region
        $region109: #{sparse_mmdit_block_forward.9} parent=63 // pred_check
          %p799 = pneg %p798
        $region110: #{sparse_mmdit_block_forward.9} parent=63 // pred_check_branch
          %801 = sbr.rel (%p799) target = $region112
        $region111: #{sparse_mmdit_block_forward.9} parent=63 // pred_region
          %v802 = vld [vmem:[%s629] sm:$0xf]
          %v803 = vld [vmem:[%s629 + $0x4] sm:$0xf]
          %v804 = vld [vmem:[%s629 + $0x8] sm:$0xf]
          %v805 = vld [vmem:[%s629 + $0xc] sm:$0xf]
          %v806 = vunpack.c.l.bf16 %v802
          %v807 = vunpack.c.l.bf16 %v803
          %v808 = vunpack.c.l.bf16 %v804
          %v809 = vunpack.c.l.bf16 %v805
          %v810 = vmul.f32 %v806, %v806
          %v811 = vmul.f32 %v807, %v807
          %v812 = vmul.f32 %v808, %v808
          %v813 = vmul.f32 %v809, %v809
          %814 = vadd.xlane.f32.xlu0 %v810
          %v815 = vpop.xlane.xlu0 %814
          %816 = vadd.xlane.f32.xlu0 %v811
          %v817 = vpop.xlane.xlu0 %816
          %818 = vadd.xlane.f32.xlu0 %v812
          %v819 = vpop.xlane.xlu0 %818
          %820 = vadd.xlane.f32.xlu0 %v813
          %v821 = vpop.xlane.xlu0 %820
          %v822 = vrcp.pop 128.0
          %v823 = vmul.f32 %v815, %v822
          %v824 = vmul.f32 %v817, %v822
          %v825 = vmul.f32 %v819, %v822
          %v826 = vmul.f32 %v821, %v822
          %v827 = vadd.f32 %v823, 1e-05
          %v828 = vadd.f32 %v824, 1e-05
          %v829 = vadd.f32 %v825, 1e-05
          %v830 = vadd.f32 %v826, 1e-05
          %v831 = vrsqrt.pop %v827
          %v832 = vrsqrt.pop %v828
          %v833 = vrsqrt.pop %v829
          %v834 = vrsqrt.pop %v830
          %v835 = vmul.f32 %v806, %v831
          %v836 = vmul.f32 %v807, %v832
          %v837 = vmul.f32 %v808, %v833
          %v838 = vmul.f32 %v809, %v834
          %v839 = vld [vmem:[%s637] sm:$0x1]
          %v841 = vlaneseq
          %v842 = vshrl.u32 %v841, 7
          %v843 = vsub.s32 0, %v842
          %v844 = vrot.slane %v839, %v843
          %v846 = vmul.f32 %v835, %v844
          %v847 = vmul.f32 %v836, %v844
          %v848 = vmul.f32 %v837, %v844
          %v849 = vmul.f32 %v838, %v844
          %v850 = vld [vmem:[%s645] sm:$0x1]
          %v851 = vadd.f32 %v850, 1.0
          %v853 = vlaneseq
          %v854 = vshrl.u32 %v853, 7
          %v855 = vsub.s32 0, %v854
          %v856 = vrot.slane %v851, %v855
          %v858 = vmul.f32 %v846, %v856
          %v859 = vmul.f32 %v847, %v856
          %v860 = vmul.f32 %v848, %v856
          %v861 = vmul.f32 %v849, %v856
          %v862 = vld [vmem:[%s653] sm:$0x1]
          %v864 = vlaneseq
          %v865 = vshrl.u32 %v864, 7
          %v866 = vsub.s32 0, %v865
          %v867 = vrot.slane %v862, %v866
          %v869 = vadd.f32 %v858, %v867
          %v870 = vadd.f32 %v859, %v867
          %v871 = vadd.f32 %v860, %v867
          %v872 = vadd.f32 %v861, %v867
          %v873 = vpack.c.bf16 %v870, %v869
          %v874 = vpack.c.bf16 %v872, %v871
          %875 = vst [vmem:[#allocation2] sm:$0xff] %v873
          %876 = vst [vmem:[#allocation2 + $0x8] sm:$0xff] %v874
          %877 = vst [vmem:[#allocation3] sm:$0xff] 0.0
          %878 = vst [vmem:[#allocation3 + $0x8] sm:$0xff] 0.0
          %879 = vst [vmem:[#allocation3 + $0x10] sm:$0xff] 0.0
          %880 = vst [vmem:[#allocation3 + $0x18] sm:$0xff] 0.0
        $region112: #{sparse_mmdit_block_forward.9} parent=63 // pred_fallthru
          _
        %v881 = vld [vmem:[#allocation2] sm:$0xff]
        %v882 = vld [vmem:[#allocation2 + $0x8] sm:$0xff]
        %v883 = vld [vmem:[%s662] sm:$0xf]
        %v884 = vld [vmem:[%s662 + $0x4] sm:$0xf]
        %v885 = vld [vmem:[%s662 + $0x8] sm:$0xf]
        %v886 = vld [vmem:[%s662 + $0xc] sm:$0xf]
        %v887 = vld [vmem:[%s662 + $0x10] sm:$0xf]
        %v888 = vld [vmem:[%s662 + $0x14] sm:$0xf]
        %v889 = vld [vmem:[%s662 + $0x18] sm:$0xf]
        %v890 = vld [vmem:[%s662 + $0x1c] sm:$0xf]
        %v891 = vld [vmem:[%s662 + $0x20] sm:$0xf]
        %v892 = vld [vmem:[%s662 + $0x24] sm:$0xf]
        %v893 = vld [vmem:[%s662 + $0x28] sm:$0xf]
        %v894 = vld [vmem:[%s662 + $0x2c] sm:$0xf]
        %v895 = vld [vmem:[%s662 + $0x30] sm:$0xf]
        %v896 = vld [vmem:[%s662 + $0x34] sm:$0xf]
        %v897 = vld [vmem:[%s662 + $0x38] sm:$0xf]
        %v898 = vld [vmem:[%s662 + $0x3c] sm:$0xf]
        %v899 = vld [vmem:[%s670] sm:$0x1]
        %v901 = vlaneseq
        %v902 = vshrl.u32 %v901, 7
        %v903 = vsub.s32 0, %v902
        %v904 = vrot.slane %v899, %v903
        %v922 = vunpack.c.l.b16 %v883
        %v923 = vunpack.c.l.b16 %v884
        %v924 = vunpack.c.l.b16 %v885
        %v925 = vunpack.c.l.b16 %v886
        %v926 = vunpack.c.l.b16 %v887
        %v927 = vunpack.c.l.b16 %v888
        %v928 = vunpack.c.l.b16 %v889
        %v929 = vunpack.c.l.b16 %v890
        %v930 = vunpack.c.l.b16 %v891
        %v931 = vunpack.c.l.b16 %v892
        %v932 = vunpack.c.l.b16 %v893
        %v933 = vunpack.c.l.b16 %v894
        %v934 = vunpack.c.l.b16 %v895
        %v935 = vunpack.c.l.b16 %v896
        %v936 = vunpack.c.l.b16 %v897
        %v937 = vunpack.c.l.b16 %v898
        %v938 = vpack.c.b16 %v923, %v922
        %v939 = vpack.c.b16 %v925, %v924
        %v940 = vpack.c.b16 %v927, %v926
        %v941 = vpack.c.b16 %v929, %v928
        %v942 = vpack.c.b16 %v931, %v930
        %v943 = vpack.c.b16 %v933, %v932
        %v944 = vpack.c.b16 %v935, %v934
        %v945 = vpack.c.b16 %v937, %v936
        %954 = vmatprep.subr.bf16.mxu0 0
        %955 = vmatpush1.bf16.msra.mxu0 %v938
        %956 = vmatprep.subr.bf16.mxu0 0
        %957 = vmatpush1.bf16.msra.mxu0 %v939
        %958 = vmatprep.subr.bf16.mxu0 0
        %959 = vmatpush1.bf16.msra.mxu0 %v940
        %960 = vmatprep.subr.bf16.mxu0 0
        %961 = vmatpush1.bf16.msra.mxu0 %v941
        %962 = vmatprep.subr.bf16.mxu0 0
        %963 = vmatpush1.bf16.msra.mxu0 %v942
        %964 = vmatprep.subr.bf16.mxu0 0
        %965 = vmatpush1.bf16.msra.mxu0 %v943
        %966 = vmatprep.subr.bf16.mxu0 0
        %967 = vmatpush1.bf16.msra.mxu0 %v944
        %968 = vmatprep.subr.bf16.mxu0 0
        %969 = vmatpush1.bf16.msra.mxu0 %v945
        %970 = vmatprep.subr.bf16.mxu0 0
        %971 = vmatpush1.bf16.msra.mxu0 0
        %972 = vmatprep.subr.bf16.mxu0 0
        %973 = vmatpush1.bf16.msra.mxu0 0
        %974 = vmatprep.subr.bf16.mxu0 0
        %975 = vmatpush1.bf16.msra.mxu0 0
        %976 = vmatprep.subr.bf16.mxu0 0
        %977 = vmatpush1.bf16.msra.mxu0 0
        %978 = vmatprep.subr.bf16.mxu0 0
        %979 = vmatpush1.bf16.msra.mxu0 0
        %980 = vmatprep.subr.bf16.mxu0 0
        %981 = vmatpush1.bf16.msra.mxu0 0
        %982 = vmatprep.subr.bf16.mxu0 0
        %983 = vmatpush1.bf16.msra.mxu0 0
        %984 = vmatprep.subr.bf16.mxu0 0
        %985 = vmatpush1.bf16.msra.mxu0 0
        %986 = vmatprep.mubr.bf16.mxu0 0
        %987 = vmatmul.mubr.bf16.gmra.mrb[0].mxu0 %v881
        %v988 = vpop.f32.mrb[0].mxu0
        %v989 = vadd.f32 %v904, %v988
        %v990 = vpop.f32.mrb[0].mxu0
        %v991 = vpop.f32.mrb[0].mxu0
        %v992 = vadd.f32 %v904, %v991
        %v993 = vpop.f32.mrb[0].mxu0
        %994 = vmatprep.mubr.bf16.mxu0 0
        %995 = vmatmul.mubr.bf16.gmra.mrb[0].mxu0 %v882
        %v996 = vpop.f32.mrb[0].mxu0
        %v997 = vadd.f32 %v904, %v996
        %v998 = vpop.f32.mrb[0].mxu0
        %v999 = vpop.f32.mrb[0].mxu0
        %v1000 = vadd.f32 %v904, %v999
        %v1001 = vpop.f32.mrb[0].mxu0
        %1002 = vdwg.mxu0
        %v1003 = vld [vmem:[%s679] sm:$0xf]
        %v1004 = vld [vmem:[%s679 + $0x4] sm:$0xf]
        %v1005 = vld [vmem:[%s679 + $0x8] sm:$0xf]
        %v1006 = vld [vmem:[%s679 + $0xc] sm:$0xf]
        %v1007 = vld [vmem:[%s679 + $0x10] sm:$0xf]
        %v1008 = vld [vmem:[%s679 + $0x14] sm:$0xf]
        %v1009 = vld [vmem:[%s679 + $0x18] sm:$0xf]
        %v1010 = vld [vmem:[%s679 + $0x1c] sm:$0xf]
        %v1011 = vld [vmem:[%s679 + $0x20] sm:$0xf]
        %v1012 = vld [vmem:[%s679 + $0x24] sm:$0xf]
        %v1013 = vld [vmem:[%s679 + $0x28] sm:$0xf]
        %v1014 = vld [vmem:[%s679 + $0x2c] sm:$0xf]
        %v1015 = vld [vmem:[%s679 + $0x30] sm:$0xf]
        %v1016 = vld [vmem:[%s679 + $0x34] sm:$0xf]
        %v1017 = vld [vmem:[%s679 + $0x38] sm:$0xf]
        %v1018 = vld [vmem:[%s679 + $0x3c] sm:$0xf]
        %v1019 = vld [vmem:[%s687] sm:$0x1]
        %v1021 = vlaneseq
        %v1022 = vshrl.u32 %v1021, 7
        %v1023 = vsub.s32 0, %v1022
        %v1024 = vrot.slane %v1019, %v1023
        %v1042 = vunpack.c.l.b16 %v1003
        %v1043 = vunpack.c.l.b16 %v1004
        %v1044 = vunpack.c.l.b16 %v1005
        %v1045 = vunpack.c.l.b16 %v1006
        %v1046 = vunpack.c.l.b16 %v1007
        %v1047 = vunpack.c.l.b16 %v1008
        %v1048 = vunpack.c.l.b16 %v1009
        %v1049 = vunpack.c.l.b16 %v1010
        %v1050 = vunpack.c.l.b16 %v1011
        %v1051 = vunpack.c.l.b16 %v1012
        %v1052 = vunpack.c.l.b16 %v1013
        %v1053 = vunpack.c.l.b16 %v1014
        %v1054 = vunpack.c.l.b16 %v1015
        %v1055 = vunpack.c.l.b16 %v1016
        %v1056 = vunpack.c.l.b16 %v1017
        %v1057 = vunpack.c.l.b16 %v1018
        %v1058 = vpack.c.b16 %v1043, %v1042
        %v1059 = vpack.c.b16 %v1045, %v1044
        %v1060 = vpack.c.b16 %v1047, %v1046
        %v1061 = vpack.c.b16 %v1049, %v1048
        %v1062 = vpack.c.b16 %v1051, %v1050
        %v1063 = vpack.c.b16 %v1053, %v1052
        %v1064 = vpack.c.b16 %v1055, %v1054
        %v1065 = vpack.c.b16 %v1057, %v1056
        %1074 = vmatprep.subr.bf16.mxu0 0
        %1075 = vmatpush1.bf16.msra.mxu0 %v1058
        %1076 = vmatprep.subr.bf16.mxu0 0
        %1077 = vmatpush1.bf16.msra.mxu0 %v1059
        %1078 = vmatprep.subr.bf16.mxu0 0
        %1079 = vmatpush1.bf16.msra.mxu0 %v1060
        %1080 = vmatprep.subr.bf16.mxu0 0
        %1081 = vmatpush1.bf16.msra.mxu0 %v1061
        %1082 = vmatprep.subr.bf16.mxu0 0
        %1083 = vmatpush1.bf16.msra.mxu0 %v1062
        %1084 = vmatprep.subr.bf16.mxu0 0
        %1085 = vmatpush1.bf16.msra.mxu0 %v1063
        %1086 = vmatprep.subr.bf16.mxu0 0
        %1087 = vmatpush1.bf16.msra.mxu0 %v1064
        %1088 = vmatprep.subr.bf16.mxu0 0
        %1089 = vmatpush1.bf16.msra.mxu0 %v1065
        %1090 = vmatprep.subr.bf16.mxu0 0
        %1091 = vmatpush1.bf16.msra.mxu0 0
        %1092 = vmatprep.subr.bf16.mxu0 0
        %1093 = vmatpush1.bf16.msra.mxu0 0
        %1094 = vmatprep.subr.bf16.mxu0 0
        %1095 = vmatpush1.bf16.msra.mxu0 0
        %1096 = vmatprep.subr.bf16.mxu0 0
        %1097 = vmatpush1.bf16.msra.mxu0 0
        %1098 = vmatprep.subr.bf16.mxu0 0
        %1099 = vmatpush1.bf16.msra.mxu0 0
        %1100 = vmatprep.subr.bf16.mxu0 0
        %1101 = vmatpush1.bf16.msra.mxu0 0
        %1102 = vmatprep.subr.bf16.mxu0 0
        %1103 = vmatpush1.bf16.msra.mxu0 0
        %1104 = vmatprep.subr.bf16.mxu0 0
        %1105 = vmatpush1.bf16.msra.mxu0 0
        %1106 = vmatprep.mubr.bf16.mxu0 0
        %1107 = vmatmul.mubr.bf16.gmra.mrb[0].mxu0 %v881
        %v1108 = vpop.f32.mrb[0].mxu0
        %v1109 = vadd.f32 %v1024, %v1108
        %v1110 = vpop.f32.mrb[0].mxu0
        %v1111 = vpop.f32.mrb[0].mxu0
        %v1112 = vadd.f32 %v1024, %v1111
        %v1113 = vpop.f32.mrb[0].mxu0
        %1114 = vmatprep.mubr.bf16.mxu0 0
        %1115 = vmatmul.mubr.bf16.gmra.mrb[0].mxu0 %v882
        %v1116 = vpop.f32.mrb[0].mxu0
        %v1117 = vadd.f32 %v1024, %v1116
        %v1118 = vpop.f32.mrb[0].mxu0
        %v1119 = vpop.f32.mrb[0].mxu0
        %v1120 = vadd.f32 %v1024, %v1119
        %v1121 = vpop.f32.mrb[0].mxu0
        %1122 = vdwg.mxu0
        %v1123 = vmul.f32 %v1109, 0.5
        %v1124 = vmul.f32 %v1112, 0.5
        %v1125 = vmul.f32 %v1117, 0.5
        %v1126 = vmul.f32 %v1120, 0.5
        %v1127 = vmul.f32 %v1109, 0.70710677
        %v1128 = vmul.f32 %v1112, 0.70710677
        %v1129 = vmul.f32 %v1117, 0.70710677
        %v1130 = vmul.f32 %v1120, 0.70710677
        %v1131 = verf.f32.pop %v1127
        %v1132 = verf.f32.pop %v1128
        %v1133 = verf.f32.pop %v1129
        %v1134 = verf.f32.pop %v1130
        %v1135 = vadd.f32 %v1131, 1.0
        %v1136 = vadd.f32 %v1132, 1.0
        %v1137 = vadd.f32 %v1133, 1.0
        %v1138 = vadd.f32 %v1134, 1.0
        %v1139 = vmul.f32 %v1123, %v1135
        %v1140 = vmul.f32 %v1124, %v1136
        %v1141 = vmul.f32 %v1125, %v1137
        %v1142 = vmul.f32 %v1126, %v1138
        %v1143 = vld [vmem:[#allocation3] sm:$0xff]
        %v1144 = vld [vmem:[#allocation3 + $0x8] sm:$0xff]
        %v1145 = vld [vmem:[#allocation3 + $0x10] sm:$0xff]
        %v1146 = vld [vmem:[#allocation3 + $0x18] sm:$0xff]
        %v1147 = vmul.f32 %v989, %v1139
        %v1148 = vmul.f32 %v992, %v1140
        %v1149 = vmul.f32 %v997, %v1141
        %v1150 = vmul.f32 %v1000, %v1142
        %v1151 = vpack.c.bf16 %v1148, %v1147
        %v1152 = vpack.c.bf16 %v1150, %v1149
        %v1153 = vld [vmem:[%s696] sm:$0xf]
        %v1154 = vld [vmem:[%s696 + $0x4] sm:$0xf]
        %v1155 = vld [vmem:[%s696 + $0x8] sm:$0xf]
        %v1156 = vld [vmem:[%s696 + $0xc] sm:$0xf]
        %v1157 = vld [vmem:[%s696 + $0x10] sm:$0xf]
        %v1158 = vld [vmem:[%s696 + $0x14] sm:$0xf]
        %v1159 = vld [vmem:[%s696 + $0x18] sm:$0xf]
        %v1160 = vld [vmem:[%s696 + $0x1c] sm:$0xf]
        %v1161 = vld [vmem:[%s696 + $0x20] sm:$0xf]
        %v1162 = vld [vmem:[%s696 + $0x24] sm:$0xf]
        %v1163 = vld [vmem:[%s696 + $0x28] sm:$0xf]
        %v1164 = vld [vmem:[%s696 + $0x2c] sm:$0xf]
        %v1165 = vld [vmem:[%s696 + $0x30] sm:$0xf]
        %v1166 = vld [vmem:[%s696 + $0x34] sm:$0xf]
        %v1167 = vld [vmem:[%s696 + $0x38] sm:$0xf]
        %v1168 = vld [vmem:[%s696 + $0x3c] sm:$0xf]
        %v1185 = vunpack.c.l.b16 %v1153
        %v1186 = vunpack.c.l.b16 %v1154
        %v1187 = vunpack.c.l.b16 %v1155
        %v1188 = vunpack.c.l.b16 %v1156
        %v1189 = vunpack.c.l.b16 %v1157
        %v1190 = vunpack.c.l.b16 %v1158
        %v1191 = vunpack.c.l.b16 %v1159
        %v1192 = vunpack.c.l.b16 %v1160
        %v1193 = vunpack.c.l.b16 %v1161
        %v1194 = vunpack.c.l.b16 %v1162
        %v1195 = vunpack.c.l.b16 %v1163
        %v1196 = vunpack.c.l.b16 %v1164
        %v1197 = vunpack.c.l.b16 %v1165
        %v1198 = vunpack.c.l.b16 %v1166
        %v1199 = vunpack.c.l.b16 %v1167
        %v1200 = vunpack.c.l.b16 %v1168
        %v1201 = vpack.c.b16 %v1186, %v1185
        %v1202 = vpack.c.b16 %v1188, %v1187
        %v1203 = vpack.c.b16 %v1190, %v1189
        %v1204 = vpack.c.b16 %v1192, %v1191
        %v1205 = vpack.c.b16 %v1194, %v1193
        %v1206 = vpack.c.b16 %v1196, %v1195
        %v1207 = vpack.c.b16 %v1198, %v1197
        %v1208 = vpack.c.b16 %v1200, %v1199
        %1217 = vmatprep.subr.bf16.mxu0 0
        %1218 = vmatpush1.bf16.msra.mxu0 %v1201
        %1219 = vmatprep.subr.bf16.mxu0 0
        %1220 = vmatpush1.bf16.msra.mxu0 %v1202
        %1221 = vmatprep.subr.bf16.mxu0 0
        %1222 = vmatpush1.bf16.msra.mxu0 %v1203
        %1223 = vmatprep.subr.bf16.mxu0 0
        %1224 = vmatpush1.bf16.msra.mxu0 %v1204
        %1225 = vmatprep.subr.bf16.mxu0 0
        %1226 = vmatpush1.bf16.msra.mxu0 %v1205
        %1227 = vmatprep.subr.bf16.mxu0 0
        %1228 = vmatpush1.bf16.msra.mxu0 %v1206
        %1229 = vmatprep.subr.bf16.mxu0 0
        %1230 = vmatpush1.bf16.msra.mxu0 %v1207
        %1231 = vmatprep.subr.bf16.mxu0 0
        %1232 = vmatpush1.bf16.msra.mxu0 %v1208
        %1233 = vmatprep.subr.bf16.mxu0 0
        %1234 = vmatpush1.bf16.msra.mxu0 0
        %1235 = vmatprep.subr.bf16.mxu0 0
        %1236 = vmatpush1.bf16.msra.mxu0 0
        %1237 = vmatprep.subr.bf16.mxu0 0
        %1238 = vmatpush1.bf16.msra.mxu0 0
        %1239 = vmatprep.subr.bf16.mxu0 0
        %1240 = vmatpush1.bf16.msra.mxu0 0
        %1241 = vmatprep.subr.bf16.mxu0 0
        %1242 = vmatpush1.bf16.msra.mxu0 0
        %1243 = vmatprep.subr.bf16.mxu0 0
        %1244 = vmatpush1.bf16.msra.mxu0 0
        %1245 = vmatprep.subr.bf16.mxu0 0
        %1246 = vmatpush1.bf16.msra.mxu0 0
        %1247 = vmatprep.subr.bf16.mxu0 0
        %1248 = vmatpush1.bf16.msra.mxu0 0
        %1249 = vmatprep.mubr.bf16.mxu0 0
        %1250 = vmatmul.mubr.bf16.gmra.mrb[0].mxu0 %v1151
        %v1251 = vpop.f32.mrb[0].mxu0
        %v1252 = vadd.f32 0.0, %v1251
        %v1253 = vpop.f32.mrb[0].mxu0
        %v1254 = vpop.f32.mrb[0].mxu0
        %v1255 = vadd.f32 0.0, %v1254
        %v1256 = vpop.f32.mrb[0].mxu0
        %1257 = vmatprep.mubr.bf16.mxu0 0
        %1258 = vmatmul.mubr.bf16.gmra.mrb[0].mxu0 %v1152
        %v1259 = vpop.f32.mrb[0].mxu0
        %v1260 = vadd.f32 0.0, %v1259
        %v1261 = vpop.f32.mrb[0].mxu0
        %v1262 = vpop.f32.mrb[0].mxu0
        %v1263 = vadd.f32 0.0, %v1262
        %v1264 = vpop.f32.mrb[0].mxu0
        %1265 = vdwg.mxu0
        %v1266 = vadd.f32 %v1143, %v1252
        %v1267 = vadd.f32 %v1144, %v1255
        %v1268 = vadd.f32 %v1145, %v1260
        %v1269 = vadd.f32 %v1146, %v1263
        %1270 = vst [vmem:[#allocation3] sm:$0xff] %v1266
        %1271 = vst [vmem:[#allocation3 + $0x8] sm:$0xff] %v1267
        %1272 = vst [vmem:[#allocation3 + $0x10] sm:$0xff] %v1268
        %1273 = vst [vmem:[#allocation3 + $0x18] sm:$0xff] %v1269
        %p1274 = scmp.eq.s32.totalorder %s48, 3
        // Predicated region
        $region113: #{sparse_mmdit_block_forward.9} parent=63 // pred_check
          %p1275 = pneg %p1274
        $region114: #{sparse_mmdit_block_forward.9} parent=63 // pred_check_branch
          %1277 = sbr.rel (%p1275) target = $region116
        $region115: #{sparse_mmdit_block_forward.9} parent=63 // pred_region
          %v1278 = vld [vmem:[%s629] sm:$0xf]
          %v1279 = vld [vmem:[%s629 + $0x4] sm:$0xf]
          %v1280 = vld [vmem:[%s629 + $0x8] sm:$0xf]
          %v1281 = vld [vmem:[%s629 + $0xc] sm:$0xf]
          %v1282 = vunpack.c.l.bf16 %v1278
          %v1283 = vunpack.c.l.bf16 %v1279
          %v1284 = vunpack.c.l.bf16 %v1280
          %v1285 = vunpack.c.l.bf16 %v1281
          %v1286 = vld [vmem:[%s708] sm:$0x1]
          %v1287 = vld [vmem:[#allocation3] sm:$0xff]
          %v1288 = vld [vmem:[#allocation3 + $0x8] sm:$0xff]
          %v1289 = vld [vmem:[#allocation3 + $0x10] sm:$0xff]
          %v1290 = vld [vmem:[#allocation3 + $0x18] sm:$0xff]
          %v1291 = vld [vmem:[#allocation19] sm:$0x1]
          %v1293 = vlaneseq
          %v1294 = vshrl.u32 %v1293, 7
          %v1295 = vsub.s32 0, %v1294
          %v1296 = vrot.slane %v1291, %v1295
          %v1298 = vadd.f32 %v1287, %v1296
          %v1299 = vadd.f32 %v1288, %v1296
          %v1300 = vadd.f32 %v1289, %v1296
          %v1301 = vadd.f32 %v1290, %v1296
          %v1303 = vlaneseq
          %v1304 = vshrl.u32 %v1303, 7
          %v1305 = vsub.s32 0, %v1304
          %v1306 = vrot.slane %v1286, %v1305
          %v1308 = vmul.f32 %v1306, %v1298
          %v1309 = vmul.f32 %v1306, %v1299
          %v1310 = vmul.f32 %v1306, %v1300
          %v1311 = vmul.f32 %v1306, %v1301
          %v1312 = vadd.f32 %v1282, %v1308
          %v1313 = vadd.f32 %v1283, %v1309
          %v1314 = vadd.f32 %v1284, %v1310
          %v1315 = vadd.f32 %v1285, %v1311
          %v1316 = vpack.c.bf16 %v1313, %v1312
          %v1317 = vpack.c.bf16 %v1315, %v1314
          %v1320 = vunpack.c.l.b16 %v1316
          %v1321 = vunpack.c.h.b16 %v1316
          %v1322 = vunpack.c.l.b16 %v1317
          %v1323 = vunpack.c.h.b16 %v1317
          %v1324 = vpack.c.b16 %v1320, %v1320
          %v1325 = vpack.c.b16 %v1321, %v1321
          %v1326 = vpack.c.b16 %v1322, %v1322
          %v1327 = vpack.c.b16 %v1323, %v1323
          %1332 = vst [vmem:[%s785] sm:$0xf] %v1324
          %1333 = vst [vmem:[%s785 + $0x4] sm:$0xf] %v1325
          %1334 = vst [vmem:[%s785 + $0x8] sm:$0xf] %v1326
          %1335 = vst [vmem:[%s785 + $0xc] sm:$0xf] %v1327
        $region116: #{sparse_mmdit_block_forward.9} parent=63 // pred_fallthru
          _
        %s1336 = sand.u32 %s375, 1
        %s1337 = scalar_lea.sflag [#allocation6], %s1336
        %s1338 = sand.u32 %s375, 1
        %s1339 = smul.addr %s1338, 16
        %s1340 = scalar_lea.vmem [#allocation22], %s1339
        // Predicated region
        $region117: #{sparse_mmdit_block_forward.9} parent=63 // pred_check
          %p1341 = pneg %p385
        $region118: #{sparse_mmdit_block_forward.9} parent=63 // pred_check_branch
          %1343 = sbr.rel (%p1341) target = $region120
        $region119: #{sparse_mmdit_block_forward.9} parent=63 // pred_region
          %s1344 = smul.u32 4, %s47
          %s1346 = ssub.s32 256, 256
          %1347 = vsyncadd %s1337, %s1346
          %s1348 = smul.addr %s46, 12
          %s1349 = sadd.s32 %s1344, %s1348
          %s1350 = smul.addr %s1349, 64
          %s1351 = scalar_lea.hbm %s11, %s1350
          %s1352 = sshll.u32 %s1340, 4
          %s1353 = int_to_ptr.vmem [resolvable:$true] %s1352
          %1358 = dma.vmem_to_hbm [thread:$0]  %s1353, 256, %s1351, %s1337, 64, 64, 4
        $region120: #{sparse_mmdit_block_forward.9} parent=63 // pred_fallthru
          _
      $region64: #{sparse_mmdit_block_forward.9} parent=5 // pred_fallthru
        _
      %p1359 = scmp.le.s32.totalorder 2, %s36
      // Predicated region
      $region121: #{sparse_mmdit_block_forward.9} parent=5 // pred_check
        %p1360 = pneg %p1359
      $region122: #{sparse_mmdit_block_forward.9} parent=5 // pred_check_branch
        %1362 = sbr.rel (%p1360) target = $region124
      $region123: #{sparse_mmdit_block_forward.9} parent=5 // pred_region
        %s1363 = ssub.s32 %s36, 2
        // Predicated region
        $region125: #{sparse_mmdit_block_forward.9} parent=123 // pred_check
          %p1364 = pneg %p391
        $region126: #{sparse_mmdit_block_forward.9} parent=123 // pred_check_branch
          %1366 = sbr.rel (%p1364) target = $region128
        $region127: #{sparse_mmdit_block_forward.9} parent=123 // pred_region
          %s1367 = sand.u32 %s376, 1
          %s1368 = scalar_lea.sflag [#allocation6], %s1367
          %s1369 = sand.u32 %s376, 1
          %s1370 = smul.addr %s1369, 16
          %s1371 = scalar_lea.vmem [#allocation22], %s1370
          %1372 = dma.done %s1368, 256
        $region128: #{sparse_mmdit_block_forward.9} parent=123 // pred_fallthru
          _
      $region124: #{sparse_mmdit_block_forward.9} parent=5 // pred_fallthru
        _
    $region6: #{sparse_mmdit_block_forward.9} parent=1 // loop_footer
      %s40 = sadd.s32 1, %s36
    $region7: #{sparse_mmdit_block_forward.9} parent=1 // loop_footer_branch
      %35 = sbr.rel target = $region3
    $region8: #{sparse_mmdit_block_forward.9} parent=1 // loop_exit
      _
    %1373 = vsyncpa [#allocation5], 1
    %s1374 = scalar_lea.sflag [#allocation5], 1
    %1375 = vsyncpa %s1374, 1
    %1376 = vsyncpa [#allocation8], 1
    %s1377 = scalar_lea.sflag [#allocation8], 1
    %1378 = vsyncpa %s1377, 1
    %1379 = vsyncpa [#allocation11], 1
    %s1380 = scalar_lea.sflag [#allocation11], 1
    %1381 = vsyncpa %s1380, 1
    %1382 = vsyncpa [#allocation14], 1
    %s1383 = scalar_lea.sflag [#allocation14], 1
    %1384 = vsyncpa %s1383, 1
    %1385 = vsyncpa [#allocation17], 1
    %s1386 = scalar_lea.sflag [#allocation17], 1
    %1387 = vsyncpa %s1386, 1
    %1388 = vsyncpa [#allocation20], 1
    %1389 = vsyncpa [#allocation6], 1
    %s1390 = scalar_lea.sflag [#allocation6], 1
    %1391 = vsyncpa %s1390, 1

</llo_original>
